<compile_context>
chip_gen: v5e
topology: v5e:2x2
jax: 0.10.0
libtpu: 0.0.40
codegen_flags: <defaults>
</compile_context>

<pallas_src>
import jax
import jax.numpy as jnp
from jax.experimental import pallas as pl
from jax.experimental.pallas import tpu as pltpu

IN_DIM = 28 * 28      # 784
HID = 1200
OUT_DIM = 10

# Lane-aligned (multiple-of-128) padded dims.
IN_PAD = 896          # 7 * 128
HID_PAD = 1280        # 10 * 128
OUT_PAD = 128         # 1 * 128


def _round_up(x, m):
    return (x + m - 1) // m * m


def _mlp_kernel(x_ref, w1_ref, b1_ref, w2_ref, b2_ref, w3_ref, b3_ref, o_ref):
    # One batch tile per grid step; weights/biases are VMEM-resident across steps.
    x = x_ref[...]                                                     # (TB, IN_PAD) bf16
    h1 = jnp.dot(x, w1_ref[...], preferred_element_type=jnp.float32) + b1_ref[...]
    h1 = jnp.maximum(h1, 0.0).astype(jnp.bfloat16)                     # ReLU, bf16 feed to MXU
    # dropout1: identity (eval mode)
    h2 = jnp.dot(h1, w2_ref[...], preferred_element_type=jnp.float32) + b2_ref[...]
    h2 = jnp.maximum(h2, 0.0).astype(jnp.bfloat16)
    # dropout2: identity (eval mode)
    out = jnp.dot(h2, w3_ref[...], preferred_element_type=jnp.float32) + b3_ref[...]
    o_ref[...] = out.astype(o_ref.dtype)                               # lane-dense store (128 wide)


def prepare_params(params):
    """Zero-pad weights/biases to lane-aligned shapes; weights in bf16, biases in f32."""
    w1, b1, w2, b2, w3, b3 = params

    def pad2(a, r, c):
        return jnp.pad(a, ((0, r - a.shape[0]), (0, c - a.shape[1])))

    w1p = pad2(w1, IN_PAD, HID_PAD).astype(jnp.bfloat16)
    w2p = pad2(w2, HID_PAD, HID_PAD).astype(jnp.bfloat16)
    w3p = pad2(w3, HID_PAD, OUT_PAD).astype(jnp.bfloat16)
    b1p = pad2(b1, 1, HID_PAD).astype(jnp.float32)
    b2p = pad2(b2, 1, HID_PAD).astype(jnp.float32)
    b3p = pad2(b3, 1, OUT_PAD).astype(jnp.float32)
    return (w1p, b1p, w2p, b2p, w3p, b3p)


def fc_model_forward(x_nchw, prepared_params, *, batch_tile=512):
    """x_nchw: [B, 1, 28, 28] float32 -> logits [B, 10] float32."""
    w1, b1, w2, b2, w3, b3 = prepared_params
    B = x_nchw.shape[0]
    x = x_nchw.reshape(B, IN_DIM)                    # same semantics as torch .view(-1, 784)

    # Batch tile: cap at 512 rows (working set ~20 MiB fits all generations); small
    # batches collapse to a single sublane-aligned tile.
    TB = min(batch_tile, _round_up(B, 8))
    B_pad = _round_up(B, TB)
    x = jnp.pad(x, ((0, B_pad - B), (0, IN_PAD - IN_DIM))).astype(jnp.bfloat16)

    resident = lambda i: (0, 0)                      # weights/biases: same block every step

    flops = 2 * B_pad * (IN_PAD * HID_PAD + HID_PAD * HID_PAD + HID_PAD * OUT_PAD)
    bytes_accessed = (
        x.size * 2                                   # bf16 input
        + (w1.size + w2.size + w3.size) * 2          # bf16 weights (loaded once)
        + (b1.size + b2.size + b3.size) * 4          # f32 biases
        + B_pad * OUT_PAD * 4                        # f32 output
    )

    out = pl.pallas_call(
        _mlp_kernel,
        out_shape=jax.ShapeDtypeStruct((B_pad, OUT_PAD), jnp.float32),
        grid=(B_pad // TB,),
        in_specs=[
            pl.BlockSpec((TB, IN_PAD), lambda i: (i, 0)),
            pl.BlockSpec((IN_PAD, HID_PAD), resident),
            pl.BlockSpec((1, HID_PAD), resident),
            pl.BlockSpec((HID_PAD, HID_PAD), resident),
            pl.BlockSpec((1, HID_PAD), resident),
            pl.BlockSpec((HID_PAD, OUT_PAD), resident),
            pl.BlockSpec((1, OUT_PAD), resident),
        ],
        out_specs=pl.BlockSpec((TB, OUT_PAD), lambda i: (i, 0)),
        compiler_params=pltpu.CompilerParams(
            dimension_semantics=("parallel",),       # shards batch tiles across TCs on v7x
            vmem_limit_bytes=32 << 20,
        ),
        cost_estimate=pl.CostEstimate(
            flops=flops, transcendentals=0, bytes_accessed=bytes_accessed),
    )(x, w1, b1, w2, b2, w3, b3)

    return out[:B, :OUT_DIM]


def init_params(key):
    """Deterministic init matching nn.Linear shapes (stored transposed: [in, out])."""
    k1, k2, k3, k4, k5, k6 = jax.random.split(key, 6)

    def lin_init(kw, kb, fan_in, fan_out):
        bound = 1.0 / jnp.sqrt(float(fan_in))
        w = jax.random.uniform(kw, (fan_in, fan_out), jnp.float32, -bound, bound)
        b = jax.random.uniform(kb, (1, fan_out), jnp.float32, -bound, bound)
        return w, b

    w1, b1 = lin_init(k1, k2, IN_DIM, HID)
    w2, b2 = lin_init(k3, k4, HID, HID)
    w3, b3 = lin_init(k5, k6, HID, OUT_DIM)
    return (w1, b1, w2, b2, w3, b3)


def _reference_forward_bf16(x_nchw, params):
    """Pure-JAX reference with the same bf16 weight/activation casting as the kernel."""
    w1, b1, w2, b2, w3, b3 = params
    x = x_nchw.reshape(x_nchw.shape[0], IN_DIM).astype(jnp.bfloat16)
    h1 = jnp.dot(x, w1.astype(jnp.bfloat16), preferred_element_type=jnp.float32) + b1
    h1 = jnp.maximum(h1, 0.0).astype(jnp.bfloat16)
    h2 = jnp.dot(h1, w2.astype(jnp.bfloat16), preferred_element_type=jnp.float32) + b2
    h2 = jnp.maximum(h2, 0.0).astype(jnp.bfloat16)
    return jnp.dot(h2, w3.astype(jnp.bfloat16), preferred_element_type=jnp.float32) + b3


if __name__ == "__main__":
    key = jax.random.PRNGKey(0)
    kx, kp = jax.random.split(key)

    B = 2
    x = jax.random.normal(kx, (B, 1, 28, 28), jnp.float32)   # NCHW, like torch MNIST input
    params = init_params(kp)
    prepared = prepare_params(params)

    out = fc_model_forward(x, prepared)
    out = jax.block_until_ready(out)

    ref = _reference_forward_bf16(x, params)
    assert out.shape == (B, OUT_DIM)
    assert jnp.allclose(out, ref, atol=2e-2, rtol=2e-2), "mismatch vs pure-JAX reference"

    print("KERNEL_OK")
</pallas_src>

<mosaic_0001>
module attributes {stable_mosaic.version = 11 : i64} {
  func.func @_mlp_kernel(%arg0: i32, %arg1: memref<8x896xbf16, #tpu.memory_space<vmem>>, %arg2: memref<896x1280xbf16, #tpu.memory_space<vmem>>, %arg3: memref<1x1280xf32, #tpu.memory_space<vmem>>, %arg4: memref<1280x1280xbf16, #tpu.memory_space<vmem>>, %arg5: memref<1x1280xf32, #tpu.memory_space<vmem>>, %arg6: memref<1280x128xbf16, #tpu.memory_space<vmem>>, %arg7: memref<1x128xf32, #tpu.memory_space<vmem>>, %arg8: memref<8x128xf32, #tpu.memory_space<vmem>>) attributes {dimension_semantics = [#tpu.dimension_semantics<parallel>], iteration_bounds = array<i64: 1>, scalar_prefetch = 0 : i64, scratch_operands = 0 : i64, tpu.core_type = #tpu.core_type<tc>, window_params = [{transform_indices = @transform_0, window_bounds = array<i64: 8, 896>}, {pipeline_mode = #tpu.pipeline_mode<synchronous>, transform_indices = @transform_1, window_bounds = array<i64: 896, 1280>}, {pipeline_mode = #tpu.pipeline_mode<synchronous>, transform_indices = @transform_2, window_bounds = array<i64: 1, 1280>}, {pipeline_mode = #tpu.pipeline_mode<synchronous>, transform_indices = @transform_3, window_bounds = array<i64: 1280, 1280>}, {pipeline_mode = #tpu.pipeline_mode<synchronous>, transform_indices = @transform_4, window_bounds = array<i64: 1, 1280>}, {pipeline_mode = #tpu.pipeline_mode<synchronous>, transform_indices = @transform_5, window_bounds = array<i64: 1280, 128>}, {pipeline_mode = #tpu.pipeline_mode<synchronous>, transform_indices = @transform_6, window_bounds = array<i64: 1, 128>}, {transform_indices = @transform_7, window_bounds = array<i64: 8, 128>}]} {
    %c0 = arith.constant 0 : index
    %c0_0 = arith.constant 0 : index
    %0 = vector.load %arg1[%c0, %c0_0] : memref<8x896xbf16, #tpu.memory_space<vmem>>, vector<8x896xbf16>
    %c0_1 = arith.constant 0 : index
    %c0_2 = arith.constant 0 : index
    %1 = vector.load %arg2[%c0_1, %c0_2] : memref<896x1280xbf16, #tpu.memory_space<vmem>>, vector<896x1280xbf16>
    %cst = arith.constant dense<0.000000e+00> : vector<8x1280xf32>
    %2 = tpu.matmul %0, %1, %cst {dimension_numbers = #tpu.dot_dimension_numbers<[1], [0], [0], [1], [0, 0, 1, 1], [], []>} : vector<8x896xbf16>, vector<896x1280xbf16>, vector<8x1280xf32> -> vector<8x1280xf32>
    %c0_3 = arith.constant 0 : index
    %c0_4 = arith.constant 0 : index
    %3 = vector.load %arg3[%c0_3, %c0_4] : memref<1x1280xf32, #tpu.memory_space<vmem>>, vector<1x1280xf32>
    %4 = vector.broadcast %3 : vector<1x1280xf32> to vector<8x1280xf32>
    %5 = arith.addf %2, %4 : vector<8x1280xf32>
    %cst_5 = arith.constant 0.000000e+00 : f32
    %6 = vector.broadcast %cst_5 : f32 to vector<8x1280xf32>
    %7 = arith.maximumf %5, %6 : vector<8x1280xf32>
    %8 = arith.truncf %7 : vector<8x1280xf32> to vector<8x1280xbf16>
    %c0_6 = arith.constant 0 : index
    %c0_7 = arith.constant 0 : index
    %9 = vector.load %arg4[%c0_6, %c0_7] : memref<1280x1280xbf16, #tpu.memory_space<vmem>>, vector<1280x1280xbf16>
    %cst_8 = arith.constant dense<0.000000e+00> : vector<8x1280xf32>
    %10 = tpu.matmul %8, %9, %cst_8 {dimension_numbers = #tpu.dot_dimension_numbers<[1], [0], [0], [1], [0, 0, 1, 1], [], []>} : vector<8x1280xbf16>, vector<1280x1280xbf16>, vector<8x1280xf32> -> vector<8x1280xf32>
    %c0_9 = arith.constant 0 : index
    %c0_10 = arith.constant 0 : index
    %11 = vector.load %arg5[%c0_9, %c0_10] : memref<1x1280xf32, #tpu.memory_space<vmem>>, vector<1x1280xf32>
    %12 = vector.broadcast %11 : vector<1x1280xf32> to vector<8x1280xf32>
    %13 = arith.addf %10, %12 : vector<8x1280xf32>
    %cst_11 = arith.constant 0.000000e+00 : f32
    %14 = vector.broadcast %cst_11 : f32 to vector<8x1280xf32>
    %15 = arith.maximumf %13, %14 : vector<8x1280xf32>
    %16 = arith.truncf %15 : vector<8x1280xf32> to vector<8x1280xbf16>
    %c0_12 = arith.constant 0 : index
    %c0_13 = arith.constant 0 : index
    %17 = vector.load %arg6[%c0_12, %c0_13] : memref<1280x128xbf16, #tpu.memory_space<vmem>>, vector<1280x128xbf16>
    %cst_14 = arith.constant dense<0.000000e+00> : vector<8x128xf32>
    %18 = tpu.matmul %16, %17, %cst_14 {dimension_numbers = #tpu.dot_dimension_numbers<[1], [0], [0], [1], [0, 0, 1, 1], [], []>} : vector<8x1280xbf16>, vector<1280x128xbf16>, vector<8x128xf32> -> vector<8x128xf32>
    %c0_15 = arith.constant 0 : index
    %c0_16 = arith.constant 0 : index
    %19 = vector.load %arg7[%c0_15, %c0_16] : memref<1x128xf32, #tpu.memory_space<vmem>>, vector<1x128xf32>
    %20 = vector.broadcast %19 : vector<1x128xf32> to vector<8x128xf32>
    %21 = arith.addf %18, %20 : vector<8x128xf32>
    %c0_17 = arith.constant 0 : index
    %c0_18 = arith.constant 0 : index
    %22 = vector.load %arg8[%c0_17, %c0_18] : memref<8x128xf32, #tpu.memory_space<vmem>>, vector<8x128xf32>
    tpu.vector_store %arg8[%c0_17, %c0_18], %21 {strides = array<i32>} : memref<8x128xf32, #tpu.memory_space<vmem>>, vector<8x128xf32>,
    return
  }
  func.func @transform_0(%arg0: i32) -> (i32, i32) {
    %c0_i32 = arith.constant 0 : i32
    %c0_i32_0 = arith.constant 0 : i32
    return %arg0, %c0_i32 : i32, i32
  }
  func.func @transform_1(%arg0: i32) -> (i32, i32) {
    %c0_i32 = arith.constant 0 : i32
    %c0_i32_0 = arith.constant 0 : i32
    %c0_i32_1 = arith.constant 0 : i32
    return %c0_i32, %c0_i32_0 : i32, i32
  }
  func.func @transform_2(%arg0: i32) -> (i32, i32) {
    %c0_i32 = arith.constant 0 : i32
    %c0_i32_0 = arith.constant 0 : i32
    %c0_i32_1 = arith.constant 0 : i32
    return %c0_i32, %c0_i32_0 : i32, i32
  }
  func.func @transform_3(%arg0: i32) -> (i32, i32) {
    %c0_i32 = arith.constant 0 : i32
    %c0_i32_0 = arith.constant 0 : i32
    %c0_i32_1 = arith.constant 0 : i32
    return %c0_i32, %c0_i32_0 : i32, i32
  }
  func.func @transform_4(%arg0: i32) -> (i32, i32) {
    %c0_i32 = arith.constant 0 : i32
    %c0_i32_0 = arith.constant 0 : i32
    %c0_i32_1 = arith.constant 0 : i32
    return %c0_i32, %c0_i32_0 : i32, i32
  }
  func.func @transform_5(%arg0: i32) -> (i32, i32) {
    %c0_i32 = arith.constant 0 : i32
    %c0_i32_0 = arith.constant 0 : i32
    %c0_i32_1 = arith.constant 0 : i32
    return %c0_i32, %c0_i32_0 : i32, i32
  }
  func.func @transform_6(%arg0: i32) -> (i32, i32) {
    %c0_i32 = arith.constant 0 : i32
    %c0_i32_0 = arith.constant 0 : i32
    %c0_i32_1 = arith.constant 0 : i32
    return %c0_i32, %c0_i32_0 : i32, i32
  }
  func.func @transform_7(%arg0: i32) -> (i32, i32) {
    %c0_i32 = arith.constant 0 : i32
    %c0_i32_0 = arith.constant 0 : i32
    return %arg0, %c0_i32 : i32, i32
  }
}

</mosaic_0001>

<llo_original>
// kernel: tpu_custom_call.1
$region0: #{tpu_custom_call.1}
  #allocation0 [shape = 'u32[]', space=smem, size = 0x4, offset = 0x4, fixed_abs, tag = 'smem constant byte address 0x4 - core index']
  #allocation1 [shape = 'u32[72,128]{1,0:T(1,128)}', space=vmem, size = 0x9000, scoped, tag = 'internal scratch']
  %s0 = inlined_call_operand.hbm [shape: bf16[8,896], index: 0, kind: input, shape index: {}]
  %s1 = inlined_call_operand.hbm [shape: bf16[896,1280], index: 1, kind: input, shape index: {}]
  %s2 = inlined_call_operand.hbm [shape: f32[1,1280], index: 2, kind: input, shape index: {}]
  %s3 = inlined_call_operand.hbm [shape: bf16[1280,1280], index: 3, kind: input, shape index: {}]
  %s4 = inlined_call_operand.hbm [shape: f32[1,1280], index: 4, kind: input, shape index: {}]
  %s5 = inlined_call_operand.hbm [shape: bf16[1280,128], index: 5, kind: input, shape index: {}]
  %s6 = inlined_call_operand.hbm [shape: f32[1,128], index: 6, kind: input, shape index: {}]
  %s7 = inlined_call_operand.hbm [shape: f32[8,128], index: 7, kind: output, shape index: {}]
  %s8 = sld [smem:[#allocation0]]
  $region66: #{tpu_custom_call.1} parent=0
    _
  %s10 = ssub.s32 1, %s8
  %s11 = scalar_select 0, %s10, %s8
  $region1: #{tpu_custom_call.1} parent=0
    #allocation2 [shape = 'u8[14336]{0}', space=vmem, size = 0x3800, scoped, tag = 'input window, operand 0, single buffered']
    #allocation3 [shape = 's32[1]{0}', space=sflag, size = 0x4, scoped, tag = 'scoped memory for tpu_custom_call.1']
    #allocation4 [shape = 's32[1]{0}', space=sflag, size = 0x4, scoped, tag = 'scoped memory for tpu_custom_call.1']
    #allocation5 [shape = 'u8[2293760]{0}', space=vmem, size = 0x230000, scoped, tag = 'input window, operand 1, single buffered']
    #allocation6 [shape = 's32[1]{0}', space=sflag, size = 0x4, scoped, tag = 'scoped memory for tpu_custom_call.1']
    #allocation7 [shape = 'u8[5120]{0}', space=vmem, size = 0x1400, scoped, tag = 'input window, operand 2, single buffered']
    #allocation8 [shape = 'u8[3276800]{0}', space=vmem, size = 0x320000, scoped, tag = 'input window, operand 3, single buffered']
    #allocation9 [shape = 's32[1]{0}', space=sflag, size = 0x4, scoped, tag = 'scoped memory for tpu_custom_call.1']
    #allocation10 [shape = 'u8[5120]{0}', space=vmem, size = 0x1400, scoped, tag = 'input window, operand 4, single buffered']
    #allocation11 [shape = 'u8[327680]{0}', space=vmem, size = 0x50000, scoped, tag = 'input window, operand 5, single buffered']
    #allocation12 [shape = 's32[1]{0}', space=sflag, size = 0x4, scoped, tag = 'scoped memory for tpu_custom_call.1']
    #allocation13 [shape = 'u8[512]{0}', space=vmem, size = 0x400, scoped, tag = 'input window, operand 6, single buffered']
    #allocation14 [shape = 'u8[4096]{0}', space=vmem, size = 0x1000, scoped, tag = 'output window, operand 0, single buffered']
    %12 = vsyncpa [#allocation3], 0
    %13 = vsyncpa [#allocation6], 0
    %14 = vsyncpa [#allocation9], 0
    %15 = vsyncpa [#allocation12], 0
    %16 = vsyncpa [#allocation4], 0
    // Predicated region
    $region2: #{tpu_custom_call.1} parent=1 // pred_check
      _
    $region3: #{tpu_custom_call.1} parent=1 // pred_check_branch
      %18 = sbr.rel (0) target = $region5
    $region4: #{tpu_custom_call.1} parent=1 // pred_region
      %20 = vsyncadd [#allocation3], 0
      %s22 = sshll.u32 %s0, 4
      %s23 = int_to_ptr.hbm [resolvable:$true] %s22
      %s24 = sshll.u32 [#allocation2], 4
      %s25 = int_to_ptr.vmem [resolvable:$true] %s24
      %27 = dma.hbm_to_vmem [thread:$0]  %s23, 448, %s25, [#allocation3]
    $region5: #{tpu_custom_call.1} parent=1 // pred_fallthru
      _
    // Predicated region
    $region6: #{tpu_custom_call.1} parent=1 // pred_check
      _
    $region7: #{tpu_custom_call.1} parent=1 // pred_check_branch
      %29 = sbr.rel (0) target = $region9
    $region8: #{tpu_custom_call.1} parent=1 // pred_region
      %31 = vsyncadd [#allocation6], 0
      %s32 = sshll.u32 %s1, 4
      %s33 = int_to_ptr.hbm [resolvable:$true] %s32
      %s34 = sshll.u32 [#allocation5], 4
      %s35 = int_to_ptr.vmem [resolvable:$true] %s34
      %40 = dma.hbm_to_vmem [thread:$0]  %s33, 71680, %s35, [#allocation6], 640, 640, 40
    $region9: #{tpu_custom_call.1} parent=1 // pred_fallthru
      _
    // Predicated region
    $region10: #{tpu_custom_call.1} parent=1 // pred_check
      _
    $region11: #{tpu_custom_call.1} parent=1 // pred_check_branch
      %42 = sbr.rel (0) target = $region13
    $region12: #{tpu_custom_call.1} parent=1 // pred_region
      %44 = vsyncadd [#allocation6], 0
      %s46 = sshll.u32 %s2, 4
      %s47 = int_to_ptr.hbm [resolvable:$true] %s46
      %s48 = sshll.u32 [#allocation7], 4
      %s49 = int_to_ptr.vmem [resolvable:$true] %s48
      %51 = dma.hbm_to_vmem [thread:$0]  %s47, 160, %s49, [#allocation6]
    $region13: #{tpu_custom_call.1} parent=1 // pred_fallthru
      _
    // Predicated region
    $region14: #{tpu_custom_call.1} parent=1 // pred_check
      _
    $region15: #{tpu_custom_call.1} parent=1 // pred_check_branch
      %53 = sbr.rel (0) target = $region17
    $region16: #{tpu_custom_call.1} parent=1 // pred_region
      %55 = vsyncadd [#allocation9], 0
      %s56 = sshll.u32 %s3, 4
      %s57 = int_to_ptr.hbm [resolvable:$true] %s56
      %s58 = sshll.u32 [#allocation8], 4
      %s59 = int_to_ptr.vmem [resolvable:$true] %s58
      %64 = dma.hbm_to_vmem [thread:$0]  %s57, 102400, %s59, [#allocation9], 640, 640, 40
    $region17: #{tpu_custom_call.1} parent=1 // pred_fallthru
      _
    // Predicated region
    $region18: #{tpu_custom_call.1} parent=1 // pred_check
      _
    $region19: #{tpu_custom_call.1} parent=1 // pred_check_branch
      %66 = sbr.rel (0) target = $region21
    $region20: #{tpu_custom_call.1} parent=1 // pred_region
      %68 = vsyncadd [#allocation9], 0
      %s70 = sshll.u32 %s4, 4
      %s71 = int_to_ptr.hbm [resolvable:$true] %s70
      %s72 = sshll.u32 [#allocation10], 4
      %s73 = int_to_ptr.vmem [resolvable:$true] %s72
      %75 = dma.hbm_to_vmem [thread:$0]  %s71, 160, %s73, [#allocation9]
    $region21: #{tpu_custom_call.1} parent=1 // pred_fallthru
      _
    // Predicated region
    $region22: #{tpu_custom_call.1} parent=1 // pred_check
      _
    $region23: #{tpu_custom_call.1} parent=1 // pred_check_branch
      %77 = sbr.rel (0) target = $region25
    $region24: #{tpu_custom_call.1} parent=1 // pred_region
      %79 = vsyncadd [#allocation12], 0
      %s80 = sshll.u32 %s5, 4
      %s81 = int_to_ptr.hbm [resolvable:$true] %s80
      %s82 = sshll.u32 [#allocation11], 4
      %s83 = int_to_ptr.vmem [resolvable:$true] %s82
      %88 = dma.hbm_to_vmem [thread:$0]  %s81, 10240, %s83, [#allocation12], 64, 64, 4
    $region25: #{tpu_custom_call.1} parent=1 // pred_fallthru
      _
    // Predicated region
    $region26: #{tpu_custom_call.1} parent=1 // pred_check
      _
    $region27: #{tpu_custom_call.1} parent=1 // pred_check_branch
      %90 = sbr.rel (0) target = $region29
    $region28: #{tpu_custom_call.1} parent=1 // pred_region
      %92 = vsyncadd [#allocation12], 0
      %s94 = sshll.u32 %s6, 4
      %s95 = int_to_ptr.hbm [resolvable:$true] %s94
      %s96 = sshll.u32 [#allocation13], 4
      %s97 = int_to_ptr.vmem [resolvable:$true] %s96
      %99 = dma.hbm_to_vmem [thread:$0]  %s95, 16, %s97, [#allocation12]
    $region29: #{tpu_custom_call.1} parent=1 // pred_fallthru
      _
    // Predicated region
    $region30: #{tpu_custom_call.1} parent=1 // pred_check
      _
    $region31: #{tpu_custom_call.1} parent=1 // pred_check_branch
      %101 = sbr.rel (0) target = $region33
    $region32: #{tpu_custom_call.1} parent=1 // pred_region
      %103 = dma.done [#allocation3], 448
    $region33: #{tpu_custom_call.1} parent=1 // pred_fallthru
      _
    // Predicated region
    $region34: #{tpu_custom_call.1} parent=1 // pred_check
      _
    $region35: #{tpu_custom_call.1} parent=1 // pred_check_branch
      %105 = sbr.rel (0) target = $region37
    $region36: #{tpu_custom_call.1} parent=1 // pred_region
      %107 = dma.done [#allocation6], 71680
    $region37: #{tpu_custom_call.1} parent=1 // pred_fallthru
      _
    // Predicated region
    $region38: #{tpu_custom_call.1} parent=1 // pred_check
      _
    $region39: #{tpu_custom_call.1} parent=1 // pred_check_branch
      %109 = sbr.rel (0) target = $region41
    $region40: #{tpu_custom_call.1} parent=1 // pred_region
      %111 = dma.done [#allocation6], 160
    $region41: #{tpu_custom_call.1} parent=1 // pred_fallthru
      _
    // Predicated region
    $region42: #{tpu_custom_call.1} parent=1 // pred_check
      _
    $region43: #{tpu_custom_call.1} parent=1 // pred_check_branch
      %113 = sbr.rel (0) target = $region45
    $region44: #{tpu_custom_call.1} parent=1 // pred_region
      %115 = dma.done [#allocation9], 102400
    $region45: #{tpu_custom_call.1} parent=1 // pred_fallthru
      _
    // Predicated region
    $region46: #{tpu_custom_call.1} parent=1 // pred_check
      _
    $region47: #{tpu_custom_call.1} parent=1 // pred_check_branch
      %117 = sbr.rel (0) target = $region49
    $region48: #{tpu_custom_call.1} parent=1 // pred_region
      %119 = dma.done [#allocation9], 160
    $region49: #{tpu_custom_call.1} parent=1 // pred_fallthru
      _
    // Predicated region
    $region50: #{tpu_custom_call.1} parent=1 // pred_check
      _
    $region51: #{tpu_custom_call.1} parent=1 // pred_check_branch
      %121 = sbr.rel (0) target = $region53
    $region52: #{tpu_custom_call.1} parent=1 // pred_region
      %123 = dma.done [#allocation12], 10240
    $region53: #{tpu_custom_call.1} parent=1 // pred_fallthru
      _
    // Predicated region
    $region54: #{tpu_custom_call.1} parent=1 // pred_check
      _
    $region55: #{tpu_custom_call.1} parent=1 // pred_check_branch
      %125 = sbr.rel (0) target = $region57
    $region56: #{tpu_custom_call.1} parent=1 // pred_region
      %127 = dma.done [#allocation12], 16
    $region57: #{tpu_custom_call.1} parent=1 // pred_fallthru
      _
    %v128 = vld [vmem:[#allocation2] sm:$0xff]
    %v129 = vld [vmem:[#allocation2 + $0x8] sm:$0xff]
    %v130 = vld [vmem:[#allocation2 + $0x10] sm:$0xff]
    %v131 = vld [vmem:[#allocation2 + $0x18] sm:$0xf]
    %v132 = vld [vmem:[#allocation5] sm:$0xff]
    %v133 = vld [vmem:[#allocation5 + $0x8] sm:$0xff]
    %v134 = vld [vmem:[#allocation5 + $0x10] sm:$0xff]
    %v135 = vld [vmem:[#allocation5 + $0x18] sm:$0xff]
    %v136 = vld [vmem:[#allocation5 + $0x20] sm:$0xff]
    %v137 = vld [vmem:[#allocation5 + $0x28] sm:$0xff]
    %v138 = vld [vmem:[#allocation5 + $0x30] sm:$0xff]
    %v139 = vld [vmem:[#allocation5 + $0x38] sm:$0xff]
    %v140 = vld [vmem:[#allocation5 + $0x40] sm:$0xff]
    %v141 = vld [vmem:[#allocation5 + $0x48] sm:$0xff]
    %v142 = vld [vmem:[#allocation5 + $0x50] sm:$0xff]
    %v143 = vld [vmem:[#allocation5 + $0x58] sm:$0xff]
    %v144 = vld [vmem:[#allocation5 + $0x60] sm:$0xff]
    %v145 = vld [vmem:[#allocation5 + $0x68] sm:$0xff]
    %v146 = vld [vmem:[#allocation5 + $0x70] sm:$0xff]
    %v147 = vld [vmem:[#allocation5 + $0x78] sm:$0xff]
    %v148 = vld [vmem:[#allocation5 + $0x80] sm:$0xff]
    %v149 = vld [vmem:[#allocation5 + $0x88] sm:$0xff]
    %v150 = vld [vmem:[#allocation5 + $0x90] sm:$0xff]
    %v151 = vld [vmem:[#allocation5 + $0x98] sm:$0xff]
    %v152 = vld [vmem:[#allocation5 + $0xa0] sm:$0xff]
    %v153 = vld [vmem:[#allocation5 + $0xa8] sm:$0xff]
    %v154 = vld [vmem:[#allocation5 + $0xb0] sm:$0xff]
    %v155 = vld [vmem:[#allocation5 + $0xb8] sm:$0xff]
    %v156 = vld [vmem:[#allocation5 + $0xc0] sm:$0xff]
    %v157 = vld [vmem:[#allocation5 + $0xc8] sm:$0xff]
    %v158 = vld [vmem:[#allocation5 + $0xd0] sm:$0xff]
    %v159 = vld [vmem:[#allocation5 + $0xd8] sm:$0xff]
    %v160 = vld [vmem:[#allocation5 + $0xe0] sm:$0xff]
    %v161 = vld [vmem:[#allocation5 + $0xe8] sm:$0xff]
    %v162 = vld [vmem:[#allocation5 + $0xf0] sm:$0xff]
    %v163 = vld [vmem:[#allocation5 + $0xf8] sm:$0xff]
    %v164 = vld [vmem:[#allocation5 + $0x100] sm:$0xff]
    %v165 = vld [vmem:[#allocation5 + $0x108] sm:$0xff]
    %v166 = vld [vmem:[#allocation5 + $0x110] sm:$0xff]
    %v167 = vld [vmem:[#allocation5 + $0x118] sm:$0xff]
    %v168 = vld [vmem:[#allocation5 + $0x120] sm:$0xff]
    %v169 = vld [vmem:[#allocation5 + $0x128] sm:$0xff]
    %v170 = vld [vmem:[#allocation5 + $0x130] sm:$0xff]
    %v171 = vld [vmem:[#allocation5 + $0x138] sm:$0xff]
    %v172 = vld [vmem:[#allocation5 + $0x140] sm:$0xff]
    %v173 = vld [vmem:[#allocation5 + $0x148] sm:$0xff]
    %v174 = vld [vmem:[#allocation5 + $0x150] sm:$0xff]
    %v175 = vld [vmem:[#allocation5 + $0x158] sm:$0xff]
    %v176 = vld [vmem:[#allocation5 + $0x160] sm:$0xff]
    %v177 = vld [vmem:[#allocation5 + $0x168] sm:$0xff]
    %v178 = vld [vmem:[#allocation5 + $0x170] sm:$0xff]
    %v179 = vld [vmem:[#allocation5 + $0x178] sm:$0xff]
    %v180 = vld [vmem:[#allocation5 + $0x180] sm:$0xff]
    %v181 = vld [vmem:[#allocation5 + $0x188] sm:$0xff]
    %v182 = vld [vmem:[#allocation5 + $0x190] sm:$0xff]
    %v183 = vld [vmem:[#allocation5 + $0x198] sm:$0xff]
    %v184 = vld [vmem:[#allocation5 + $0x1a0] sm:$0xff]
    %v185 = vld [vmem:[#allocation5 + $0x1a8] sm:$0xff]
    %v186 = vld [vmem:[#allocation5 + $0x1b0] sm:$0xff]
    %v187 = vld [vmem:[#allocation5 + $0x1b8] sm:$0xff]
    %v188 = vld [vmem:[#allocation5 + $0x1c0] sm:$0xff]
    %v189 = vld [vmem:[#allocation5 + $0x1c8] sm:$0xff]
    %v190 = vld [vmem:[#allocation5 + $0x1d0] sm:$0xff]
    %v191 = vld [vmem:[#allocation5 + $0x1d8] sm:$0xff]
    %v192 = vld [vmem:[#allocation5 + $0x1e0] sm:$0xff]
    %v193 = vld [vmem:[#allocation5 + $0x1e8] sm:$0xff]
    %v194 = vld [vmem:[#allocation5 + $0x1f0] sm:$0xff]
    %v195 = vld [vmem:[#allocation5 + $0x1f8] sm:$0xff]
    %v196 = vld [vmem:[#allocation5 + $0x200] sm:$0xff]
    %v197 = vld [vmem:[#allocation5 + $0x208] sm:$0xff]
    %v198 = vld [vmem:[#allocation5 + $0x210] sm:$0xff]
    %v199 = vld [vmem:[#allocation5 + $0x218] sm:$0xff]
    %v200 = vld [vmem:[#allocation5 + $0x220] sm:$0xff]
    %v201 = vld [vmem:[#allocation5 + $0x228] sm:$0xff]
    %v202 = vld [vmem:[#allocation5 + $0x230] sm:$0xff]
    %v203 = vld [vmem:[#allocation5 + $0x238] sm:$0xff]
    %v204 = vld [vmem:[#allocation5 + $0x240] sm:$0xff]
    %v205 = vld [vmem:[#allocation5 + $0x248] sm:$0xff]
    %v206 = vld [vmem:[#allocation5 + $0x250] sm:$0xff]
    %v207 = vld [vmem:[#allocation5 + $0x258] sm:$0xff]
    %v208 = vld [vmem:[#allocation5 + $0x260] sm:$0xff]
    %v209 = vld [vmem:[#allocation5 + $0x268] sm:$0xff]
    %v210 = vld [vmem:[#allocation5 + $0x270] sm:$0xff]
    %v211 = vld [vmem:[#allocation5 + $0x278] sm:$0xff]
    %v212 = vld [vmem:[#allocation5 + $0x280] sm:$0xff]
    %v213 = vld [vmem:[#allocation5 + $0x288] sm:$0xff]
    %v214 = vld [vmem:[#allocation5 + $0x290] sm:$0xff]
    %v215 = vld [vmem:[#allocation5 + $0x298] sm:$0xff]
    %v216 = vld [vmem:[#allocation5 + $0x2a0] sm:$0xff]
    %v217 = vld [vmem:[#allocation5 + $0x2a8] sm:$0xff]
    %v218 = vld [vmem:[#allocation5 + $0x2b0] sm:$0xff]
    %v219 = vld [vmem:[#allocation5 + $0x2b8] sm:$0xff]
    %v220 = vld [vmem:[#allocation5 + $0x2c0] sm:$0xff]
    %v221 = vld [vmem:[#allocation5 + $0x2c8] sm:$0xff]
    %v222 = vld [vmem:[#allocation5 + $0x2d0] sm:$0xff]
    %v223 = vld [vmem:[#allocation5 + $0x2d8] sm:$0xff]
    %v224 = vld [vmem:[#allocation5 + $0x2e0] sm:$0xff]
    %v225 = vld [vmem:[#allocation5 + $0x2e8] sm:$0xff]
    %v226 = vld [vmem:[#allocation5 + $0x2f0] sm:$0xff]
    %v227 = vld [vmem:[#allocation5 + $0x2f8] sm:$0xff]
    %v228 = vld [vmem:[#allocation5 + $0x300] sm:$0xff]
    %v229 = vld [vmem:[#allocation5 + $0x308] sm:$0xff]
    %v230 = vld [vmem:[#allocation5 + $0x310] sm:$0xff]
    %v231 = vld [vmem:[#allocation5 + $0x318] sm:$0xff]
    %v232 = vld [vmem:[#allocation5 + $0x320] sm:$0xff]
    %v233 = vld [vmem:[#allocation5 + $0x328] sm:$0xff]
    %v234 = vld [vmem:[#allocation5 + $0x330] sm:$0xff]
    %v235 = vld [vmem:[#allocation5 + $0x338] sm:$0xff]
    %v236 = vld [vmem:[#allocation5 + $0x340] sm:$0xff]
    %v237 = vld [vmem:[#allocation5 + $0x348] sm:$0xff]
    %v238 = vld [vmem:[#allocation5 + $0x350] sm:$0xff]
    %v239 = vld [vmem:[#allocation5 + $0x358] sm:$0xff]
    %v240 = vld [vmem:[#allocation5 + $0x360] sm:$0xff]
    %v241 = vld [vmem:[#allocation5 + $0x368] sm:$0xff]
    %v242 = vld [vmem:[#allocation5 + $0x370] sm:$0xff]
    %v243 = vld [vmem:[#allocation5 + $0x378] sm:$0xff]
    %v244 = vld [vmem:[#allocation5 + $0x380] sm:$0xff]
    %v245 = vld [vmem:[#allocation5 + $0x388] sm:$0xff]
    %v246 = vld [vmem:[#allocation5 + $0x390] sm:$0xff]
    %v247 = vld [vmem:[#allocation5 + $0x398] sm:$0xff]
    %v248 = vld [vmem:[#allocation5 + $0x3a0] sm:$0xff]
    %v249 = vld [vmem:[#allocation5 + $0x3a8] sm:$0xff]
    %v250 = vld [vmem:[#allocation5 + $0x3b0] sm:$0xff]
    %v251 = vld [vmem:[#allocation5 + $0x3b8] sm:$0xff]
    %v252 = vld [vmem:[#allocation5 + $0x3c0] sm:$0xff]
    %v253 = vld [vmem:[#allocation5 + $0x3c8] sm:$0xff]
    %v254 = vld [vmem:[#allocation5 + $0x3d0] sm:$0xff]
    %v255 = vld [vmem:[#allocation5 + $0x3d8] sm:$0xff]
    %v256 = vld [vmem:[#allocation5 + $0x3e0] sm:$0xff]
    %v257 = vld [vmem:[#allocation5 + $0x3e8] sm:$0xff]
    %v258 = vld [vmem:[#allocation5 + $0x3f0] sm:$0xff]
    %v259 = vld [vmem:[#allocation5 + $0x3f8] sm:$0xff]
    %v260 = vld [vmem:[#allocation5 + $0x400] sm:$0xff]
    %v261 = vld [vmem:[#allocation5 + $0x408] sm:$0xff]
    %v262 = vld [vmem:[#allocation5 + $0x410] sm:$0xff]
    %v263 = vld [vmem:[#allocation5 + $0x418] sm:$0xff]
    %v264 = vld [vmem:[#allocation5 + $0x420] sm:$0xff]
    %v265 = vld [vmem:[#allocation5 + $0x428] sm:$0xff]
    %v266 = vld [vmem:[#allocation5 + $0x430] sm:$0xff]
    %v267 = vld [vmem:[#allocation5 + $0x438] sm:$0xff]
    %v268 = vld [vmem:[#allocation5 + $0x440] sm:$0xff]
    %v269 = vld [vmem:[#allocation5 + $0x448] sm:$0xff]
    %v270 = vld [vmem:[#allocation5 + $0x450] sm:$0xff]
    %v271 = vld [vmem:[#allocation5 + $0x458] sm:$0xff]
    %v272 = vld [vmem:[#allocation5 + $0x460] sm:$0xff]
    %v273 = vld [vmem:[#allocation5 + $0x468] sm:$0xff]
    %v274 = vld [vmem:[#allocation5 + $0x470] sm:$0xff]
    %v275 = vld [vmem:[#allocation5 + $0x478] sm:$0xff]
    %v276 = vld [vmem:[#allocation5 + $0x480] sm:$0xff]
    %v277 = vld [vmem:[#allocation5 + $0x488] sm:$0xff]
    %v278 = vld [vmem:[#allocation5 + $0x490] sm:$0xff]
    %v279 = vld [vmem:[#allocation5 + $0x498] sm:$0xff]
    %v280 = vld [vmem:[#allocation5 + $0x4a0] sm:$0xff]
    %v281 = vld [vmem:[#allocation5 + $0x4a8] sm:$0xff]
    %v282 = vld [vmem:[#allocation5 + $0x4b0] sm:$0xff]
    %v283 = vld [vmem:[#allocation5 + $0x4b8] sm:$0xff]
    %v284 = vld [vmem:[#allocation5 + $0x4c0] sm:$0xff]
    %v285 = vld [vmem:[#allocation5 + $0x4c8] sm:$0xff]
    %v286 = vld [vmem:[#allocation5 + $0x4d0] sm:$0xff]
    %v287 = vld [vmem:[#allocation5 + $0x4d8] sm:$0xff]
    %v288 = vld [vmem:[#allocation5 + $0x4e0] sm:$0xff]
    %v289 = vld [vmem:[#allocation5 + $0x4e8] sm:$0xff]
    %v290 = vld [vmem:[#allocation5 + $0x4f0] sm:$0xff]
    %v291 = vld [vmem:[#allocation5 + $0x4f8] sm:$0xff]
    %v292 = vld [vmem:[#allocation5 + $0x500] sm:$0xff]
    %v293 = vld [vmem:[#allocation5 + $0x508] sm:$0xff]
    %v294 = vld [vmem:[#allocation5 + $0x510] sm:$0xff]
    %v295 = vld [vmem:[#allocation5 + $0x518] sm:$0xff]
    %v296 = vld [vmem:[#allocation5 + $0x520] sm:$0xff]
    %v297 = vld [vmem:[#allocation5 + $0x528] sm:$0xff]
    %v298 = vld [vmem:[#allocation5 + $0x530] sm:$0xff]
    %v299 = vld [vmem:[#allocation5 + $0x538] sm:$0xff]
    %v300 = vld [vmem:[#allocation5 + $0x540] sm:$0xff]
    %v301 = vld [vmem:[#allocation5 + $0x548] sm:$0xff]
    %v302 = vld [vmem:[#allocation5 + $0x550] sm:$0xff]
    %v303 = vld [vmem:[#allocation5 + $0x558] sm:$0xff]
    %v304 = vld [vmem:[#allocation5 + $0x560] sm:$0xff]
    %v305 = vld [vmem:[#allocation5 + $0x568] sm:$0xff]
    %v306 = vld [vmem:[#allocation5 + $0x570] sm:$0xff]
    %v307 = vld [vmem:[#allocation5 + $0x578] sm:$0xff]
    %v308 = vld [vmem:[#allocation5 + $0x580] sm:$0xff]
    %v309 = vld [vmem:[#allocation5 + $0x588] sm:$0xff]
    %v310 = vld [vmem:[#allocation5 + $0x590] sm:$0xff]
    %v311 = vld [vmem:[#allocation5 + $0x598] sm:$0xff]
    %v312 = vld [vmem:[#allocation5 + $0x5a0] sm:$0xff]
    %v313 = vld [vmem:[#allocation5 + $0x5a8] sm:$0xff]
    %v314 = vld [vmem:[#allocation5 + $0x5b0] sm:$0xff]
    %v315 = vld [vmem:[#allocation5 + $0x5b8] sm:$0xff]
    %v316 = vld [vmem:[#allocation5 + $0x5c0] sm:$0xff]
    %v317 = vld [vmem:[#allocation5 + $0x5c8] sm:$0xff]
    %v318 = vld [vmem:[#allocation5 + $0x5d0] sm:$0xff]
    %v319 = vld [vmem:[#allocation5 + $0x5d8] sm:$0xff]
    %v320 = vld [vmem:[#allocation5 + $0x5e0] sm:$0xff]
    %v321 = vld [vmem:[#allocation5 + $0x5e8] sm:$0xff]
    %v322 = vld [vmem:[#allocation5 + $0x5f0] sm:$0xff]
    %v323 = vld [vmem:[#allocation5 + $0x5f8] sm:$0xff]
    %v324 = vld [vmem:[#allocation5 + $0x600] sm:$0xff]
    %v325 = vld [vmem:[#allocation5 + $0x608] sm:$0xff]
    %v326 = vld [vmem:[#allocation5 + $0x610] sm:$0xff]
    %v327 = vld [vmem:[#allocation5 + $0x618] sm:$0xff]
    %v328 = vld [vmem:[#allocation5 + $0x620] sm:$0xff]
    %v329 = vld [vmem:[#allocation5 + $0x628] sm:$0xff]
    %v330 = vld [vmem:[#allocation5 + $0x630] sm:$0xff]
    %v331 = vld [vmem:[#allocation5 + $0x638] sm:$0xff]
    %v332 = vld [vmem:[#allocation5 + $0x640] sm:$0xff]
    %v333 = vld [vmem:[#allocation5 + $0x648] sm:$0xff]
    %v334 = vld [vmem:[#allocation5 + $0x650] sm:$0xff]
    %v335 = vld [vmem:[#allocation5 + $0x658] sm:$0xff]
    %v336 = vld [vmem:[#allocation5 + $0x660] sm:$0xff]
    %v337 = vld [vmem:[#allocation5 + $0x668] sm:$0xff]
    %v338 = vld [vmem:[#allocation5 + $0x670] sm:$0xff]
    %v339 = vld [vmem:[#allocation5 + $0x678] sm:$0xff]
    %v340 = vld [vmem:[#allocation5 + $0x680] sm:$0xff]
    %v341 = vld [vmem:[#allocation5 + $0x688] sm:$0xff]
    %v342 = vld [vmem:[#allocation5 + $0x690] sm:$0xff]
    %v343 = vld [vmem:[#allocation5 + $0x698] sm:$0xff]
    %v344 = vld [vmem:[#allocation5 + $0x6a0] sm:$0xff]
    %v345 = vld [vmem:[#allocation5 + $0x6a8] sm:$0xff]
    %v346 = vld [vmem:[#allocation5 + $0x6b0] sm:$0xff]
    %v347 = vld [vmem:[#allocation5 + $0x6b8] sm:$0xff]
    %v348 = vld [vmem:[#allocation5 + $0x6c0] sm:$0xff]
    %v349 = vld [vmem:[#allocation5 + $0x6c8] sm:$0xff]
    %v350 = vld [vmem:[#allocation5 + $0x6d0] sm:$0xff]
    %v351 = vld [vmem:[#allocation5 + $0x6d8] sm:$0xff]
    %v352 = vld [vmem:[#allocation5 + $0x6e0] sm:$0xff]
    %v353 = vld [vmem:[#allocation5 + $0x6e8] sm:$0xff]
    %v354 = vld [vmem:[#allocation5 + $0x6f0] sm:$0xff]
    %v355 = vld [vmem:[#allocation5 + $0x6f8] sm:$0xff]
    %v356 = vld [vmem:[#allocation5 + $0x700] sm:$0xff]
    %v357 = vld [vmem:[#allocation5 + $0x708] sm:$0xff]
    %v358 = vld [vmem:[#allocation5 + $0x710] sm:$0xff]
    %v359 = vld [vmem:[#allocation5 + $0x718] sm:$0xff]
    %v360 = vld [vmem:[#allocation5 + $0x720] sm:$0xff]
    %v361 = vld [vmem:[#allocation5 + $0x728] sm:$0xff]
    %v362 = vld [vmem:[#allocation5 + $0x730] sm:$0xff]
    %v363 = vld [vmem:[#allocation5 + $0x738] sm:$0xff]
    %v364 = vld [vmem:[#allocation5 + $0x740] sm:$0xff]
    %v365 = vld [vmem:[#allocation5 + $0x748] sm:$0xff]
    %v366 = vld [vmem:[#allocation5 + $0x750] sm:$0xff]
    %v367 = vld [vmem:[#allocation5 + $0x758] sm:$0xff]
    %v368 = vld [vmem:[#allocation5 + $0x760] sm:$0xff]
    %v369 = vld [vmem:[#allocation5 + $0x768] sm:$0xff]
    %v370 = vld [vmem:[#allocation5 + $0x770] sm:$0xff]
    %v371 = vld [vmem:[#allocation5 + $0x778] sm:$0xff]
    %v372 = vld [vmem:[#allocation5 + $0x780] sm:$0xff]
    %v373 = vld [vmem:[#allocation5 + $0x788] sm:$0xff]
    %v374 = vld [vmem:[#allocation5 + $0x790] sm:$0xff]
    %v375 = vld [vmem:[#allocation5 + $0x798] sm:$0xff]
    %v376 = vld [vmem:[#allocation5 + $0x7a0] sm:$0xff]
    %v377 = vld [vmem:[#allocation5 + $0x7a8] sm:$0xff]
    %v378 = vld [vmem:[#allocation5 + $0x7b0] sm:$0xff]
    %v379 = vld [vmem:[#allocation5 + $0x7b8] sm:$0xff]
    %v380 = vld [vmem:[#allocation5 + $0x7c0] sm:$0xff]
    %v381 = vld [vmem:[#allocation5 + $0x7c8] sm:$0xff]
    %v382 = vld [vmem:[#allocation5 + $0x7d0] sm:$0xff]
    %v383 = vld [vmem:[#allocation5 + $0x7d8] sm:$0xff]
    %v384 = vld [vmem:[#allocation5 + $0x7e0] sm:$0xff]
    %v385 = vld [vmem:[#allocation5 + $0x7e8] sm:$0xff]
    %v386 = vld [vmem:[#allocation5 + $0x7f0] sm:$0xff]
    %v387 = vld [vmem:[#allocation5 + $0x7f8] sm:$0xff]
    %v388 = vld [vmem:[#allocation5 + $0x800] sm:$0xff]
    %v389 = vld [vmem:[#allocation5 + $0x808] sm:$0xff]
    %v390 = vld [vmem:[#allocation5 + $0x810] sm:$0xff]
    %v391 = vld [vmem:[#allocation5 + $0x818] sm:$0xff]
    %v392 = vld [vmem:[#allocation5 + $0x820] sm:$0xff]
    %v393 = vld [vmem:[#allocation5 + $0x828] sm:$0xff]
    %v394 = vld [vmem:[#allocation5 + $0x830] sm:$0xff]
    %v395 = vld [vmem:[#allocation5 + $0x838] sm:$0xff]
    %v396 = vld [vmem:[#allocation5 + $0x840] sm:$0xff]
    %v397 = vld [vmem:[#allocation5 + $0x848] sm:$0xff]
    %v398 = vld [vmem:[#allocation5 + $0x850] sm:$0xff]
    %v399 = vld [vmem:[#allocation5 + $0x858] sm:$0xff]
    %v400 = vld [vmem:[#allocation5 + $0x860] sm:$0xff]
    %v401 = vld [vmem:[#allocation5 + $0x868] sm:$0xff]
    %v402 = vld [vmem:[#allocation5 + $0x870] sm:$0xff]
    %v403 = vld [vmem:[#allocation5 + $0x878] sm:$0xff]
    %v404 = vld [vmem:[#allocation5 + $0x880] sm:$0xff]
    %v405 = vld [vmem:[#allocation5 + $0x888] sm:$0xff]
    %v406 = vld [vmem:[#allocation5 + $0x890] sm:$0xff]
    %v407 = vld [vmem:[#allocation5 + $0x898] sm:$0xff]
    %v408 = vld [vmem:[#allocation5 + $0x8a0] sm:$0xff]
    %v409 = vld [vmem:[#allocation5 + $0x8a8] sm:$0xff]
    %v410 = vld [vmem:[#allocation5 + $0x8b0] sm:$0xff]
    %v411 = vld [vmem:[#allocation5 + $0x8b8] sm:$0xff]
    %v412 = vld [vmem:[#allocation5 + $0x8c0] sm:$0xff]
    %v413 = vld [vmem:[#allocation5 + $0x8c8] sm:$0xff]
    %v414 = vld [vmem:[#allocation5 + $0x8d0] sm:$0xff]
    %v415 = vld [vmem:[#allocation5 + $0x8d8] sm:$0xff]
    %v416 = vld [vmem:[#allocation5 + $0x8e0] sm:$0xff]
    %v417 = vld [vmem:[#allocation5 + $0x8e8] sm:$0xff]
    %v418 = vld [vmem:[#allocation5 + $0x8f0] sm:$0xff]
    %v419 = vld [vmem:[#allocation5 + $0x8f8] sm:$0xff]
    %v420 = vld [vmem:[#allocation5 + $0x900] sm:$0xff]
    %v421 = vld [vmem:[#allocation5 + $0x908] sm:$0xff]
    %v422 = vld [vmem:[#allocation5 + $0x910] sm:$0xff]
    %v423 = vld [vmem:[#allocation5 + $0x918] sm:$0xff]
    %v424 = vld [vmem:[#allocation5 + $0x920] sm:$0xff]
    %v425 = vld [vmem:[#allocation5 + $0x928] sm:$0xff]
    %v426 = vld [vmem:[#allocation5 + $0x930] sm:$0xff]
    %v427 = vld [vmem:[#allocation5 + $0x938] sm:$0xff]
    %v428 = vld [vmem:[#allocation5 + $0x940] sm:$0xff]
    %v429 = vld [vmem:[#allocation5 + $0x948] sm:$0xff]
    %v430 = vld [vmem:[#allocation5 + $0x950] sm:$0xff]
    %v431 = vld [vmem:[#allocation5 + $0x958] sm:$0xff]
    %v432 = vld [vmem:[#allocation5 + $0x960] sm:$0xff]
    %v433 = vld [vmem:[#allocation5 + $0x968] sm:$0xff]
    %v434 = vld [vmem:[#allocation5 + $0x970] sm:$0xff]
    %v435 = vld [vmem:[#allocation5 + $0x978] sm:$0xff]
    %v436 = vld [vmem:[#allocation5 + $0x980] sm:$0xff]
    %v437 = vld [vmem:[#allocation5 + $0x988] sm:$0xff]
    %v438 = vld [vmem:[#allocation5 + $0x990] sm:$0xff]
    %v439 = vld [vmem:[#allocation5 + $0x998] sm:$0xff]
    %v440 = vld [vmem:[#allocation5 + $0x9a0] sm:$0xff]
    %v441 = vld [vmem:[#allocation5 + $0x9a8] sm:$0xff]
    %v442 = vld [vmem:[#allocation5 + $0x9b0] sm:$0xff]
    %v443 = vld [vmem:[#allocation5 + $0x9b8] sm:$0xff]
    %v444 = vld [vmem:[#allocation5 + $0x9c0] sm:$0xff]
    %v445 = vld [vmem:[#allocation5 + $0x9c8] sm:$0xff]
    %v446 = vld [vmem:[#allocation5 + $0x9d0] sm:$0xff]
    %v447 = vld [vmem:[#allocation5 + $0x9d8] sm:$0xff]
    %v448 = vld [vmem:[#allocation5 + $0x9e0] sm:$0xff]
    %v449 = vld [vmem:[#allocation5 + $0x9e8] sm:$0xff]
    %v450 = vld [vmem:[#allocation5 + $0x9f0] sm:$0xff]
    %v451 = vld [vmem:[#allocation5 + $0x9f8] sm:$0xff]
    %v452 = vld [vmem:[#allocation5 + $0xa00] sm:$0xff]
    %v453 = vld [vmem:[#allocation5 + $0xa08] sm:$0xff]
    %v454 = vld [vmem:[#allocation5 + $0xa10] sm:$0xff]
    %v455 = vld [vmem:[#allocation5 + $0xa18] sm:$0xff]
    %v456 = vld [vmem:[#allocation5 + $0xa20] sm:$0xff]
    %v457 = vld [vmem:[#allocation5 + $0xa28] sm:$0xff]
    %v458 = vld [vmem:[#allocation5 + $0xa30] sm:$0xff]
    %v459 = vld [vmem:[#allocation5 + $0xa38] sm:$0xff]
    %v460 = vld [vmem:[#allocation5 + $0xa40] sm:$0xff]
    %v461 = vld [vmem:[#allocation5 + $0xa48] sm:$0xff]
    %v462 = vld [vmem:[#allocation5 + $0xa50] sm:$0xff]
    %v463 = vld [vmem:[#allocation5 + $0xa58] sm:$0xff]
    %v464 = vld [vmem:[#allocation5 + $0xa60] sm:$0xff]
    %v465 = vld [vmem:[#allocation5 + $0xa68] sm:$0xff]
    %v466 = vld [vmem:[#allocation5 + $0xa70] sm:$0xff]
    %v467 = vld [vmem:[#allocation5 + $0xa78] sm:$0xff]
    %v468 = vld [vmem:[#allocation5 + $0xa80] sm:$0xff]
    %v469 = vld [vmem:[#allocation5 + $0xa88] sm:$0xff]
    %v470 = vld [vmem:[#allocation5 + $0xa90] sm:$0xff]
    %v471 = vld [vmem:[#allocation5 + $0xa98] sm:$0xff]
    %v472 = vld [vmem:[#allocation5 + $0xaa0] sm:$0xff]
    %v473 = vld [vmem:[#allocation5 + $0xaa8] sm:$0xff]
    %v474 = vld [vmem:[#allocation5 + $0xab0] sm:$0xff]
    %v475 = vld [vmem:[#allocation5 + $0xab8] sm:$0xff]
    %v476 = vld [vmem:[#allocation5 + $0xac0] sm:$0xff]
    %v477 = vld [vmem:[#allocation5 + $0xac8] sm:$0xff]
    %v478 = vld [vmem:[#allocation5 + $0xad0] sm:$0xff]
    %v479 = vld [vmem:[#allocation5 + $0xad8] sm:$0xff]
    %v480 = vld [vmem:[#allocation5 + $0xae0] sm:$0xff]
    %v481 = vld [vmem:[#allocation5 + $0xae8] sm:$0xff]
    %v482 = vld [vmem:[#allocation5 + $0xaf0] sm:$0xff]
    %v483 = vld [vmem:[#allocation5 + $0xaf8] sm:$0xff]
    %v484 = vld [vmem:[#allocation5 + $0xb00] sm:$0xff]
    %v485 = vld [vmem:[#allocation5 + $0xb08] sm:$0xff]
    %v486 = vld [vmem:[#allocation5 + $0xb10] sm:$0xff]
    %v487 = vld [vmem:[#allocation5 + $0xb18] sm:$0xff]
    %v488 = vld [vmem:[#allocation5 + $0xb20] sm:$0xff]
    %v489 = vld [vmem:[#allocation5 + $0xb28] sm:$0xff]
    %v490 = vld [vmem:[#allocation5 + $0xb30] sm:$0xff]
    %v491 = vld [vmem:[#allocation5 + $0xb38] sm:$0xff]
    %v492 = vld [vmem:[#allocation5 + $0xb40] sm:$0xff]
    %v493 = vld [vmem:[#allocation5 + $0xb48] sm:$0xff]
    %v494 = vld [vmem:[#allocation5 + $0xb50] sm:$0xff]
    %v495 = vld [vmem:[#allocation5 + $0xb58] sm:$0xff]
    %v496 = vld [vmem:[#allocation5 + $0xb60] sm:$0xff]
    %v497 = vld [vmem:[#allocation5 + $0xb68] sm:$0xff]
    %v498 = vld [vmem:[#allocation5 + $0xb70] sm:$0xff]
    %v499 = vld [vmem:[#allocation5 + $0xb78] sm:$0xff]
    %v500 = vld [vmem:[#allocation5 + $0xb80] sm:$0xff]
    %v501 = vld [vmem:[#allocation5 + $0xb88] sm:$0xff]
    %v502 = vld [vmem:[#allocation5 + $0xb90] sm:$0xff]
    %v503 = vld [vmem:[#allocation5 + $0xb98] sm:$0xff]
    %v504 = vld [vmem:[#allocation5 + $0xba0] sm:$0xff]
    %v505 = vld [vmem:[#allocation5 + $0xba8] sm:$0xff]
    %v506 = vld [vmem:[#allocation5 + $0xbb0] sm:$0xff]
    %v507 = vld [vmem:[#allocation5 + $0xbb8] sm:$0xff]
    %v508 = vld [vmem:[#allocation5 + $0xbc0] sm:$0xff]
    %v509 = vld [vmem:[#allocation5 + $0xbc8] sm:$0xff]
    %v510 = vld [vmem:[#allocation5 + $0xbd0] sm:$0xff]
    %v511 = vld [vmem:[#allocation5 + $0xbd8] sm:$0xff]
    %v512 = vld [vmem:[#allocation5 + $0xbe0] sm:$0xff]
    %v513 = vld [vmem:[#allocation5 + $0xbe8] sm:$0xff]
    %v514 = vld [vmem:[#allocation5 + $0xbf0] sm:$0xff]
    %v515 = vld [vmem:[#allocation5 + $0xbf8] sm:$0xff]
    %v516 = vld [vmem:[#allocation5 + $0xc00] sm:$0xff]
    %v517 = vld [vmem:[#allocation5 + $0xc08] sm:$0xff]
    %v518 = vld [vmem:[#allocation5 + $0xc10] sm:$0xff]
    %v519 = vld [vmem:[#allocation5 + $0xc18] sm:$0xff]
    %v520 = vld [vmem:[#allocation5 + $0xc20] sm:$0xff]
    %v521 = vld [vmem:[#allocation5 + $0xc28] sm:$0xff]
    %v522 = vld [vmem:[#allocation5 + $0xc30] sm:$0xff]
    %v523 = vld [vmem:[#allocation5 + $0xc38] sm:$0xff]
    %v524 = vld [vmem:[#allocation5 + $0xc40] sm:$0xff]
    %v525 = vld [vmem:[#allocation5 + $0xc48] sm:$0xff]
    %v526 = vld [vmem:[#allocation5 + $0xc50] sm:$0xff]
    %v527 = vld [vmem:[#allocation5 + $0xc58] sm:$0xff]
    %v528 = vld [vmem:[#allocation5 + $0xc60] sm:$0xff]
    %v529 = vld [vmem:[#allocation5 + $0xc68] sm:$0xff]
    %v530 = vld [vmem:[#allocation5 + $0xc70] sm:$0xff]
    %v531 = vld [vmem:[#allocation5 + $0xc78] sm:$0xff]
    %v532 = vld [vmem:[#allocation5 + $0xc80] sm:$0xff]
    %v533 = vld [vmem:[#allocation5 + $0xc88] sm:$0xff]
    %v534 = vld [vmem:[#allocation5 + $0xc90] sm:$0xff]
    %v535 = vld [vmem:[#allocation5 + $0xc98] sm:$0xff]
    %v536 = vld [vmem:[#allocation5 + $0xca0] sm:$0xff]
    %v537 = vld [vmem:[#allocation5 + $0xca8] sm:$0xff]
    %v538 = vld [vmem:[#allocation5 + $0xcb0] sm:$0xff]
    %v539 = vld [vmem:[#allocation5 + $0xcb8] sm:$0xff]
    %v540 = vld [vmem:[#allocation5 + $0xcc0] sm:$0xff]
    %v541 = vld [vmem:[#allocation5 + $0xcc8] sm:$0xff]
    %v542 = vld [vmem:[#allocation5 + $0xcd0] sm:$0xff]
    %v543 = vld [vmem:[#allocation5 + $0xcd8] sm:$0xff]
    %v544 = vld [vmem:[#allocation5 + $0xce0] sm:$0xff]
    %v545 = vld [vmem:[#allocation5 + $0xce8] sm:$0xff]
    %v546 = vld [vmem:[#allocation5 + $0xcf0] sm:$0xff]
    %v547 = vld [vmem:[#allocation5 + $0xcf8] sm:$0xff]
    %v548 = vld [vmem:[#allocation5 + $0xd00] sm:$0xff]
    %v549 = vld [vmem:[#allocation5 + $0xd08] sm:$0xff]
    %v550 = vld [vmem:[#allocation5 + $0xd10] sm:$0xff]
    %v551 = vld [vmem:[#allocation5 + $0xd18] sm:$0xff]
    %v552 = vld [vmem:[#allocation5 + $0xd20] sm:$0xff]
    %v553 = vld [vmem:[#allocation5 + $0xd28] sm:$0xff]
    %v554 = vld [vmem:[#allocation5 + $0xd30] sm:$0xff]
    %v555 = vld [vmem:[#allocation5 + $0xd38] sm:$0xff]
    %v556 = vld [vmem:[#allocation5 + $0xd40] sm:$0xff]
    %v557 = vld [vmem:[#allocation5 + $0xd48] sm:$0xff]
    %v558 = vld [vmem:[#allocation5 + $0xd50] sm:$0xff]
    %v559 = vld [vmem:[#allocation5 + $0xd58] sm:$0xff]
    %v560 = vld [vmem:[#allocation5 + $0xd60] sm:$0xff]
    %v561 = vld [vmem:[#allocation5 + $0xd68] sm:$0xff]
    %v562 = vld [vmem:[#allocation5 + $0xd70] sm:$0xff]
    %v563 = vld [vmem:[#allocation5 + $0xd78] sm:$0xff]
    %v564 = vld [vmem:[#allocation5 + $0xd80] sm:$0xff]
    %v565 = vld [vmem:[#allocation5 + $0xd88] sm:$0xff]
    %v566 = vld [vmem:[#allocation5 + $0xd90] sm:$0xff]
    %v567 = vld [vmem:[#allocation5 + $0xd98] sm:$0xff]
    %v568 = vld [vmem:[#allocation5 + $0xda0] sm:$0xff]
    %v569 = vld [vmem:[#allocation5 + $0xda8] sm:$0xff]
    %v570 = vld [vmem:[#allocation5 + $0xdb0] sm:$0xff]
    %v571 = vld [vmem:[#allocation5 + $0xdb8] sm:$0xff]
    %v572 = vld [vmem:[#allocation5 + $0xdc0] sm:$0xff]
    %v573 = vld [vmem:[#allocation5 + $0xdc8] sm:$0xff]
    %v574 = vld [vmem:[#allocation5 + $0xdd0] sm:$0xff]
    %v575 = vld [vmem:[#allocation5 + $0xdd8] sm:$0xff]
    %v576 = vld [vmem:[#allocation5 + $0xde0] sm:$0xff]
    %v577 = vld [vmem:[#allocation5 + $0xde8] sm:$0xff]
    %v578 = vld [vmem:[#allocation5 + $0xdf0] sm:$0xff]
    %v579 = vld [vmem:[#allocation5 + $0xdf8] sm:$0xff]
    %v580 = vld [vmem:[#allocation5 + $0xe00] sm:$0xff]
    %v581 = vld [vmem:[#allocation5 + $0xe08] sm:$0xff]
    %v582 = vld [vmem:[#allocation5 + $0xe10] sm:$0xff]
    %v583 = vld [vmem:[#allocation5 + $0xe18] sm:$0xff]
    %v584 = vld [vmem:[#allocation5 + $0xe20] sm:$0xff]
    %v585 = vld [vmem:[#allocation5 + $0xe28] sm:$0xff]
    %v586 = vld [vmem:[#allocation5 + $0xe30] sm:$0xff]
    %v587 = vld [vmem:[#allocation5 + $0xe38] sm:$0xff]
    %v588 = vld [vmem:[#allocation5 + $0xe40] sm:$0xff]
    %v589 = vld [vmem:[#allocation5 + $0xe48] sm:$0xff]
    %v590 = vld [vmem:[#allocation5 + $0xe50] sm:$0xff]
    %v591 = vld [vmem:[#allocation5 + $0xe58] sm:$0xff]
    %v592 = vld [vmem:[#allocation5 + $0xe60] sm:$0xff]
    %v593 = vld [vmem:[#allocation5 + $0xe68] sm:$0xff]
    %v594 = vld [vmem:[#allocation5 + $0xe70] sm:$0xff]
    %v595 = vld [vmem:[#allocation5 + $0xe78] sm:$0xff]
    %v596 = vld [vmem:[#allocation5 + $0xe80] sm:$0xff]
    %v597 = vld [vmem:[#allocation5 + $0xe88] sm:$0xff]
    %v598 = vld [vmem:[#allocation5 + $0xe90] sm:$0xff]
    %v599 = vld [vmem:[#allocation5 + $0xe98] sm:$0xff]
    %v600 = vld [vmem:[#allocation5 + $0xea0] sm:$0xff]
    %v601 = vld [vmem:[#allocation5 + $0xea8] sm:$0xff]
    %v602 = vld [vmem:[#allocation5 + $0xeb0] sm:$0xff]
    %v603 = vld [vmem:[#allocation5 + $0xeb8] sm:$0xff]
    %v604 = vld [vmem:[#allocation5 + $0xec0] sm:$0xff]
    %v605 = vld [vmem:[#allocation5 + $0xec8] sm:$0xff]
    %v606 = vld [vmem:[#allocation5 + $0xed0] sm:$0xff]
    %v607 = vld [vmem:[#allocation5 + $0xed8] sm:$0xff]
    %v608 = vld [vmem:[#allocation5 + $0xee0] sm:$0xff]
    %v609 = vld [vmem:[#allocation5 + $0xee8] sm:$0xff]
    %v610 = vld [vmem:[#allocation5 + $0xef0] sm:$0xff]
    %v611 = vld [vmem:[#allocation5 + $0xef8] sm:$0xff]
    %v612 = vld [vmem:[#allocation5 + $0xf00] sm:$0xff]
    %v613 = vld [vmem:[#allocation5 + $0xf08] sm:$0xff]
    %v614 = vld [vmem:[#allocation5 + $0xf10] sm:$0xff]
    %v615 = vld [vmem:[#allocation5 + $0xf18] sm:$0xff]
    %v616 = vld [vmem:[#allocation5 + $0xf20] sm:$0xff]
    %v617 = vld [vmem:[#allocation5 + $0xf28] sm:$0xff]
    %v618 = vld [vmem:[#allocation5 + $0xf30] sm:$0xff]
    %v619 = vld [vmem:[#allocation5 + $0xf38] sm:$0xff]
    %v620 = vld [vmem:[#allocation5 + $0xf40] sm:$0xff]
    %v621 = vld [vmem:[#allocation5 + $0xf48] sm:$0xff]
    %v622 = vld [vmem:[#allocation5 + $0xf50] sm:$0xff]
    %v623 = vld [vmem:[#allocation5 + $0xf58] sm:$0xff]
    %v624 = vld [vmem:[#allocation5 + $0xf60] sm:$0xff]
    %v625 = vld [vmem:[#allocation5 + $0xf68] sm:$0xff]
    %v626 = vld [vmem:[#allocation5 + $0xf70] sm:$0xff]
    %v627 = vld [vmem:[#allocation5 + $0xf78] sm:$0xff]
    %v628 = vld [vmem:[#allocation5 + $0xf80] sm:$0xff]
    %v629 = vld [vmem:[#allocation5 + $0xf88] sm:$0xff]
    %v630 = vld [vmem:[#allocation5 + $0xf90] sm:$0xff]
    %v631 = vld [vmem:[#allocation5 + $0xf98] sm:$0xff]
    %v632 = vld [vmem:[#allocation5 + $0xfa0] sm:$0xff]
    %v633 = vld [vmem:[#allocation5 + $0xfa8] sm:$0xff]
    %v634 = vld [vmem:[#allocation5 + $0xfb0] sm:$0xff]
    %v635 = vld [vmem:[#allocation5 + $0xfb8] sm:$0xff]
    %v636 = vld [vmem:[#allocation5 + $0xfc0] sm:$0xff]
    %v637 = vld [vmem:[#allocation5 + $0xfc8] sm:$0xff]
    %v638 = vld [vmem:[#allocation5 + $0xfd0] sm:$0xff]
    %v639 = vld [vmem:[#allocation5 + $0xfd8] sm:$0xff]
    %v640 = vld [vmem:[#allocation5 + $0xfe0] sm:$0xff]
    %v641 = vld [vmem:[#allocation5 + $0xfe8] sm:$0xff]
    %v642 = vld [vmem:[#allocation5 + $0xff0] sm:$0xff]
    %v643 = vld [vmem:[#allocation5 + $0xff8] sm:$0xff]
    %v644 = vld [vmem:[#allocation5 + $0x1000] sm:$0xff]
    %v645 = vld [vmem:[#allocation5 + $0x1008] sm:$0xff]
    %v646 = vld [vmem:[#allocation5 + $0x1010] sm:$0xff]
    %v647 = vld [vmem:[#allocation5 + $0x1018] sm:$0xff]
    %v648 = vld [vmem:[#allocation5 + $0x1020] sm:$0xff]
    %v649 = vld [vmem:[#allocation5 + $0x1028] sm:$0xff]
    %v650 = vld [vmem:[#allocation5 + $0x1030] sm:$0xff]
    %v651 = vld [vmem:[#allocation5 + $0x1038] sm:$0xff]
    %v652 = vld [vmem:[#allocation5 + $0x1040] sm:$0xff]
    %v653 = vld [vmem:[#allocation5 + $0x1048] sm:$0xff]
    %v654 = vld [vmem:[#allocation5 + $0x1050] sm:$0xff]
    %v655 = vld [vmem:[#allocation5 + $0x1058] sm:$0xff]
    %v656 = vld [vmem:[#allocation5 + $0x1060] sm:$0xff]
    %v657 = vld [vmem:[#allocation5 + $0x1068] sm:$0xff]
    %v658 = vld [vmem:[#allocation5 + $0x1070] sm:$0xff]
    %v659 = vld [vmem:[#allocation5 + $0x1078] sm:$0xff]
    %v660 = vld [vmem:[#allocation5 + $0x1080] sm:$0xff]
    %v661 = vld [vmem:[#allocation5 + $0x1088] sm:$0xff]
    %v662 = vld [vmem:[#allocation5 + $0x1090] sm:$0xff]
    %v663 = vld [vmem:[#allocation5 + $0x1098] sm:$0xff]
    %v664 = vld [vmem:[#allocation5 + $0x10a0] sm:$0xff]
    %v665 = vld [vmem:[#allocation5 + $0x10a8] sm:$0xff]
    %v666 = vld [vmem:[#allocation5 + $0x10b0] sm:$0xff]
    %v667 = vld [vmem:[#allocation5 + $0x10b8] sm:$0xff]
    %v668 = vld [vmem:[#allocation5 + $0x10c0] sm:$0xff]
    %v669 = vld [vmem:[#allocation5 + $0x10c8] sm:$0xff]
    %v670 = vld [vmem:[#allocation5 + $0x10d0] sm:$0xff]
    %v671 = vld [vmem:[#allocation5 + $0x10d8] sm:$0xff]
    %v672 = vld [vmem:[#allocation5 + $0x10e0] sm:$0xff]
    %v673 = vld [vmem:[#allocation5 + $0x10e8] sm:$0xff]
    %v674 = vld [vmem:[#allocation5 + $0x10f0] sm:$0xff]
    %v675 = vld [vmem:[#allocation5 + $0x10f8] sm:$0xff]
    %v676 = vld [vmem:[#allocation5 + $0x1100] sm:$0xff]
    %v677 = vld [vmem:[#allocation5 + $0x1108] sm:$0xff]
    %v678 = vld [vmem:[#allocation5 + $0x1110] sm:$0xff]
    %v679 = vld [vmem:[#allocation5 + $0x1118] sm:$0xff]
    %v680 = vld [vmem:[#allocation5 + $0x1120] sm:$0xff]
    %v681 = vld [vmem:[#allocation5 + $0x1128] sm:$0xff]
    %v682 = vld [vmem:[#allocation5 + $0x1130] sm:$0xff]
    %v683 = vld [vmem:[#allocation5 + $0x1138] sm:$0xff]
    %v684 = vld [vmem:[#allocation5 + $0x1140] sm:$0xff]
    %v685 = vld [vmem:[#allocation5 + $0x1148] sm:$0xff]
    %v686 = vld [vmem:[#allocation5 + $0x1150] sm:$0xff]
    %v687 = vld [vmem:[#allocation5 + $0x1158] sm:$0xff]
    %v688 = vld [vmem:[#allocation5 + $0x1160] sm:$0xff]
    %v689 = vld [vmem:[#allocation5 + $0x1168] sm:$0xff]
    %v690 = vld [vmem:[#allocation5 + $0x1170] sm:$0xff]
    %v691 = vld [vmem:[#allocation5 + $0x1178] sm:$0xff]
    %v692 = vld [vmem:[#allocation7] sm:$0xff]
    %v693 = vld [vmem:[#allocation7 + $0x8] sm:$0x3]
    %v696 = vperm.slane %v692, 0
    %v697 = vperm.slane %v692, 1
    %v698 = vperm.slane %v692, 2
    %v699 = vperm.slane %v692, 3
    %v700 = vperm.slane %v692, 4
    %v701 = vperm.slane %v692, 5
    %v702 = vperm.slane %v692, 6
    %v703 = vperm.slane %v692, 7
    %v704 = vperm.slane %v693, 0
    %v705 = vperm.slane %v693, 1
    %v720 = vunpack.c.l.b16 %v128
    %v721 = vunpack.c.h.b16 %v128
    %v722 = vunpack.c.l.b16 %v129
    %v723 = vunpack.c.h.b16 %v129
    %v724 = vunpack.c.l.b16 %v130
    %v725 = vunpack.c.h.b16 %v130
    %v726 = vunpack.c.l.b16 %v131
    %v727 = vpack.c.b16 %v720, %v720
    %v728 = vpack.c.b16 %v721, %v721
    %v729 = vpack.c.b16 %v722, %v722
    %v730 = vpack.c.b16 %v723, %v723
    %v731 = vpack.c.b16 %v724, %v724
    %v732 = vpack.c.b16 %v725, %v725
    %v733 = vpack.c.b16 %v726, %v726
    %v1301 = vunpack.c.l.b16 %v132
    %v1302 = vunpack.c.h.b16 %v132
    %v1303 = vunpack.c.l.b16 %v133
    %v1304 = vunpack.c.h.b16 %v133
    %v1305 = vunpack.c.l.b16 %v134
    %v1306 = vunpack.c.h.b16 %v134
    %v1307 = vunpack.c.l.b16 %v135
    %v1308 = vunpack.c.h.b16 %v135
    %v1309 = vunpack.c.l.b16 %v136
    %v1310 = vunpack.c.h.b16 %v136
    %v1311 = vunpack.c.l.b16 %v137
    %v1312 = vunpack.c.h.b16 %v137
    %v1313 = vunpack.c.l.b16 %v138
    %v1314 = vunpack.c.h.b16 %v138
    %v1315 = vunpack.c.l.b16 %v139
    %v1316 = vunpack.c.h.b16 %v139
    %v1317 = vunpack.c.l.b16 %v140
    %v1318 = vunpack.c.h.b16 %v140
    %v1319 = vunpack.c.l.b16 %v141
    %v1320 = vunpack.c.h.b16 %v141
    %v1321 = vunpack.c.l.b16 %v142
    %v1322 = vunpack.c.h.b16 %v142
    %v1323 = vunpack.c.l.b16 %v143
    %v1324 = vunpack.c.h.b16 %v143
    %v1325 = vunpack.c.l.b16 %v144
    %v1326 = vunpack.c.h.b16 %v144
    %v1327 = vunpack.c.l.b16 %v145
    %v1328 = vunpack.c.h.b16 %v145
    %v1329 = vunpack.c.l.b16 %v146
    %v1330 = vunpack.c.h.b16 %v146
    %v1331 = vunpack.c.l.b16 %v147
    %v1332 = vunpack.c.h.b16 %v147
    %v1333 = vunpack.c.l.b16 %v148
    %v1334 = vunpack.c.h.b16 %v148
    %v1335 = vunpack.c.l.b16 %v149
    %v1336 = vunpack.c.h.b16 %v149
    %v1337 = vunpack.c.l.b16 %v150
    %v1338 = vunpack.c.h.b16 %v150
    %v1339 = vunpack.c.l.b16 %v151
    %v1340 = vunpack.c.h.b16 %v151
    %v1341 = vunpack.c.l.b16 %v152
    %v1342 = vunpack.c.h.b16 %v152
    %v1343 = vunpack.c.l.b16 %v153
    %v1344 = vunpack.c.h.b16 %v153
    %v1345 = vunpack.c.l.b16 %v154
    %v1346 = vunpack.c.h.b16 %v154
    %v1347 = vunpack.c.l.b16 %v155
    %v1348 = vunpack.c.h.b16 %v155
    %v1349 = vunpack.c.l.b16 %v156
    %v1350 = vunpack.c.h.b16 %v156
    %v1351 = vunpack.c.l.b16 %v157
    %v1352 = vunpack.c.h.b16 %v157
    %v1353 = vunpack.c.l.b16 %v158
    %v1354 = vunpack.c.h.b16 %v158
    %v1355 = vunpack.c.l.b16 %v159
    %v1356 = vunpack.c.h.b16 %v159
    %v1357 = vunpack.c.l.b16 %v160
    %v1358 = vunpack.c.h.b16 %v160
    %v1359 = vunpack.c.l.b16 %v161
    %v1360 = vunpack.c.h.b16 %v161
    %v1361 = vunpack.c.l.b16 %v162
    %v1362 = vunpack.c.h.b16 %v162
    %v1363 = vunpack.c.l.b16 %v163
    %v1364 = vunpack.c.h.b16 %v163
    %v1365 = vunpack.c.l.b16 %v164
    %v1366 = vunpack.c.h.b16 %v164
    %v1367 = vunpack.c.l.b16 %v165
    %v1368 = vunpack.c.h.b16 %v165
    %v1369 = vunpack.c.l.b16 %v166
    %v1370 = vunpack.c.h.b16 %v166
    %v1371 = vunpack.c.l.b16 %v167
    %v1372 = vunpack.c.h.b16 %v167
    %v1373 = vunpack.c.l.b16 %v168
    %v1374 = vunpack.c.h.b16 %v168
    %v1375 = vunpack.c.l.b16 %v169
    %v1376 = vunpack.c.h.b16 %v169
    %v1377 = vunpack.c.l.b16 %v170
    %v1378 = vunpack.c.h.b16 %v170
    %v1379 = vunpack.c.l.b16 %v171
    %v1380 = vunpack.c.h.b16 %v171
    %v1381 = vunpack.c.l.b16 %v172
    %v1382 = vunpack.c.h.b16 %v172
    %v1383 = vunpack.c.l.b16 %v173
    %v1384 = vunpack.c.h.b16 %v173
    %v1385 = vunpack.c.l.b16 %v174
    %v1386 = vunpack.c.h.b16 %v174
    %v1387 = vunpack.c.l.b16 %v175
    %v1388 = vunpack.c.h.b16 %v175
    %v1389 = vunpack.c.l.b16 %v176
    %v1390 = vunpack.c.h.b16 %v176
    %v1391 = vunpack.c.l.b16 %v177
    %v1392 = vunpack.c.h.b16 %v177
    %v1393 = vunpack.c.l.b16 %v178
    %v1394 = vunpack.c.h.b16 %v178
    %v1395 = vunpack.c.l.b16 %v179
    %v1396 = vunpack.c.h.b16 %v179
    %v1397 = vunpack.c.l.b16 %v180
    %v1398 = vunpack.c.h.b16 %v180
    %v1399 = vunpack.c.l.b16 %v181
    %v1400 = vunpack.c.h.b16 %v181
    %v1401 = vunpack.c.l.b16 %v182
    %v1402 = vunpack.c.h.b16 %v182
    %v1403 = vunpack.c.l.b16 %v183
    %v1404 = vunpack.c.h.b16 %v183
    %v1405 = vunpack.c.l.b16 %v184
    %v1406 = vunpack.c.h.b16 %v184
    %v1407 = vunpack.c.l.b16 %v185
    %v1408 = vunpack.c.h.b16 %v185
    %v1409 = vunpack.c.l.b16 %v186
    %v1410 = vunpack.c.h.b16 %v186
    %v1411 = vunpack.c.l.b16 %v187
    %v1412 = vunpack.c.h.b16 %v187
    %v1413 = vunpack.c.l.b16 %v188
    %v1414 = vunpack.c.h.b16 %v188
    %v1415 = vunpack.c.l.b16 %v189
    %v1416 = vunpack.c.h.b16 %v189
    %v1417 = vunpack.c.l.b16 %v190
    %v1418 = vunpack.c.h.b16 %v190
    %v1419 = vunpack.c.l.b16 %v191
    %v1420 = vunpack.c.h.b16 %v191
    %v1421 = vunpack.c.l.b16 %v192
    %v1422 = vunpack.c.h.b16 %v192
    %v1423 = vunpack.c.l.b16 %v193
    %v1424 = vunpack.c.h.b16 %v193
    %v1425 = vunpack.c.l.b16 %v194
    %v1426 = vunpack.c.h.b16 %v194
    %v1427 = vunpack.c.l.b16 %v195
    %v1428 = vunpack.c.h.b16 %v195
    %v1429 = vunpack.c.l.b16 %v196
    %v1430 = vunpack.c.h.b16 %v196
    %v1431 = vunpack.c.l.b16 %v197
    %v1432 = vunpack.c.h.b16 %v197
    %v1433 = vunpack.c.l.b16 %v198
    %v1434 = vunpack.c.h.b16 %v198
    %v1435 = vunpack.c.l.b16 %v199
    %v1436 = vunpack.c.h.b16 %v199
    %v1437 = vunpack.c.l.b16 %v200
    %v1438 = vunpack.c.h.b16 %v200
    %v1439 = vunpack.c.l.b16 %v201
    %v1440 = vunpack.c.h.b16 %v201
    %v1441 = vunpack.c.l.b16 %v202
    %v1442 = vunpack.c.h.b16 %v202
    %v1443 = vunpack.c.l.b16 %v203
    %v1444 = vunpack.c.h.b16 %v203
    %v1445 = vunpack.c.l.b16 %v204
    %v1446 = vunpack.c.h.b16 %v204
    %v1447 = vunpack.c.l.b16 %v205
    %v1448 = vunpack.c.h.b16 %v205
    %v1449 = vunpack.c.l.b16 %v206
    %v1450 = vunpack.c.h.b16 %v206
    %v1451 = vunpack.c.l.b16 %v207
    %v1452 = vunpack.c.h.b16 %v207
    %v1453 = vunpack.c.l.b16 %v208
    %v1454 = vunpack.c.h.b16 %v208
    %v1455 = vunpack.c.l.b16 %v209
    %v1456 = vunpack.c.h.b16 %v209
    %v1457 = vunpack.c.l.b16 %v210
    %v1458 = vunpack.c.h.b16 %v210
    %v1459 = vunpack.c.l.b16 %v211
    %v1460 = vunpack.c.h.b16 %v211
    %v1461 = vunpack.c.l.b16 %v212
    %v1462 = vunpack.c.h.b16 %v212
    %v1463 = vunpack.c.l.b16 %v213
    %v1464 = vunpack.c.h.b16 %v213
    %v1465 = vunpack.c.l.b16 %v214
    %v1466 = vunpack.c.h.b16 %v214
    %v1467 = vunpack.c.l.b16 %v215
    %v1468 = vunpack.c.h.b16 %v215
    %v1469 = vunpack.c.l.b16 %v216
    %v1470 = vunpack.c.h.b16 %v216
    %v1471 = vunpack.c.l.b16 %v217
    %v1472 = vunpack.c.h.b16 %v217
    %v1473 = vunpack.c.l.b16 %v218
    %v1474 = vunpack.c.h.b16 %v218
    %v1475 = vunpack.c.l.b16 %v219
    %v1476 = vunpack.c.h.b16 %v219
    %v1477 = vunpack.c.l.b16 %v220
    %v1478 = vunpack.c.h.b16 %v220
    %v1479 = vunpack.c.l.b16 %v221
    %v1480 = vunpack.c.h.b16 %v221
    %v1481 = vunpack.c.l.b16 %v222
    %v1482 = vunpack.c.h.b16 %v222
    %v1483 = vunpack.c.l.b16 %v223
    %v1484 = vunpack.c.h.b16 %v223
    %v1485 = vunpack.c.l.b16 %v224
    %v1486 = vunpack.c.h.b16 %v224
    %v1487 = vunpack.c.l.b16 %v225
    %v1488 = vunpack.c.h.b16 %v225
    %v1489 = vunpack.c.l.b16 %v226
    %v1490 = vunpack.c.h.b16 %v226
    %v1491 = vunpack.c.l.b16 %v227
    %v1492 = vunpack.c.h.b16 %v227
    %v1493 = vunpack.c.l.b16 %v228
    %v1494 = vunpack.c.h.b16 %v228
    %v1495 = vunpack.c.l.b16 %v229
    %v1496 = vunpack.c.h.b16 %v229
    %v1497 = vunpack.c.l.b16 %v230
    %v1498 = vunpack.c.h.b16 %v230
    %v1499 = vunpack.c.l.b16 %v231
    %v1500 = vunpack.c.h.b16 %v231
    %v1501 = vunpack.c.l.b16 %v232
    %v1502 = vunpack.c.h.b16 %v232
    %v1503 = vunpack.c.l.b16 %v233
    %v1504 = vunpack.c.h.b16 %v233
    %v1505 = vunpack.c.l.b16 %v234
    %v1506 = vunpack.c.h.b16 %v234
    %v1507 = vunpack.c.l.b16 %v235
    %v1508 = vunpack.c.h.b16 %v235
    %v1509 = vunpack.c.l.b16 %v236
    %v1510 = vunpack.c.h.b16 %v236
    %v1511 = vunpack.c.l.b16 %v237
    %v1512 = vunpack.c.h.b16 %v237
    %v1513 = vunpack.c.l.b16 %v238
    %v1514 = vunpack.c.h.b16 %v238
    %v1515 = vunpack.c.l.b16 %v239
    %v1516 = vunpack.c.h.b16 %v239
    %v1517 = vunpack.c.l.b16 %v240
    %v1518 = vunpack.c.h.b16 %v240
    %v1519 = vunpack.c.l.b16 %v241
    %v1520 = vunpack.c.h.b16 %v241
    %v1521 = vunpack.c.l.b16 %v242
    %v1522 = vunpack.c.h.b16 %v242
    %v1523 = vunpack.c.l.b16 %v243
    %v1524 = vunpack.c.h.b16 %v243
    %v1525 = vunpack.c.l.b16 %v244
    %v1526 = vunpack.c.h.b16 %v244
    %v1527 = vunpack.c.l.b16 %v245
    %v1528 = vunpack.c.h.b16 %v245
    %v1529 = vunpack.c.l.b16 %v246
    %v1530 = vunpack.c.h.b16 %v246
    %v1531 = vunpack.c.l.b16 %v247
    %v1532 = vunpack.c.h.b16 %v247
    %v1533 = vunpack.c.l.b16 %v248
    %v1534 = vunpack.c.h.b16 %v248
    %v1535 = vunpack.c.l.b16 %v249
    %v1536 = vunpack.c.h.b16 %v249
    %v1537 = vunpack.c.l.b16 %v250
    %v1538 = vunpack.c.h.b16 %v250
    %v1539 = vunpack.c.l.b16 %v251
    %v1540 = vunpack.c.h.b16 %v251
    %v1541 = vunpack.c.l.b16 %v252
    %v1542 = vunpack.c.h.b16 %v252
    %v1543 = vunpack.c.l.b16 %v253
    %v1544 = vunpack.c.h.b16 %v253
    %v1545 = vunpack.c.l.b16 %v254
    %v1546 = vunpack.c.h.b16 %v254
    %v1547 = vunpack.c.l.b16 %v255
    %v1548 = vunpack.c.h.b16 %v255
    %v1549 = vunpack.c.l.b16 %v256
    %v1550 = vunpack.c.h.b16 %v256
    %v1551 = vunpack.c.l.b16 %v257
    %v1552 = vunpack.c.h.b16 %v257
    %v1553 = vunpack.c.l.b16 %v258
    %v1554 = vunpack.c.h.b16 %v258
    %v1555 = vunpack.c.l.b16 %v259
    %v1556 = vunpack.c.h.b16 %v259
    %v1557 = vunpack.c.l.b16 %v260
    %v1558 = vunpack.c.h.b16 %v260
    %v1559 = vunpack.c.l.b16 %v261
    %v1560 = vunpack.c.h.b16 %v261
    %v1561 = vunpack.c.l.b16 %v262
    %v1562 = vunpack.c.h.b16 %v262
    %v1563 = vunpack.c.l.b16 %v263
    %v1564 = vunpack.c.h.b16 %v263
    %v1565 = vunpack.c.l.b16 %v264
    %v1566 = vunpack.c.h.b16 %v264
    %v1567 = vunpack.c.l.b16 %v265
    %v1568 = vunpack.c.h.b16 %v265
    %v1569 = vunpack.c.l.b16 %v266
    %v1570 = vunpack.c.h.b16 %v266
    %v1571 = vunpack.c.l.b16 %v267
    %v1572 = vunpack.c.h.b16 %v267
    %v1573 = vunpack.c.l.b16 %v268
    %v1574 = vunpack.c.h.b16 %v268
    %v1575 = vunpack.c.l.b16 %v269
    %v1576 = vunpack.c.h.b16 %v269
    %v1577 = vunpack.c.l.b16 %v270
    %v1578 = vunpack.c.h.b16 %v270
    %v1579 = vunpack.c.l.b16 %v271
    %v1580 = vunpack.c.h.b16 %v271
    %v1581 = vunpack.c.l.b16 %v272
    %v1582 = vunpack.c.h.b16 %v272
    %v1583 = vunpack.c.l.b16 %v273
    %v1584 = vunpack.c.h.b16 %v273
    %v1585 = vunpack.c.l.b16 %v274
    %v1586 = vunpack.c.h.b16 %v274
    %v1587 = vunpack.c.l.b16 %v275
    %v1588 = vunpack.c.h.b16 %v275
    %v1589 = vunpack.c.l.b16 %v276
    %v1590 = vunpack.c.h.b16 %v276
    %v1591 = vunpack.c.l.b16 %v277
    %v1592 = vunpack.c.h.b16 %v277
    %v1593 = vunpack.c.l.b16 %v278
    %v1594 = vunpack.c.h.b16 %v278
    %v1595 = vunpack.c.l.b16 %v279
    %v1596 = vunpack.c.h.b16 %v279
    %v1597 = vunpack.c.l.b16 %v280
    %v1598 = vunpack.c.h.b16 %v280
    %v1599 = vunpack.c.l.b16 %v281
    %v1600 = vunpack.c.h.b16 %v281
    %v1601 = vunpack.c.l.b16 %v282
    %v1602 = vunpack.c.h.b16 %v282
    %v1603 = vunpack.c.l.b16 %v283
    %v1604 = vunpack.c.h.b16 %v283
    %v1605 = vunpack.c.l.b16 %v284
    %v1606 = vunpack.c.h.b16 %v284
    %v1607 = vunpack.c.l.b16 %v285
    %v1608 = vunpack.c.h.b16 %v285
    %v1609 = vunpack.c.l.b16 %v286
    %v1610 = vunpack.c.h.b16 %v286
    %v1611 = vunpack.c.l.b16 %v287
    %v1612 = vunpack.c.h.b16 %v287
    %v1613 = vunpack.c.l.b16 %v288
    %v1614 = vunpack.c.h.b16 %v288
    %v1615 = vunpack.c.l.b16 %v289
    %v1616 = vunpack.c.h.b16 %v289
    %v1617 = vunpack.c.l.b16 %v290
    %v1618 = vunpack.c.h.b16 %v290
    %v1619 = vunpack.c.l.b16 %v291
    %v1620 = vunpack.c.h.b16 %v291
    %v1621 = vunpack.c.l.b16 %v292
    %v1622 = vunpack.c.h.b16 %v292
    %v1623 = vunpack.c.l.b16 %v293
    %v1624 = vunpack.c.h.b16 %v293
    %v1625 = vunpack.c.l.b16 %v294
    %v1626 = vunpack.c.h.b16 %v294
    %v1627 = vunpack.c.l.b16 %v295
    %v1628 = vunpack.c.h.b16 %v295
    %v1629 = vunpack.c.l.b16 %v296
    %v1630 = vunpack.c.h.b16 %v296
    %v1631 = vunpack.c.l.b16 %v297
    %v1632 = vunpack.c.h.b16 %v297
    %v1633 = vunpack.c.l.b16 %v298
    %v1634 = vunpack.c.h.b16 %v298
    %v1635 = vunpack.c.l.b16 %v299
    %v1636 = vunpack.c.h.b16 %v299
    %v1637 = vunpack.c.l.b16 %v300
    %v1638 = vunpack.c.h.b16 %v300
    %v1639 = vunpack.c.l.b16 %v301
    %v1640 = vunpack.c.h.b16 %v301
    %v1641 = vunpack.c.l.b16 %v302
    %v1642 = vunpack.c.h.b16 %v302
    %v1643 = vunpack.c.l.b16 %v303
    %v1644 = vunpack.c.h.b16 %v303
    %v1645 = vunpack.c.l.b16 %v304
    %v1646 = vunpack.c.h.b16 %v304
    %v1647 = vunpack.c.l.b16 %v305
    %v1648 = vunpack.c.h.b16 %v305
    %v1649 = vunpack.c.l.b16 %v306
    %v1650 = vunpack.c.h.b16 %v306
    %v1651 = vunpack.c.l.b16 %v307
    %v1652 = vunpack.c.h.b16 %v307
    %v1653 = vunpack.c.l.b16 %v308
    %v1654 = vunpack.c.h.b16 %v308
    %v1655 = vunpack.c.l.b16 %v309
    %v1656 = vunpack.c.h.b16 %v309
    %v1657 = vunpack.c.l.b16 %v310
    %v1658 = vunpack.c.h.b16 %v310
    %v1659 = vunpack.c.l.b16 %v311
    %v1660 = vunpack.c.h.b16 %v311
    %v1661 = vunpack.c.l.b16 %v312
    %v1662 = vunpack.c.h.b16 %v312
    %v1663 = vunpack.c.l.b16 %v313
    %v1664 = vunpack.c.h.b16 %v313
    %v1665 = vunpack.c.l.b16 %v314
    %v1666 = vunpack.c.h.b16 %v314
    %v1667 = vunpack.c.l.b16 %v315
    %v1668 = vunpack.c.h.b16 %v315
    %v1669 = vunpack.c.l.b16 %v316
    %v1670 = vunpack.c.h.b16 %v316
    %v1671 = vunpack.c.l.b16 %v317
    %v1672 = vunpack.c.h.b16 %v317
    %v1673 = vunpack.c.l.b16 %v318
    %v1674 = vunpack.c.h.b16 %v318
    %v1675 = vunpack.c.l.b16 %v319
    %v1676 = vunpack.c.h.b16 %v319
    %v1677 = vunpack.c.l.b16 %v320
    %v1678 = vunpack.c.h.b16 %v320
    %v1679 = vunpack.c.l.b16 %v321
    %v1680 = vunpack.c.h.b16 %v321
    %v1681 = vunpack.c.l.b16 %v322
    %v1682 = vunpack.c.h.b16 %v322
    %v1683 = vunpack.c.l.b16 %v323
    %v1684 = vunpack.c.h.b16 %v323
    %v1685 = vunpack.c.l.b16 %v324
    %v1686 = vunpack.c.h.b16 %v324
    %v1687 = vunpack.c.l.b16 %v325
    %v1688 = vunpack.c.h.b16 %v325
    %v1689 = vunpack.c.l.b16 %v326
    %v1690 = vunpack.c.h.b16 %v326
    %v1691 = vunpack.c.l.b16 %v327
    %v1692 = vunpack.c.h.b16 %v327
    %v1693 = vunpack.c.l.b16 %v328
    %v1694 = vunpack.c.h.b16 %v328
    %v1695 = vunpack.c.l.b16 %v329
    %v1696 = vunpack.c.h.b16 %v329
    %v1697 = vunpack.c.l.b16 %v330
    %v1698 = vunpack.c.h.b16 %v330
    %v1699 = vunpack.c.l.b16 %v331
    %v1700 = vunpack.c.h.b16 %v331
    %v1701 = vunpack.c.l.b16 %v332
    %v1702 = vunpack.c.h.b16 %v332
    %v1703 = vunpack.c.l.b16 %v333
    %v1704 = vunpack.c.h.b16 %v333
    %v1705 = vunpack.c.l.b16 %v334
    %v1706 = vunpack.c.h.b16 %v334
    %v1707 = vunpack.c.l.b16 %v335
    %v1708 = vunpack.c.h.b16 %v335
    %v1709 = vunpack.c.l.b16 %v336
    %v1710 = vunpack.c.h.b16 %v336
    %v1711 = vunpack.c.l.b16 %v337
    %v1712 = vunpack.c.h.b16 %v337
    %v1713 = vunpack.c.l.b16 %v338
    %v1714 = vunpack.c.h.b16 %v338
    %v1715 = vunpack.c.l.b16 %v339
    %v1716 = vunpack.c.h.b16 %v339
    %v1717 = vunpack.c.l.b16 %v340
    %v1718 = vunpack.c.h.b16 %v340
    %v1719 = vunpack.c.l.b16 %v341
    %v1720 = vunpack.c.h.b16 %v341
    %v1721 = vunpack.c.l.b16 %v342
    %v1722 = vunpack.c.h.b16 %v342
    %v1723 = vunpack.c.l.b16 %v343
    %v1724 = vunpack.c.h.b16 %v343
    %v1725 = vunpack.c.l.b16 %v344
    %v1726 = vunpack.c.h.b16 %v344
    %v1727 = vunpack.c.l.b16 %v345
    %v1728 = vunpack.c.h.b16 %v345
    %v1729 = vunpack.c.l.b16 %v346
    %v1730 = vunpack.c.h.b16 %v346
    %v1731 = vunpack.c.l.b16 %v347
    %v1732 = vunpack.c.h.b16 %v347
    %v1733 = vunpack.c.l.b16 %v348
    %v1734 = vunpack.c.h.b16 %v348
    %v1735 = vunpack.c.l.b16 %v349
    %v1736 = vunpack.c.h.b16 %v349
    %v1737 = vunpack.c.l.b16 %v350
    %v1738 = vunpack.c.h.b16 %v350
    %v1739 = vunpack.c.l.b16 %v351
    %v1740 = vunpack.c.h.b16 %v351
    %v1741 = vunpack.c.l.b16 %v352
    %v1742 = vunpack.c.h.b16 %v352
    %v1743 = vunpack.c.l.b16 %v353
    %v1744 = vunpack.c.h.b16 %v353
    %v1745 = vunpack.c.l.b16 %v354
    %v1746 = vunpack.c.h.b16 %v354
    %v1747 = vunpack.c.l.b16 %v355
    %v1748 = vunpack.c.h.b16 %v355
    %v1749 = vunpack.c.l.b16 %v356
    %v1750 = vunpack.c.h.b16 %v356
    %v1751 = vunpack.c.l.b16 %v357
    %v1752 = vunpack.c.h.b16 %v357
    %v1753 = vunpack.c.l.b16 %v358
    %v1754 = vunpack.c.h.b16 %v358
    %v1755 = vunpack.c.l.b16 %v359
    %v1756 = vunpack.c.h.b16 %v359
    %v1757 = vunpack.c.l.b16 %v360
    %v1758 = vunpack.c.h.b16 %v360
    %v1759 = vunpack.c.l.b16 %v361
    %v1760 = vunpack.c.h.b16 %v361
    %v1761 = vunpack.c.l.b16 %v362
    %v1762 = vunpack.c.h.b16 %v362
    %v1763 = vunpack.c.l.b16 %v363
    %v1764 = vunpack.c.h.b16 %v363
    %v1765 = vunpack.c.l.b16 %v364
    %v1766 = vunpack.c.h.b16 %v364
    %v1767 = vunpack.c.l.b16 %v365
    %v1768 = vunpack.c.h.b16 %v365
    %v1769 = vunpack.c.l.b16 %v366
    %v1770 = vunpack.c.h.b16 %v366
    %v1771 = vunpack.c.l.b16 %v367
    %v1772 = vunpack.c.h.b16 %v367
    %v1773 = vunpack.c.l.b16 %v368
    %v1774 = vunpack.c.h.b16 %v368
    %v1775 = vunpack.c.l.b16 %v369
    %v1776 = vunpack.c.h.b16 %v369
    %v1777 = vunpack.c.l.b16 %v370
    %v1778 = vunpack.c.h.b16 %v370
    %v1779 = vunpack.c.l.b16 %v371
    %v1780 = vunpack.c.h.b16 %v371
    %v1781 = vunpack.c.l.b16 %v372
    %v1782 = vunpack.c.h.b16 %v372
    %v1783 = vunpack.c.l.b16 %v373
    %v1784 = vunpack.c.h.b16 %v373
    %v1785 = vunpack.c.l.b16 %v374
    %v1786 = vunpack.c.h.b16 %v374
    %v1787 = vunpack.c.l.b16 %v375
    %v1788 = vunpack.c.h.b16 %v375
    %v1789 = vunpack.c.l.b16 %v376
    %v1790 = vunpack.c.h.b16 %v376
    %v1791 = vunpack.c.l.b16 %v377
    %v1792 = vunpack.c.h.b16 %v377
    %v1793 = vunpack.c.l.b16 %v378
    %v1794 = vunpack.c.h.b16 %v378
    %v1795 = vunpack.c.l.b16 %v379
    %v1796 = vunpack.c.h.b16 %v379
    %v1797 = vunpack.c.l.b16 %v380
    %v1798 = vunpack.c.h.b16 %v380
    %v1799 = vunpack.c.l.b16 %v381
    %v1800 = vunpack.c.h.b16 %v381
    %v1801 = vunpack.c.l.b16 %v382
    %v1802 = vunpack.c.h.b16 %v382
    %v1803 = vunpack.c.l.b16 %v383
    %v1804 = vunpack.c.h.b16 %v383
    %v1805 = vunpack.c.l.b16 %v384
    %v1806 = vunpack.c.h.b16 %v384
    %v1807 = vunpack.c.l.b16 %v385
    %v1808 = vunpack.c.h.b16 %v385
    %v1809 = vunpack.c.l.b16 %v386
    %v1810 = vunpack.c.h.b16 %v386
    %v1811 = vunpack.c.l.b16 %v387
    %v1812 = vunpack.c.h.b16 %v387
    %v1813 = vunpack.c.l.b16 %v388
    %v1814 = vunpack.c.h.b16 %v388
    %v1815 = vunpack.c.l.b16 %v389
    %v1816 = vunpack.c.h.b16 %v389
    %v1817 = vunpack.c.l.b16 %v390
    %v1818 = vunpack.c.h.b16 %v390
    %v1819 = vunpack.c.l.b16 %v391
    %v1820 = vunpack.c.h.b16 %v391
    %v1821 = vunpack.c.l.b16 %v392
    %v1822 = vunpack.c.h.b16 %v392
    %v1823 = vunpack.c.l.b16 %v393
    %v1824 = vunpack.c.h.b16 %v393
    %v1825 = vunpack.c.l.b16 %v394
    %v1826 = vunpack.c.h.b16 %v394
    %v1827 = vunpack.c.l.b16 %v395
    %v1828 = vunpack.c.h.b16 %v395
    %v1829 = vunpack.c.l.b16 %v396
    %v1830 = vunpack.c.h.b16 %v396
    %v1831 = vunpack.c.l.b16 %v397
    %v1832 = vunpack.c.h.b16 %v397
    %v1833 = vunpack.c.l.b16 %v398
    %v1834 = vunpack.c.h.b16 %v398
    %v1835 = vunpack.c.l.b16 %v399
    %v1836 = vunpack.c.h.b16 %v399
    %v1837 = vunpack.c.l.b16 %v400
    %v1838 = vunpack.c.h.b16 %v400
    %v1839 = vunpack.c.l.b16 %v401
    %v1840 = vunpack.c.h.b16 %v401
    %v1841 = vunpack.c.l.b16 %v402
    %v1842 = vunpack.c.h.b16 %v402
    %v1843 = vunpack.c.l.b16 %v403
    %v1844 = vunpack.c.h.b16 %v403
    %v1845 = vunpack.c.l.b16 %v404
    %v1846 = vunpack.c.h.b16 %v404
    %v1847 = vunpack.c.l.b16 %v405
    %v1848 = vunpack.c.h.b16 %v405
    %v1849 = vunpack.c.l.b16 %v406
    %v1850 = vunpack.c.h.b16 %v406
    %v1851 = vunpack.c.l.b16 %v407
    %v1852 = vunpack.c.h.b16 %v407
    %v1853 = vunpack.c.l.b16 %v408
    %v1854 = vunpack.c.h.b16 %v408
    %v1855 = vunpack.c.l.b16 %v409
    %v1856 = vunpack.c.h.b16 %v409
    %v1857 = vunpack.c.l.b16 %v410
    %v1858 = vunpack.c.h.b16 %v410
    %v1859 = vunpack.c.l.b16 %v411
    %v1860 = vunpack.c.h.b16 %v411
    %v1861 = vunpack.c.l.b16 %v412
    %v1862 = vunpack.c.h.b16 %v412
    %v1863 = vunpack.c.l.b16 %v413
    %v1864 = vunpack.c.h.b16 %v413
    %v1865 = vunpack.c.l.b16 %v414
    %v1866 = vunpack.c.h.b16 %v414
    %v1867 = vunpack.c.l.b16 %v415
    %v1868 = vunpack.c.h.b16 %v415
    %v1869 = vunpack.c.l.b16 %v416
    %v1870 = vunpack.c.h.b16 %v416
    %v1871 = vunpack.c.l.b16 %v417
    %v1872 = vunpack.c.h.b16 %v417
    %v1873 = vunpack.c.l.b16 %v418
    %v1874 = vunpack.c.h.b16 %v418
    %v1875 = vunpack.c.l.b16 %v419
    %v1876 = vunpack.c.h.b16 %v419
    %v1877 = vunpack.c.l.b16 %v420
    %v1878 = vunpack.c.h.b16 %v420
    %v1879 = vunpack.c.l.b16 %v421
    %v1880 = vunpack.c.h.b16 %v421
    %v1881 = vunpack.c.l.b16 %v422
    %v1882 = vunpack.c.h.b16 %v422
    %v1883 = vunpack.c.l.b16 %v423
    %v1884 = vunpack.c.h.b16 %v423
    %v1885 = vunpack.c.l.b16 %v424
    %v1886 = vunpack.c.h.b16 %v424
    %v1887 = vunpack.c.l.b16 %v425
    %v1888 = vunpack.c.h.b16 %v425
    %v1889 = vunpack.c.l.b16 %v426
    %v1890 = vunpack.c.h.b16 %v426
    %v1891 = vunpack.c.l.b16 %v427
    %v1892 = vunpack.c.h.b16 %v427
    %v1893 = vunpack.c.l.b16 %v428
    %v1894 = vunpack.c.h.b16 %v428
    %v1895 = vunpack.c.l.b16 %v429
    %v1896 = vunpack.c.h.b16 %v429
    %v1897 = vunpack.c.l.b16 %v430
    %v1898 = vunpack.c.h.b16 %v430
    %v1899 = vunpack.c.l.b16 %v431
    %v1900 = vunpack.c.h.b16 %v431
    %v1901 = vunpack.c.l.b16 %v432
    %v1902 = vunpack.c.h.b16 %v432
    %v1903 = vunpack.c.l.b16 %v433
    %v1904 = vunpack.c.h.b16 %v433
    %v1905 = vunpack.c.l.b16 %v434
    %v1906 = vunpack.c.h.b16 %v434
    %v1907 = vunpack.c.l.b16 %v435
    %v1908 = vunpack.c.h.b16 %v435
    %v1909 = vunpack.c.l.b16 %v436
    %v1910 = vunpack.c.h.b16 %v436
    %v1911 = vunpack.c.l.b16 %v437
    %v1912 = vunpack.c.h.b16 %v437
    %v1913 = vunpack.c.l.b16 %v438
    %v1914 = vunpack.c.h.b16 %v438
    %v1915 = vunpack.c.l.b16 %v439
    %v1916 = vunpack.c.h.b16 %v439
    %v1917 = vunpack.c.l.b16 %v440
    %v1918 = vunpack.c.h.b16 %v440
    %v1919 = vunpack.c.l.b16 %v441
    %v1920 = vunpack.c.h.b16 %v441
    %v1921 = vunpack.c.l.b16 %v442
    %v1922 = vunpack.c.h.b16 %v442
    %v1923 = vunpack.c.l.b16 %v443
    %v1924 = vunpack.c.h.b16 %v443
    %v1925 = vunpack.c.l.b16 %v444
    %v1926 = vunpack.c.h.b16 %v444
    %v1927 = vunpack.c.l.b16 %v445
    %v1928 = vunpack.c.h.b16 %v445
    %v1929 = vunpack.c.l.b16 %v446
    %v1930 = vunpack.c.h.b16 %v446
    %v1931 = vunpack.c.l.b16 %v447
    %v1932 = vunpack.c.h.b16 %v447
    %v1933 = vunpack.c.l.b16 %v448
    %v1934 = vunpack.c.h.b16 %v448
    %v1935 = vunpack.c.l.b16 %v449
    %v1936 = vunpack.c.h.b16 %v449
    %v1937 = vunpack.c.l.b16 %v450
    %v1938 = vunpack.c.h.b16 %v450
    %v1939 = vunpack.c.l.b16 %v451
    %v1940 = vunpack.c.h.b16 %v451
    %v1941 = vunpack.c.l.b16 %v452
    %v1942 = vunpack.c.h.b16 %v452
    %v1943 = vunpack.c.l.b16 %v453
    %v1944 = vunpack.c.h.b16 %v453
    %v1945 = vunpack.c.l.b16 %v454
    %v1946 = vunpack.c.h.b16 %v454
    %v1947 = vunpack.c.l.b16 %v455
    %v1948 = vunpack.c.h.b16 %v455
    %v1949 = vunpack.c.l.b16 %v456
    %v1950 = vunpack.c.h.b16 %v456
    %v1951 = vunpack.c.l.b16 %v457
    %v1952 = vunpack.c.h.b16 %v457
    %v1953 = vunpack.c.l.b16 %v458
    %v1954 = vunpack.c.h.b16 %v458
    %v1955 = vunpack.c.l.b16 %v459
    %v1956 = vunpack.c.h.b16 %v459
    %v1957 = vunpack.c.l.b16 %v460
    %v1958 = vunpack.c.h.b16 %v460
    %v1959 = vunpack.c.l.b16 %v461
    %v1960 = vunpack.c.h.b16 %v461
    %v1961 = vunpack.c.l.b16 %v462
    %v1962 = vunpack.c.h.b16 %v462
    %v1963 = vunpack.c.l.b16 %v463
    %v1964 = vunpack.c.h.b16 %v463
    %v1965 = vunpack.c.l.b16 %v464
    %v1966 = vunpack.c.h.b16 %v464
    %v1967 = vunpack.c.l.b16 %v465
    %v1968 = vunpack.c.h.b16 %v465
    %v1969 = vunpack.c.l.b16 %v466
    %v1970 = vunpack.c.h.b16 %v466
    %v1971 = vunpack.c.l.b16 %v467
    %v1972 = vunpack.c.h.b16 %v467
    %v1973 = vunpack.c.l.b16 %v468
    %v1974 = vunpack.c.h.b16 %v468
    %v1975 = vunpack.c.l.b16 %v469
    %v1976 = vunpack.c.h.b16 %v469
    %v1977 = vunpack.c.l.b16 %v470
    %v1978 = vunpack.c.h.b16 %v470
    %v1979 = vunpack.c.l.b16 %v471
    %v1980 = vunpack.c.h.b16 %v471
    %v1981 = vunpack.c.l.b16 %v472
    %v1982 = vunpack.c.h.b16 %v472
    %v1983 = vunpack.c.l.b16 %v473
    %v1984 = vunpack.c.h.b16 %v473
    %v1985 = vunpack.c.l.b16 %v474
    %v1986 = vunpack.c.h.b16 %v474
    %v1987 = vunpack.c.l.b16 %v475
    %v1988 = vunpack.c.h.b16 %v475
    %v1989 = vunpack.c.l.b16 %v476
    %v1990 = vunpack.c.h.b16 %v476
    %v1991 = vunpack.c.l.b16 %v477
    %v1992 = vunpack.c.h.b16 %v477
    %v1993 = vunpack.c.l.b16 %v478
    %v1994 = vunpack.c.h.b16 %v478
    %v1995 = vunpack.c.l.b16 %v479
    %v1996 = vunpack.c.h.b16 %v479
    %v1997 = vunpack.c.l.b16 %v480
    %v1998 = vunpack.c.h.b16 %v480
    %v1999 = vunpack.c.l.b16 %v481
    %v2000 = vunpack.c.h.b16 %v481
    %v2001 = vunpack.c.l.b16 %v482
    %v2002 = vunpack.c.h.b16 %v482
    %v2003 = vunpack.c.l.b16 %v483
    %v2004 = vunpack.c.h.b16 %v483
    %v2005 = vunpack.c.l.b16 %v484
    %v2006 = vunpack.c.h.b16 %v484
    %v2007 = vunpack.c.l.b16 %v485
    %v2008 = vunpack.c.h.b16 %v485
    %v2009 = vunpack.c.l.b16 %v486
    %v2010 = vunpack.c.h.b16 %v486
    %v2011 = vunpack.c.l.b16 %v487
    %v2012 = vunpack.c.h.b16 %v487
    %v2013 = vunpack.c.l.b16 %v488
    %v2014 = vunpack.c.h.b16 %v488
    %v2015 = vunpack.c.l.b16 %v489
    %v2016 = vunpack.c.h.b16 %v489
    %v2017 = vunpack.c.l.b16 %v490
    %v2018 = vunpack.c.h.b16 %v490
    %v2019 = vunpack.c.l.b16 %v491
    %v2020 = vunpack.c.h.b16 %v491
    %v2021 = vunpack.c.l.b16 %v492
    %v2022 = vunpack.c.h.b16 %v492
    %v2023 = vunpack.c.l.b16 %v493
    %v2024 = vunpack.c.h.b16 %v493
    %v2025 = vunpack.c.l.b16 %v494
    %v2026 = vunpack.c.h.b16 %v494
    %v2027 = vunpack.c.l.b16 %v495
    %v2028 = vunpack.c.h.b16 %v495
    %v2029 = vunpack.c.l.b16 %v496
    %v2030 = vunpack.c.h.b16 %v496
    %v2031 = vunpack.c.l.b16 %v497
    %v2032 = vunpack.c.h.b16 %v497
    %v2033 = vunpack.c.l.b16 %v498
    %v2034 = vunpack.c.h.b16 %v498
    %v2035 = vunpack.c.l.b16 %v499
    %v2036 = vunpack.c.h.b16 %v499
    %v2037 = vunpack.c.l.b16 %v500
    %v2038 = vunpack.c.h.b16 %v500
    %v2039 = vunpack.c.l.b16 %v501
    %v2040 = vunpack.c.h.b16 %v501
    %v2041 = vunpack.c.l.b16 %v502
    %v2042 = vunpack.c.h.b16 %v502
    %v2043 = vunpack.c.l.b16 %v503
    %v2044 = vunpack.c.h.b16 %v503
    %v2045 = vunpack.c.l.b16 %v504
    %v2046 = vunpack.c.h.b16 %v504
    %v2047 = vunpack.c.l.b16 %v505
    %v2048 = vunpack.c.h.b16 %v505
    %v2049 = vunpack.c.l.b16 %v506
    %v2050 = vunpack.c.h.b16 %v506
    %v2051 = vunpack.c.l.b16 %v507
    %v2052 = vunpack.c.h.b16 %v507
    %v2053 = vunpack.c.l.b16 %v508
    %v2054 = vunpack.c.h.b16 %v508
    %v2055 = vunpack.c.l.b16 %v509
    %v2056 = vunpack.c.h.b16 %v509
    %v2057 = vunpack.c.l.b16 %v510
    %v2058 = vunpack.c.h.b16 %v510
    %v2059 = vunpack.c.l.b16 %v511
    %v2060 = vunpack.c.h.b16 %v511
    %v2061 = vunpack.c.l.b16 %v512
    %v2062 = vunpack.c.h.b16 %v512
    %v2063 = vunpack.c.l.b16 %v513
    %v2064 = vunpack.c.h.b16 %v513
    %v2065 = vunpack.c.l.b16 %v514
    %v2066 = vunpack.c.h.b16 %v514
    %v2067 = vunpack.c.l.b16 %v515
    %v2068 = vunpack.c.h.b16 %v515
    %v2069 = vunpack.c.l.b16 %v516
    %v2070 = vunpack.c.h.b16 %v516
    %v2071 = vunpack.c.l.b16 %v517
    %v2072 = vunpack.c.h.b16 %v517
    %v2073 = vunpack.c.l.b16 %v518
    %v2074 = vunpack.c.h.b16 %v518
    %v2075 = vunpack.c.l.b16 %v519
    %v2076 = vunpack.c.h.b16 %v519
    %v2077 = vunpack.c.l.b16 %v520
    %v2078 = vunpack.c.h.b16 %v520
    %v2079 = vunpack.c.l.b16 %v521
    %v2080 = vunpack.c.h.b16 %v521
    %v2081 = vunpack.c.l.b16 %v522
    %v2082 = vunpack.c.h.b16 %v522
    %v2083 = vunpack.c.l.b16 %v523
    %v2084 = vunpack.c.h.b16 %v523
    %v2085 = vunpack.c.l.b16 %v524
    %v2086 = vunpack.c.h.b16 %v524
    %v2087 = vunpack.c.l.b16 %v525
    %v2088 = vunpack.c.h.b16 %v525
    %v2089 = vunpack.c.l.b16 %v526
    %v2090 = vunpack.c.h.b16 %v526
    %v2091 = vunpack.c.l.b16 %v527
    %v2092 = vunpack.c.h.b16 %v527
    %v2093 = vunpack.c.l.b16 %v528
    %v2094 = vunpack.c.h.b16 %v528
    %v2095 = vunpack.c.l.b16 %v529
    %v2096 = vunpack.c.h.b16 %v529
    %v2097 = vunpack.c.l.b16 %v530
    %v2098 = vunpack.c.h.b16 %v530
    %v2099 = vunpack.c.l.b16 %v531
    %v2100 = vunpack.c.h.b16 %v531
    %v2101 = vunpack.c.l.b16 %v532
    %v2102 = vunpack.c.h.b16 %v532
    %v2103 = vunpack.c.l.b16 %v533
    %v2104 = vunpack.c.h.b16 %v533
    %v2105 = vunpack.c.l.b16 %v534
    %v2106 = vunpack.c.h.b16 %v534
    %v2107 = vunpack.c.l.b16 %v535
    %v2108 = vunpack.c.h.b16 %v535
    %v2109 = vunpack.c.l.b16 %v536
    %v2110 = vunpack.c.h.b16 %v536
    %v2111 = vunpack.c.l.b16 %v537
    %v2112 = vunpack.c.h.b16 %v537
    %v2113 = vunpack.c.l.b16 %v538
    %v2114 = vunpack.c.h.b16 %v538
    %v2115 = vunpack.c.l.b16 %v539
    %v2116 = vunpack.c.h.b16 %v539
    %v2117 = vunpack.c.l.b16 %v540
    %v2118 = vunpack.c.h.b16 %v540
    %v2119 = vunpack.c.l.b16 %v541
    %v2120 = vunpack.c.h.b16 %v541
    %v2121 = vunpack.c.l.b16 %v542
    %v2122 = vunpack.c.h.b16 %v542
    %v2123 = vunpack.c.l.b16 %v543
    %v2124 = vunpack.c.h.b16 %v543
    %v2125 = vunpack.c.l.b16 %v544
    %v2126 = vunpack.c.h.b16 %v544
    %v2127 = vunpack.c.l.b16 %v545
    %v2128 = vunpack.c.h.b16 %v545
    %v2129 = vunpack.c.l.b16 %v546
    %v2130 = vunpack.c.h.b16 %v546
    %v2131 = vunpack.c.l.b16 %v547
    %v2132 = vunpack.c.h.b16 %v547
    %v2133 = vunpack.c.l.b16 %v548
    %v2134 = vunpack.c.h.b16 %v548
    %v2135 = vunpack.c.l.b16 %v549
    %v2136 = vunpack.c.h.b16 %v549
    %v2137 = vunpack.c.l.b16 %v550
    %v2138 = vunpack.c.h.b16 %v550
    %v2139 = vunpack.c.l.b16 %v551
    %v2140 = vunpack.c.h.b16 %v551
    %v2141 = vunpack.c.l.b16 %v552
    %v2142 = vunpack.c.h.b16 %v552
    %v2143 = vunpack.c.l.b16 %v553
    %v2144 = vunpack.c.h.b16 %v553
    %v2145 = vunpack.c.l.b16 %v554
    %v2146 = vunpack.c.h.b16 %v554
    %v2147 = vunpack.c.l.b16 %v555
    %v2148 = vunpack.c.h.b16 %v555
    %v2149 = vunpack.c.l.b16 %v556
    %v2150 = vunpack.c.h.b16 %v556
    %v2151 = vunpack.c.l.b16 %v557
    %v2152 = vunpack.c.h.b16 %v557
    %v2153 = vunpack.c.l.b16 %v558
    %v2154 = vunpack.c.h.b16 %v558
    %v2155 = vunpack.c.l.b16 %v559
    %v2156 = vunpack.c.h.b16 %v559
    %v2157 = vunpack.c.l.b16 %v560
    %v2158 = vunpack.c.h.b16 %v560
    %v2159 = vunpack.c.l.b16 %v561
    %v2160 = vunpack.c.h.b16 %v561
    %v2161 = vunpack.c.l.b16 %v562
    %v2162 = vunpack.c.h.b16 %v562
    %v2163 = vunpack.c.l.b16 %v563
    %v2164 = vunpack.c.h.b16 %v563
    %v2165 = vunpack.c.l.b16 %v564
    %v2166 = vunpack.c.h.b16 %v564
    %v2167 = vunpack.c.l.b16 %v565
    %v2168 = vunpack.c.h.b16 %v565
    %v2169 = vunpack.c.l.b16 %v566
    %v2170 = vunpack.c.h.b16 %v566
    %v2171 = vunpack.c.l.b16 %v567
    %v2172 = vunpack.c.h.b16 %v567
    %v2173 = vunpack.c.l.b16 %v568
    %v2174 = vunpack.c.h.b16 %v568
    %v2175 = vunpack.c.l.b16 %v569
    %v2176 = vunpack.c.h.b16 %v569
    %v2177 = vunpack.c.l.b16 %v570
    %v2178 = vunpack.c.h.b16 %v570
    %v2179 = vunpack.c.l.b16 %v571
    %v2180 = vunpack.c.h.b16 %v571
    %v2181 = vunpack.c.l.b16 %v572
    %v2182 = vunpack.c.h.b16 %v572
    %v2183 = vunpack.c.l.b16 %v573
    %v2184 = vunpack.c.h.b16 %v573
    %v2185 = vunpack.c.l.b16 %v574
    %v2186 = vunpack.c.h.b16 %v574
    %v2187 = vunpack.c.l.b16 %v575
    %v2188 = vunpack.c.h.b16 %v575
    %v2189 = vunpack.c.l.b16 %v576
    %v2190 = vunpack.c.h.b16 %v576
    %v2191 = vunpack.c.l.b16 %v577
    %v2192 = vunpack.c.h.b16 %v577
    %v2193 = vunpack.c.l.b16 %v578
    %v2194 = vunpack.c.h.b16 %v578
    %v2195 = vunpack.c.l.b16 %v579
    %v2196 = vunpack.c.h.b16 %v579
    %v2197 = vunpack.c.l.b16 %v580
    %v2198 = vunpack.c.h.b16 %v580
    %v2199 = vunpack.c.l.b16 %v581
    %v2200 = vunpack.c.h.b16 %v581
    %v2201 = vunpack.c.l.b16 %v582
    %v2202 = vunpack.c.h.b16 %v582
    %v2203 = vunpack.c.l.b16 %v583
    %v2204 = vunpack.c.h.b16 %v583
    %v2205 = vunpack.c.l.b16 %v584
    %v2206 = vunpack.c.h.b16 %v584
    %v2207 = vunpack.c.l.b16 %v585
    %v2208 = vunpack.c.h.b16 %v585
    %v2209 = vunpack.c.l.b16 %v586
    %v2210 = vunpack.c.h.b16 %v586
    %v2211 = vunpack.c.l.b16 %v587
    %v2212 = vunpack.c.h.b16 %v587
    %v2213 = vunpack.c.l.b16 %v588
    %v2214 = vunpack.c.h.b16 %v588
    %v2215 = vunpack.c.l.b16 %v589
    %v2216 = vunpack.c.h.b16 %v589
    %v2217 = vunpack.c.l.b16 %v590
    %v2218 = vunpack.c.h.b16 %v590
    %v2219 = vunpack.c.l.b16 %v591
    %v2220 = vunpack.c.h.b16 %v591
    %v2221 = vunpack.c.l.b16 %v592
    %v2222 = vunpack.c.h.b16 %v592
    %v2223 = vunpack.c.l.b16 %v593
    %v2224 = vunpack.c.h.b16 %v593
    %v2225 = vunpack.c.l.b16 %v594
    %v2226 = vunpack.c.h.b16 %v594
    %v2227 = vunpack.c.l.b16 %v595
    %v2228 = vunpack.c.h.b16 %v595
    %v2229 = vunpack.c.l.b16 %v596
    %v2230 = vunpack.c.h.b16 %v596
    %v2231 = vunpack.c.l.b16 %v597
    %v2232 = vunpack.c.h.b16 %v597
    %v2233 = vunpack.c.l.b16 %v598
    %v2234 = vunpack.c.h.b16 %v598
    %v2235 = vunpack.c.l.b16 %v599
    %v2236 = vunpack.c.h.b16 %v599
    %v2237 = vunpack.c.l.b16 %v600
    %v2238 = vunpack.c.h.b16 %v600
    %v2239 = vunpack.c.l.b16 %v601
    %v2240 = vunpack.c.h.b16 %v601
    %v2241 = vunpack.c.l.b16 %v602
    %v2242 = vunpack.c.h.b16 %v602
    %v2243 = vunpack.c.l.b16 %v603
    %v2244 = vunpack.c.h.b16 %v603
    %v2245 = vunpack.c.l.b16 %v604
    %v2246 = vunpack.c.h.b16 %v604
    %v2247 = vunpack.c.l.b16 %v605
    %v2248 = vunpack.c.h.b16 %v605
    %v2249 = vunpack.c.l.b16 %v606
    %v2250 = vunpack.c.h.b16 %v606
    %v2251 = vunpack.c.l.b16 %v607
    %v2252 = vunpack.c.h.b16 %v607
    %v2253 = vunpack.c.l.b16 %v608
    %v2254 = vunpack.c.h.b16 %v608
    %v2255 = vunpack.c.l.b16 %v609
    %v2256 = vunpack.c.h.b16 %v609
    %v2257 = vunpack.c.l.b16 %v610
    %v2258 = vunpack.c.h.b16 %v610
    %v2259 = vunpack.c.l.b16 %v611
    %v2260 = vunpack.c.h.b16 %v611
    %v2261 = vunpack.c.l.b16 %v612
    %v2262 = vunpack.c.h.b16 %v612
    %v2263 = vunpack.c.l.b16 %v613
    %v2264 = vunpack.c.h.b16 %v613
    %v2265 = vunpack.c.l.b16 %v614
    %v2266 = vunpack.c.h.b16 %v614
    %v2267 = vunpack.c.l.b16 %v615
    %v2268 = vunpack.c.h.b16 %v615
    %v2269 = vunpack.c.l.b16 %v616
    %v2270 = vunpack.c.h.b16 %v616
    %v2271 = vunpack.c.l.b16 %v617
    %v2272 = vunpack.c.h.b16 %v617
    %v2273 = vunpack.c.l.b16 %v618
    %v2274 = vunpack.c.h.b16 %v618
    %v2275 = vunpack.c.l.b16 %v619
    %v2276 = vunpack.c.h.b16 %v619
    %v2277 = vunpack.c.l.b16 %v620
    %v2278 = vunpack.c.h.b16 %v620
    %v2279 = vunpack.c.l.b16 %v621
    %v2280 = vunpack.c.h.b16 %v621
    %v2281 = vunpack.c.l.b16 %v622
    %v2282 = vunpack.c.h.b16 %v622
    %v2283 = vunpack.c.l.b16 %v623
    %v2284 = vunpack.c.h.b16 %v623
    %v2285 = vunpack.c.l.b16 %v624
    %v2286 = vunpack.c.h.b16 %v624
    %v2287 = vunpack.c.l.b16 %v625
    %v2288 = vunpack.c.h.b16 %v625
    %v2289 = vunpack.c.l.b16 %v626
    %v2290 = vunpack.c.h.b16 %v626
    %v2291 = vunpack.c.l.b16 %v627
    %v2292 = vunpack.c.h.b16 %v627
    %v2293 = vunpack.c.l.b16 %v628
    %v2294 = vunpack.c.h.b16 %v628
    %v2295 = vunpack.c.l.b16 %v629
    %v2296 = vunpack.c.h.b16 %v629
    %v2297 = vunpack.c.l.b16 %v630
    %v2298 = vunpack.c.h.b16 %v630
    %v2299 = vunpack.c.l.b16 %v631
    %v2300 = vunpack.c.h.b16 %v631
    %v2301 = vunpack.c.l.b16 %v632
    %v2302 = vunpack.c.h.b16 %v632
    %v2303 = vunpack.c.l.b16 %v633
    %v2304 = vunpack.c.h.b16 %v633
    %v2305 = vunpack.c.l.b16 %v634
    %v2306 = vunpack.c.h.b16 %v634
    %v2307 = vunpack.c.l.b16 %v635
    %v2308 = vunpack.c.h.b16 %v635
    %v2309 = vunpack.c.l.b16 %v636
    %v2310 = vunpack.c.h.b16 %v636
    %v2311 = vunpack.c.l.b16 %v637
    %v2312 = vunpack.c.h.b16 %v637
    %v2313 = vunpack.c.l.b16 %v638
    %v2314 = vunpack.c.h.b16 %v638
    %v2315 = vunpack.c.l.b16 %v639
    %v2316 = vunpack.c.h.b16 %v639
    %v2317 = vunpack.c.l.b16 %v640
    %v2318 = vunpack.c.h.b16 %v640
    %v2319 = vunpack.c.l.b16 %v641
    %v2320 = vunpack.c.h.b16 %v641
    %v2321 = vunpack.c.l.b16 %v642
    %v2322 = vunpack.c.h.b16 %v642
    %v2323 = vunpack.c.l.b16 %v643
    %v2324 = vunpack.c.h.b16 %v643
    %v2325 = vunpack.c.l.b16 %v644
    %v2326 = vunpack.c.h.b16 %v644
    %v2327 = vunpack.c.l.b16 %v645
    %v2328 = vunpack.c.h.b16 %v645
    %v2329 = vunpack.c.l.b16 %v646
    %v2330 = vunpack.c.h.b16 %v646
    %v2331 = vunpack.c.l.b16 %v647
    %v2332 = vunpack.c.h.b16 %v647
    %v2333 = vunpack.c.l.b16 %v648
    %v2334 = vunpack.c.h.b16 %v648
    %v2335 = vunpack.c.l.b16 %v649
    %v2336 = vunpack.c.h.b16 %v649
    %v2337 = vunpack.c.l.b16 %v650
    %v2338 = vunpack.c.h.b16 %v650
    %v2339 = vunpack.c.l.b16 %v651
    %v2340 = vunpack.c.h.b16 %v651
    %v2341 = vunpack.c.l.b16 %v652
    %v2342 = vunpack.c.h.b16 %v652
    %v2343 = vunpack.c.l.b16 %v653
    %v2344 = vunpack.c.h.b16 %v653
    %v2345 = vunpack.c.l.b16 %v654
    %v2346 = vunpack.c.h.b16 %v654
    %v2347 = vunpack.c.l.b16 %v655
    %v2348 = vunpack.c.h.b16 %v655
    %v2349 = vunpack.c.l.b16 %v656
    %v2350 = vunpack.c.h.b16 %v656
    %v2351 = vunpack.c.l.b16 %v657
    %v2352 = vunpack.c.h.b16 %v657
    %v2353 = vunpack.c.l.b16 %v658
    %v2354 = vunpack.c.h.b16 %v658
    %v2355 = vunpack.c.l.b16 %v659
    %v2356 = vunpack.c.h.b16 %v659
    %v2357 = vunpack.c.l.b16 %v660
    %v2358 = vunpack.c.h.b16 %v660
    %v2359 = vunpack.c.l.b16 %v661
    %v2360 = vunpack.c.h.b16 %v661
    %v2361 = vunpack.c.l.b16 %v662
    %v2362 = vunpack.c.h.b16 %v662
    %v2363 = vunpack.c.l.b16 %v663
    %v2364 = vunpack.c.h.b16 %v663
    %v2365 = vunpack.c.l.b16 %v664
    %v2366 = vunpack.c.h.b16 %v664
    %v2367 = vunpack.c.l.b16 %v665
    %v2368 = vunpack.c.h.b16 %v665
    %v2369 = vunpack.c.l.b16 %v666
    %v2370 = vunpack.c.h.b16 %v666
    %v2371 = vunpack.c.l.b16 %v667
    %v2372 = vunpack.c.h.b16 %v667
    %v2373 = vunpack.c.l.b16 %v668
    %v2374 = vunpack.c.h.b16 %v668
    %v2375 = vunpack.c.l.b16 %v669
    %v2376 = vunpack.c.h.b16 %v669
    %v2377 = vunpack.c.l.b16 %v670
    %v2378 = vunpack.c.h.b16 %v670
    %v2379 = vunpack.c.l.b16 %v671
    %v2380 = vunpack.c.h.b16 %v671
    %v2381 = vunpack.c.l.b16 %v672
    %v2382 = vunpack.c.h.b16 %v672
    %v2383 = vunpack.c.l.b16 %v673
    %v2384 = vunpack.c.h.b16 %v673
    %v2385 = vunpack.c.l.b16 %v674
    %v2386 = vunpack.c.h.b16 %v674
    %v2387 = vunpack.c.l.b16 %v675
    %v2388 = vunpack.c.h.b16 %v675
    %v2389 = vunpack.c.l.b16 %v676
    %v2390 = vunpack.c.h.b16 %v676
    %v2391 = vunpack.c.l.b16 %v677
    %v2392 = vunpack.c.h.b16 %v677
    %v2393 = vunpack.c.l.b16 %v678
    %v2394 = vunpack.c.h.b16 %v678
    %v2395 = vunpack.c.l.b16 %v679
    %v2396 = vunpack.c.h.b16 %v679
    %v2397 = vunpack.c.l.b16 %v680
    %v2398 = vunpack.c.h.b16 %v680
    %v2399 = vunpack.c.l.b16 %v681
    %v2400 = vunpack.c.h.b16 %v681
    %v2401 = vunpack.c.l.b16 %v682
    %v2402 = vunpack.c.h.b16 %v682
    %v2403 = vunpack.c.l.b16 %v683
    %v2404 = vunpack.c.h.b16 %v683
    %v2405 = vunpack.c.l.b16 %v684
    %v2406 = vunpack.c.h.b16 %v684
    %v2407 = vunpack.c.l.b16 %v685
    %v2408 = vunpack.c.h.b16 %v685
    %v2409 = vunpack.c.l.b16 %v686
    %v2410 = vunpack.c.h.b16 %v686
    %v2411 = vunpack.c.l.b16 %v687
    %v2412 = vunpack.c.h.b16 %v687
    %v2413 = vunpack.c.l.b16 %v688
    %v2414 = vunpack.c.h.b16 %v688
    %v2415 = vunpack.c.l.b16 %v689
    %v2416 = vunpack.c.h.b16 %v689
    %v2417 = vunpack.c.l.b16 %v690
    %v2418 = vunpack.c.h.b16 %v690
    %v2419 = vunpack.c.l.b16 %v691
    %v2420 = vunpack.c.h.b16 %v691
    %v2421 = vpack.c.b16 %v1311, %v1301
    %v2422 = vpack.c.b16 %v1312, %v1302
    %v2423 = vpack.c.b16 %v1313, %v1303
    %v2424 = vpack.c.b16 %v1314, %v1304
    %v2425 = vpack.c.b16 %v1315, %v1305
    %v2426 = vpack.c.b16 %v1316, %v1306
    %v2427 = vpack.c.b16 %v1317, %v1307
    %v2428 = vpack.c.b16 %v1318, %v1308
    %v2429 = vpack.c.b16 %v1319, %v1309
    %v2430 = vpack.c.b16 %v1320, %v1310
    %v2431 = vpack.c.b16 %v1331, %v1321
    %v2432 = vpack.c.b16 %v1332, %v1322
    %v2433 = vpack.c.b16 %v1333, %v1323
    %v2434 = vpack.c.b16 %v1334, %v1324
    %v2435 = vpack.c.b16 %v1335, %v1325
    %v2436 = vpack.c.b16 %v1336, %v1326
    %v2437 = vpack.c.b16 %v1337, %v1327
    %v2438 = vpack.c.b16 %v1338, %v1328
    %v2439 = vpack.c.b16 %v1339, %v1329
    %v2440 = vpack.c.b16 %v1340, %v1330
    %v2441 = vpack.c.b16 %v1351, %v1341
    %v2442 = vpack.c.b16 %v1352, %v1342
    %v2443 = vpack.c.b16 %v1353, %v1343
    %v2444 = vpack.c.b16 %v1354, %v1344
    %v2445 = vpack.c.b16 %v1355, %v1345
    %v2446 = vpack.c.b16 %v1356, %v1346
    %v2447 = vpack.c.b16 %v1357, %v1347
    %v2448 = vpack.c.b16 %v1358, %v1348
    %v2449 = vpack.c.b16 %v1359, %v1349
    %v2450 = vpack.c.b16 %v1360, %v1350
    %v2451 = vpack.c.b16 %v1371, %v1361
    %v2452 = vpack.c.b16 %v1372, %v1362
    %v2453 = vpack.c.b16 %v1373, %v1363
    %v2454 = vpack.c.b16 %v1374, %v1364
    %v2455 = vpack.c.b16 %v1375, %v1365
    %v2456 = vpack.c.b16 %v1376, %v1366
    %v2457 = vpack.c.b16 %v1377, %v1367
    %v2458 = vpack.c.b16 %v1378, %v1368
    %v2459 = vpack.c.b16 %v1379, %v1369
    %v2460 = vpack.c.b16 %v1380, %v1370
    %v2461 = vpack.c.b16 %v1391, %v1381
    %v2462 = vpack.c.b16 %v1392, %v1382
    %v2463 = vpack.c.b16 %v1393, %v1383
    %v2464 = vpack.c.b16 %v1394, %v1384
    %v2465 = vpack.c.b16 %v1395, %v1385
    %v2466 = vpack.c.b16 %v1396, %v1386
    %v2467 = vpack.c.b16 %v1397, %v1387
    %v2468 = vpack.c.b16 %v1398, %v1388
    %v2469 = vpack.c.b16 %v1399, %v1389
    %v2470 = vpack.c.b16 %v1400, %v1390
    %v2471 = vpack.c.b16 %v1411, %v1401
    %v2472 = vpack.c.b16 %v1412, %v1402
    %v2473 = vpack.c.b16 %v1413, %v1403
    %v2474 = vpack.c.b16 %v1414, %v1404
    %v2475 = vpack.c.b16 %v1415, %v1405
    %v2476 = vpack.c.b16 %v1416, %v1406
    %v2477 = vpack.c.b16 %v1417, %v1407
    %v2478 = vpack.c.b16 %v1418, %v1408
    %v2479 = vpack.c.b16 %v1419, %v1409
    %v2480 = vpack.c.b16 %v1420, %v1410
    %v2481 = vpack.c.b16 %v1431, %v1421
    %v2482 = vpack.c.b16 %v1432, %v1422
    %v2483 = vpack.c.b16 %v1433, %v1423
    %v2484 = vpack.c.b16 %v1434, %v1424
    %v2485 = vpack.c.b16 %v1435, %v1425
    %v2486 = vpack.c.b16 %v1436, %v1426
    %v2487 = vpack.c.b16 %v1437, %v1427
    %v2488 = vpack.c.b16 %v1438, %v1428
    %v2489 = vpack.c.b16 %v1439, %v1429
    %v2490 = vpack.c.b16 %v1440, %v1430
    %v2491 = vpack.c.b16 %v1451, %v1441
    %v2492 = vpack.c.b16 %v1452, %v1442
    %v2493 = vpack.c.b16 %v1453, %v1443
    %v2494 = vpack.c.b16 %v1454, %v1444
    %v2495 = vpack.c.b16 %v1455, %v1445
    %v2496 = vpack.c.b16 %v1456, %v1446
    %v2497 = vpack.c.b16 %v1457, %v1447
    %v2498 = vpack.c.b16 %v1458, %v1448
    %v2499 = vpack.c.b16 %v1459, %v1449
    %v2500 = vpack.c.b16 %v1460, %v1450
    %v2501 = vpack.c.b16 %v1471, %v1461
    %v2502 = vpack.c.b16 %v1472, %v1462
    %v2503 = vpack.c.b16 %v1473, %v1463
    %v2504 = vpack.c.b16 %v1474, %v1464
    %v2505 = vpack.c.b16 %v1475, %v1465
    %v2506 = vpack.c.b16 %v1476, %v1466
    %v2507 = vpack.c.b16 %v1477, %v1467
    %v2508 = vpack.c.b16 %v1478, %v1468
    %v2509 = vpack.c.b16 %v1479, %v1469
    %v2510 = vpack.c.b16 %v1480, %v1470
    %v2511 = vpack.c.b16 %v1491, %v1481
    %v2512 = vpack.c.b16 %v1492, %v1482
    %v2513 = vpack.c.b16 %v1493, %v1483
    %v2514 = vpack.c.b16 %v1494, %v1484
    %v2515 = vpack.c.b16 %v1495, %v1485
    %v2516 = vpack.c.b16 %v1496, %v1486
    %v2517 = vpack.c.b16 %v1497, %v1487
    %v2518 = vpack.c.b16 %v1498, %v1488
    %v2519 = vpack.c.b16 %v1499, %v1489
    %v2520 = vpack.c.b16 %v1500, %v1490
    %v2521 = vpack.c.b16 %v1511, %v1501
    %v2522 = vpack.c.b16 %v1512, %v1502
    %v2523 = vpack.c.b16 %v1513, %v1503
    %v2524 = vpack.c.b16 %v1514, %v1504
    %v2525 = vpack.c.b16 %v1515, %v1505
    %v2526 = vpack.c.b16 %v1516, %v1506
    %v2527 = vpack.c.b16 %v1517, %v1507
    %v2528 = vpack.c.b16 %v1518, %v1508
    %v2529 = vpack.c.b16 %v1519, %v1509
    %v2530 = vpack.c.b16 %v1520, %v1510
    %v2531 = vpack.c.b16 %v1531, %v1521
    %v2532 = vpack.c.b16 %v1532, %v1522
    %v2533 = vpack.c.b16 %v1533, %v1523
    %v2534 = vpack.c.b16 %v1534, %v1524
    %v2535 = vpack.c.b16 %v1535, %v1525
    %v2536 = vpack.c.b16 %v1536, %v1526
    %v2537 = vpack.c.b16 %v1537, %v1527
    %v2538 = vpack.c.b16 %v1538, %v1528
    %v2539 = vpack.c.b16 %v1539, %v1529
    %v2540 = vpack.c.b16 %v1540, %v1530
    %v2541 = vpack.c.b16 %v1551, %v1541
    %v2542 = vpack.c.b16 %v1552, %v1542
    %v2543 = vpack.c.b16 %v1553, %v1543
    %v2544 = vpack.c.b16 %v1554, %v1544
    %v2545 = vpack.c.b16 %v1555, %v1545
    %v2546 = vpack.c.b16 %v1556, %v1546
    %v2547 = vpack.c.b16 %v1557, %v1547
    %v2548 = vpack.c.b16 %v1558, %v1548
    %v2549 = vpack.c.b16 %v1559, %v1549
    %v2550 = vpack.c.b16 %v1560, %v1550
    %v2551 = vpack.c.b16 %v1571, %v1561
    %v2552 = vpack.c.b16 %v1572, %v1562
    %v2553 = vpack.c.b16 %v1573, %v1563
    %v2554 = vpack.c.b16 %v1574, %v1564
    %v2555 = vpack.c.b16 %v1575, %v1565
    %v2556 = vpack.c.b16 %v1576, %v1566
    %v2557 = vpack.c.b16 %v1577, %v1567
    %v2558 = vpack.c.b16 %v1578, %v1568
    %v2559 = vpack.c.b16 %v1579, %v1569
    %v2560 = vpack.c.b16 %v1580, %v1570
    %v2561 = vpack.c.b16 %v1591, %v1581
    %v2562 = vpack.c.b16 %v1592, %v1582
    %v2563 = vpack.c.b16 %v1593, %v1583
    %v2564 = vpack.c.b16 %v1594, %v1584
    %v2565 = vpack.c.b16 %v1595, %v1585
    %v2566 = vpack.c.b16 %v1596, %v1586
    %v2567 = vpack.c.b16 %v1597, %v1587
    %v2568 = vpack.c.b16 %v1598, %v1588
    %v2569 = vpack.c.b16 %v1599, %v1589
    %v2570 = vpack.c.b16 %v1600, %v1590
    %v2571 = vpack.c.b16 %v1611, %v1601
    %v2572 = vpack.c.b16 %v1612, %v1602
    %v2573 = vpack.c.b16 %v1613, %v1603
    %v2574 = vpack.c.b16 %v1614, %v1604
    %v2575 = vpack.c.b16 %v1615, %v1605
    %v2576 = vpack.c.b16 %v1616, %v1606
    %v2577 = vpack.c.b16 %v1617, %v1607
    %v2578 = vpack.c.b16 %v1618, %v1608
    %v2579 = vpack.c.b16 %v1619, %v1609
    %v2580 = vpack.c.b16 %v1620, %v1610
    %v2581 = vpack.c.b16 %v1631, %v1621
    %v2582 = vpack.c.b16 %v1632, %v1622
    %v2583 = vpack.c.b16 %v1633, %v1623
    %v2584 = vpack.c.b16 %v1634, %v1624
    %v2585 = vpack.c.b16 %v1635, %v1625
    %v2586 = vpack.c.b16 %v1636, %v1626
    %v2587 = vpack.c.b16 %v1637, %v1627
    %v2588 = vpack.c.b16 %v1638, %v1628
    %v2589 = vpack.c.b16 %v1639, %v1629
    %v2590 = vpack.c.b16 %v1640, %v1630
    %v2591 = vpack.c.b16 %v1651, %v1641
    %v2592 = vpack.c.b16 %v1652, %v1642
    %v2593 = vpack.c.b16 %v1653, %v1643
    %v2594 = vpack.c.b16 %v1654, %v1644
    %v2595 = vpack.c.b16 %v1655, %v1645
    %v2596 = vpack.c.b16 %v1656, %v1646
    %v2597 = vpack.c.b16 %v1657, %v1647
    %v2598 = vpack.c.b16 %v1658, %v1648
    %v2599 = vpack.c.b16 %v1659, %v1649
    %v2600 = vpack.c.b16 %v1660, %v1650
    %v2601 = vpack.c.b16 %v1671, %v1661
    %v2602 = vpack.c.b16 %v1672, %v1662
    %v2603 = vpack.c.b16 %v1673, %v1663
    %v2604 = vpack.c.b16 %v1674, %v1664
    %v2605 = vpack.c.b16 %v1675, %v1665
    %v2606 = vpack.c.b16 %v1676, %v1666
    %v2607 = vpack.c.b16 %v1677, %v1667
    %v2608 = vpack.c.b16 %v1678, %v1668
    %v2609 = vpack.c.b16 %v1679, %v1669
    %v2610 = vpack.c.b16 %v1680, %v1670
    %v2611 = vpack.c.b16 %v1691, %v1681
    %v2612 = vpack.c.b16 %v1692, %v1682
    %v2613 = vpack.c.b16 %v1693, %v1683
    %v2614 = vpack.c.b16 %v1694, %v1684
    %v2615 = vpack.c.b16 %v1695, %v1685
    %v2616 = vpack.c.b16 %v1696, %v1686
    %v2617 = vpack.c.b16 %v1697, %v1687
    %v2618 = vpack.c.b16 %v1698, %v1688
    %v2619 = vpack.c.b16 %v1699, %v1689
    %v2620 = vpack.c.b16 %v1700, %v1690
    %v2621 = vpack.c.b16 %v1711, %v1701
    %v2622 = vpack.c.b16 %v1712, %v1702
    %v2623 = vpack.c.b16 %v1713, %v1703
    %v2624 = vpack.c.b16 %v1714, %v1704
    %v2625 = vpack.c.b16 %v1715, %v1705
    %v2626 = vpack.c.b16 %v1716, %v1706
    %v2627 = vpack.c.b16 %v1717, %v1707
    %v2628 = vpack.c.b16 %v1718, %v1708
    %v2629 = vpack.c.b16 %v1719, %v1709
    %v2630 = vpack.c.b16 %v1720, %v1710
    %v2631 = vpack.c.b16 %v1731, %v1721
    %v2632 = vpack.c.b16 %v1732, %v1722
    %v2633 = vpack.c.b16 %v1733, %v1723
    %v2634 = vpack.c.b16 %v1734, %v1724
    %v2635 = vpack.c.b16 %v1735, %v1725
    %v2636 = vpack.c.b16 %v1736, %v1726
    %v2637 = vpack.c.b16 %v1737, %v1727
    %v2638 = vpack.c.b16 %v1738, %v1728
    %v2639 = vpack.c.b16 %v1739, %v1729
    %v2640 = vpack.c.b16 %v1740, %v1730
    %v2641 = vpack.c.b16 %v1751, %v1741
    %v2642 = vpack.c.b16 %v1752, %v1742
    %v2643 = vpack.c.b16 %v1753, %v1743
    %v2644 = vpack.c.b16 %v1754, %v1744
    %v2645 = vpack.c.b16 %v1755, %v1745
    %v2646 = vpack.c.b16 %v1756, %v1746
    %v2647 = vpack.c.b16 %v1757, %v1747
    %v2648 = vpack.c.b16 %v1758, %v1748
    %v2649 = vpack.c.b16 %v1759, %v1749
    %v2650 = vpack.c.b16 %v1760, %v1750
    %v2651 = vpack.c.b16 %v1771, %v1761
    %v2652 = vpack.c.b16 %v1772, %v1762
    %v2653 = vpack.c.b16 %v1773, %v1763
    %v2654 = vpack.c.b16 %v1774, %v1764
    %v2655 = vpack.c.b16 %v1775, %v1765
    %v2656 = vpack.c.b16 %v1776, %v1766
    %v2657 = vpack.c.b16 %v1777, %v1767
    %v2658 = vpack.c.b16 %v1778, %v1768
    %v2659 = vpack.c.b16 %v1779, %v1769
    %v2660 = vpack.c.b16 %v1780, %v1770
    %v2661 = vpack.c.b16 %v1791, %v1781
    %v2662 = vpack.c.b16 %v1792, %v1782
    %v2663 = vpack.c.b16 %v1793, %v1783
    %v2664 = vpack.c.b16 %v1794, %v1784
    %v2665 = vpack.c.b16 %v1795, %v1785
    %v2666 = vpack.c.b16 %v1796, %v1786
    %v2667 = vpack.c.b16 %v1797, %v1787
    %v2668 = vpack.c.b16 %v1798, %v1788
    %v2669 = vpack.c.b16 %v1799, %v1789
    %v2670 = vpack.c.b16 %v1800, %v1790
    %v2671 = vpack.c.b16 %v1811, %v1801
    %v2672 = vpack.c.b16 %v1812, %v1802
    %v2673 = vpack.c.b16 %v1813, %v1803
    %v2674 = vpack.c.b16 %v1814, %v1804
    %v2675 = vpack.c.b16 %v1815, %v1805
    %v2676 = vpack.c.b16 %v1816, %v1806
    %v2677 = vpack.c.b16 %v1817, %v1807
    %v2678 = vpack.c.b16 %v1818, %v1808
    %v2679 = vpack.c.b16 %v1819, %v1809
    %v2680 = vpack.c.b16 %v1820, %v1810
    %v2681 = vpack.c.b16 %v1831, %v1821
    %v2682 = vpack.c.b16 %v1832, %v1822
    %v2683 = vpack.c.b16 %v1833, %v1823
    %v2684 = vpack.c.b16 %v1834, %v1824
    %v2685 = vpack.c.b16 %v1835, %v1825
    %v2686 = vpack.c.b16 %v1836, %v1826
    %v2687 = vpack.c.b16 %v1837, %v1827
    %v2688 = vpack.c.b16 %v1838, %v1828
    %v2689 = vpack.c.b16 %v1839, %v1829
    %v2690 = vpack.c.b16 %v1840, %v1830
    %v2691 = vpack.c.b16 %v1851, %v1841
    %v2692 = vpack.c.b16 %v1852, %v1842
    %v2693 = vpack.c.b16 %v1853, %v1843
    %v2694 = vpack.c.b16 %v1854, %v1844
    %v2695 = vpack.c.b16 %v1855, %v1845
    %v2696 = vpack.c.b16 %v1856, %v1846
    %v2697 = vpack.c.b16 %v1857, %v1847
    %v2698 = vpack.c.b16 %v1858, %v1848
    %v2699 = vpack.c.b16 %v1859, %v1849
    %v2700 = vpack.c.b16 %v1860, %v1850
    %v2701 = vpack.c.b16 %v1871, %v1861
    %v2702 = vpack.c.b16 %v1872, %v1862
    %v2703 = vpack.c.b16 %v1873, %v1863
    %v2704 = vpack.c.b16 %v1874, %v1864
    %v2705 = vpack.c.b16 %v1875, %v1865
    %v2706 = vpack.c.b16 %v1876, %v1866
    %v2707 = vpack.c.b16 %v1877, %v1867
    %v2708 = vpack.c.b16 %v1878, %v1868
    %v2709 = vpack.c.b16 %v1879, %v1869
    %v2710 = vpack.c.b16 %v1880, %v1870
    %v2711 = vpack.c.b16 %v1891, %v1881
    %v2712 = vpack.c.b16 %v1892, %v1882
    %v2713 = vpack.c.b16 %v1893, %v1883
    %v2714 = vpack.c.b16 %v1894, %v1884
    %v2715 = vpack.c.b16 %v1895, %v1885
    %v2716 = vpack.c.b16 %v1896, %v1886
    %v2717 = vpack.c.b16 %v1897, %v1887
    %v2718 = vpack.c.b16 %v1898, %v1888
    %v2719 = vpack.c.b16 %v1899, %v1889
    %v2720 = vpack.c.b16 %v1900, %v1890
    %v2721 = vpack.c.b16 %v1911, %v1901
    %v2722 = vpack.c.b16 %v1912, %v1902
    %v2723 = vpack.c.b16 %v1913, %v1903
    %v2724 = vpack.c.b16 %v1914, %v1904
    %v2725 = vpack.c.b16 %v1915, %v1905
    %v2726 = vpack.c.b16 %v1916, %v1906
    %v2727 = vpack.c.b16 %v1917, %v1907
    %v2728 = vpack.c.b16 %v1918, %v1908
    %v2729 = vpack.c.b16 %v1919, %v1909
    %v2730 = vpack.c.b16 %v1920, %v1910
    %v2731 = vpack.c.b16 %v1931, %v1921
    %v2732 = vpack.c.b16 %v1932, %v1922
    %v2733 = vpack.c.b16 %v1933, %v1923
    %v2734 = vpack.c.b16 %v1934, %v1924
    %v2735 = vpack.c.b16 %v1935, %v1925
    %v2736 = vpack.c.b16 %v1936, %v1926
    %v2737 = vpack.c.b16 %v1937, %v1927
    %v2738 = vpack.c.b16 %v1938, %v1928
    %v2739 = vpack.c.b16 %v1939, %v1929
    %v2740 = vpack.c.b16 %v1940, %v1930
    %v2741 = vpack.c.b16 %v1951, %v1941
    %v2742 = vpack.c.b16 %v1952, %v1942
    %v2743 = vpack.c.b16 %v1953, %v1943
    %v2744 = vpack.c.b16 %v1954, %v1944
    %v2745 = vpack.c.b16 %v1955, %v1945
    %v2746 = vpack.c.b16 %v1956, %v1946
    %v2747 = vpack.c.b16 %v1957, %v1947
    %v2748 = vpack.c.b16 %v1958, %v1948
    %v2749 = vpack.c.b16 %v1959, %v1949
    %v2750 = vpack.c.b16 %v1960, %v1950
    %v2751 = vpack.c.b16 %v1971, %v1961
    %v2752 = vpack.c.b16 %v1972, %v1962
    %v2753 = vpack.c.b16 %v1973, %v1963
    %v2754 = vpack.c.b16 %v1974, %v1964
    %v2755 = vpack.c.b16 %v1975, %v1965
    %v2756 = vpack.c.b16 %v1976, %v1966
    %v2757 = vpack.c.b16 %v1977, %v1967
    %v2758 = vpack.c.b16 %v1978, %v1968
    %v2759 = vpack.c.b16 %v1979, %v1969
    %v2760 = vpack.c.b16 %v1980, %v1970
    %v2761 = vpack.c.b16 %v1991, %v1981
    %v2762 = vpack.c.b16 %v1992, %v1982
    %v2763 = vpack.c.b16 %v1993, %v1983
    %v2764 = vpack.c.b16 %v1994, %v1984
    %v2765 = vpack.c.b16 %v1995, %v1985
    %v2766 = vpack.c.b16 %v1996, %v1986
    %v2767 = vpack.c.b16 %v1997, %v1987
    %v2768 = vpack.c.b16 %v1998, %v1988
    %v2769 = vpack.c.b16 %v1999, %v1989
    %v2770 = vpack.c.b16 %v2000, %v1990
    %v2771 = vpack.c.b16 %v2011, %v2001
    %v2772 = vpack.c.b16 %v2012, %v2002
    %v2773 = vpack.c.b16 %v2013, %v2003
    %v2774 = vpack.c.b16 %v2014, %v2004
    %v2775 = vpack.c.b16 %v2015, %v2005
    %v2776 = vpack.c.b16 %v2016, %v2006
    %v2777 = vpack.c.b16 %v2017, %v2007
    %v2778 = vpack.c.b16 %v2018, %v2008
    %v2779 = vpack.c.b16 %v2019, %v2009
    %v2780 = vpack.c.b16 %v2020, %v2010
    %v2781 = vpack.c.b16 %v2031, %v2021
    %v2782 = vpack.c.b16 %v2032, %v2022
    %v2783 = vpack.c.b16 %v2033, %v2023
    %v2784 = vpack.c.b16 %v2034, %v2024
    %v2785 = vpack.c.b16 %v2035, %v2025
    %v2786 = vpack.c.b16 %v2036, %v2026
    %v2787 = vpack.c.b16 %v2037, %v2027
    %v2788 = vpack.c.b16 %v2038, %v2028
    %v2789 = vpack.c.b16 %v2039, %v2029
    %v2790 = vpack.c.b16 %v2040, %v2030
    %v2791 = vpack.c.b16 %v2051, %v2041
    %v2792 = vpack.c.b16 %v2052, %v2042
    %v2793 = vpack.c.b16 %v2053, %v2043
    %v2794 = vpack.c.b16 %v2054, %v2044
    %v2795 = vpack.c.b16 %v2055, %v2045
    %v2796 = vpack.c.b16 %v2056, %v2046
    %v2797 = vpack.c.b16 %v2057, %v2047
    %v2798 = vpack.c.b16 %v2058, %v2048
    %v2799 = vpack.c.b16 %v2059, %v2049
    %v2800 = vpack.c.b16 %v2060, %v2050
    %v2801 = vpack.c.b16 %v2071, %v2061
    %v2802 = vpack.c.b16 %v2072, %v2062
    %v2803 = vpack.c.b16 %v2073, %v2063
    %v2804 = vpack.c.b16 %v2074, %v2064
    %v2805 = vpack.c.b16 %v2075, %v2065
    %v2806 = vpack.c.b16 %v2076, %v2066
    %v2807 = vpack.c.b16 %v2077, %v2067
    %v2808 = vpack.c.b16 %v2078, %v2068
    %v2809 = vpack.c.b16 %v2079, %v2069
    %v2810 = vpack.c.b16 %v2080, %v2070
    %v2811 = vpack.c.b16 %v2091, %v2081
    %v2812 = vpack.c.b16 %v2092, %v2082
    %v2813 = vpack.c.b16 %v2093, %v2083
    %v2814 = vpack.c.b16 %v2094, %v2084
    %v2815 = vpack.c.b16 %v2095, %v2085
    %v2816 = vpack.c.b16 %v2096, %v2086
    %v2817 = vpack.c.b16 %v2097, %v2087
    %v2818 = vpack.c.b16 %v2098, %v2088
    %v2819 = vpack.c.b16 %v2099, %v2089
    %v2820 = vpack.c.b16 %v2100, %v2090
    %v2821 = vpack.c.b16 %v2111, %v2101
    %v2822 = vpack.c.b16 %v2112, %v2102
    %v2823 = vpack.c.b16 %v2113, %v2103
    %v2824 = vpack.c.b16 %v2114, %v2104
    %v2825 = vpack.c.b16 %v2115, %v2105
    %v2826 = vpack.c.b16 %v2116, %v2106
    %v2827 = vpack.c.b16 %v2117, %v2107
    %v2828 = vpack.c.b16 %v2118, %v2108
    %v2829 = vpack.c.b16 %v2119, %v2109
    %v2830 = vpack.c.b16 %v2120, %v2110
    %v2831 = vpack.c.b16 %v2131, %v2121
    %v2832 = vpack.c.b16 %v2132, %v2122
    %v2833 = vpack.c.b16 %v2133, %v2123
    %v2834 = vpack.c.b16 %v2134, %v2124
    %v2835 = vpack.c.b16 %v2135, %v2125
    %v2836 = vpack.c.b16 %v2136, %v2126
    %v2837 = vpack.c.b16 %v2137, %v2127
    %v2838 = vpack.c.b16 %v2138, %v2128
    %v2839 = vpack.c.b16 %v2139, %v2129
    %v2840 = vpack.c.b16 %v2140, %v2130
    %v2841 = vpack.c.b16 %v2151, %v2141
    %v2842 = vpack.c.b16 %v2152, %v2142
    %v2843 = vpack.c.b16 %v2153, %v2143
    %v2844 = vpack.c.b16 %v2154, %v2144
    %v2845 = vpack.c.b16 %v2155, %v2145
    %v2846 = vpack.c.b16 %v2156, %v2146
    %v2847 = vpack.c.b16 %v2157, %v2147
    %v2848 = vpack.c.b16 %v2158, %v2148
    %v2849 = vpack.c.b16 %v2159, %v2149
    %v2850 = vpack.c.b16 %v2160, %v2150
    %v2851 = vpack.c.b16 %v2171, %v2161
    %v2852 = vpack.c.b16 %v2172, %v2162
    %v2853 = vpack.c.b16 %v2173, %v2163
    %v2854 = vpack.c.b16 %v2174, %v2164
    %v2855 = vpack.c.b16 %v2175, %v2165
    %v2856 = vpack.c.b16 %v2176, %v2166
    %v2857 = vpack.c.b16 %v2177, %v2167
    %v2858 = vpack.c.b16 %v2178, %v2168
    %v2859 = vpack.c.b16 %v2179, %v2169
    %v2860 = vpack.c.b16 %v2180, %v2170
    %v2861 = vpack.c.b16 %v2191, %v2181
    %v2862 = vpack.c.b16 %v2192, %v2182
    %v2863 = vpack.c.b16 %v2193, %v2183
    %v2864 = vpack.c.b16 %v2194, %v2184
    %v2865 = vpack.c.b16 %v2195, %v2185
    %v2866 = vpack.c.b16 %v2196, %v2186
    %v2867 = vpack.c.b16 %v2197, %v2187
    %v2868 = vpack.c.b16 %v2198, %v2188
    %v2869 = vpack.c.b16 %v2199, %v2189
    %v2870 = vpack.c.b16 %v2200, %v2190
    %v2871 = vpack.c.b16 %v2211, %v2201
    %v2872 = vpack.c.b16 %v2212, %v2202
    %v2873 = vpack.c.b16 %v2213, %v2203
    %v2874 = vpack.c.b16 %v2214, %v2204
    %v2875 = vpack.c.b16 %v2215, %v2205
    %v2876 = vpack.c.b16 %v2216, %v2206
    %v2877 = vpack.c.b16 %v2217, %v2207
    %v2878 = vpack.c.b16 %v2218, %v2208
    %v2879 = vpack.c.b16 %v2219, %v2209
    %v2880 = vpack.c.b16 %v2220, %v2210
    %v2881 = vpack.c.b16 %v2231, %v2221
    %v2882 = vpack.c.b16 %v2232, %v2222
    %v2883 = vpack.c.b16 %v2233, %v2223
    %v2884 = vpack.c.b16 %v2234, %v2224
    %v2885 = vpack.c.b16 %v2235, %v2225
    %v2886 = vpack.c.b16 %v2236, %v2226
    %v2887 = vpack.c.b16 %v2237, %v2227
    %v2888 = vpack.c.b16 %v2238, %v2228
    %v2889 = vpack.c.b16 %v2239, %v2229
    %v2890 = vpack.c.b16 %v2240, %v2230
    %v2891 = vpack.c.b16 %v2251, %v2241
    %v2892 = vpack.c.b16 %v2252, %v2242
    %v2893 = vpack.c.b16 %v2253, %v2243
    %v2894 = vpack.c.b16 %v2254, %v2244
    %v2895 = vpack.c.b16 %v2255, %v2245
    %v2896 = vpack.c.b16 %v2256, %v2246
    %v2897 = vpack.c.b16 %v2257, %v2247
    %v2898 = vpack.c.b16 %v2258, %v2248
    %v2899 = vpack.c.b16 %v2259, %v2249
    %v2900 = vpack.c.b16 %v2260, %v2250
    %v2901 = vpack.c.b16 %v2271, %v2261
    %v2902 = vpack.c.b16 %v2272, %v2262
    %v2903 = vpack.c.b16 %v2273, %v2263
    %v2904 = vpack.c.b16 %v2274, %v2264
    %v2905 = vpack.c.b16 %v2275, %v2265
    %v2906 = vpack.c.b16 %v2276, %v2266
    %v2907 = vpack.c.b16 %v2277, %v2267
    %v2908 = vpack.c.b16 %v2278, %v2268
    %v2909 = vpack.c.b16 %v2279, %v2269
    %v2910 = vpack.c.b16 %v2280, %v2270
    %v2911 = vpack.c.b16 %v2291, %v2281
    %v2912 = vpack.c.b16 %v2292, %v2282
    %v2913 = vpack.c.b16 %v2293, %v2283
    %v2914 = vpack.c.b16 %v2294, %v2284
    %v2915 = vpack.c.b16 %v2295, %v2285
    %v2916 = vpack.c.b16 %v2296, %v2286
    %v2917 = vpack.c.b16 %v2297, %v2287
    %v2918 = vpack.c.b16 %v2298, %v2288
    %v2919 = vpack.c.b16 %v2299, %v2289
    %v2920 = vpack.c.b16 %v2300, %v2290
    %v2921 = vpack.c.b16 %v2311, %v2301
    %v2922 = vpack.c.b16 %v2312, %v2302
    %v2923 = vpack.c.b16 %v2313, %v2303
    %v2924 = vpack.c.b16 %v2314, %v2304
    %v2925 = vpack.c.b16 %v2315, %v2305
    %v2926 = vpack.c.b16 %v2316, %v2306
    %v2927 = vpack.c.b16 %v2317, %v2307
    %v2928 = vpack.c.b16 %v2318, %v2308
    %v2929 = vpack.c.b16 %v2319, %v2309
    %v2930 = vpack.c.b16 %v2320, %v2310
    %v2931 = vpack.c.b16 %v2331, %v2321
    %v2932 = vpack.c.b16 %v2332, %v2322
    %v2933 = vpack.c.b16 %v2333, %v2323
    %v2934 = vpack.c.b16 %v2334, %v2324
    %v2935 = vpack.c.b16 %v2335, %v2325
    %v2936 = vpack.c.b16 %v2336, %v2326
    %v2937 = vpack.c.b16 %v2337, %v2327
    %v2938 = vpack.c.b16 %v2338, %v2328
    %v2939 = vpack.c.b16 %v2339, %v2329
    %v2940 = vpack.c.b16 %v2340, %v2330
    %v2941 = vpack.c.b16 %v2351, %v2341
    %v2942 = vpack.c.b16 %v2352, %v2342
    %v2943 = vpack.c.b16 %v2353, %v2343
    %v2944 = vpack.c.b16 %v2354, %v2344
    %v2945 = vpack.c.b16 %v2355, %v2345
    %v2946 = vpack.c.b16 %v2356, %v2346
    %v2947 = vpack.c.b16 %v2357, %v2347
    %v2948 = vpack.c.b16 %v2358, %v2348
    %v2949 = vpack.c.b16 %v2359, %v2349
    %v2950 = vpack.c.b16 %v2360, %v2350
    %v2951 = vpack.c.b16 %v2371, %v2361
    %v2952 = vpack.c.b16 %v2372, %v2362
    %v2953 = vpack.c.b16 %v2373, %v2363
    %v2954 = vpack.c.b16 %v2374, %v2364
    %v2955 = vpack.c.b16 %v2375, %v2365
    %v2956 = vpack.c.b16 %v2376, %v2366
    %v2957 = vpack.c.b16 %v2377, %v2367
    %v2958 = vpack.c.b16 %v2378, %v2368
    %v2959 = vpack.c.b16 %v2379, %v2369
    %v2960 = vpack.c.b16 %v2380, %v2370
    %v2961 = vpack.c.b16 %v2391, %v2381
    %v2962 = vpack.c.b16 %v2392, %v2382
    %v2963 = vpack.c.b16 %v2393, %v2383
    %v2964 = vpack.c.b16 %v2394, %v2384
    %v2965 = vpack.c.b16 %v2395, %v2385
    %v2966 = vpack.c.b16 %v2396, %v2386
    %v2967 = vpack.c.b16 %v2397, %v2387
    %v2968 = vpack.c.b16 %v2398, %v2388
    %v2969 = vpack.c.b16 %v2399, %v2389
    %v2970 = vpack.c.b16 %v2400, %v2390
    %v2971 = vpack.c.b16 %v2411, %v2401
    %v2972 = vpack.c.b16 %v2412, %v2402
    %v2973 = vpack.c.b16 %v2413, %v2403
    %v2974 = vpack.c.b16 %v2414, %v2404
    %v2975 = vpack.c.b16 %v2415, %v2405
    %v2976 = vpack.c.b16 %v2416, %v2406
    %v2977 = vpack.c.b16 %v2417, %v2407
    %v2978 = vpack.c.b16 %v2418, %v2408
    %v2979 = vpack.c.b16 %v2419, %v2409
    %v2980 = vpack.c.b16 %v2420, %v2410
    %3541 = vmatpush.bf16.msra.mxu0 %v2491
    %3542 = vmatpush.bf16.msra.mxu0 %v2481
    %3543 = vmatpush.bf16.msra.mxu0 %v2471
    %3544 = vmatpush.bf16.msra.mxu0 %v2461
    %3545 = vmatpush.bf16.msra.mxu0 %v2451
    %3546 = vmatpush.bf16.msra.mxu0 %v2441
    %3547 = vmatpush.bf16.msra.mxu0 %v2431
    %3548 = vmatpush.bf16.msra.mxu0 %v2421
    %3549 = vmatmul.bf16.gmra.mxu0 %v727
    %v3550 = vpop.f32.mrf.mxu0
    %v3551 = vadd.f32 %v696, %v3550
    %v3552 = vpop.f32.mrf.mxu0
    %3553 = vdwg.mxu0
    %3554 = vmatpush.bf16.msra.mxu0 %v2571
    %3555 = vmatpush.bf16.msra.mxu0 %v2561
    %3556 = vmatpush.bf16.msra.mxu0 %v2551
    %3557 = vmatpush.bf16.msra.mxu0 %v2541
    %3558 = vmatpush.bf16.msra.mxu0 %v2531
    %3559 = vmatpush.bf16.msra.mxu0 %v2521
    %3560 = vmatpush.bf16.msra.mxu0 %v2511
    %3561 = vmatpush.bf16.msra.mxu0 %v2501
    %3562 = vmatmul.bf16.gmra.mxu0 %v728
    %v3563 = vpop.f32.mrf.mxu0
    %v3564 = vadd.f32 %v3551, %v3563
    %v3565 = vpop.f32.mrf.mxu0
    %3566 = vdwg.mxu0
    %3567 = vmatpush.bf16.msra.mxu0 %v2651
    %3568 = vmatpush.bf16.msra.mxu0 %v2641
    %3569 = vmatpush.bf16.msra.mxu0 %v2631
    %3570 = vmatpush.bf16.msra.mxu0 %v2621
    %3571 = vmatpush.bf16.msra.mxu0 %v2611
    %3572 = vmatpush.bf16.msra.mxu0 %v2601
    %3573 = vmatpush.bf16.msra.mxu0 %v2591
    %3574 = vmatpush.bf16.msra.mxu0 %v2581
    %3575 = vmatmul.bf16.gmra.mxu0 %v729
    %v3576 = vpop.f32.mrf.mxu0
    %v3577 = vadd.f32 %v3564, %v3576
    %v3578 = vpop.f32.mrf.mxu0
    %3579 = vdwg.mxu0
    %3580 = vmatpush.bf16.msra.mxu0 %v2731
    %3581 = vmatpush.bf16.msra.mxu0 %v2721
    %3582 = vmatpush.bf16.msra.mxu0 %v2711
    %3583 = vmatpush.bf16.msra.mxu0 %v2701
    %3584 = vmatpush.bf16.msra.mxu0 %v2691
    %3585 = vmatpush.bf16.msra.mxu0 %v2681
    %3586 = vmatpush.bf16.msra.mxu0 %v2671
    %3587 = vmatpush.bf16.msra.mxu0 %v2661
    %3588 = vmatmul.bf16.gmra.mxu0 %v730
    %v3589 = vpop.f32.mrf.mxu0
    %v3590 = vadd.f32 %v3577, %v3589
    %v3591 = vpop.f32.mrf.mxu0
    %3592 = vdwg.mxu0
    %3593 = vmatpush.bf16.msra.mxu0 %v2811
    %3594 = vmatpush.bf16.msra.mxu0 %v2801
    %3595 = vmatpush.bf16.msra.mxu0 %v2791
    %3596 = vmatpush.bf16.msra.mxu0 %v2781
    %3597 = vmatpush.bf16.msra.mxu0 %v2771
    %3598 = vmatpush.bf16.msra.mxu0 %v2761
    %3599 = vmatpush.bf16.msra.mxu0 %v2751
    %3600 = vmatpush.bf16.msra.mxu0 %v2741
    %3601 = vmatmul.bf16.gmra.mxu0 %v731
    %v3602 = vpop.f32.mrf.mxu0
    %v3603 = vadd.f32 %v3590, %v3602
    %v3604 = vpop.f32.mrf.mxu0
    %3605 = vdwg.mxu0
    %3606 = vmatpush.bf16.msra.mxu0 %v2891
    %3607 = vmatpush.bf16.msra.mxu0 %v2881
    %3608 = vmatpush.bf16.msra.mxu0 %v2871
    %3609 = vmatpush.bf16.msra.mxu0 %v2861
    %3610 = vmatpush.bf16.msra.mxu0 %v2851
    %3611 = vmatpush.bf16.msra.mxu0 %v2841
    %3612 = vmatpush.bf16.msra.mxu0 %v2831
    %3613 = vmatpush.bf16.msra.mxu0 %v2821
    %3614 = vmatmul.bf16.gmra.mxu0 %v732
    %v3615 = vpop.f32.mrf.mxu0
    %v3616 = vadd.f32 %v3603, %v3615
    %v3617 = vpop.f32.mrf.mxu0
    %3618 = vdwg.mxu0
    %3619 = vmatpush.bf16.msra.mxu0 %v2971
    %3620 = vmatpush.bf16.msra.mxu0 %v2961
    %3621 = vmatpush.bf16.msra.mxu0 %v2951
    %3622 = vmatpush.bf16.msra.mxu0 %v2941
    %3623 = vmatpush.bf16.msra.mxu0 %v2931
    %3624 = vmatpush.bf16.msra.mxu0 %v2921
    %3625 = vmatpush.bf16.msra.mxu0 %v2911
    %3626 = vmatpush.bf16.msra.mxu0 %v2901
    %3627 = vmatmul.bf16.gmra.mxu0 %v733
    %v3628 = vpop.f32.mrf.mxu0
    %v3629 = vadd.f32 %v3616, %v3628
    %v3630 = vpop.f32.mrf.mxu0
    %3631 = vdwg.mxu0
    %3632 = vmatpush.bf16.msra.mxu0 %v2492
    %3633 = vmatpush.bf16.msra.mxu0 %v2482
    %3634 = vmatpush.bf16.msra.mxu0 %v2472
    %3635 = vmatpush.bf16.msra.mxu0 %v2462
    %3636 = vmatpush.bf16.msra.mxu0 %v2452
    %3637 = vmatpush.bf16.msra.mxu0 %v2442
    %3638 = vmatpush.bf16.msra.mxu0 %v2432
    %3639 = vmatpush.bf16.msra.mxu0 %v2422
    %3640 = vmatmul.bf16.gmra.mxu0 %v727
    %v3641 = vpop.f32.mrf.mxu0
    %v3642 = vadd.f32 %v697, %v3641
    %v3643 = vpop.f32.mrf.mxu0
    %3644 = vdwg.mxu0
    %3645 = vmatpush.bf16.msra.mxu0 %v2572
    %3646 = vmatpush.bf16.msra.mxu0 %v2562
    %3647 = vmatpush.bf16.msra.mxu0 %v2552
    %3648 = vmatpush.bf16.msra.mxu0 %v2542
    %3649 = vmatpush.bf16.msra.mxu0 %v2532
    %3650 = vmatpush.bf16.msra.mxu0 %v2522
    %3651 = vmatpush.bf16.msra.mxu0 %v2512
    %3652 = vmatpush.bf16.msra.mxu0 %v2502
    %3653 = vmatmul.bf16.gmra.mxu0 %v728
    %v3654 = vpop.f32.mrf.mxu0
    %v3655 = vadd.f32 %v3642, %v3654
    %v3656 = vpop.f32.mrf.mxu0
    %3657 = vdwg.mxu0
    %3658 = vmatpush.bf16.msra.mxu0 %v2652
    %3659 = vmatpush.bf16.msra.mxu0 %v2642
    %3660 = vmatpush.bf16.msra.mxu0 %v2632
    %3661 = vmatpush.bf16.msra.mxu0 %v2622
    %3662 = vmatpush.bf16.msra.mxu0 %v2612
    %3663 = vmatpush.bf16.msra.mxu0 %v2602
    %3664 = vmatpush.bf16.msra.mxu0 %v2592
    %3665 = vmatpush.bf16.msra.mxu0 %v2582
    %3666 = vmatmul.bf16.gmra.mxu0 %v729
    %v3667 = vpop.f32.mrf.mxu0
    %v3668 = vadd.f32 %v3655, %v3667
    %v3669 = vpop.f32.mrf.mxu0
    %3670 = vdwg.mxu0
    %3671 = vmatpush.bf16.msra.mxu0 %v2732
    %3672 = vmatpush.bf16.msra.mxu0 %v2722
    %3673 = vmatpush.bf16.msra.mxu0 %v2712
    %3674 = vmatpush.bf16.msra.mxu0 %v2702
    %3675 = vmatpush.bf16.msra.mxu0 %v2692
    %3676 = vmatpush.bf16.msra.mxu0 %v2682
    %3677 = vmatpush.bf16.msra.mxu0 %v2672
    %3678 = vmatpush.bf16.msra.mxu0 %v2662
    %3679 = vmatmul.bf16.gmra.mxu0 %v730
    %v3680 = vpop.f32.mrf.mxu0
    %v3681 = vadd.f32 %v3668, %v3680
    %v3682 = vpop.f32.mrf.mxu0
    %3683 = vdwg.mxu0
    %3684 = vmatpush.bf16.msra.mxu0 %v2812
    %3685 = vmatpush.bf16.msra.mxu0 %v2802
    %3686 = vmatpush.bf16.msra.mxu0 %v2792
    %3687 = vmatpush.bf16.msra.mxu0 %v2782
    %3688 = vmatpush.bf16.msra.mxu0 %v2772
    %3689 = vmatpush.bf16.msra.mxu0 %v2762
    %3690 = vmatpush.bf16.msra.mxu0 %v2752
    %3691 = vmatpush.bf16.msra.mxu0 %v2742
    %3692 = vmatmul.bf16.gmra.mxu0 %v731
    %v3693 = vpop.f32.mrf.mxu0
    %v3694 = vadd.f32 %v3681, %v3693
    %v3695 = vpop.f32.mrf.mxu0
    %3696 = vdwg.mxu0
    %3697 = vmatpush.bf16.msra.mxu0 %v2892
    %3698 = vmatpush.bf16.msra.mxu0 %v2882
    %3699 = vmatpush.bf16.msra.mxu0 %v2872
    %3700 = vmatpush.bf16.msra.mxu0 %v2862
    %3701 = vmatpush.bf16.msra.mxu0 %v2852
    %3702 = vmatpush.bf16.msra.mxu0 %v2842
    %3703 = vmatpush.bf16.msra.mxu0 %v2832
    %3704 = vmatpush.bf16.msra.mxu0 %v2822
    %3705 = vmatmul.bf16.gmra.mxu0 %v732
    %v3706 = vpop.f32.mrf.mxu0
    %v3707 = vadd.f32 %v3694, %v3706
    %v3708 = vpop.f32.mrf.mxu0
    %3709 = vdwg.mxu0
    %3710 = vmatpush.bf16.msra.mxu0 %v2972
    %3711 = vmatpush.bf16.msra.mxu0 %v2962
    %3712 = vmatpush.bf16.msra.mxu0 %v2952
    %3713 = vmatpush.bf16.msra.mxu0 %v2942
    %3714 = vmatpush.bf16.msra.mxu0 %v2932
    %3715 = vmatpush.bf16.msra.mxu0 %v2922
    %3716 = vmatpush.bf16.msra.mxu0 %v2912
    %3717 = vmatpush.bf16.msra.mxu0 %v2902
    %3718 = vmatmul.bf16.gmra.mxu0 %v733
    %v3719 = vpop.f32.mrf.mxu0
    %v3720 = vadd.f32 %v3707, %v3719
    %v3721 = vpop.f32.mrf.mxu0
    %3722 = vdwg.mxu0
    %3723 = vmatpush.bf16.msra.mxu0 %v2493
    %3724 = vmatpush.bf16.msra.mxu0 %v2483
    %3725 = vmatpush.bf16.msra.mxu0 %v2473
    %3726 = vmatpush.bf16.msra.mxu0 %v2463
    %3727 = vmatpush.bf16.msra.mxu0 %v2453
    %3728 = vmatpush.bf16.msra.mxu0 %v2443
    %3729 = vmatpush.bf16.msra.mxu0 %v2433
    %3730 = vmatpush.bf16.msra.mxu0 %v2423
    %3731 = vmatmul.bf16.gmra.mxu0 %v727
    %v3732 = vpop.f32.mrf.mxu0
    %v3733 = vadd.f32 %v698, %v3732
    %v3734 = vpop.f32.mrf.mxu0
    %3735 = vdwg.mxu0
    %3736 = vmatpush.bf16.msra.mxu0 %v2573
    %3737 = vmatpush.bf16.msra.mxu0 %v2563
    %3738 = vmatpush.bf16.msra.mxu0 %v2553
    %3739 = vmatpush.bf16.msra.mxu0 %v2543
    %3740 = vmatpush.bf16.msra.mxu0 %v2533
    %3741 = vmatpush.bf16.msra.mxu0 %v2523
    %3742 = vmatpush.bf16.msra.mxu0 %v2513
    %3743 = vmatpush.bf16.msra.mxu0 %v2503
    %3744 = vmatmul.bf16.gmra.mxu0 %v728
    %v3745 = vpop.f32.mrf.mxu0
    %v3746 = vadd.f32 %v3733, %v3745
    %v3747 = vpop.f32.mrf.mxu0
    %3748 = vdwg.mxu0
    %3749 = vmatpush.bf16.msra.mxu0 %v2653
    %3750 = vmatpush.bf16.msra.mxu0 %v2643
    %3751 = vmatpush.bf16.msra.mxu0 %v2633
    %3752 = vmatpush.bf16.msra.mxu0 %v2623
    %3753 = vmatpush.bf16.msra.mxu0 %v2613
    %3754 = vmatpush.bf16.msra.mxu0 %v2603
    %3755 = vmatpush.bf16.msra.mxu0 %v2593
    %3756 = vmatpush.bf16.msra.mxu0 %v2583
    %3757 = vmatmul.bf16.gmra.mxu0 %v729
    %v3758 = vpop.f32.mrf.mxu0
    %v3759 = vadd.f32 %v3746, %v3758
    %v3760 = vpop.f32.mrf.mxu0
    %3761 = vdwg.mxu0
    %3762 = vmatpush.bf16.msra.mxu0 %v2733
    %3763 = vmatpush.bf16.msra.mxu0 %v2723
    %3764 = vmatpush.bf16.msra.mxu0 %v2713
    %3765 = vmatpush.bf16.msra.mxu0 %v2703
    %3766 = vmatpush.bf16.msra.mxu0 %v2693
    %3767 = vmatpush.bf16.msra.mxu0 %v2683
    %3768 = vmatpush.bf16.msra.mxu0 %v2673
    %3769 = vmatpush.bf16.msra.mxu0 %v2663
    %3770 = vmatmul.bf16.gmra.mxu0 %v730
    %v3771 = vpop.f32.mrf.mxu0
    %v3772 = vadd.f32 %v3759, %v3771
    %v3773 = vpop.f32.mrf.mxu0
    %3774 = vdwg.mxu0
    %3775 = vmatpush.bf16.msra.mxu0 %v2813
    %3776 = vmatpush.bf16.msra.mxu0 %v2803
    %3777 = vmatpush.bf16.msra.mxu0 %v2793
    %3778 = vmatpush.bf16.msra.mxu0 %v2783
    %3779 = vmatpush.bf16.msra.mxu0 %v2773
    %3780 = vmatpush.bf16.msra.mxu0 %v2763
    %3781 = vmatpush.bf16.msra.mxu0 %v2753
    %3782 = vmatpush.bf16.msra.mxu0 %v2743
    %3783 = vmatmul.bf16.gmra.mxu0 %v731
    %v3784 = vpop.f32.mrf.mxu0
    %v3785 = vadd.f32 %v3772, %v3784
    %v3786 = vpop.f32.mrf.mxu0
    %3787 = vdwg.mxu0
    %3788 = vmatpush.bf16.msra.mxu0 %v2893
    %3789 = vmatpush.bf16.msra.mxu0 %v2883
    %3790 = vmatpush.bf16.msra.mxu0 %v2873
    %3791 = vmatpush.bf16.msra.mxu0 %v2863
    %3792 = vmatpush.bf16.msra.mxu0 %v2853
    %3793 = vmatpush.bf16.msra.mxu0 %v2843
    %3794 = vmatpush.bf16.msra.mxu0 %v2833
    %3795 = vmatpush.bf16.msra.mxu0 %v2823
    %3796 = vmatmul.bf16.gmra.mxu0 %v732
    %v3797 = vpop.f32.mrf.mxu0
    %v3798 = vadd.f32 %v3785, %v3797
    %v3799 = vpop.f32.mrf.mxu0
    %3800 = vdwg.mxu0
    %3801 = vmatpush.bf16.msra.mxu0 %v2973
    %3802 = vmatpush.bf16.msra.mxu0 %v2963
    %3803 = vmatpush.bf16.msra.mxu0 %v2953
    %3804 = vmatpush.bf16.msra.mxu0 %v2943
    %3805 = vmatpush.bf16.msra.mxu0 %v2933
    %3806 = vmatpush.bf16.msra.mxu0 %v2923
    %3807 = vmatpush.bf16.msra.mxu0 %v2913
    %3808 = vmatpush.bf16.msra.mxu0 %v2903
    %3809 = vmatmul.bf16.gmra.mxu0 %v733
    %v3810 = vpop.f32.mrf.mxu0
    %v3811 = vadd.f32 %v3798, %v3810
    %v3812 = vpop.f32.mrf.mxu0
    %3813 = vdwg.mxu0
    %3814 = vmatpush.bf16.msra.mxu0 %v2494
    %3815 = vmatpush.bf16.msra.mxu0 %v2484
    %3816 = vmatpush.bf16.msra.mxu0 %v2474
    %3817 = vmatpush.bf16.msra.mxu0 %v2464
    %3818 = vmatpush.bf16.msra.mxu0 %v2454
    %3819 = vmatpush.bf16.msra.mxu0 %v2444
    %3820 = vmatpush.bf16.msra.mxu0 %v2434
    %3821 = vmatpush.bf16.msra.mxu0 %v2424
    %3822 = vmatmul.bf16.gmra.mxu0 %v727
    %v3823 = vpop.f32.mrf.mxu0
    %v3824 = vadd.f32 %v699, %v3823
    %v3825 = vpop.f32.mrf.mxu0
    %3826 = vdwg.mxu0
    %3827 = vmatpush.bf16.msra.mxu0 %v2574
    %3828 = vmatpush.bf16.msra.mxu0 %v2564
    %3829 = vmatpush.bf16.msra.mxu0 %v2554
    %3830 = vmatpush.bf16.msra.mxu0 %v2544
    %3831 = vmatpush.bf16.msra.mxu0 %v2534
    %3832 = vmatpush.bf16.msra.mxu0 %v2524
    %3833 = vmatpush.bf16.msra.mxu0 %v2514
    %3834 = vmatpush.bf16.msra.mxu0 %v2504
    %3835 = vmatmul.bf16.gmra.mxu0 %v728
    %v3836 = vpop.f32.mrf.mxu0
    %v3837 = vadd.f32 %v3824, %v3836
    %v3838 = vpop.f32.mrf.mxu0
    %3839 = vdwg.mxu0
    %3840 = vmatpush.bf16.msra.mxu0 %v2654
    %3841 = vmatpush.bf16.msra.mxu0 %v2644
    %3842 = vmatpush.bf16.msra.mxu0 %v2634
    %3843 = vmatpush.bf16.msra.mxu0 %v2624
    %3844 = vmatpush.bf16.msra.mxu0 %v2614
    %3845 = vmatpush.bf16.msra.mxu0 %v2604
    %3846 = vmatpush.bf16.msra.mxu0 %v2594
    %3847 = vmatpush.bf16.msra.mxu0 %v2584
    %3848 = vmatmul.bf16.gmra.mxu0 %v729
    %v3849 = vpop.f32.mrf.mxu0
    %v3850 = vadd.f32 %v3837, %v3849
    %v3851 = vpop.f32.mrf.mxu0
    %3852 = vdwg.mxu0
    %3853 = vmatpush.bf16.msra.mxu0 %v2734
    %3854 = vmatpush.bf16.msra.mxu0 %v2724
    %3855 = vmatpush.bf16.msra.mxu0 %v2714
    %3856 = vmatpush.bf16.msra.mxu0 %v2704
    %3857 = vmatpush.bf16.msra.mxu0 %v2694
    %3858 = vmatpush.bf16.msra.mxu0 %v2684
    %3859 = vmatpush.bf16.msra.mxu0 %v2674
    %3860 = vmatpush.bf16.msra.mxu0 %v2664
    %3861 = vmatmul.bf16.gmra.mxu0 %v730
    %v3862 = vpop.f32.mrf.mxu0
    %v3863 = vadd.f32 %v3850, %v3862
    %v3864 = vpop.f32.mrf.mxu0
    %3865 = vdwg.mxu0
    %3866 = vmatpush.bf16.msra.mxu0 %v2814
    %3867 = vmatpush.bf16.msra.mxu0 %v2804
    %3868 = vmatpush.bf16.msra.mxu0 %v2794
    %3869 = vmatpush.bf16.msra.mxu0 %v2784
    %3870 = vmatpush.bf16.msra.mxu0 %v2774
    %3871 = vmatpush.bf16.msra.mxu0 %v2764
    %3872 = vmatpush.bf16.msra.mxu0 %v2754
    %3873 = vmatpush.bf16.msra.mxu0 %v2744
    %3874 = vmatmul.bf16.gmra.mxu0 %v731
    %v3875 = vpop.f32.mrf.mxu0
    %v3876 = vadd.f32 %v3863, %v3875
    %v3877 = vpop.f32.mrf.mxu0
    %3878 = vdwg.mxu0
    %3879 = vmatpush.bf16.msra.mxu0 %v2894
    %3880 = vmatpush.bf16.msra.mxu0 %v2884
    %3881 = vmatpush.bf16.msra.mxu0 %v2874
    %3882 = vmatpush.bf16.msra.mxu0 %v2864
    %3883 = vmatpush.bf16.msra.mxu0 %v2854
    %3884 = vmatpush.bf16.msra.mxu0 %v2844
    %3885 = vmatpush.bf16.msra.mxu0 %v2834
    %3886 = vmatpush.bf16.msra.mxu0 %v2824
    %3887 = vmatmul.bf16.gmra.mxu0 %v732
    %v3888 = vpop.f32.mrf.mxu0
    %v3889 = vadd.f32 %v3876, %v3888
    %v3890 = vpop.f32.mrf.mxu0
    %3891 = vdwg.mxu0
    %3892 = vmatpush.bf16.msra.mxu0 %v2974
    %3893 = vmatpush.bf16.msra.mxu0 %v2964
    %3894 = vmatpush.bf16.msra.mxu0 %v2954
    %3895 = vmatpush.bf16.msra.mxu0 %v2944
    %3896 = vmatpush.bf16.msra.mxu0 %v2934
    %3897 = vmatpush.bf16.msra.mxu0 %v2924
    %3898 = vmatpush.bf16.msra.mxu0 %v2914
    %3899 = vmatpush.bf16.msra.mxu0 %v2904
    %3900 = vmatmul.bf16.gmra.mxu0 %v733
    %v3901 = vpop.f32.mrf.mxu0
    %v3902 = vadd.f32 %v3889, %v3901
    %v3903 = vpop.f32.mrf.mxu0
    %3904 = vdwg.mxu0
    %3905 = vmatpush.bf16.msra.mxu0 %v2495
    %3906 = vmatpush.bf16.msra.mxu0 %v2485
    %3907 = vmatpush.bf16.msra.mxu0 %v2475
    %3908 = vmatpush.bf16.msra.mxu0 %v2465
    %3909 = vmatpush.bf16.msra.mxu0 %v2455
    %3910 = vmatpush.bf16.msra.mxu0 %v2445
    %3911 = vmatpush.bf16.msra.mxu0 %v2435
    %3912 = vmatpush.bf16.msra.mxu0 %v2425
    %3913 = vmatmul.bf16.gmra.mxu0 %v727
    %v3914 = vpop.f32.mrf.mxu0
    %v3915 = vadd.f32 %v700, %v3914
    %v3916 = vpop.f32.mrf.mxu0
    %3917 = vdwg.mxu0
    %3918 = vmatpush.bf16.msra.mxu0 %v2575
    %3919 = vmatpush.bf16.msra.mxu0 %v2565
    %3920 = vmatpush.bf16.msra.mxu0 %v2555
    %3921 = vmatpush.bf16.msra.mxu0 %v2545
    %3922 = vmatpush.bf16.msra.mxu0 %v2535
    %3923 = vmatpush.bf16.msra.mxu0 %v2525
    %3924 = vmatpush.bf16.msra.mxu0 %v2515
    %3925 = vmatpush.bf16.msra.mxu0 %v2505
    %3926 = vmatmul.bf16.gmra.mxu0 %v728
    %v3927 = vpop.f32.mrf.mxu0
    %v3928 = vadd.f32 %v3915, %v3927
    %v3929 = vpop.f32.mrf.mxu0
    %3930 = vdwg.mxu0
    %3931 = vmatpush.bf16.msra.mxu0 %v2655
    %3932 = vmatpush.bf16.msra.mxu0 %v2645
    %3933 = vmatpush.bf16.msra.mxu0 %v2635
    %3934 = vmatpush.bf16.msra.mxu0 %v2625
    %3935 = vmatpush.bf16.msra.mxu0 %v2615
    %3936 = vmatpush.bf16.msra.mxu0 %v2605
    %3937 = vmatpush.bf16.msra.mxu0 %v2595
    %3938 = vmatpush.bf16.msra.mxu0 %v2585
    %3939 = vmatmul.bf16.gmra.mxu0 %v729
    %v3940 = vpop.f32.mrf.mxu0
    %v3941 = vadd.f32 %v3928, %v3940
    %v3942 = vpop.f32.mrf.mxu0
    %3943 = vdwg.mxu0
    %3944 = vmatpush.bf16.msra.mxu0 %v2735
    %3945 = vmatpush.bf16.msra.mxu0 %v2725
    %3946 = vmatpush.bf16.msra.mxu0 %v2715
    %3947 = vmatpush.bf16.msra.mxu0 %v2705
    %3948 = vmatpush.bf16.msra.mxu0 %v2695
    %3949 = vmatpush.bf16.msra.mxu0 %v2685
    %3950 = vmatpush.bf16.msra.mxu0 %v2675
    %3951 = vmatpush.bf16.msra.mxu0 %v2665
    %3952 = vmatmul.bf16.gmra.mxu0 %v730
    %v3953 = vpop.f32.mrf.mxu0
    %v3954 = vadd.f32 %v3941, %v3953
    %v3955 = vpop.f32.mrf.mxu0
    %3956 = vdwg.mxu0
    %3957 = vmatpush.bf16.msra.mxu0 %v2815
    %3958 = vmatpush.bf16.msra.mxu0 %v2805
    %3959 = vmatpush.bf16.msra.mxu0 %v2795
    %3960 = vmatpush.bf16.msra.mxu0 %v2785
    %3961 = vmatpush.bf16.msra.mxu0 %v2775
    %3962 = vmatpush.bf16.msra.mxu0 %v2765
    %3963 = vmatpush.bf16.msra.mxu0 %v2755
    %3964 = vmatpush.bf16.msra.mxu0 %v2745
    %3965 = vmatmul.bf16.gmra.mxu0 %v731
    %v3966 = vpop.f32.mrf.mxu0
    %v3967 = vadd.f32 %v3954, %v3966
    %v3968 = vpop.f32.mrf.mxu0
    %3969 = vdwg.mxu0
    %3970 = vmatpush.bf16.msra.mxu0 %v2895
    %3971 = vmatpush.bf16.msra.mxu0 %v2885
    %3972 = vmatpush.bf16.msra.mxu0 %v2875
    %3973 = vmatpush.bf16.msra.mxu0 %v2865
    %3974 = vmatpush.bf16.msra.mxu0 %v2855
    %3975 = vmatpush.bf16.msra.mxu0 %v2845
    %3976 = vmatpush.bf16.msra.mxu0 %v2835
    %3977 = vmatpush.bf16.msra.mxu0 %v2825
    %3978 = vmatmul.bf16.gmra.mxu0 %v732
    %v3979 = vpop.f32.mrf.mxu0
    %v3980 = vadd.f32 %v3967, %v3979
    %v3981 = vpop.f32.mrf.mxu0
    %3982 = vdwg.mxu0
    %3983 = vmatpush.bf16.msra.mxu0 %v2975
    %3984 = vmatpush.bf16.msra.mxu0 %v2965
    %3985 = vmatpush.bf16.msra.mxu0 %v2955
    %3986 = vmatpush.bf16.msra.mxu0 %v2945
    %3987 = vmatpush.bf16.msra.mxu0 %v2935
    %3988 = vmatpush.bf16.msra.mxu0 %v2925
    %3989 = vmatpush.bf16.msra.mxu0 %v2915
    %3990 = vmatpush.bf16.msra.mxu0 %v2905
    %3991 = vmatmul.bf16.gmra.mxu0 %v733
    %v3992 = vpop.f32.mrf.mxu0
    %v3993 = vadd.f32 %v3980, %v3992
    %v3994 = vpop.f32.mrf.mxu0
    %3995 = vdwg.mxu0
    %3996 = vmatpush.bf16.msra.mxu0 %v2496
    %3997 = vmatpush.bf16.msra.mxu0 %v2486
    %3998 = vmatpush.bf16.msra.mxu0 %v2476
    %3999 = vmatpush.bf16.msra.mxu0 %v2466
    %4000 = vmatpush.bf16.msra.mxu0 %v2456
    %4001 = vmatpush.bf16.msra.mxu0 %v2446
    %4002 = vmatpush.bf16.msra.mxu0 %v2436
    %4003 = vmatpush.bf16.msra.mxu0 %v2426
    %4004 = vmatmul.bf16.gmra.mxu0 %v727
    %v4005 = vpop.f32.mrf.mxu0
    %v4006 = vadd.f32 %v701, %v4005
    %v4007 = vpop.f32.mrf.mxu0
    %4008 = vdwg.mxu0
    %4009 = vmatpush.bf16.msra.mxu0 %v2576
    %4010 = vmatpush.bf16.msra.mxu0 %v2566
    %4011 = vmatpush.bf16.msra.mxu0 %v2556
    %4012 = vmatpush.bf16.msra.mxu0 %v2546
    %4013 = vmatpush.bf16.msra.mxu0 %v2536
    %4014 = vmatpush.bf16.msra.mxu0 %v2526
    %4015 = vmatpush.bf16.msra.mxu0 %v2516
    %4016 = vmatpush.bf16.msra.mxu0 %v2506
    %4017 = vmatmul.bf16.gmra.mxu0 %v728
    %v4018 = vpop.f32.mrf.mxu0
    %v4019 = vadd.f32 %v4006, %v4018
    %v4020 = vpop.f32.mrf.mxu0
    %4021 = vdwg.mxu0
    %4022 = vmatpush.bf16.msra.mxu0 %v2656
    %4023 = vmatpush.bf16.msra.mxu0 %v2646
    %4024 = vmatpush.bf16.msra.mxu0 %v2636
    %4025 = vmatpush.bf16.msra.mxu0 %v2626
    %4026 = vmatpush.bf16.msra.mxu0 %v2616
    %4027 = vmatpush.bf16.msra.mxu0 %v2606
    %4028 = vmatpush.bf16.msra.mxu0 %v2596
    %4029 = vmatpush.bf16.msra.mxu0 %v2586
    %4030 = vmatmul.bf16.gmra.mxu0 %v729
    %v4031 = vpop.f32.mrf.mxu0
    %v4032 = vadd.f32 %v4019, %v4031
    %v4033 = vpop.f32.mrf.mxu0
    %4034 = vdwg.mxu0
    %4035 = vmatpush.bf16.msra.mxu0 %v2736
    %4036 = vmatpush.bf16.msra.mxu0 %v2726
    %4037 = vmatpush.bf16.msra.mxu0 %v2716
    %4038 = vmatpush.bf16.msra.mxu0 %v2706
    %4039 = vmatpush.bf16.msra.mxu0 %v2696
    %4040 = vmatpush.bf16.msra.mxu0 %v2686
    %4041 = vmatpush.bf16.msra.mxu0 %v2676
    %4042 = vmatpush.bf16.msra.mxu0 %v2666
    %4043 = vmatmul.bf16.gmra.mxu0 %v730
    %v4044 = vpop.f32.mrf.mxu0
    %v4045 = vadd.f32 %v4032, %v4044
    %v4046 = vpop.f32.mrf.mxu0
    %4047 = vdwg.mxu0
    %4048 = vmatpush.bf16.msra.mxu0 %v2816
    %4049 = vmatpush.bf16.msra.mxu0 %v2806
    %4050 = vmatpush.bf16.msra.mxu0 %v2796
    %4051 = vmatpush.bf16.msra.mxu0 %v2786
    %4052 = vmatpush.bf16.msra.mxu0 %v2776
    %4053 = vmatpush.bf16.msra.mxu0 %v2766
    %4054 = vmatpush.bf16.msra.mxu0 %v2756
    %4055 = vmatpush.bf16.msra.mxu0 %v2746
    %4056 = vmatmul.bf16.gmra.mxu0 %v731
    %v4057 = vpop.f32.mrf.mxu0
    %v4058 = vadd.f32 %v4045, %v4057
    %v4059 = vpop.f32.mrf.mxu0
    %4060 = vdwg.mxu0
    %4061 = vmatpush.bf16.msra.mxu0 %v2896
    %4062 = vmatpush.bf16.msra.mxu0 %v2886
    %4063 = vmatpush.bf16.msra.mxu0 %v2876
    %4064 = vmatpush.bf16.msra.mxu0 %v2866
    %4065 = vmatpush.bf16.msra.mxu0 %v2856
    %4066 = vmatpush.bf16.msra.mxu0 %v2846
    %4067 = vmatpush.bf16.msra.mxu0 %v2836
    %4068 = vmatpush.bf16.msra.mxu0 %v2826
    %4069 = vmatmul.bf16.gmra.mxu0 %v732
    %v4070 = vpop.f32.mrf.mxu0
    %v4071 = vadd.f32 %v4058, %v4070
    %v4072 = vpop.f32.mrf.mxu0
    %4073 = vdwg.mxu0
    %4074 = vmatpush.bf16.msra.mxu0 %v2976
    %4075 = vmatpush.bf16.msra.mxu0 %v2966
    %4076 = vmatpush.bf16.msra.mxu0 %v2956
    %4077 = vmatpush.bf16.msra.mxu0 %v2946
    %4078 = vmatpush.bf16.msra.mxu0 %v2936
    %4079 = vmatpush.bf16.msra.mxu0 %v2926
    %4080 = vmatpush.bf16.msra.mxu0 %v2916
    %4081 = vmatpush.bf16.msra.mxu0 %v2906
    %4082 = vmatmul.bf16.gmra.mxu0 %v733
    %v4083 = vpop.f32.mrf.mxu0
    %v4084 = vadd.f32 %v4071, %v4083
    %v4085 = vpop.f32.mrf.mxu0
    %4086 = vdwg.mxu0
    %4087 = vmatpush.bf16.msra.mxu0 %v2497
    %4088 = vmatpush.bf16.msra.mxu0 %v2487
    %4089 = vmatpush.bf16.msra.mxu0 %v2477
    %4090 = vmatpush.bf16.msra.mxu0 %v2467
    %4091 = vmatpush.bf16.msra.mxu0 %v2457
    %4092 = vmatpush.bf16.msra.mxu0 %v2447
    %4093 = vmatpush.bf16.msra.mxu0 %v2437
    %4094 = vmatpush.bf16.msra.mxu0 %v2427
    %4095 = vmatmul.bf16.gmra.mxu0 %v727
    %v4096 = vpop.f32.mrf.mxu0
    %v4097 = vadd.f32 %v702, %v4096
    %v4098 = vpop.f32.mrf.mxu0
    %4099 = vdwg.mxu0
    %4100 = vmatpush.bf16.msra.mxu0 %v2577
    %4101 = vmatpush.bf16.msra.mxu0 %v2567
    %4102 = vmatpush.bf16.msra.mxu0 %v2557
    %4103 = vmatpush.bf16.msra.mxu0 %v2547
    %4104 = vmatpush.bf16.msra.mxu0 %v2537
    %4105 = vmatpush.bf16.msra.mxu0 %v2527
    %4106 = vmatpush.bf16.msra.mxu0 %v2517
    %4107 = vmatpush.bf16.msra.mxu0 %v2507
    %4108 = vmatmul.bf16.gmra.mxu0 %v728
    %v4109 = vpop.f32.mrf.mxu0
    %v4110 = vadd.f32 %v4097, %v4109
    %v4111 = vpop.f32.mrf.mxu0
    %4112 = vdwg.mxu0
    %4113 = vmatpush.bf16.msra.mxu0 %v2657
    %4114 = vmatpush.bf16.msra.mxu0 %v2647
    %4115 = vmatpush.bf16.msra.mxu0 %v2637
    %4116 = vmatpush.bf16.msra.mxu0 %v2627
    %4117 = vmatpush.bf16.msra.mxu0 %v2617
    %4118 = vmatpush.bf16.msra.mxu0 %v2607
    %4119 = vmatpush.bf16.msra.mxu0 %v2597
    %4120 = vmatpush.bf16.msra.mxu0 %v2587
    %4121 = vmatmul.bf16.gmra.mxu0 %v729
    %v4122 = vpop.f32.mrf.mxu0
    %v4123 = vadd.f32 %v4110, %v4122
    %v4124 = vpop.f32.mrf.mxu0
    %4125 = vdwg.mxu0
    %4126 = vmatpush.bf16.msra.mxu0 %v2737
    %4127 = vmatpush.bf16.msra.mxu0 %v2727
    %4128 = vmatpush.bf16.msra.mxu0 %v2717
    %4129 = vmatpush.bf16.msra.mxu0 %v2707
    %4130 = vmatpush.bf16.msra.mxu0 %v2697
    %4131 = vmatpush.bf16.msra.mxu0 %v2687
    %4132 = vmatpush.bf16.msra.mxu0 %v2677
    %4133 = vmatpush.bf16.msra.mxu0 %v2667
    %4134 = vmatmul.bf16.gmra.mxu0 %v730
    %v4135 = vpop.f32.mrf.mxu0
    %v4136 = vadd.f32 %v4123, %v4135
    %v4137 = vpop.f32.mrf.mxu0
    %4138 = vdwg.mxu0
    %4139 = vmatpush.bf16.msra.mxu0 %v2817
    %4140 = vmatpush.bf16.msra.mxu0 %v2807
    %4141 = vmatpush.bf16.msra.mxu0 %v2797
    %4142 = vmatpush.bf16.msra.mxu0 %v2787
    %4143 = vmatpush.bf16.msra.mxu0 %v2777
    %4144 = vmatpush.bf16.msra.mxu0 %v2767
    %4145 = vmatpush.bf16.msra.mxu0 %v2757
    %4146 = vmatpush.bf16.msra.mxu0 %v2747
    %4147 = vmatmul.bf16.gmra.mxu0 %v731
    %v4148 = vpop.f32.mrf.mxu0
    %v4149 = vadd.f32 %v4136, %v4148
    %v4150 = vpop.f32.mrf.mxu0
    %4151 = vdwg.mxu0
    %4152 = vmatpush.bf16.msra.mxu0 %v2897
    %4153 = vmatpush.bf16.msra.mxu0 %v2887
    %4154 = vmatpush.bf16.msra.mxu0 %v2877
    %4155 = vmatpush.bf16.msra.mxu0 %v2867
    %4156 = vmatpush.bf16.msra.mxu0 %v2857
    %4157 = vmatpush.bf16.msra.mxu0 %v2847
    %4158 = vmatpush.bf16.msra.mxu0 %v2837
    %4159 = vmatpush.bf16.msra.mxu0 %v2827
    %4160 = vmatmul.bf16.gmra.mxu0 %v732
    %v4161 = vpop.f32.mrf.mxu0
    %v4162 = vadd.f32 %v4149, %v4161
    %v4163 = vpop.f32.mrf.mxu0
    %4164 = vdwg.mxu0
    %4165 = vmatpush.bf16.msra.mxu0 %v2977
    %4166 = vmatpush.bf16.msra.mxu0 %v2967
    %4167 = vmatpush.bf16.msra.mxu0 %v2957
    %4168 = vmatpush.bf16.msra.mxu0 %v2947
    %4169 = vmatpush.bf16.msra.mxu0 %v2937
    %4170 = vmatpush.bf16.msra.mxu0 %v2927
    %4171 = vmatpush.bf16.msra.mxu0 %v2917
    %4172 = vmatpush.bf16.msra.mxu0 %v2907
    %4173 = vmatmul.bf16.gmra.mxu0 %v733
    %v4174 = vpop.f32.mrf.mxu0
    %v4175 = vadd.f32 %v4162, %v4174
    %v4176 = vpop.f32.mrf.mxu0
    %4177 = vdwg.mxu0
    %4178 = vmatpush.bf16.msra.mxu0 %v2498
    %4179 = vmatpush.bf16.msra.mxu0 %v2488
    %4180 = vmatpush.bf16.msra.mxu0 %v2478
    %4181 = vmatpush.bf16.msra.mxu0 %v2468
    %4182 = vmatpush.bf16.msra.mxu0 %v2458
    %4183 = vmatpush.bf16.msra.mxu0 %v2448
    %4184 = vmatpush.bf16.msra.mxu0 %v2438
    %4185 = vmatpush.bf16.msra.mxu0 %v2428
    %4186 = vmatmul.bf16.gmra.mxu0 %v727
    %v4187 = vpop.f32.mrf.mxu0
    %v4188 = vadd.f32 %v703, %v4187
    %v4189 = vpop.f32.mrf.mxu0
    %4190 = vdwg.mxu0
    %4191 = vmatpush.bf16.msra.mxu0 %v2578
    %4192 = vmatpush.bf16.msra.mxu0 %v2568
    %4193 = vmatpush.bf16.msra.mxu0 %v2558
    %4194 = vmatpush.bf16.msra.mxu0 %v2548
    %4195 = vmatpush.bf16.msra.mxu0 %v2538
    %4196 = vmatpush.bf16.msra.mxu0 %v2528
    %4197 = vmatpush.bf16.msra.mxu0 %v2518
    %4198 = vmatpush.bf16.msra.mxu0 %v2508
    %4199 = vmatmul.bf16.gmra.mxu0 %v728
    %v4200 = vpop.f32.mrf.mxu0
    %v4201 = vadd.f32 %v4188, %v4200
    %v4202 = vpop.f32.mrf.mxu0
    %4203 = vdwg.mxu0
    %4204 = vmatpush.bf16.msra.mxu0 %v2658
    %4205 = vmatpush.bf16.msra.mxu0 %v2648
    %4206 = vmatpush.bf16.msra.mxu0 %v2638
    %4207 = vmatpush.bf16.msra.mxu0 %v2628
    %4208 = vmatpush.bf16.msra.mxu0 %v2618
    %4209 = vmatpush.bf16.msra.mxu0 %v2608
    %4210 = vmatpush.bf16.msra.mxu0 %v2598
    %4211 = vmatpush.bf16.msra.mxu0 %v2588
    %4212 = vmatmul.bf16.gmra.mxu0 %v729
    %v4213 = vpop.f32.mrf.mxu0
    %v4214 = vadd.f32 %v4201, %v4213
    %v4215 = vpop.f32.mrf.mxu0
    %4216 = vdwg.mxu0
    %4217 = vmatpush.bf16.msra.mxu0 %v2738
    %4218 = vmatpush.bf16.msra.mxu0 %v2728
    %4219 = vmatpush.bf16.msra.mxu0 %v2718
    %4220 = vmatpush.bf16.msra.mxu0 %v2708
    %4221 = vmatpush.bf16.msra.mxu0 %v2698
    %4222 = vmatpush.bf16.msra.mxu0 %v2688
    %4223 = vmatpush.bf16.msra.mxu0 %v2678
    %4224 = vmatpush.bf16.msra.mxu0 %v2668
    %4225 = vmatmul.bf16.gmra.mxu0 %v730
    %v4226 = vpop.f32.mrf.mxu0
    %v4227 = vadd.f32 %v4214, %v4226
    %v4228 = vpop.f32.mrf.mxu0
    %4229 = vdwg.mxu0
    %4230 = vmatpush.bf16.msra.mxu0 %v2818
    %4231 = vmatpush.bf16.msra.mxu0 %v2808
    %4232 = vmatpush.bf16.msra.mxu0 %v2798
    %4233 = vmatpush.bf16.msra.mxu0 %v2788
    %4234 = vmatpush.bf16.msra.mxu0 %v2778
    %4235 = vmatpush.bf16.msra.mxu0 %v2768
    %4236 = vmatpush.bf16.msra.mxu0 %v2758
    %4237 = vmatpush.bf16.msra.mxu0 %v2748
    %4238 = vmatmul.bf16.gmra.mxu0 %v731
    %v4239 = vpop.f32.mrf.mxu0
    %v4240 = vadd.f32 %v4227, %v4239
    %v4241 = vpop.f32.mrf.mxu0
    %4242 = vdwg.mxu0
    %4243 = vmatpush.bf16.msra.mxu0 %v2898
    %4244 = vmatpush.bf16.msra.mxu0 %v2888
    %4245 = vmatpush.bf16.msra.mxu0 %v2878
    %4246 = vmatpush.bf16.msra.mxu0 %v2868
    %4247 = vmatpush.bf16.msra.mxu0 %v2858
    %4248 = vmatpush.bf16.msra.mxu0 %v2848
    %4249 = vmatpush.bf16.msra.mxu0 %v2838
    %4250 = vmatpush.bf16.msra.mxu0 %v2828
    %4251 = vmatmul.bf16.gmra.mxu0 %v732
    %v4252 = vpop.f32.mrf.mxu0
    %v4253 = vadd.f32 %v4240, %v4252
    %v4254 = vpop.f32.mrf.mxu0
    %4255 = vdwg.mxu0
    %4256 = vmatpush.bf16.msra.mxu0 %v2978
    %4257 = vmatpush.bf16.msra.mxu0 %v2968
    %4258 = vmatpush.bf16.msra.mxu0 %v2958
    %4259 = vmatpush.bf16.msra.mxu0 %v2948
    %4260 = vmatpush.bf16.msra.mxu0 %v2938
    %4261 = vmatpush.bf16.msra.mxu0 %v2928
    %4262 = vmatpush.bf16.msra.mxu0 %v2918
    %4263 = vmatpush.bf16.msra.mxu0 %v2908
    %4264 = vmatmul.bf16.gmra.mxu0 %v733
    %v4265 = vpop.f32.mrf.mxu0
    %v4266 = vadd.f32 %v4253, %v4265
    %v4267 = vpop.f32.mrf.mxu0
    %4268 = vdwg.mxu0
    %4269 = vmatpush.bf16.msra.mxu0 %v2499
    %4270 = vmatpush.bf16.msra.mxu0 %v2489
    %4271 = vmatpush.bf16.msra.mxu0 %v2479
    %4272 = vmatpush.bf16.msra.mxu0 %v2469
    %4273 = vmatpush.bf16.msra.mxu0 %v2459
    %4274 = vmatpush.bf16.msra.mxu0 %v2449
    %4275 = vmatpush.bf16.msra.mxu0 %v2439
    %4276 = vmatpush.bf16.msra.mxu0 %v2429
    %4277 = vmatmul.bf16.gmra.mxu0 %v727
    %v4278 = vpop.f32.mrf.mxu0
    %v4279 = vadd.f32 %v704, %v4278
    %v4280 = vpop.f32.mrf.mxu0
    %4281 = vdwg.mxu0
    %4282 = vmatpush.bf16.msra.mxu0 %v2579
    %4283 = vmatpush.bf16.msra.mxu0 %v2569
    %4284 = vmatpush.bf16.msra.mxu0 %v2559
    %4285 = vmatpush.bf16.msra.mxu0 %v2549
    %4286 = vmatpush.bf16.msra.mxu0 %v2539
    %4287 = vmatpush.bf16.msra.mxu0 %v2529
    %4288 = vmatpush.bf16.msra.mxu0 %v2519
    %4289 = vmatpush.bf16.msra.mxu0 %v2509
    %4290 = vmatmul.bf16.gmra.mxu0 %v728
    %v4291 = vpop.f32.mrf.mxu0
    %v4292 = vadd.f32 %v4279, %v4291
    %v4293 = vpop.f32.mrf.mxu0
    %4294 = vdwg.mxu0
    %4295 = vmatpush.bf16.msra.mxu0 %v2659
    %4296 = vmatpush.bf16.msra.mxu0 %v2649
    %4297 = vmatpush.bf16.msra.mxu0 %v2639
    %4298 = vmatpush.bf16.msra.mxu0 %v2629
    %4299 = vmatpush.bf16.msra.mxu0 %v2619
    %4300 = vmatpush.bf16.msra.mxu0 %v2609
    %4301 = vmatpush.bf16.msra.mxu0 %v2599
    %4302 = vmatpush.bf16.msra.mxu0 %v2589
    %4303 = vmatmul.bf16.gmra.mxu0 %v729
    %v4304 = vpop.f32.mrf.mxu0
    %v4305 = vadd.f32 %v4292, %v4304
    %v4306 = vpop.f32.mrf.mxu0
    %4307 = vdwg.mxu0
    %4308 = vmatpush.bf16.msra.mxu0 %v2739
    %4309 = vmatpush.bf16.msra.mxu0 %v2729
    %4310 = vmatpush.bf16.msra.mxu0 %v2719
    %4311 = vmatpush.bf16.msra.mxu0 %v2709
    %4312 = vmatpush.bf16.msra.mxu0 %v2699
    %4313 = vmatpush.bf16.msra.mxu0 %v2689
    %4314 = vmatpush.bf16.msra.mxu0 %v2679
    %4315 = vmatpush.bf16.msra.mxu0 %v2669
    %4316 = vmatmul.bf16.gmra.mxu0 %v730
    %v4317 = vpop.f32.mrf.mxu0
    %v4318 = vadd.f32 %v4305, %v4317
    %v4319 = vpop.f32.mrf.mxu0
    %4320 = vdwg.mxu0
    %4321 = vmatpush.bf16.msra.mxu0 %v2819
    %4322 = vmatpush.bf16.msra.mxu0 %v2809
    %4323 = vmatpush.bf16.msra.mxu0 %v2799
    %4324 = vmatpush.bf16.msra.mxu0 %v2789
    %4325 = vmatpush.bf16.msra.mxu0 %v2779
    %4326 = vmatpush.bf16.msra.mxu0 %v2769
    %4327 = vmatpush.bf16.msra.mxu0 %v2759
    %4328 = vmatpush.bf16.msra.mxu0 %v2749
    %4329 = vmatmul.bf16.gmra.mxu0 %v731
    %v4330 = vpop.f32.mrf.mxu0
    %v4331 = vadd.f32 %v4318, %v4330
    %v4332 = vpop.f32.mrf.mxu0
    %4333 = vdwg.mxu0
    %4334 = vmatpush.bf16.msra.mxu0 %v2899
    %4335 = vmatpush.bf16.msra.mxu0 %v2889
    %4336 = vmatpush.bf16.msra.mxu0 %v2879
    %4337 = vmatpush.bf16.msra.mxu0 %v2869
    %4338 = vmatpush.bf16.msra.mxu0 %v2859
    %4339 = vmatpush.bf16.msra.mxu0 %v2849
    %4340 = vmatpush.bf16.msra.mxu0 %v2839
    %4341 = vmatpush.bf16.msra.mxu0 %v2829
    %4342 = vmatmul.bf16.gmra.mxu0 %v732
    %v4343 = vpop.f32.mrf.mxu0
    %v4344 = vadd.f32 %v4331, %v4343
    %v4345 = vpop.f32.mrf.mxu0
    %4346 = vdwg.mxu0
    %4347 = vmatpush.bf16.msra.mxu0 %v2979
    %4348 = vmatpush.bf16.msra.mxu0 %v2969
    %4349 = vmatpush.bf16.msra.mxu0 %v2959
    %4350 = vmatpush.bf16.msra.mxu0 %v2949
    %4351 = vmatpush.bf16.msra.mxu0 %v2939
    %4352 = vmatpush.bf16.msra.mxu0 %v2929
    %4353 = vmatpush.bf16.msra.mxu0 %v2919
    %4354 = vmatpush.bf16.msra.mxu0 %v2909
    %4355 = vmatmul.bf16.gmra.mxu0 %v733
    %v4356 = vpop.f32.mrf.mxu0
    %v4357 = vadd.f32 %v4344, %v4356
    %v4358 = vpop.f32.mrf.mxu0
    %4359 = vdwg.mxu0
    %4360 = vmatpush.bf16.msra.mxu0 %v2500
    %4361 = vmatpush.bf16.msra.mxu0 %v2490
    %4362 = vmatpush.bf16.msra.mxu0 %v2480
    %4363 = vmatpush.bf16.msra.mxu0 %v2470
    %4364 = vmatpush.bf16.msra.mxu0 %v2460
    %4365 = vmatpush.bf16.msra.mxu0 %v2450
    %4366 = vmatpush.bf16.msra.mxu0 %v2440
    %4367 = vmatpush.bf16.msra.mxu0 %v2430
    %4368 = vmatmul.bf16.gmra.mxu0 %v727
    %v4369 = vpop.f32.mrf.mxu0
    %v4370 = vadd.f32 %v705, %v4369
    %v4371 = vpop.f32.mrf.mxu0
    %4372 = vdwg.mxu0
    %4373 = vmatpush.bf16.msra.mxu0 %v2580
    %4374 = vmatpush.bf16.msra.mxu0 %v2570
    %4375 = vmatpush.bf16.msra.mxu0 %v2560
    %4376 = vmatpush.bf16.msra.mxu0 %v2550
    %4377 = vmatpush.bf16.msra.mxu0 %v2540
    %4378 = vmatpush.bf16.msra.mxu0 %v2530
    %4379 = vmatpush.bf16.msra.mxu0 %v2520
    %4380 = vmatpush.bf16.msra.mxu0 %v2510
    %4381 = vmatmul.bf16.gmra.mxu0 %v728
    %v4382 = vpop.f32.mrf.mxu0
    %v4383 = vadd.f32 %v4370, %v4382
    %v4384 = vpop.f32.mrf.mxu0
    %4385 = vdwg.mxu0
    %4386 = vmatpush.bf16.msra.mxu0 %v2660
    %4387 = vmatpush.bf16.msra.mxu0 %v2650
    %4388 = vmatpush.bf16.msra.mxu0 %v2640
    %4389 = vmatpush.bf16.msra.mxu0 %v2630
    %4390 = vmatpush.bf16.msra.mxu0 %v2620
    %4391 = vmatpush.bf16.msra.mxu0 %v2610
    %4392 = vmatpush.bf16.msra.mxu0 %v2600
    %4393 = vmatpush.bf16.msra.mxu0 %v2590
    %4394 = vmatmul.bf16.gmra.mxu0 %v729
    %v4395 = vpop.f32.mrf.mxu0
    %v4396 = vadd.f32 %v4383, %v4395
    %v4397 = vpop.f32.mrf.mxu0
    %4398 = vdwg.mxu0
    %4399 = vmatpush.bf16.msra.mxu0 %v2740
    %4400 = vmatpush.bf16.msra.mxu0 %v2730
    %4401 = vmatpush.bf16.msra.mxu0 %v2720
    %4402 = vmatpush.bf16.msra.mxu0 %v2710
    %4403 = vmatpush.bf16.msra.mxu0 %v2700
    %4404 = vmatpush.bf16.msra.mxu0 %v2690
    %4405 = vmatpush.bf16.msra.mxu0 %v2680
    %4406 = vmatpush.bf16.msra.mxu0 %v2670
    %4407 = vmatmul.bf16.gmra.mxu0 %v730
    %v4408 = vpop.f32.mrf.mxu0
    %v4409 = vadd.f32 %v4396, %v4408
    %v4410 = vpop.f32.mrf.mxu0
    %4411 = vdwg.mxu0
    %4412 = vmatpush.bf16.msra.mxu0 %v2820
    %4413 = vmatpush.bf16.msra.mxu0 %v2810
    %4414 = vmatpush.bf16.msra.mxu0 %v2800
    %4415 = vmatpush.bf16.msra.mxu0 %v2790
    %4416 = vmatpush.bf16.msra.mxu0 %v2780
    %4417 = vmatpush.bf16.msra.mxu0 %v2770
    %4418 = vmatpush.bf16.msra.mxu0 %v2760
    %4419 = vmatpush.bf16.msra.mxu0 %v2750
    %4420 = vmatmul.bf16.gmra.mxu0 %v731
    %v4421 = vpop.f32.mrf.mxu0
    %v4422 = vadd.f32 %v4409, %v4421
    %v4423 = vpop.f32.mrf.mxu0
    %4424 = vdwg.mxu0
    %4425 = vmatpush.bf16.msra.mxu0 %v2900
    %4426 = vmatpush.bf16.msra.mxu0 %v2890
    %4427 = vmatpush.bf16.msra.mxu0 %v2880
    %4428 = vmatpush.bf16.msra.mxu0 %v2870
    %4429 = vmatpush.bf16.msra.mxu0 %v2860
    %4430 = vmatpush.bf16.msra.mxu0 %v2850
    %4431 = vmatpush.bf16.msra.mxu0 %v2840
    %4432 = vmatpush.bf16.msra.mxu0 %v2830
    %4433 = vmatmul.bf16.gmra.mxu0 %v732
    %v4434 = vpop.f32.mrf.mxu0
    %v4435 = vadd.f32 %v4422, %v4434
    %v4436 = vpop.f32.mrf.mxu0
    %4437 = vdwg.mxu0
    %4438 = vmatpush.bf16.msra.mxu0 %v2980
    %4439 = vmatpush.bf16.msra.mxu0 %v2970
    %4440 = vmatpush.bf16.msra.mxu0 %v2960
    %4441 = vmatpush.bf16.msra.mxu0 %v2950
    %4442 = vmatpush.bf16.msra.mxu0 %v2940
    %4443 = vmatpush.bf16.msra.mxu0 %v2930
    %4444 = vmatpush.bf16.msra.mxu0 %v2920
    %4445 = vmatpush.bf16.msra.mxu0 %v2910
    %4446 = vmatmul.bf16.gmra.mxu0 %v733
    %v4447 = vpop.f32.mrf.mxu0
    %v4448 = vadd.f32 %v4435, %v4447
    %v4449 = vpop.f32.mrf.mxu0
    %4450 = vdwg.mxu0
    %v4451 = vmax.f32 %v3629, 0.0
    %v4452 = vmax.f32 %v3720, 0.0
    %v4453 = vmax.f32 %v3811, 0.0
    %v4454 = vmax.f32 %v3902, 0.0
    %v4455 = vmax.f32 %v3993, 0.0
    %v4456 = vmax.f32 %v4084, 0.0
    %v4457 = vmax.f32 %v4175, 0.0
    %v4458 = vmax.f32 %v4266, 0.0
    %v4459 = vmax.f32 %v4357, 0.0
    %v4460 = vmax.f32 %v4448, 0.0
    %v4461 = vpack.c.bf16 %v4451, %v4451
    %v4462 = vpack.c.bf16 %v4452, %v4452
    %v4463 = vpack.c.bf16 %v4453, %v4453
    %v4464 = vpack.c.bf16 %v4454, %v4454
    %v4465 = vpack.c.bf16 %v4455, %v4455
    %v4466 = vpack.c.bf16 %v4456, %v4456
    %v4467 = vpack.c.bf16 %v4457, %v4457
    %v4468 = vpack.c.bf16 %v4458, %v4458
    %v4469 = vpack.c.bf16 %v4459, %v4459
    %v4470 = vpack.c.bf16 %v4460, %v4460
    %v4471 = vld [vmem:[#allocation8] sm:$0xff]
    %v4472 = vld [vmem:[#allocation8 + $0x8] sm:$0xff]
    %v4473 = vld [vmem:[#allocation8 + $0x10] sm:$0xff]
    %v4474 = vld [vmem:[#allocation8 + $0x18] sm:$0xff]
    %v4475 = vld [vmem:[#allocation8 + $0x20] sm:$0xff]
    %v4476 = vld [vmem:[#allocation8 + $0x28] sm:$0xff]
    %v4477 = vld [vmem:[#allocation8 + $0x30] sm:$0xff]
    %v4478 = vld [vmem:[#allocation8 + $0x38] sm:$0xff]
    %v4479 = vld [vmem:[#allocation8 + $0x40] sm:$0xff]
    %v4480 = vld [vmem:[#allocation8 + $0x48] sm:$0xff]
    %v4481 = vld [vmem:[#allocation8 + $0x50] sm:$0xff]
    %v4482 = vld [vmem:[#allocation8 + $0x58] sm:$0xff]
    %v4483 = vld [vmem:[#allocation8 + $0x60] sm:$0xff]
    %v4484 = vld [vmem:[#allocation8 + $0x68] sm:$0xff]
    %v4485 = vld [vmem:[#allocation8 + $0x70] sm:$0xff]
    %v4486 = vld [vmem:[#allocation8 + $0x78] sm:$0xff]
    %v4487 = vld [vmem:[#allocation8 + $0x80] sm:$0xff]
    %v4488 = vld [vmem:[#allocation8 + $0x88] sm:$0xff]
    %v4489 = vld [vmem:[#allocation8 + $0x90] sm:$0xff]
    %v4490 = vld [vmem:[#allocation8 + $0x98] sm:$0xff]
    %v4491 = vld [vmem:[#allocation8 + $0xa0] sm:$0xff]
    %v4492 = vld [vmem:[#allocation8 + $0xa8] sm:$0xff]
    %v4493 = vld [vmem:[#allocation8 + $0xb0] sm:$0xff]
    %v4494 = vld [vmem:[#allocation8 + $0xb8] sm:$0xff]
    %v4495 = vld [vmem:[#allocation8 + $0xc0] sm:$0xff]
    %v4496 = vld [vmem:[#allocation8 + $0xc8] sm:$0xff]
    %v4497 = vld [vmem:[#allocation8 + $0xd0] sm:$0xff]
    %v4498 = vld [vmem:[#allocation8 + $0xd8] sm:$0xff]
    %v4499 = vld [vmem:[#allocation8 + $0xe0] sm:$0xff]
    %v4500 = vld [vmem:[#allocation8 + $0xe8] sm:$0xff]
    %v4501 = vld [vmem:[#allocation8 + $0xf0] sm:$0xff]
    %v4502 = vld [vmem:[#allocation8 + $0xf8] sm:$0xff]
    %v4503 = vld [vmem:[#allocation8 + $0x100] sm:$0xff]
    %v4504 = vld [vmem:[#allocation8 + $0x108] sm:$0xff]
    %v4505 = vld [vmem:[#allocation8 + $0x110] sm:$0xff]
    %v4506 = vld [vmem:[#allocation8 + $0x118] sm:$0xff]
    %v4507 = vld [vmem:[#allocation8 + $0x120] sm:$0xff]
    %v4508 = vld [vmem:[#allocation8 + $0x128] sm:$0xff]
    %v4509 = vld [vmem:[#allocation8 + $0x130] sm:$0xff]
    %v4510 = vld [vmem:[#allocation8 + $0x138] sm:$0xff]
    %v4511 = vld [vmem:[#allocation8 + $0x140] sm:$0xff]
    %v4512 = vld [vmem:[#allocation8 + $0x148] sm:$0xff]
    %v4513 = vld [vmem:[#allocation8 + $0x150] sm:$0xff]
    %v4514 = vld [vmem:[#allocation8 + $0x158] sm:$0xff]
    %v4515 = vld [vmem:[#allocation8 + $0x160] sm:$0xff]
    %v4516 = vld [vmem:[#allocation8 + $0x168] sm:$0xff]
    %v4517 = vld [vmem:[#allocation8 + $0x170] sm:$0xff]
    %v4518 = vld [vmem:[#allocation8 + $0x178] sm:$0xff]
    %v4519 = vld [vmem:[#allocation8 + $0x180] sm:$0xff]
    %v4520 = vld [vmem:[#allocation8 + $0x188] sm:$0xff]
    %v4521 = vld [vmem:[#allocation8 + $0x190] sm:$0xff]
    %v4522 = vld [vmem:[#allocation8 + $0x198] sm:$0xff]
    %v4523 = vld [vmem:[#allocation8 + $0x1a0] sm:$0xff]
    %v4524 = vld [vmem:[#allocation8 + $0x1a8] sm:$0xff]
    %v4525 = vld [vmem:[#allocation8 + $0x1b0] sm:$0xff]
    %v4526 = vld [vmem:[#allocation8 + $0x1b8] sm:$0xff]
    %v4527 = vld [vmem:[#allocation8 + $0x1c0] sm:$0xff]
    %v4528 = vld [vmem:[#allocation8 + $0x1c8] sm:$0xff]
    %v4529 = vld [vmem:[#allocation8 + $0x1d0] sm:$0xff]
    %v4530 = vld [vmem:[#allocation8 + $0x1d8] sm:$0xff]
    %v4531 = vld [vmem:[#allocation8 + $0x1e0] sm:$0xff]
    %v4532 = vld [vmem:[#allocation8 + $0x1e8] sm:$0xff]
    %v4533 = vld [vmem:[#allocation8 + $0x1f0] sm:$0xff]
    %v4534 = vld [vmem:[#allocation8 + $0x1f8] sm:$0xff]
    %v4535 = vld [vmem:[#allocation8 + $0x200] sm:$0xff]
    %v4536 = vld [vmem:[#allocation8 + $0x208] sm:$0xff]
    %v4537 = vld [vmem:[#allocation8 + $0x210] sm:$0xff]
    %v4538 = vld [vmem:[#allocation8 + $0x218] sm:$0xff]
    %v4539 = vld [vmem:[#allocation8 + $0x220] sm:$0xff]
    %v4540 = vld [vmem:[#allocation8 + $0x228] sm:$0xff]
    %v4541 = vld [vmem:[#allocation8 + $0x230] sm:$0xff]
    %v4542 = vld [vmem:[#allocation8 + $0x238] sm:$0xff]
    %v4543 = vld [vmem:[#allocation8 + $0x240] sm:$0xff]
    %v4544 = vld [vmem:[#allocation8 + $0x248] sm:$0xff]
    %v4545 = vld [vmem:[#allocation8 + $0x250] sm:$0xff]
    %v4546 = vld [vmem:[#allocation8 + $0x258] sm:$0xff]
    %v4547 = vld [vmem:[#allocation8 + $0x260] sm:$0xff]
    %v4548 = vld [vmem:[#allocation8 + $0x268] sm:$0xff]
    %v4549 = vld [vmem:[#allocation8 + $0x270] sm:$0xff]
    %v4550 = vld [vmem:[#allocation8 + $0x278] sm:$0xff]
    %v4551 = vld [vmem:[#allocation8 + $0x280] sm:$0xff]
    %v4552 = vld [vmem:[#allocation8 + $0x288] sm:$0xff]
    %v4553 = vld [vmem:[#allocation8 + $0x290] sm:$0xff]
    %v4554 = vld [vmem:[#allocation8 + $0x298] sm:$0xff]
    %v4555 = vld [vmem:[#allocation8 + $0x2a0] sm:$0xff]
    %v4556 = vld [vmem:[#allocation8 + $0x2a8] sm:$0xff]
    %v4557 = vld [vmem:[#allocation8 + $0x2b0] sm:$0xff]
    %v4558 = vld [vmem:[#allocation8 + $0x2b8] sm:$0xff]
    %v4559 = vld [vmem:[#allocation8 + $0x2c0] sm:$0xff]
    %v4560 = vld [vmem:[#allocation8 + $0x2c8] sm:$0xff]
    %v4561 = vld [vmem:[#allocation8 + $0x2d0] sm:$0xff]
    %v4562 = vld [vmem:[#allocation8 + $0x2d8] sm:$0xff]
    %v4563 = vld [vmem:[#allocation8 + $0x2e0] sm:$0xff]
    %v4564 = vld [vmem:[#allocation8 + $0x2e8] sm:$0xff]
    %v4565 = vld [vmem:[#allocation8 + $0x2f0] sm:$0xff]
    %v4566 = vld [vmem:[#allocation8 + $0x2f8] sm:$0xff]
    %v4567 = vld [vmem:[#allocation8 + $0x300] sm:$0xff]
    %v4568 = vld [vmem:[#allocation8 + $0x308] sm:$0xff]
    %v4569 = vld [vmem:[#allocation8 + $0x310] sm:$0xff]
    %v4570 = vld [vmem:[#allocation8 + $0x318] sm:$0xff]
    %v4571 = vld [vmem:[#allocation8 + $0x320] sm:$0xff]
    %v4572 = vld [vmem:[#allocation8 + $0x328] sm:$0xff]
    %v4573 = vld [vmem:[#allocation8 + $0x330] sm:$0xff]
    %v4574 = vld [vmem:[#allocation8 + $0x338] sm:$0xff]
    %v4575 = vld [vmem:[#allocation8 + $0x340] sm:$0xff]
    %v4576 = vld [vmem:[#allocation8 + $0x348] sm:$0xff]
    %v4577 = vld [vmem:[#allocation8 + $0x350] sm:$0xff]
    %v4578 = vld [vmem:[#allocation8 + $0x358] sm:$0xff]
    %v4579 = vld [vmem:[#allocation8 + $0x360] sm:$0xff]
    %v4580 = vld [vmem:[#allocation8 + $0x368] sm:$0xff]
    %v4581 = vld [vmem:[#allocation8 + $0x370] sm:$0xff]
    %v4582 = vld [vmem:[#allocation8 + $0x378] sm:$0xff]
    %v4583 = vld [vmem:[#allocation8 + $0x380] sm:$0xff]
    %v4584 = vld [vmem:[#allocation8 + $0x388] sm:$0xff]
    %v4585 = vld [vmem:[#allocation8 + $0x390] sm:$0xff]
    %v4586 = vld [vmem:[#allocation8 + $0x398] sm:$0xff]
    %v4587 = vld [vmem:[#allocation8 + $0x3a0] sm:$0xff]
    %v4588 = vld [vmem:[#allocation8 + $0x3a8] sm:$0xff]
    %v4589 = vld [vmem:[#allocation8 + $0x3b0] sm:$0xff]
    %v4590 = vld [vmem:[#allocation8 + $0x3b8] sm:$0xff]
    %v4591 = vld [vmem:[#allocation8 + $0x3c0] sm:$0xff]
    %v4592 = vld [vmem:[#allocation8 + $0x3c8] sm:$0xff]
    %v4593 = vld [vmem:[#allocation8 + $0x3d0] sm:$0xff]
    %v4594 = vld [vmem:[#allocation8 + $0x3d8] sm:$0xff]
    %v4595 = vld [vmem:[#allocation8 + $0x3e0] sm:$0xff]
    %v4596 = vld [vmem:[#allocation8 + $0x3e8] sm:$0xff]
    %v4597 = vld [vmem:[#allocation8 + $0x3f0] sm:$0xff]
    %v4598 = vld [vmem:[#allocation8 + $0x3f8] sm:$0xff]
    %v4599 = vld [vmem:[#allocation8 + $0x400] sm:$0xff]
    %v4600 = vld [vmem:[#allocation8 + $0x408] sm:$0xff]
    %v4601 = vld [vmem:[#allocation8 + $0x410] sm:$0xff]
    %v4602 = vld [vmem:[#allocation8 + $0x418] sm:$0xff]
    %v4603 = vld [vmem:[#allocation8 + $0x420] sm:$0xff]
    %v4604 = vld [vmem:[#allocation8 + $0x428] sm:$0xff]
    %v4605 = vld [vmem:[#allocation8 + $0x430] sm:$0xff]
    %v4606 = vld [vmem:[#allocation8 + $0x438] sm:$0xff]
    %v4607 = vld [vmem:[#allocation8 + $0x440] sm:$0xff]
    %v4608 = vld [vmem:[#allocation8 + $0x448] sm:$0xff]
    %v4609 = vld [vmem:[#allocation8 + $0x450] sm:$0xff]
    %v4610 = vld [vmem:[#allocation8 + $0x458] sm:$0xff]
    %v4611 = vld [vmem:[#allocation8 + $0x460] sm:$0xff]
    %v4612 = vld [vmem:[#allocation8 + $0x468] sm:$0xff]
    %v4613 = vld [vmem:[#allocation8 + $0x470] sm:$0xff]
    %v4614 = vld [vmem:[#allocation8 + $0x478] sm:$0xff]
    %v4615 = vld [vmem:[#allocation8 + $0x480] sm:$0xff]
    %v4616 = vld [vmem:[#allocation8 + $0x488] sm:$0xff]
    %v4617 = vld [vmem:[#allocation8 + $0x490] sm:$0xff]
    %v4618 = vld [vmem:[#allocation8 + $0x498] sm:$0xff]
    %v4619 = vld [vmem:[#allocation8 + $0x4a0] sm:$0xff]
    %v4620 = vld [vmem:[#allocation8 + $0x4a8] sm:$0xff]
    %v4621 = vld [vmem:[#allocation8 + $0x4b0] sm:$0xff]
    %v4622 = vld [vmem:[#allocation8 + $0x4b8] sm:$0xff]
    %v4623 = vld [vmem:[#allocation8 + $0x4c0] sm:$0xff]
    %v4624 = vld [vmem:[#allocation8 + $0x4c8] sm:$0xff]
    %v4625 = vld [vmem:[#allocation8 + $0x4d0] sm:$0xff]
    %v4626 = vld [vmem:[#allocation8 + $0x4d8] sm:$0xff]
    %v4627 = vld [vmem:[#allocation8 + $0x4e0] sm:$0xff]
    %v4628 = vld [vmem:[#allocation8 + $0x4e8] sm:$0xff]
    %v4629 = vld [vmem:[#allocation8 + $0x4f0] sm:$0xff]
    %v4630 = vld [vmem:[#allocation8 + $0x4f8] sm:$0xff]
    %v4631 = vld [vmem:[#allocation8 + $0x500] sm:$0xff]
    %v4632 = vld [vmem:[#allocation8 + $0x508] sm:$0xff]
    %v4633 = vld [vmem:[#allocation8 + $0x510] sm:$0xff]
    %v4634 = vld [vmem:[#allocation8 + $0x518] sm:$0xff]
    %v4635 = vld [vmem:[#allocation8 + $0x520] sm:$0xff]
    %v4636 = vld [vmem:[#allocation8 + $0x528] sm:$0xff]
    %v4637 = vld [vmem:[#allocation8 + $0x530] sm:$0xff]
    %v4638 = vld [vmem:[#allocation8 + $0x538] sm:$0xff]
    %v4639 = vld [vmem:[#allocation8 + $0x540] sm:$0xff]
    %v4640 = vld [vmem:[#allocation8 + $0x548] sm:$0xff]
    %v4641 = vld [vmem:[#allocation8 + $0x550] sm:$0xff]
    %v4642 = vld [vmem:[#allocation8 + $0x558] sm:$0xff]
    %v4643 = vld [vmem:[#allocation8 + $0x560] sm:$0xff]
    %v4644 = vld [vmem:[#allocation8 + $0x568] sm:$0xff]
    %v4645 = vld [vmem:[#allocation8 + $0x570] sm:$0xff]
    %v4646 = vld [vmem:[#allocation8 + $0x578] sm:$0xff]
    %v4647 = vld [vmem:[#allocation8 + $0x580] sm:$0xff]
    %v4648 = vld [vmem:[#allocation8 + $0x588] sm:$0xff]
    %v4649 = vld [vmem:[#allocation8 + $0x590] sm:$0xff]
    %v4650 = vld [vmem:[#allocation8 + $0x598] sm:$0xff]
    %v4651 = vld [vmem:[#allocation8 + $0x5a0] sm:$0xff]
    %v4652 = vld [vmem:[#allocation8 + $0x5a8] sm:$0xff]
    %v4653 = vld [vmem:[#allocation8 + $0x5b0] sm:$0xff]
    %v4654 = vld [vmem:[#allocation8 + $0x5b8] sm:$0xff]
    %v4655 = vld [vmem:[#allocation8 + $0x5c0] sm:$0xff]
    %v4656 = vld [vmem:[#allocation8 + $0x5c8] sm:$0xff]
    %v4657 = vld [vmem:[#allocation8 + $0x5d0] sm:$0xff]
    %v4658 = vld [vmem:[#allocation8 + $0x5d8] sm:$0xff]
    %v4659 = vld [vmem:[#allocation8 + $0x5e0] sm:$0xff]
    %v4660 = vld [vmem:[#allocation8 + $0x5e8] sm:$0xff]
    %v4661 = vld [vmem:[#allocation8 + $0x5f0] sm:$0xff]
    %v4662 = vld [vmem:[#allocation8 + $0x5f8] sm:$0xff]
    %v4663 = vld [vmem:[#allocation8 + $0x600] sm:$0xff]
    %v4664 = vld [vmem:[#allocation8 + $0x608] sm:$0xff]
    %v4665 = vld [vmem:[#allocation8 + $0x610] sm:$0xff]
    %v4666 = vld [vmem:[#allocation8 + $0x618] sm:$0xff]
    %v4667 = vld [vmem:[#allocation8 + $0x620] sm:$0xff]
    %v4668 = vld [vmem:[#allocation8 + $0x628] sm:$0xff]
    %v4669 = vld [vmem:[#allocation8 + $0x630] sm:$0xff]
    %v4670 = vld [vmem:[#allocation8 + $0x638] sm:$0xff]
    %v4671 = vld [vmem:[#allocation8 + $0x640] sm:$0xff]
    %v4672 = vld [vmem:[#allocation8 + $0x648] sm:$0xff]
    %v4673 = vld [vmem:[#allocation8 + $0x650] sm:$0xff]
    %v4674 = vld [vmem:[#allocation8 + $0x658] sm:$0xff]
    %v4675 = vld [vmem:[#allocation8 + $0x660] sm:$0xff]
    %v4676 = vld [vmem:[#allocation8 + $0x668] sm:$0xff]
    %v4677 = vld [vmem:[#allocation8 + $0x670] sm:$0xff]
    %v4678 = vld [vmem:[#allocation8 + $0x678] sm:$0xff]
    %v4679 = vld [vmem:[#allocation8 + $0x680] sm:$0xff]
    %v4680 = vld [vmem:[#allocation8 + $0x688] sm:$0xff]
    %v4681 = vld [vmem:[#allocation8 + $0x690] sm:$0xff]
    %v4682 = vld [vmem:[#allocation8 + $0x698] sm:$0xff]
    %v4683 = vld [vmem:[#allocation8 + $0x6a0] sm:$0xff]
    %v4684 = vld [vmem:[#allocation8 + $0x6a8] sm:$0xff]
    %v4685 = vld [vmem:[#allocation8 + $0x6b0] sm:$0xff]
    %v4686 = vld [vmem:[#allocation8 + $0x6b8] sm:$0xff]
    %v4687 = vld [vmem:[#allocation8 + $0x6c0] sm:$0xff]
    %v4688 = vld [vmem:[#allocation8 + $0x6c8] sm:$0xff]
    %v4689 = vld [vmem:[#allocation8 + $0x6d0] sm:$0xff]
    %v4690 = vld [vmem:[#allocation8 + $0x6d8] sm:$0xff]
    %v4691 = vld [vmem:[#allocation8 + $0x6e0] sm:$0xff]
    %v4692 = vld [vmem:[#allocation8 + $0x6e8] sm:$0xff]
    %v4693 = vld [vmem:[#allocation8 + $0x6f0] sm:$0xff]
    %v4694 = vld [vmem:[#allocation8 + $0x6f8] sm:$0xff]
    %v4695 = vld [vmem:[#allocation8 + $0x700] sm:$0xff]
    %v4696 = vld [vmem:[#allocation8 + $0x708] sm:$0xff]
    %v4697 = vld [vmem:[#allocation8 + $0x710] sm:$0xff]
    %v4698 = vld [vmem:[#allocation8 + $0x718] sm:$0xff]
    %v4699 = vld [vmem:[#allocation8 + $0x720] sm:$0xff]
    %v4700 = vld [vmem:[#allocation8 + $0x728] sm:$0xff]
    %v4701 = vld [vmem:[#allocation8 + $0x730] sm:$0xff]
    %v4702 = vld [vmem:[#allocation8 + $0x738] sm:$0xff]
    %v4703 = vld [vmem:[#allocation8 + $0x740] sm:$0xff]
    %v4704 = vld [vmem:[#allocation8 + $0x748] sm:$0xff]
    %v4705 = vld [vmem:[#allocation8 + $0x750] sm:$0xff]
    %v4706 = vld [vmem:[#allocation8 + $0x758] sm:$0xff]
    %v4707 = vld [vmem:[#allocation8 + $0x760] sm:$0xff]
    %v4708 = vld [vmem:[#allocation8 + $0x768] sm:$0xff]
    %v4709 = vld [vmem:[#allocation8 + $0x770] sm:$0xff]
    %v4710 = vld [vmem:[#allocation8 + $0x778] sm:$0xff]
    %v4711 = vld [vmem:[#allocation8 + $0x780] sm:$0xff]
    %v4712 = vld [vmem:[#allocation8 + $0x788] sm:$0xff]
    %v4713 = vld [vmem:[#allocation8 + $0x790] sm:$0xff]
    %v4714 = vld [vmem:[#allocation8 + $0x798] sm:$0xff]
    %v4715 = vld [vmem:[#allocation8 + $0x7a0] sm:$0xff]
    %v4716 = vld [vmem:[#allocation8 + $0x7a8] sm:$0xff]
    %v4717 = vld [vmem:[#allocation8 + $0x7b0] sm:$0xff]
    %v4718 = vld [vmem:[#allocation8 + $0x7b8] sm:$0xff]
    %v4719 = vld [vmem:[#allocation8 + $0x7c0] sm:$0xff]
    %v4720 = vld [vmem:[#allocation8 + $0x7c8] sm:$0xff]
    %v4721 = vld [vmem:[#allocation8 + $0x7d0] sm:$0xff]
    %v4722 = vld [vmem:[#allocation8 + $0x7d8] sm:$0xff]
    %v4723 = vld [vmem:[#allocation8 + $0x7e0] sm:$0xff]
    %v4724 = vld [vmem:[#allocation8 + $0x7e8] sm:$0xff]
    %v4725 = vld [vmem:[#allocation8 + $0x7f0] sm:$0xff]
    %v4726 = vld [vmem:[#allocation8 + $0x7f8] sm:$0xff]
    %v4727 = vld [vmem:[#allocation8 + $0x800] sm:$0xff]
    %v4728 = vld [vmem:[#allocation8 + $0x808] sm:$0xff]
    %v4729 = vld [vmem:[#allocation8 + $0x810] sm:$0xff]
    %v4730 = vld [vmem:[#allocation8 + $0x818] sm:$0xff]
    %v4731 = vld [vmem:[#allocation8 + $0x820] sm:$0xff]
    %v4732 = vld [vmem:[#allocation8 + $0x828] sm:$0xff]
    %v4733 = vld [vmem:[#allocation8 + $0x830] sm:$0xff]
    %v4734 = vld [vmem:[#allocation8 + $0x838] sm:$0xff]
    %v4735 = vld [vmem:[#allocation8 + $0x840] sm:$0xff]
    %v4736 = vld [vmem:[#allocation8 + $0x848] sm:$0xff]
    %v4737 = vld [vmem:[#allocation8 + $0x850] sm:$0xff]
    %v4738 = vld [vmem:[#allocation8 + $0x858] sm:$0xff]
    %v4739 = vld [vmem:[#allocation8 + $0x860] sm:$0xff]
    %v4740 = vld [vmem:[#allocation8 + $0x868] sm:$0xff]
    %v4741 = vld [vmem:[#allocation8 + $0x870] sm:$0xff]
    %v4742 = vld [vmem:[#allocation8 + $0x878] sm:$0xff]
    %v4743 = vld [vmem:[#allocation8 + $0x880] sm:$0xff]
    %v4744 = vld [vmem:[#allocation8 + $0x888] sm:$0xff]
    %v4745 = vld [vmem:[#allocation8 + $0x890] sm:$0xff]
    %v4746 = vld [vmem:[#allocation8 + $0x898] sm:$0xff]
    %v4747 = vld [vmem:[#allocation8 + $0x8a0] sm:$0xff]
    %v4748 = vld [vmem:[#allocation8 + $0x8a8] sm:$0xff]
    %v4749 = vld [vmem:[#allocation8 + $0x8b0] sm:$0xff]
    %v4750 = vld [vmem:[#allocation8 + $0x8b8] sm:$0xff]
    %v4751 = vld [vmem:[#allocation8 + $0x8c0] sm:$0xff]
    %v4752 = vld [vmem:[#allocation8 + $0x8c8] sm:$0xff]
    %v4753 = vld [vmem:[#allocation8 + $0x8d0] sm:$0xff]
    %v4754 = vld [vmem:[#allocation8 + $0x8d8] sm:$0xff]
    %v4755 = vld [vmem:[#allocation8 + $0x8e0] sm:$0xff]
    %v4756 = vld [vmem:[#allocation8 + $0x8e8] sm:$0xff]
    %v4757 = vld [vmem:[#allocation8 + $0x8f0] sm:$0xff]
    %v4758 = vld [vmem:[#allocation8 + $0x8f8] sm:$0xff]
    %v4759 = vld [vmem:[#allocation8 + $0x900] sm:$0xff]
    %v4760 = vld [vmem:[#allocation8 + $0x908] sm:$0xff]
    %v4761 = vld [vmem:[#allocation8 + $0x910] sm:$0xff]
    %v4762 = vld [vmem:[#allocation8 + $0x918] sm:$0xff]
    %v4763 = vld [vmem:[#allocation8 + $0x920] sm:$0xff]
    %v4764 = vld [vmem:[#allocation8 + $0x928] sm:$0xff]
    %v4765 = vld [vmem:[#allocation8 + $0x930] sm:$0xff]
    %v4766 = vld [vmem:[#allocation8 + $0x938] sm:$0xff]
    %v4767 = vld [vmem:[#allocation8 + $0x940] sm:$0xff]
    %v4768 = vld [vmem:[#allocation8 + $0x948] sm:$0xff]
    %v4769 = vld [vmem:[#allocation8 + $0x950] sm:$0xff]
    %v4770 = vld [vmem:[#allocation8 + $0x958] sm:$0xff]
    %v4771 = vld [vmem:[#allocation8 + $0x960] sm:$0xff]
    %v4772 = vld [vmem:[#allocation8 + $0x968] sm:$0xff]
    %v4773 = vld [vmem:[#allocation8 + $0x970] sm:$0xff]
    %v4774 = vld [vmem:[#allocation8 + $0x978] sm:$0xff]
    %v4775 = vld [vmem:[#allocation8 + $0x980] sm:$0xff]
    %v4776 = vld [vmem:[#allocation8 + $0x988] sm:$0xff]
    %v4777 = vld [vmem:[#allocation8 + $0x990] sm:$0xff]
    %v4778 = vld [vmem:[#allocation8 + $0x998] sm:$0xff]
    %v4779 = vld [vmem:[#allocation8 + $0x9a0] sm:$0xff]
    %v4780 = vld [vmem:[#allocation8 + $0x9a8] sm:$0xff]
    %v4781 = vld [vmem:[#allocation8 + $0x9b0] sm:$0xff]
    %v4782 = vld [vmem:[#allocation8 + $0x9b8] sm:$0xff]
    %v4783 = vld [vmem:[#allocation8 + $0x9c0] sm:$0xff]
    %v4784 = vld [vmem:[#allocation8 + $0x9c8] sm:$0xff]
    %v4785 = vld [vmem:[#allocation8 + $0x9d0] sm:$0xff]
    %v4786 = vld [vmem:[#allocation8 + $0x9d8] sm:$0xff]
    %v4787 = vld [vmem:[#allocation8 + $0x9e0] sm:$0xff]
    %v4788 = vld [vmem:[#allocation8 + $0x9e8] sm:$0xff]
    %v4789 = vld [vmem:[#allocation8 + $0x9f0] sm:$0xff]
    %v4790 = vld [vmem:[#allocation8 + $0x9f8] sm:$0xff]
    %v4791 = vld [vmem:[#allocation8 + $0xa00] sm:$0xff]
    %v4792 = vld [vmem:[#allocation8 + $0xa08] sm:$0xff]
    %v4793 = vld [vmem:[#allocation8 + $0xa10] sm:$0xff]
    %v4794 = vld [vmem:[#allocation8 + $0xa18] sm:$0xff]
    %v4795 = vld [vmem:[#allocation8 + $0xa20] sm:$0xff]
    %v4796 = vld [vmem:[#allocation8 + $0xa28] sm:$0xff]
    %v4797 = vld [vmem:[#allocation8 + $0xa30] sm:$0xff]
    %v4798 = vld [vmem:[#allocation8 + $0xa38] sm:$0xff]
    %v4799 = vld [vmem:[#allocation8 + $0xa40] sm:$0xff]
    %v4800 = vld [vmem:[#allocation8 + $0xa48] sm:$0xff]
    %v4801 = vld [vmem:[#allocation8 + $0xa50] sm:$0xff]
    %v4802 = vld [vmem:[#allocation8 + $0xa58] sm:$0xff]
    %v4803 = vld [vmem:[#allocation8 + $0xa60] sm:$0xff]
    %v4804 = vld [vmem:[#allocation8 + $0xa68] sm:$0xff]
    %v4805 = vld [vmem:[#allocation8 + $0xa70] sm:$0xff]
    %v4806 = vld [vmem:[#allocation8 + $0xa78] sm:$0xff]
    %v4807 = vld [vmem:[#allocation8 + $0xa80] sm:$0xff]
    %v4808 = vld [vmem:[#allocation8 + $0xa88] sm:$0xff]
    %v4809 = vld [vmem:[#allocation8 + $0xa90] sm:$0xff]
    %v4810 = vld [vmem:[#allocation8 + $0xa98] sm:$0xff]
    %v4811 = vld [vmem:[#allocation8 + $0xaa0] sm:$0xff]
    %v4812 = vld [vmem:[#allocation8 + $0xaa8] sm:$0xff]
    %v4813 = vld [vmem:[#allocation8 + $0xab0] sm:$0xff]
    %v4814 = vld [vmem:[#allocation8 + $0xab8] sm:$0xff]
    %v4815 = vld [vmem:[#allocation8 + $0xac0] sm:$0xff]
    %v4816 = vld [vmem:[#allocation8 + $0xac8] sm:$0xff]
    %v4817 = vld [vmem:[#allocation8 + $0xad0] sm:$0xff]
    %v4818 = vld [vmem:[#allocation8 + $0xad8] sm:$0xff]
    %v4819 = vld [vmem:[#allocation8 + $0xae0] sm:$0xff]
    %v4820 = vld [vmem:[#allocation8 + $0xae8] sm:$0xff]
    %v4821 = vld [vmem:[#allocation8 + $0xaf0] sm:$0xff]
    %v4822 = vld [vmem:[#allocation8 + $0xaf8] sm:$0xff]
    %v4823 = vld [vmem:[#allocation8 + $0xb00] sm:$0xff]
    %v4824 = vld [vmem:[#allocation8 + $0xb08] sm:$0xff]
    %v4825 = vld [vmem:[#allocation8 + $0xb10] sm:$0xff]
    %v4826 = vld [vmem:[#allocation8 + $0xb18] sm:$0xff]
    %v4827 = vld [vmem:[#allocation8 + $0xb20] sm:$0xff]
    %v4828 = vld [vmem:[#allocation8 + $0xb28] sm:$0xff]
    %v4829 = vld [vmem:[#allocation8 + $0xb30] sm:$0xff]
    %v4830 = vld [vmem:[#allocation8 + $0xb38] sm:$0xff]
    %v4831 = vld [vmem:[#allocation8 + $0xb40] sm:$0xff]
    %v4832 = vld [vmem:[#allocation8 + $0xb48] sm:$0xff]
    %v4833 = vld [vmem:[#allocation8 + $0xb50] sm:$0xff]
    %v4834 = vld [vmem:[#allocation8 + $0xb58] sm:$0xff]
    %v4835 = vld [vmem:[#allocation8 + $0xb60] sm:$0xff]
    %v4836 = vld [vmem:[#allocation8 + $0xb68] sm:$0xff]
    %v4837 = vld [vmem:[#allocation8 + $0xb70] sm:$0xff]
    %v4838 = vld [vmem:[#allocation8 + $0xb78] sm:$0xff]
    %v4839 = vld [vmem:[#allocation8 + $0xb80] sm:$0xff]
    %v4840 = vld [vmem:[#allocation8 + $0xb88] sm:$0xff]
    %v4841 = vld [vmem:[#allocation8 + $0xb90] sm:$0xff]
    %v4842 = vld [vmem:[#allocation8 + $0xb98] sm:$0xff]
    %v4843 = vld [vmem:[#allocation8 + $0xba0] sm:$0xff]
    %v4844 = vld [vmem:[#allocation8 + $0xba8] sm:$0xff]
    %v4845 = vld [vmem:[#allocation8 + $0xbb0] sm:$0xff]
    %v4846 = vld [vmem:[#allocation8 + $0xbb8] sm:$0xff]
    %v4847 = vld [vmem:[#allocation8 + $0xbc0] sm:$0xff]
    %v4848 = vld [vmem:[#allocation8 + $0xbc8] sm:$0xff]
    %v4849 = vld [vmem:[#allocation8 + $0xbd0] sm:$0xff]
    %v4850 = vld [vmem:[#allocation8 + $0xbd8] sm:$0xff]
    %v4851 = vld [vmem:[#allocation8 + $0xbe0] sm:$0xff]
    %v4852 = vld [vmem:[#allocation8 + $0xbe8] sm:$0xff]
    %v4853 = vld [vmem:[#allocation8 + $0xbf0] sm:$0xff]
    %v4854 = vld [vmem:[#allocation8 + $0xbf8] sm:$0xff]
    %v4855 = vld [vmem:[#allocation8 + $0xc00] sm:$0xff]
    %v4856 = vld [vmem:[#allocation8 + $0xc08] sm:$0xff]
    %v4857 = vld [vmem:[#allocation8 + $0xc10] sm:$0xff]
    %v4858 = vld [vmem:[#allocation8 + $0xc18] sm:$0xff]
    %v4859 = vld [vmem:[#allocation8 + $0xc20] sm:$0xff]
    %v4860 = vld [vmem:[#allocation8 + $0xc28] sm:$0xff]
    %v4861 = vld [vmem:[#allocation8 + $0xc30] sm:$0xff]
    %v4862 = vld [vmem:[#allocation8 + $0xc38] sm:$0xff]
    %v4863 = vld [vmem:[#allocation8 + $0xc40] sm:$0xff]
    %v4864 = vld [vmem:[#allocation8 + $0xc48] sm:$0xff]
    %v4865 = vld [vmem:[#allocation8 + $0xc50] sm:$0xff]
    %v4866 = vld [vmem:[#allocation8 + $0xc58] sm:$0xff]
    %v4867 = vld [vmem:[#allocation8 + $0xc60] sm:$0xff]
    %v4868 = vld [vmem:[#allocation8 + $0xc68] sm:$0xff]
    %v4869 = vld [vmem:[#allocation8 + $0xc70] sm:$0xff]
    %v4870 = vld [vmem:[#allocation8 + $0xc78] sm:$0xff]
    %v4871 = vld [vmem:[#allocation8 + $0xc80] sm:$0xff]
    %v4872 = vld [vmem:[#allocation8 + $0xc88] sm:$0xff]
    %v4873 = vld [vmem:[#allocation8 + $0xc90] sm:$0xff]
    %v4874 = vld [vmem:[#allocation8 + $0xc98] sm:$0xff]
    %v4875 = vld [vmem:[#allocation8 + $0xca0] sm:$0xff]
    %v4876 = vld [vmem:[#allocation8 + $0xca8] sm:$0xff]
    %v4877 = vld [vmem:[#allocation8 + $0xcb0] sm:$0xff]
    %v4878 = vld [vmem:[#allocation8 + $0xcb8] sm:$0xff]
    %v4879 = vld [vmem:[#allocation8 + $0xcc0] sm:$0xff]
    %v4880 = vld [vmem:[#allocation8 + $0xcc8] sm:$0xff]
    %v4881 = vld [vmem:[#allocation8 + $0xcd0] sm:$0xff]
    %v4882 = vld [vmem:[#allocation8 + $0xcd8] sm:$0xff]
    %v4883 = vld [vmem:[#allocation8 + $0xce0] sm:$0xff]
    %v4884 = vld [vmem:[#allocation8 + $0xce8] sm:$0xff]
    %v4885 = vld [vmem:[#allocation8 + $0xcf0] sm:$0xff]
    %v4886 = vld [vmem:[#allocation8 + $0xcf8] sm:$0xff]
    %v4887 = vld [vmem:[#allocation8 + $0xd00] sm:$0xff]
    %v4888 = vld [vmem:[#allocation8 + $0xd08] sm:$0xff]
    %v4889 = vld [vmem:[#allocation8 + $0xd10] sm:$0xff]
    %v4890 = vld [vmem:[#allocation8 + $0xd18] sm:$0xff]
    %v4891 = vld [vmem:[#allocation8 + $0xd20] sm:$0xff]
    %v4892 = vld [vmem:[#allocation8 + $0xd28] sm:$0xff]
    %v4893 = vld [vmem:[#allocation8 + $0xd30] sm:$0xff]
    %v4894 = vld [vmem:[#allocation8 + $0xd38] sm:$0xff]
    %v4895 = vld [vmem:[#allocation8 + $0xd40] sm:$0xff]
    %v4896 = vld [vmem:[#allocation8 + $0xd48] sm:$0xff]
    %v4897 = vld [vmem:[#allocation8 + $0xd50] sm:$0xff]
    %v4898 = vld [vmem:[#allocation8 + $0xd58] sm:$0xff]
    %v4899 = vld [vmem:[#allocation8 + $0xd60] sm:$0xff]
    %v4900 = vld [vmem:[#allocation8 + $0xd68] sm:$0xff]
    %v4901 = vld [vmem:[#allocation8 + $0xd70] sm:$0xff]
    %v4902 = vld [vmem:[#allocation8 + $0xd78] sm:$0xff]
    %v4903 = vld [vmem:[#allocation8 + $0xd80] sm:$0xff]
    %v4904 = vld [vmem:[#allocation8 + $0xd88] sm:$0xff]
    %v4905 = vld [vmem:[#allocation8 + $0xd90] sm:$0xff]
    %v4906 = vld [vmem:[#allocation8 + $0xd98] sm:$0xff]
    %v4907 = vld [vmem:[#allocation8 + $0xda0] sm:$0xff]
    %v4908 = vld [vmem:[#allocation8 + $0xda8] sm:$0xff]
    %v4909 = vld [vmem:[#allocation8 + $0xdb0] sm:$0xff]
    %v4910 = vld [vmem:[#allocation8 + $0xdb8] sm:$0xff]
    %v4911 = vld [vmem:[#allocation8 + $0xdc0] sm:$0xff]
    %v4912 = vld [vmem:[#allocation8 + $0xdc8] sm:$0xff]
    %v4913 = vld [vmem:[#allocation8 + $0xdd0] sm:$0xff]
    %v4914 = vld [vmem:[#allocation8 + $0xdd8] sm:$0xff]
    %v4915 = vld [vmem:[#allocation8 + $0xde0] sm:$0xff]
    %v4916 = vld [vmem:[#allocation8 + $0xde8] sm:$0xff]
    %v4917 = vld [vmem:[#allocation8 + $0xdf0] sm:$0xff]
    %v4918 = vld [vmem:[#allocation8 + $0xdf8] sm:$0xff]
    %v4919 = vld [vmem:[#allocation8 + $0xe00] sm:$0xff]
    %v4920 = vld [vmem:[#allocation8 + $0xe08] sm:$0xff]
    %v4921 = vld [vmem:[#allocation8 + $0xe10] sm:$0xff]
    %v4922 = vld [vmem:[#allocation8 + $0xe18] sm:$0xff]
    %v4923 = vld [vmem:[#allocation8 + $0xe20] sm:$0xff]
    %v4924 = vld [vmem:[#allocation8 + $0xe28] sm:$0xff]
    %v4925 = vld [vmem:[#allocation8 + $0xe30] sm:$0xff]
    %v4926 = vld [vmem:[#allocation8 + $0xe38] sm:$0xff]
    %v4927 = vld [vmem:[#allocation8 + $0xe40] sm:$0xff]
    %v4928 = vld [vmem:[#allocation8 + $0xe48] sm:$0xff]
    %v4929 = vld [vmem:[#allocation8 + $0xe50] sm:$0xff]
    %v4930 = vld [vmem:[#allocation8 + $0xe58] sm:$0xff]
    %v4931 = vld [vmem:[#allocation8 + $0xe60] sm:$0xff]
    %v4932 = vld [vmem:[#allocation8 + $0xe68] sm:$0xff]
    %v4933 = vld [vmem:[#allocation8 + $0xe70] sm:$0xff]
    %v4934 = vld [vmem:[#allocation8 + $0xe78] sm:$0xff]
    %v4935 = vld [vmem:[#allocation8 + $0xe80] sm:$0xff]
    %v4936 = vld [vmem:[#allocation8 + $0xe88] sm:$0xff]
    %v4937 = vld [vmem:[#allocation8 + $0xe90] sm:$0xff]
    %v4938 = vld [vmem:[#allocation8 + $0xe98] sm:$0xff]
    %v4939 = vld [vmem:[#allocation8 + $0xea0] sm:$0xff]
    %v4940 = vld [vmem:[#allocation8 + $0xea8] sm:$0xff]
    %v4941 = vld [vmem:[#allocation8 + $0xeb0] sm:$0xff]
    %v4942 = vld [vmem:[#allocation8 + $0xeb8] sm:$0xff]
    %v4943 = vld [vmem:[#allocation8 + $0xec0] sm:$0xff]
    %v4944 = vld [vmem:[#allocation8 + $0xec8] sm:$0xff]
    %v4945 = vld [vmem:[#allocation8 + $0xed0] sm:$0xff]
    %v4946 = vld [vmem:[#allocation8 + $0xed8] sm:$0xff]
    %v4947 = vld [vmem:[#allocation8 + $0xee0] sm:$0xff]
    %v4948 = vld [vmem:[#allocation8 + $0xee8] sm:$0xff]
    %v4949 = vld [vmem:[#allocation8 + $0xef0] sm:$0xff]
    %v4950 = vld [vmem:[#allocation8 + $0xef8] sm:$0xff]
    %v4951 = vld [vmem:[#allocation8 + $0xf00] sm:$0xff]
    %v4952 = vld [vmem:[#allocation8 + $0xf08] sm:$0xff]
    %v4953 = vld [vmem:[#allocation8 + $0xf10] sm:$0xff]
    %v4954 = vld [vmem:[#allocation8 + $0xf18] sm:$0xff]
    %v4955 = vld [vmem:[#allocation8 + $0xf20] sm:$0xff]
    %v4956 = vld [vmem:[#allocation8 + $0xf28] sm:$0xff]
    %v4957 = vld [vmem:[#allocation8 + $0xf30] sm:$0xff]
    %v4958 = vld [vmem:[#allocation8 + $0xf38] sm:$0xff]
    %v4959 = vld [vmem:[#allocation8 + $0xf40] sm:$0xff]
    %v4960 = vld [vmem:[#allocation8 + $0xf48] sm:$0xff]
    %v4961 = vld [vmem:[#allocation8 + $0xf50] sm:$0xff]
    %v4962 = vld [vmem:[#allocation8 + $0xf58] sm:$0xff]
    %v4963 = vld [vmem:[#allocation8 + $0xf60] sm:$0xff]
    %v4964 = vld [vmem:[#allocation8 + $0xf68] sm:$0xff]
    %v4965 = vld [vmem:[#allocation8 + $0xf70] sm:$0xff]
    %v4966 = vld [vmem:[#allocation8 + $0xf78] sm:$0xff]
    %v4967 = vld [vmem:[#allocation8 + $0xf80] sm:$0xff]
    %v4968 = vld [vmem:[#allocation8 + $0xf88] sm:$0xff]
    %v4969 = vld [vmem:[#allocation8 + $0xf90] sm:$0xff]
    %v4970 = vld [vmem:[#allocation8 + $0xf98] sm:$0xff]
    %v4971 = vld [vmem:[#allocation8 + $0xfa0] sm:$0xff]
    %v4972 = vld [vmem:[#allocation8 + $0xfa8] sm:$0xff]
    %v4973 = vld [vmem:[#allocation8 + $0xfb0] sm:$0xff]
    %v4974 = vld [vmem:[#allocation8 + $0xfb8] sm:$0xff]
    %v4975 = vld [vmem:[#allocation8 + $0xfc0] sm:$0xff]
    %v4976 = vld [vmem:[#allocation8 + $0xfc8] sm:$0xff]
    %v4977 = vld [vmem:[#allocation8 + $0xfd0] sm:$0xff]
    %v4978 = vld [vmem:[#allocation8 + $0xfd8] sm:$0xff]
    %v4979 = vld [vmem:[#allocation8 + $0xfe0] sm:$0xff]
    %v4980 = vld [vmem:[#allocation8 + $0xfe8] sm:$0xff]
    %v4981 = vld [vmem:[#allocation8 + $0xff0] sm:$0xff]
    %v4982 = vld [vmem:[#allocation8 + $0xff8] sm:$0xff]
    %v4983 = vld [vmem:[#allocation8 + $0x1000] sm:$0xff]
    %v4984 = vld [vmem:[#allocation8 + $0x1008] sm:$0xff]
    %v4985 = vld [vmem:[#allocation8 + $0x1010] sm:$0xff]
    %v4986 = vld [vmem:[#allocation8 + $0x1018] sm:$0xff]
    %v4987 = vld [vmem:[#allocation8 + $0x1020] sm:$0xff]
    %v4988 = vld [vmem:[#allocation8 + $0x1028] sm:$0xff]
    %v4989 = vld [vmem:[#allocation8 + $0x1030] sm:$0xff]
    %v4990 = vld [vmem:[#allocation8 + $0x1038] sm:$0xff]
    %v4991 = vld [vmem:[#allocation8 + $0x1040] sm:$0xff]
    %v4992 = vld [vmem:[#allocation8 + $0x1048] sm:$0xff]
    %v4993 = vld [vmem:[#allocation8 + $0x1050] sm:$0xff]
    %v4994 = vld [vmem:[#allocation8 + $0x1058] sm:$0xff]
    %v4995 = vld [vmem:[#allocation8 + $0x1060] sm:$0xff]
    %v4996 = vld [vmem:[#allocation8 + $0x1068] sm:$0xff]
    %v4997 = vld [vmem:[#allocation8 + $0x1070] sm:$0xff]
    %v4998 = vld [vmem:[#allocation8 + $0x1078] sm:$0xff]
    %v4999 = vld [vmem:[#allocation8 + $0x1080] sm:$0xff]
    %v5000 = vld [vmem:[#allocation8 + $0x1088] sm:$0xff]
    %v5001 = vld [vmem:[#allocation8 + $0x1090] sm:$0xff]
    %v5002 = vld [vmem:[#allocation8 + $0x1098] sm:$0xff]
    %v5003 = vld [vmem:[#allocation8 + $0x10a0] sm:$0xff]
    %v5004 = vld [vmem:[#allocation8 + $0x10a8] sm:$0xff]
    %v5005 = vld [vmem:[#allocation8 + $0x10b0] sm:$0xff]
    %v5006 = vld [vmem:[#allocation8 + $0x10b8] sm:$0xff]
    %v5007 = vld [vmem:[#allocation8 + $0x10c0] sm:$0xff]
    %v5008 = vld [vmem:[#allocation8 + $0x10c8] sm:$0xff]
    %v5009 = vld [vmem:[#allocation8 + $0x10d0] sm:$0xff]
    %v5010 = vld [vmem:[#allocation8 + $0x10d8] sm:$0xff]
    %v5011 = vld [vmem:[#allocation8 + $0x10e0] sm:$0xff]
    %v5012 = vld [vmem:[#allocation8 + $0x10e8] sm:$0xff]
    %v5013 = vld [vmem:[#allocation8 + $0x10f0] sm:$0xff]
    %v5014 = vld [vmem:[#allocation8 + $0x10f8] sm:$0xff]
    %v5015 = vld [vmem:[#allocation8 + $0x1100] sm:$0xff]
    %v5016 = vld [vmem:[#allocation8 + $0x1108] sm:$0xff]
    %v5017 = vld [vmem:[#allocation8 + $0x1110] sm:$0xff]
    %v5018 = vld [vmem:[#allocation8 + $0x1118] sm:$0xff]
    %v5019 = vld [vmem:[#allocation8 + $0x1120] sm:$0xff]
    %v5020 = vld [vmem:[#allocation8 + $0x1128] sm:$0xff]
    %v5021 = vld [vmem:[#allocation8 + $0x1130] sm:$0xff]
    %v5022 = vld [vmem:[#allocation8 + $0x1138] sm:$0xff]
    %v5023 = vld [vmem:[#allocation8 + $0x1140] sm:$0xff]
    %v5024 = vld [vmem:[#allocation8 + $0x1148] sm:$0xff]
    %v5025 = vld [vmem:[#allocation8 + $0x1150] sm:$0xff]
    %v5026 = vld [vmem:[#allocation8 + $0x1158] sm:$0xff]
    %v5027 = vld [vmem:[#allocation8 + $0x1160] sm:$0xff]
    %v5028 = vld [vmem:[#allocation8 + $0x1168] sm:$0xff]
    %v5029 = vld [vmem:[#allocation8 + $0x1170] sm:$0xff]
    %v5030 = vld [vmem:[#allocation8 + $0x1178] sm:$0xff]
    %v5031 = vld [vmem:[#allocation8 + $0x1180] sm:$0xff]
    %v5032 = vld [vmem:[#allocation8 + $0x1188] sm:$0xff]
    %v5033 = vld [vmem:[#allocation8 + $0x1190] sm:$0xff]
    %v5034 = vld [vmem:[#allocation8 + $0x1198] sm:$0xff]
    %v5035 = vld [vmem:[#allocation8 + $0x11a0] sm:$0xff]
    %v5036 = vld [vmem:[#allocation8 + $0x11a8] sm:$0xff]
    %v5037 = vld [vmem:[#allocation8 + $0x11b0] sm:$0xff]
    %v5038 = vld [vmem:[#allocation8 + $0x11b8] sm:$0xff]
    %v5039 = vld [vmem:[#allocation8 + $0x11c0] sm:$0xff]
    %v5040 = vld [vmem:[#allocation8 + $0x11c8] sm:$0xff]
    %v5041 = vld [vmem:[#allocation8 + $0x11d0] sm:$0xff]
    %v5042 = vld [vmem:[#allocation8 + $0x11d8] sm:$0xff]
    %v5043 = vld [vmem:[#allocation8 + $0x11e0] sm:$0xff]
    %v5044 = vld [vmem:[#allocation8 + $0x11e8] sm:$0xff]
    %v5045 = vld [vmem:[#allocation8 + $0x11f0] sm:$0xff]
    %v5046 = vld [vmem:[#allocation8 + $0x11f8] sm:$0xff]
    %v5047 = vld [vmem:[#allocation8 + $0x1200] sm:$0xff]
    %v5048 = vld [vmem:[#allocation8 + $0x1208] sm:$0xff]
    %v5049 = vld [vmem:[#allocation8 + $0x1210] sm:$0xff]
    %v5050 = vld [vmem:[#allocation8 + $0x1218] sm:$0xff]
    %v5051 = vld [vmem:[#allocation8 + $0x1220] sm:$0xff]
    %v5052 = vld [vmem:[#allocation8 + $0x1228] sm:$0xff]
    %v5053 = vld [vmem:[#allocation8 + $0x1230] sm:$0xff]
    %v5054 = vld [vmem:[#allocation8 + $0x1238] sm:$0xff]
    %v5055 = vld [vmem:[#allocation8 + $0x1240] sm:$0xff]
    %v5056 = vld [vmem:[#allocation8 + $0x1248] sm:$0xff]
    %v5057 = vld [vmem:[#allocation8 + $0x1250] sm:$0xff]
    %v5058 = vld [vmem:[#allocation8 + $0x1258] sm:$0xff]
    %v5059 = vld [vmem:[#allocation8 + $0x1260] sm:$0xff]
    %v5060 = vld [vmem:[#allocation8 + $0x1268] sm:$0xff]
    %v5061 = vld [vmem:[#allocation8 + $0x1270] sm:$0xff]
    %v5062 = vld [vmem:[#allocation8 + $0x1278] sm:$0xff]
    %v5063 = vld [vmem:[#allocation8 + $0x1280] sm:$0xff]
    %v5064 = vld [vmem:[#allocation8 + $0x1288] sm:$0xff]
    %v5065 = vld [vmem:[#allocation8 + $0x1290] sm:$0xff]
    %v5066 = vld [vmem:[#allocation8 + $0x1298] sm:$0xff]
    %v5067 = vld [vmem:[#allocation8 + $0x12a0] sm:$0xff]
    %v5068 = vld [vmem:[#allocation8 + $0x12a8] sm:$0xff]
    %v5069 = vld [vmem:[#allocation8 + $0x12b0] sm:$0xff]
    %v5070 = vld [vmem:[#allocation8 + $0x12b8] sm:$0xff]
    %v5071 = vld [vmem:[#allocation8 + $0x12c0] sm:$0xff]
    %v5072 = vld [vmem:[#allocation8 + $0x12c8] sm:$0xff]
    %v5073 = vld [vmem:[#allocation8 + $0x12d0] sm:$0xff]
    %v5074 = vld [vmem:[#allocation8 + $0x12d8] sm:$0xff]
    %v5075 = vld [vmem:[#allocation8 + $0x12e0] sm:$0xff]
    %v5076 = vld [vmem:[#allocation8 + $0x12e8] sm:$0xff]
    %v5077 = vld [vmem:[#allocation8 + $0x12f0] sm:$0xff]
    %v5078 = vld [vmem:[#allocation8 + $0x12f8] sm:$0xff]
    %v5079 = vld [vmem:[#allocation8 + $0x1300] sm:$0xff]
    %v5080 = vld [vmem:[#allocation8 + $0x1308] sm:$0xff]
    %v5081 = vld [vmem:[#allocation8 + $0x1310] sm:$0xff]
    %v5082 = vld [vmem:[#allocation8 + $0x1318] sm:$0xff]
    %v5083 = vld [vmem:[#allocation8 + $0x1320] sm:$0xff]
    %v5084 = vld [vmem:[#allocation8 + $0x1328] sm:$0xff]
    %v5085 = vld [vmem:[#allocation8 + $0x1330] sm:$0xff]
    %v5086 = vld [vmem:[#allocation8 + $0x1338] sm:$0xff]
    %v5087 = vld [vmem:[#allocation8 + $0x1340] sm:$0xff]
    %v5088 = vld [vmem:[#allocation8 + $0x1348] sm:$0xff]
    %v5089 = vld [vmem:[#allocation8 + $0x1350] sm:$0xff]
    %v5090 = vld [vmem:[#allocation8 + $0x1358] sm:$0xff]
    %v5091 = vld [vmem:[#allocation8 + $0x1360] sm:$0xff]
    %v5092 = vld [vmem:[#allocation8 + $0x1368] sm:$0xff]
    %v5093 = vld [vmem:[#allocation8 + $0x1370] sm:$0xff]
    %v5094 = vld [vmem:[#allocation8 + $0x1378] sm:$0xff]
    %v5095 = vld [vmem:[#allocation8 + $0x1380] sm:$0xff]
    %v5096 = vld [vmem:[#allocation8 + $0x1388] sm:$0xff]
    %v5097 = vld [vmem:[#allocation8 + $0x1390] sm:$0xff]
    %v5098 = vld [vmem:[#allocation8 + $0x1398] sm:$0xff]
    %v5099 = vld [vmem:[#allocation8 + $0x13a0] sm:$0xff]
    %v5100 = vld [vmem:[#allocation8 + $0x13a8] sm:$0xff]
    %v5101 = vld [vmem:[#allocation8 + $0x13b0] sm:$0xff]
    %v5102 = vld [vmem:[#allocation8 + $0x13b8] sm:$0xff]
    %v5103 = vld [vmem:[#allocation8 + $0x13c0] sm:$0xff]
    %v5104 = vld [vmem:[#allocation8 + $0x13c8] sm:$0xff]
    %v5105 = vld [vmem:[#allocation8 + $0x13d0] sm:$0xff]
    %v5106 = vld [vmem:[#allocation8 + $0x13d8] sm:$0xff]
    %v5107 = vld [vmem:[#allocation8 + $0x13e0] sm:$0xff]
    %v5108 = vld [vmem:[#allocation8 + $0x13e8] sm:$0xff]
    %v5109 = vld [vmem:[#allocation8 + $0x13f0] sm:$0xff]
    %v5110 = vld [vmem:[#allocation8 + $0x13f8] sm:$0xff]
    %v5111 = vld [vmem:[#allocation8 + $0x1400] sm:$0xff]
    %v5112 = vld [vmem:[#allocation8 + $0x1408] sm:$0xff]
    %v5113 = vld [vmem:[#allocation8 + $0x1410] sm:$0xff]
    %v5114 = vld [vmem:[#allocation8 + $0x1418] sm:$0xff]
    %v5115 = vld [vmem:[#allocation8 + $0x1420] sm:$0xff]
    %v5116 = vld [vmem:[#allocation8 + $0x1428] sm:$0xff]
    %v5117 = vld [vmem:[#allocation8 + $0x1430] sm:$0xff]
    %v5118 = vld [vmem:[#allocation8 + $0x1438] sm:$0xff]
    %v5119 = vld [vmem:[#allocation8 + $0x1440] sm:$0xff]
    %v5120 = vld [vmem:[#allocation8 + $0x1448] sm:$0xff]
    %v5121 = vld [vmem:[#allocation8 + $0x1450] sm:$0xff]
    %v5122 = vld [vmem:[#allocation8 + $0x1458] sm:$0xff]
    %v5123 = vld [vmem:[#allocation8 + $0x1460] sm:$0xff]
    %v5124 = vld [vmem:[#allocation8 + $0x1468] sm:$0xff]
    %v5125 = vld [vmem:[#allocation8 + $0x1470] sm:$0xff]
    %v5126 = vld [vmem:[#allocation8 + $0x1478] sm:$0xff]
    %v5127 = vld [vmem:[#allocation8 + $0x1480] sm:$0xff]
    %v5128 = vld [vmem:[#allocation8 + $0x1488] sm:$0xff]
    %v5129 = vld [vmem:[#allocation8 + $0x1490] sm:$0xff]
    %v5130 = vld [vmem:[#allocation8 + $0x1498] sm:$0xff]
    %v5131 = vld [vmem:[#allocation8 + $0x14a0] sm:$0xff]
    %v5132 = vld [vmem:[#allocation8 + $0x14a8] sm:$0xff]
    %v5133 = vld [vmem:[#allocation8 + $0x14b0] sm:$0xff]
    %v5134 = vld [vmem:[#allocation8 + $0x14b8] sm:$0xff]
    %v5135 = vld [vmem:[#allocation8 + $0x14c0] sm:$0xff]
    %v5136 = vld [vmem:[#allocation8 + $0x14c8] sm:$0xff]
    %v5137 = vld [vmem:[#allocation8 + $0x14d0] sm:$0xff]
    %v5138 = vld [vmem:[#allocation8 + $0x14d8] sm:$0xff]
    %v5139 = vld [vmem:[#allocation8 + $0x14e0] sm:$0xff]
    %v5140 = vld [vmem:[#allocation8 + $0x14e8] sm:$0xff]
    %v5141 = vld [vmem:[#allocation8 + $0x14f0] sm:$0xff]
    %v5142 = vld [vmem:[#allocation8 + $0x14f8] sm:$0xff]
    %v5143 = vld [vmem:[#allocation8 + $0x1500] sm:$0xff]
    %v5144 = vld [vmem:[#allocation8 + $0x1508] sm:$0xff]
    %v5145 = vld [vmem:[#allocation8 + $0x1510] sm:$0xff]
    %v5146 = vld [vmem:[#allocation8 + $0x1518] sm:$0xff]
    %v5147 = vld [vmem:[#allocation8 + $0x1520] sm:$0xff]
    %v5148 = vld [vmem:[#allocation8 + $0x1528] sm:$0xff]
    %v5149 = vld [vmem:[#allocation8 + $0x1530] sm:$0xff]
    %v5150 = vld [vmem:[#allocation8 + $0x1538] sm:$0xff]
    %v5151 = vld [vmem:[#allocation8 + $0x1540] sm:$0xff]
    %v5152 = vld [vmem:[#allocation8 + $0x1548] sm:$0xff]
    %v5153 = vld [vmem:[#allocation8 + $0x1550] sm:$0xff]
    %v5154 = vld [vmem:[#allocation8 + $0x1558] sm:$0xff]
    %v5155 = vld [vmem:[#allocation8 + $0x1560] sm:$0xff]
    %v5156 = vld [vmem:[#allocation8 + $0x1568] sm:$0xff]
    %v5157 = vld [vmem:[#allocation8 + $0x1570] sm:$0xff]
    %v5158 = vld [vmem:[#allocation8 + $0x1578] sm:$0xff]
    %v5159 = vld [vmem:[#allocation8 + $0x1580] sm:$0xff]
    %v5160 = vld [vmem:[#allocation8 + $0x1588] sm:$0xff]
    %v5161 = vld [vmem:[#allocation8 + $0x1590] sm:$0xff]
    %v5162 = vld [vmem:[#allocation8 + $0x1598] sm:$0xff]
    %v5163 = vld [vmem:[#allocation8 + $0x15a0] sm:$0xff]
    %v5164 = vld [vmem:[#allocation8 + $0x15a8] sm:$0xff]
    %v5165 = vld [vmem:[#allocation8 + $0x15b0] sm:$0xff]
    %v5166 = vld [vmem:[#allocation8 + $0x15b8] sm:$0xff]
    %v5167 = vld [vmem:[#allocation8 + $0x15c0] sm:$0xff]
    %v5168 = vld [vmem:[#allocation8 + $0x15c8] sm:$0xff]
    %v5169 = vld [vmem:[#allocation8 + $0x15d0] sm:$0xff]
    %v5170 = vld [vmem:[#allocation8 + $0x15d8] sm:$0xff]
    %v5171 = vld [vmem:[#allocation8 + $0x15e0] sm:$0xff]
    %v5172 = vld [vmem:[#allocation8 + $0x15e8] sm:$0xff]
    %v5173 = vld [vmem:[#allocation8 + $0x15f0] sm:$0xff]
    %v5174 = vld [vmem:[#allocation8 + $0x15f8] sm:$0xff]
    %v5175 = vld [vmem:[#allocation8 + $0x1600] sm:$0xff]
    %v5176 = vld [vmem:[#allocation8 + $0x1608] sm:$0xff]
    %v5177 = vld [vmem:[#allocation8 + $0x1610] sm:$0xff]
    %v5178 = vld [vmem:[#allocation8 + $0x1618] sm:$0xff]
    %v5179 = vld [vmem:[#allocation8 + $0x1620] sm:$0xff]
    %v5180 = vld [vmem:[#allocation8 + $0x1628] sm:$0xff]
    %v5181 = vld [vmem:[#allocation8 + $0x1630] sm:$0xff]
    %v5182 = vld [vmem:[#allocation8 + $0x1638] sm:$0xff]
    %v5183 = vld [vmem:[#allocation8 + $0x1640] sm:$0xff]
    %v5184 = vld [vmem:[#allocation8 + $0x1648] sm:$0xff]
    %v5185 = vld [vmem:[#allocation8 + $0x1650] sm:$0xff]
    %v5186 = vld [vmem:[#allocation8 + $0x1658] sm:$0xff]
    %v5187 = vld [vmem:[#allocation8 + $0x1660] sm:$0xff]
    %v5188 = vld [vmem:[#allocation8 + $0x1668] sm:$0xff]
    %v5189 = vld [vmem:[#allocation8 + $0x1670] sm:$0xff]
    %v5190 = vld [vmem:[#allocation8 + $0x1678] sm:$0xff]
    %v5191 = vld [vmem:[#allocation8 + $0x1680] sm:$0xff]
    %v5192 = vld [vmem:[#allocation8 + $0x1688] sm:$0xff]
    %v5193 = vld [vmem:[#allocation8 + $0x1690] sm:$0xff]
    %v5194 = vld [vmem:[#allocation8 + $0x1698] sm:$0xff]
    %v5195 = vld [vmem:[#allocation8 + $0x16a0] sm:$0xff]
    %v5196 = vld [vmem:[#allocation8 + $0x16a8] sm:$0xff]
    %v5197 = vld [vmem:[#allocation8 + $0x16b0] sm:$0xff]
    %v5198 = vld [vmem:[#allocation8 + $0x16b8] sm:$0xff]
    %v5199 = vld [vmem:[#allocation8 + $0x16c0] sm:$0xff]
    %v5200 = vld [vmem:[#allocation8 + $0x16c8] sm:$0xff]
    %v5201 = vld [vmem:[#allocation8 + $0x16d0] sm:$0xff]
    %v5202 = vld [vmem:[#allocation8 + $0x16d8] sm:$0xff]
    %v5203 = vld [vmem:[#allocation8 + $0x16e0] sm:$0xff]
    %v5204 = vld [vmem:[#allocation8 + $0x16e8] sm:$0xff]
    %v5205 = vld [vmem:[#allocation8 + $0x16f0] sm:$0xff]
    %v5206 = vld [vmem:[#allocation8 + $0x16f8] sm:$0xff]
    %v5207 = vld [vmem:[#allocation8 + $0x1700] sm:$0xff]
    %v5208 = vld [vmem:[#allocation8 + $0x1708] sm:$0xff]
    %v5209 = vld [vmem:[#allocation8 + $0x1710] sm:$0xff]
    %v5210 = vld [vmem:[#allocation8 + $0x1718] sm:$0xff]
    %v5211 = vld [vmem:[#allocation8 + $0x1720] sm:$0xff]
    %v5212 = vld [vmem:[#allocation8 + $0x1728] sm:$0xff]
    %v5213 = vld [vmem:[#allocation8 + $0x1730] sm:$0xff]
    %v5214 = vld [vmem:[#allocation8 + $0x1738] sm:$0xff]
    %v5215 = vld [vmem:[#allocation8 + $0x1740] sm:$0xff]
    %v5216 = vld [vmem:[#allocation8 + $0x1748] sm:$0xff]
    %v5217 = vld [vmem:[#allocation8 + $0x1750] sm:$0xff]
    %v5218 = vld [vmem:[#allocation8 + $0x1758] sm:$0xff]
    %v5219 = vld [vmem:[#allocation8 + $0x1760] sm:$0xff]
    %v5220 = vld [vmem:[#allocation8 + $0x1768] sm:$0xff]
    %v5221 = vld [vmem:[#allocation8 + $0x1770] sm:$0xff]
    %v5222 = vld [vmem:[#allocation8 + $0x1778] sm:$0xff]
    %v5223 = vld [vmem:[#allocation8 + $0x1780] sm:$0xff]
    %v5224 = vld [vmem:[#allocation8 + $0x1788] sm:$0xff]
    %v5225 = vld [vmem:[#allocation8 + $0x1790] sm:$0xff]
    %v5226 = vld [vmem:[#allocation8 + $0x1798] sm:$0xff]
    %v5227 = vld [vmem:[#allocation8 + $0x17a0] sm:$0xff]
    %v5228 = vld [vmem:[#allocation8 + $0x17a8] sm:$0xff]
    %v5229 = vld [vmem:[#allocation8 + $0x17b0] sm:$0xff]
    %v5230 = vld [vmem:[#allocation8 + $0x17b8] sm:$0xff]
    %v5231 = vld [vmem:[#allocation8 + $0x17c0] sm:$0xff]
    %v5232 = vld [vmem:[#allocation8 + $0x17c8] sm:$0xff]
    %v5233 = vld [vmem:[#allocation8 + $0x17d0] sm:$0xff]
    %v5234 = vld [vmem:[#allocation8 + $0x17d8] sm:$0xff]
    %v5235 = vld [vmem:[#allocation8 + $0x17e0] sm:$0xff]
    %v5236 = vld [vmem:[#allocation8 + $0x17e8] sm:$0xff]
    %v5237 = vld [vmem:[#allocation8 + $0x17f0] sm:$0xff]
    %v5238 = vld [vmem:[#allocation8 + $0x17f8] sm:$0xff]
    %v5239 = vld [vmem:[#allocation8 + $0x1800] sm:$0xff]
    %v5240 = vld [vmem:[#allocation8 + $0x1808] sm:$0xff]
    %v5241 = vld [vmem:[#allocation8 + $0x1810] sm:$0xff]
    %v5242 = vld [vmem:[#allocation8 + $0x1818] sm:$0xff]
    %v5243 = vld [vmem:[#allocation8 + $0x1820] sm:$0xff]
    %v5244 = vld [vmem:[#allocation8 + $0x1828] sm:$0xff]
    %v5245 = vld [vmem:[#allocation8 + $0x1830] sm:$0xff]
    %v5246 = vld [vmem:[#allocation8 + $0x1838] sm:$0xff]
    %v5247 = vld [vmem:[#allocation8 + $0x1840] sm:$0xff]
    %v5248 = vld [vmem:[#allocation8 + $0x1848] sm:$0xff]
    %v5249 = vld [vmem:[#allocation8 + $0x1850] sm:$0xff]
    %v5250 = vld [vmem:[#allocation8 + $0x1858] sm:$0xff]
    %v5251 = vld [vmem:[#allocation8 + $0x1860] sm:$0xff]
    %v5252 = vld [vmem:[#allocation8 + $0x1868] sm:$0xff]
    %v5253 = vld [vmem:[#allocation8 + $0x1870] sm:$0xff]
    %v5254 = vld [vmem:[#allocation8 + $0x1878] sm:$0xff]
    %v5255 = vld [vmem:[#allocation8 + $0x1880] sm:$0xff]
    %v5256 = vld [vmem:[#allocation8 + $0x1888] sm:$0xff]
    %v5257 = vld [vmem:[#allocation8 + $0x1890] sm:$0xff]
    %v5258 = vld [vmem:[#allocation8 + $0x1898] sm:$0xff]
    %v5259 = vld [vmem:[#allocation8 + $0x18a0] sm:$0xff]
    %v5260 = vld [vmem:[#allocation8 + $0x18a8] sm:$0xff]
    %v5261 = vld [vmem:[#allocation8 + $0x18b0] sm:$0xff]
    %v5262 = vld [vmem:[#allocation8 + $0x18b8] sm:$0xff]
    %v5263 = vld [vmem:[#allocation8 + $0x18c0] sm:$0xff]
    %v5264 = vld [vmem:[#allocation8 + $0x18c8] sm:$0xff]
    %v5265 = vld [vmem:[#allocation8 + $0x18d0] sm:$0xff]
    %v5266 = vld [vmem:[#allocation8 + $0x18d8] sm:$0xff]
    %v5267 = vld [vmem:[#allocation8 + $0x18e0] sm:$0xff]
    %v5268 = vld [vmem:[#allocation8 + $0x18e8] sm:$0xff]
    %v5269 = vld [vmem:[#allocation8 + $0x18f0] sm:$0xff]
    %v5270 = vld [vmem:[#allocation8 + $0x18f8] sm:$0xff]
    %v5271 = vld [vmem:[#allocation10] sm:$0xff]
    %v5272 = vld [vmem:[#allocation10 + $0x8] sm:$0x3]
    %v5275 = vperm.slane %v5271, 0
    %v5276 = vperm.slane %v5271, 1
    %v5277 = vperm.slane %v5271, 2
    %v5278 = vperm.slane %v5271, 3
    %v5279 = vperm.slane %v5271, 4
    %v5280 = vperm.slane %v5271, 5
    %v5281 = vperm.slane %v5271, 6
    %v5282 = vperm.slane %v5271, 7
    %v5283 = vperm.slane %v5272, 0
    %v5284 = vperm.slane %v5272, 1
    %v6095 = vunpack.c.l.b16 %v4471
    %v6096 = vunpack.c.h.b16 %v4471
    %v6097 = vunpack.c.l.b16 %v4472
    %v6098 = vunpack.c.h.b16 %v4472
    %v6099 = vunpack.c.l.b16 %v4473
    %v6100 = vunpack.c.h.b16 %v4473
    %v6101 = vunpack.c.l.b16 %v4474
    %v6102 = vunpack.c.h.b16 %v4474
    %v6103 = vunpack.c.l.b16 %v4475
    %v6104 = vunpack.c.h.b16 %v4475
    %v6105 = vunpack.c.l.b16 %v4476
    %v6106 = vunpack.c.h.b16 %v4476
    %v6107 = vunpack.c.l.b16 %v4477
    %v6108 = vunpack.c.h.b16 %v4477
    %v6109 = vunpack.c.l.b16 %v4478
    %v6110 = vunpack.c.h.b16 %v4478
    %v6111 = vunpack.c.l.b16 %v4479
    %v6112 = vunpack.c.h.b16 %v4479
    %v6113 = vunpack.c.l.b16 %v4480
    %v6114 = vunpack.c.h.b16 %v4480
    %v6115 = vunpack.c.l.b16 %v4481
    %v6116 = vunpack.c.h.b16 %v4481
    %v6117 = vunpack.c.l.b16 %v4482
    %v6118 = vunpack.c.h.b16 %v4482
    %v6119 = vunpack.c.l.b16 %v4483
    %v6120 = vunpack.c.h.b16 %v4483
    %v6121 = vunpack.c.l.b16 %v4484
    %v6122 = vunpack.c.h.b16 %v4484
    %v6123 = vunpack.c.l.b16 %v4485
    %v6124 = vunpack.c.h.b16 %v4485
    %v6125 = vunpack.c.l.b16 %v4486
    %v6126 = vunpack.c.h.b16 %v4486
    %v6127 = vunpack.c.l.b16 %v4487
    %v6128 = vunpack.c.h.b16 %v4487
    %v6129 = vunpack.c.l.b16 %v4488
    %v6130 = vunpack.c.h.b16 %v4488
    %v6131 = vunpack.c.l.b16 %v4489
    %v6132 = vunpack.c.h.b16 %v4489
    %v6133 = vunpack.c.l.b16 %v4490
    %v6134 = vunpack.c.h.b16 %v4490
    %v6135 = vunpack.c.l.b16 %v4491
    %v6136 = vunpack.c.h.b16 %v4491
    %v6137 = vunpack.c.l.b16 %v4492
    %v6138 = vunpack.c.h.b16 %v4492
    %v6139 = vunpack.c.l.b16 %v4493
    %v6140 = vunpack.c.h.b16 %v4493
    %v6141 = vunpack.c.l.b16 %v4494
    %v6142 = vunpack.c.h.b16 %v4494
    %v6143 = vunpack.c.l.b16 %v4495
    %v6144 = vunpack.c.h.b16 %v4495
    %v6145 = vunpack.c.l.b16 %v4496
    %v6146 = vunpack.c.h.b16 %v4496
    %v6147 = vunpack.c.l.b16 %v4497
    %v6148 = vunpack.c.h.b16 %v4497
    %v6149 = vunpack.c.l.b16 %v4498
    %v6150 = vunpack.c.h.b16 %v4498
    %v6151 = vunpack.c.l.b16 %v4499
    %v6152 = vunpack.c.h.b16 %v4499
    %v6153 = vunpack.c.l.b16 %v4500
    %v6154 = vunpack.c.h.b16 %v4500
    %v6155 = vunpack.c.l.b16 %v4501
    %v6156 = vunpack.c.h.b16 %v4501
    %v6157 = vunpack.c.l.b16 %v4502
    %v6158 = vunpack.c.h.b16 %v4502
    %v6159 = vunpack.c.l.b16 %v4503
    %v6160 = vunpack.c.h.b16 %v4503
    %v6161 = vunpack.c.l.b16 %v4504
    %v6162 = vunpack.c.h.b16 %v4504
    %v6163 = vunpack.c.l.b16 %v4505
    %v6164 = vunpack.c.h.b16 %v4505
    %v6165 = vunpack.c.l.b16 %v4506
    %v6166 = vunpack.c.h.b16 %v4506
    %v6167 = vunpack.c.l.b16 %v4507
    %v6168 = vunpack.c.h.b16 %v4507
    %v6169 = vunpack.c.l.b16 %v4508
    %v6170 = vunpack.c.h.b16 %v4508
    %v6171 = vunpack.c.l.b16 %v4509
    %v6172 = vunpack.c.h.b16 %v4509
    %v6173 = vunpack.c.l.b16 %v4510
    %v6174 = vunpack.c.h.b16 %v4510
    %v6175 = vunpack.c.l.b16 %v4511
    %v6176 = vunpack.c.h.b16 %v4511
    %v6177 = vunpack.c.l.b16 %v4512
    %v6178 = vunpack.c.h.b16 %v4512
    %v6179 = vunpack.c.l.b16 %v4513
    %v6180 = vunpack.c.h.b16 %v4513
    %v6181 = vunpack.c.l.b16 %v4514
    %v6182 = vunpack.c.h.b16 %v4514
    %v6183 = vunpack.c.l.b16 %v4515
    %v6184 = vunpack.c.h.b16 %v4515
    %v6185 = vunpack.c.l.b16 %v4516
    %v6186 = vunpack.c.h.b16 %v4516
    %v6187 = vunpack.c.l.b16 %v4517
    %v6188 = vunpack.c.h.b16 %v4517
    %v6189 = vunpack.c.l.b16 %v4518
    %v6190 = vunpack.c.h.b16 %v4518
    %v6191 = vunpack.c.l.b16 %v4519
    %v6192 = vunpack.c.h.b16 %v4519
    %v6193 = vunpack.c.l.b16 %v4520
    %v6194 = vunpack.c.h.b16 %v4520
    %v6195 = vunpack.c.l.b16 %v4521
    %v6196 = vunpack.c.h.b16 %v4521
    %v6197 = vunpack.c.l.b16 %v4522
    %v6198 = vunpack.c.h.b16 %v4522
    %v6199 = vunpack.c.l.b16 %v4523
    %v6200 = vunpack.c.h.b16 %v4523
    %v6201 = vunpack.c.l.b16 %v4524
    %v6202 = vunpack.c.h.b16 %v4524
    %v6203 = vunpack.c.l.b16 %v4525
    %v6204 = vunpack.c.h.b16 %v4525
    %v6205 = vunpack.c.l.b16 %v4526
    %v6206 = vunpack.c.h.b16 %v4526
    %v6207 = vunpack.c.l.b16 %v4527
    %v6208 = vunpack.c.h.b16 %v4527
    %v6209 = vunpack.c.l.b16 %v4528
    %v6210 = vunpack.c.h.b16 %v4528
    %v6211 = vunpack.c.l.b16 %v4529
    %v6212 = vunpack.c.h.b16 %v4529
    %v6213 = vunpack.c.l.b16 %v4530
    %v6214 = vunpack.c.h.b16 %v4530
    %v6215 = vunpack.c.l.b16 %v4531
    %v6216 = vunpack.c.h.b16 %v4531
    %v6217 = vunpack.c.l.b16 %v4532
    %v6218 = vunpack.c.h.b16 %v4532
    %v6219 = vunpack.c.l.b16 %v4533
    %v6220 = vunpack.c.h.b16 %v4533
    %v6221 = vunpack.c.l.b16 %v4534
    %v6222 = vunpack.c.h.b16 %v4534
    %v6223 = vunpack.c.l.b16 %v4535
    %v6224 = vunpack.c.h.b16 %v4535
    %v6225 = vunpack.c.l.b16 %v4536
    %v6226 = vunpack.c.h.b16 %v4536
    %v6227 = vunpack.c.l.b16 %v4537
    %v6228 = vunpack.c.h.b16 %v4537
    %v6229 = vunpack.c.l.b16 %v4538
    %v6230 = vunpack.c.h.b16 %v4538
    %v6231 = vunpack.c.l.b16 %v4539
    %v6232 = vunpack.c.h.b16 %v4539
    %v6233 = vunpack.c.l.b16 %v4540
    %v6234 = vunpack.c.h.b16 %v4540
    %v6235 = vunpack.c.l.b16 %v4541
    %v6236 = vunpack.c.h.b16 %v4541
    %v6237 = vunpack.c.l.b16 %v4542
    %v6238 = vunpack.c.h.b16 %v4542
    %v6239 = vunpack.c.l.b16 %v4543
    %v6240 = vunpack.c.h.b16 %v4543
    %v6241 = vunpack.c.l.b16 %v4544
    %v6242 = vunpack.c.h.b16 %v4544
    %v6243 = vunpack.c.l.b16 %v4545
    %v6244 = vunpack.c.h.b16 %v4545
    %v6245 = vunpack.c.l.b16 %v4546
    %v6246 = vunpack.c.h.b16 %v4546
    %v6247 = vunpack.c.l.b16 %v4547
    %v6248 = vunpack.c.h.b16 %v4547
    %v6249 = vunpack.c.l.b16 %v4548
    %v6250 = vunpack.c.h.b16 %v4548
    %v6251 = vunpack.c.l.b16 %v4549
    %v6252 = vunpack.c.h.b16 %v4549
    %v6253 = vunpack.c.l.b16 %v4550
    %v6254 = vunpack.c.h.b16 %v4550
    %v6255 = vunpack.c.l.b16 %v4551
    %v6256 = vunpack.c.h.b16 %v4551
    %v6257 = vunpack.c.l.b16 %v4552
    %v6258 = vunpack.c.h.b16 %v4552
    %v6259 = vunpack.c.l.b16 %v4553
    %v6260 = vunpack.c.h.b16 %v4553
    %v6261 = vunpack.c.l.b16 %v4554
    %v6262 = vunpack.c.h.b16 %v4554
    %v6263 = vunpack.c.l.b16 %v4555
    %v6264 = vunpack.c.h.b16 %v4555
    %v6265 = vunpack.c.l.b16 %v4556
    %v6266 = vunpack.c.h.b16 %v4556
    %v6267 = vunpack.c.l.b16 %v4557
    %v6268 = vunpack.c.h.b16 %v4557
    %v6269 = vunpack.c.l.b16 %v4558
    %v6270 = vunpack.c.h.b16 %v4558
    %v6271 = vunpack.c.l.b16 %v4559
    %v6272 = vunpack.c.h.b16 %v4559
    %v6273 = vunpack.c.l.b16 %v4560
    %v6274 = vunpack.c.h.b16 %v4560
    %v6275 = vunpack.c.l.b16 %v4561
    %v6276 = vunpack.c.h.b16 %v4561
    %v6277 = vunpack.c.l.b16 %v4562
    %v6278 = vunpack.c.h.b16 %v4562
    %v6279 = vunpack.c.l.b16 %v4563
    %v6280 = vunpack.c.h.b16 %v4563
    %v6281 = vunpack.c.l.b16 %v4564
    %v6282 = vunpack.c.h.b16 %v4564
    %v6283 = vunpack.c.l.b16 %v4565
    %v6284 = vunpack.c.h.b16 %v4565
    %v6285 = vunpack.c.l.b16 %v4566
    %v6286 = vunpack.c.h.b16 %v4566
    %v6287 = vunpack.c.l.b16 %v4567
    %v6288 = vunpack.c.h.b16 %v4567
    %v6289 = vunpack.c.l.b16 %v4568
    %v6290 = vunpack.c.h.b16 %v4568
    %v6291 = vunpack.c.l.b16 %v4569
    %v6292 = vunpack.c.h.b16 %v4569
    %v6293 = vunpack.c.l.b16 %v4570
    %v6294 = vunpack.c.h.b16 %v4570
    %v6295 = vunpack.c.l.b16 %v4571
    %v6296 = vunpack.c.h.b16 %v4571
    %v6297 = vunpack.c.l.b16 %v4572
    %v6298 = vunpack.c.h.b16 %v4572
    %v6299 = vunpack.c.l.b16 %v4573
    %v6300 = vunpack.c.h.b16 %v4573
    %v6301 = vunpack.c.l.b16 %v4574
    %v6302 = vunpack.c.h.b16 %v4574
    %v6303 = vunpack.c.l.b16 %v4575
    %v6304 = vunpack.c.h.b16 %v4575
    %v6305 = vunpack.c.l.b16 %v4576
    %v6306 = vunpack.c.h.b16 %v4576
    %v6307 = vunpack.c.l.b16 %v4577
    %v6308 = vunpack.c.h.b16 %v4577
    %v6309 = vunpack.c.l.b16 %v4578
    %v6310 = vunpack.c.h.b16 %v4578
    %v6311 = vunpack.c.l.b16 %v4579
    %v6312 = vunpack.c.h.b16 %v4579
    %v6313 = vunpack.c.l.b16 %v4580
    %v6314 = vunpack.c.h.b16 %v4580
    %v6315 = vunpack.c.l.b16 %v4581
    %v6316 = vunpack.c.h.b16 %v4581
    %v6317 = vunpack.c.l.b16 %v4582
    %v6318 = vunpack.c.h.b16 %v4582
    %v6319 = vunpack.c.l.b16 %v4583
    %v6320 = vunpack.c.h.b16 %v4583
    %v6321 = vunpack.c.l.b16 %v4584
    %v6322 = vunpack.c.h.b16 %v4584
    %v6323 = vunpack.c.l.b16 %v4585
    %v6324 = vunpack.c.h.b16 %v4585
    %v6325 = vunpack.c.l.b16 %v4586
    %v6326 = vunpack.c.h.b16 %v4586
    %v6327 = vunpack.c.l.b16 %v4587
    %v6328 = vunpack.c.h.b16 %v4587
    %v6329 = vunpack.c.l.b16 %v4588
    %v6330 = vunpack.c.h.b16 %v4588
    %v6331 = vunpack.c.l.b16 %v4589
    %v6332 = vunpack.c.h.b16 %v4589
    %v6333 = vunpack.c.l.b16 %v4590
    %v6334 = vunpack.c.h.b16 %v4590
    %v6335 = vunpack.c.l.b16 %v4591
    %v6336 = vunpack.c.h.b16 %v4591
    %v6337 = vunpack.c.l.b16 %v4592
    %v6338 = vunpack.c.h.b16 %v4592
    %v6339 = vunpack.c.l.b16 %v4593
    %v6340 = vunpack.c.h.b16 %v4593
    %v6341 = vunpack.c.l.b16 %v4594
    %v6342 = vunpack.c.h.b16 %v4594
    %v6343 = vunpack.c.l.b16 %v4595
    %v6344 = vunpack.c.h.b16 %v4595
    %v6345 = vunpack.c.l.b16 %v4596
    %v6346 = vunpack.c.h.b16 %v4596
    %v6347 = vunpack.c.l.b16 %v4597
    %v6348 = vunpack.c.h.b16 %v4597
    %v6349 = vunpack.c.l.b16 %v4598
    %v6350 = vunpack.c.h.b16 %v4598
    %v6351 = vunpack.c.l.b16 %v4599
    %v6352 = vunpack.c.h.b16 %v4599
    %v6353 = vunpack.c.l.b16 %v4600
    %v6354 = vunpack.c.h.b16 %v4600
    %v6355 = vunpack.c.l.b16 %v4601
    %v6356 = vunpack.c.h.b16 %v4601
    %v6357 = vunpack.c.l.b16 %v4602
    %v6358 = vunpack.c.h.b16 %v4602
    %v6359 = vunpack.c.l.b16 %v4603
    %v6360 = vunpack.c.h.b16 %v4603
    %v6361 = vunpack.c.l.b16 %v4604
    %v6362 = vunpack.c.h.b16 %v4604
    %v6363 = vunpack.c.l.b16 %v4605
    %v6364 = vunpack.c.h.b16 %v4605
    %v6365 = vunpack.c.l.b16 %v4606
    %v6366 = vunpack.c.h.b16 %v4606
    %v6367 = vunpack.c.l.b16 %v4607
    %v6368 = vunpack.c.h.b16 %v4607
    %v6369 = vunpack.c.l.b16 %v4608
    %v6370 = vunpack.c.h.b16 %v4608
    %v6371 = vunpack.c.l.b16 %v4609
    %v6372 = vunpack.c.h.b16 %v4609
    %v6373 = vunpack.c.l.b16 %v4610
    %v6374 = vunpack.c.h.b16 %v4610
    %v6375 = vunpack.c.l.b16 %v4611
    %v6376 = vunpack.c.h.b16 %v4611
    %v6377 = vunpack.c.l.b16 %v4612
    %v6378 = vunpack.c.h.b16 %v4612
    %v6379 = vunpack.c.l.b16 %v4613
    %v6380 = vunpack.c.h.b16 %v4613
    %v6381 = vunpack.c.l.b16 %v4614
    %v6382 = vunpack.c.h.b16 %v4614
    %v6383 = vunpack.c.l.b16 %v4615
    %v6384 = vunpack.c.h.b16 %v4615
    %v6385 = vunpack.c.l.b16 %v4616
    %v6386 = vunpack.c.h.b16 %v4616
    %v6387 = vunpack.c.l.b16 %v4617
    %v6388 = vunpack.c.h.b16 %v4617
    %v6389 = vunpack.c.l.b16 %v4618
    %v6390 = vunpack.c.h.b16 %v4618
    %v6391 = vunpack.c.l.b16 %v4619
    %v6392 = vunpack.c.h.b16 %v4619
    %v6393 = vunpack.c.l.b16 %v4620
    %v6394 = vunpack.c.h.b16 %v4620
    %v6395 = vunpack.c.l.b16 %v4621
    %v6396 = vunpack.c.h.b16 %v4621
    %v6397 = vunpack.c.l.b16 %v4622
    %v6398 = vunpack.c.h.b16 %v4622
    %v6399 = vunpack.c.l.b16 %v4623
    %v6400 = vunpack.c.h.b16 %v4623
    %v6401 = vunpack.c.l.b16 %v4624
    %v6402 = vunpack.c.h.b16 %v4624
    %v6403 = vunpack.c.l.b16 %v4625
    %v6404 = vunpack.c.h.b16 %v4625
    %v6405 = vunpack.c.l.b16 %v4626
    %v6406 = vunpack.c.h.b16 %v4626
    %v6407 = vunpack.c.l.b16 %v4627
    %v6408 = vunpack.c.h.b16 %v4627
    %v6409 = vunpack.c.l.b16 %v4628
    %v6410 = vunpack.c.h.b16 %v4628
    %v6411 = vunpack.c.l.b16 %v4629
    %v6412 = vunpack.c.h.b16 %v4629
    %v6413 = vunpack.c.l.b16 %v4630
    %v6414 = vunpack.c.h.b16 %v4630
    %v6415 = vunpack.c.l.b16 %v4631
    %v6416 = vunpack.c.h.b16 %v4631
    %v6417 = vunpack.c.l.b16 %v4632
    %v6418 = vunpack.c.h.b16 %v4632
    %v6419 = vunpack.c.l.b16 %v4633
    %v6420 = vunpack.c.h.b16 %v4633
    %v6421 = vunpack.c.l.b16 %v4634
    %v6422 = vunpack.c.h.b16 %v4634
    %v6423 = vunpack.c.l.b16 %v4635
    %v6424 = vunpack.c.h.b16 %v4635
    %v6425 = vunpack.c.l.b16 %v4636
    %v6426 = vunpack.c.h.b16 %v4636
    %v6427 = vunpack.c.l.b16 %v4637
    %v6428 = vunpack.c.h.b16 %v4637
    %v6429 = vunpack.c.l.b16 %v4638
    %v6430 = vunpack.c.h.b16 %v4638
    %v6431 = vunpack.c.l.b16 %v4639
    %v6432 = vunpack.c.h.b16 %v4639
    %v6433 = vunpack.c.l.b16 %v4640
    %v6434 = vunpack.c.h.b16 %v4640
    %v6435 = vunpack.c.l.b16 %v4641
    %v6436 = vunpack.c.h.b16 %v4641
    %v6437 = vunpack.c.l.b16 %v4642
    %v6438 = vunpack.c.h.b16 %v4642
    %v6439 = vunpack.c.l.b16 %v4643
    %v6440 = vunpack.c.h.b16 %v4643
    %v6441 = vunpack.c.l.b16 %v4644
    %v6442 = vunpack.c.h.b16 %v4644
    %v6443 = vunpack.c.l.b16 %v4645
    %v6444 = vunpack.c.h.b16 %v4645
    %v6445 = vunpack.c.l.b16 %v4646
    %v6446 = vunpack.c.h.b16 %v4646
    %v6447 = vunpack.c.l.b16 %v4647
    %v6448 = vunpack.c.h.b16 %v4647
    %v6449 = vunpack.c.l.b16 %v4648
    %v6450 = vunpack.c.h.b16 %v4648
    %v6451 = vunpack.c.l.b16 %v4649
    %v6452 = vunpack.c.h.b16 %v4649
    %v6453 = vunpack.c.l.b16 %v4650
    %v6454 = vunpack.c.h.b16 %v4650
    %v6455 = vunpack.c.l.b16 %v4651
    %v6456 = vunpack.c.h.b16 %v4651
    %v6457 = vunpack.c.l.b16 %v4652
    %v6458 = vunpack.c.h.b16 %v4652
    %v6459 = vunpack.c.l.b16 %v4653
    %v6460 = vunpack.c.h.b16 %v4653
    %v6461 = vunpack.c.l.b16 %v4654
    %v6462 = vunpack.c.h.b16 %v4654
    %v6463 = vunpack.c.l.b16 %v4655
    %v6464 = vunpack.c.h.b16 %v4655
    %v6465 = vunpack.c.l.b16 %v4656
    %v6466 = vunpack.c.h.b16 %v4656
    %v6467 = vunpack.c.l.b16 %v4657
    %v6468 = vunpack.c.h.b16 %v4657
    %v6469 = vunpack.c.l.b16 %v4658
    %v6470 = vunpack.c.h.b16 %v4658
    %v6471 = vunpack.c.l.b16 %v4659
    %v6472 = vunpack.c.h.b16 %v4659
    %v6473 = vunpack.c.l.b16 %v4660
    %v6474 = vunpack.c.h.b16 %v4660
    %v6475 = vunpack.c.l.b16 %v4661
    %v6476 = vunpack.c.h.b16 %v4661
    %v6477 = vunpack.c.l.b16 %v4662
    %v6478 = vunpack.c.h.b16 %v4662
    %v6479 = vunpack.c.l.b16 %v4663
    %v6480 = vunpack.c.h.b16 %v4663
    %v6481 = vunpack.c.l.b16 %v4664
    %v6482 = vunpack.c.h.b16 %v4664
    %v6483 = vunpack.c.l.b16 %v4665
    %v6484 = vunpack.c.h.b16 %v4665
    %v6485 = vunpack.c.l.b16 %v4666
    %v6486 = vunpack.c.h.b16 %v4666
    %v6487 = vunpack.c.l.b16 %v4667
    %v6488 = vunpack.c.h.b16 %v4667
    %v6489 = vunpack.c.l.b16 %v4668
    %v6490 = vunpack.c.h.b16 %v4668
    %v6491 = vunpack.c.l.b16 %v4669
    %v6492 = vunpack.c.h.b16 %v4669
    %v6493 = vunpack.c.l.b16 %v4670
    %v6494 = vunpack.c.h.b16 %v4670
    %v6495 = vunpack.c.l.b16 %v4671
    %v6496 = vunpack.c.h.b16 %v4671
    %v6497 = vunpack.c.l.b16 %v4672
    %v6498 = vunpack.c.h.b16 %v4672
    %v6499 = vunpack.c.l.b16 %v4673
    %v6500 = vunpack.c.h.b16 %v4673
    %v6501 = vunpack.c.l.b16 %v4674
    %v6502 = vunpack.c.h.b16 %v4674
    %v6503 = vunpack.c.l.b16 %v4675
    %v6504 = vunpack.c.h.b16 %v4675
    %v6505 = vunpack.c.l.b16 %v4676
    %v6506 = vunpack.c.h.b16 %v4676
    %v6507 = vunpack.c.l.b16 %v4677
    %v6508 = vunpack.c.h.b16 %v4677
    %v6509 = vunpack.c.l.b16 %v4678
    %v6510 = vunpack.c.h.b16 %v4678
    %v6511 = vunpack.c.l.b16 %v4679
    %v6512 = vunpack.c.h.b16 %v4679
    %v6513 = vunpack.c.l.b16 %v4680
    %v6514 = vunpack.c.h.b16 %v4680
    %v6515 = vunpack.c.l.b16 %v4681
    %v6516 = vunpack.c.h.b16 %v4681
    %v6517 = vunpack.c.l.b16 %v4682
    %v6518 = vunpack.c.h.b16 %v4682
    %v6519 = vunpack.c.l.b16 %v4683
    %v6520 = vunpack.c.h.b16 %v4683
    %v6521 = vunpack.c.l.b16 %v4684
    %v6522 = vunpack.c.h.b16 %v4684
    %v6523 = vunpack.c.l.b16 %v4685
    %v6524 = vunpack.c.h.b16 %v4685
    %v6525 = vunpack.c.l.b16 %v4686
    %v6526 = vunpack.c.h.b16 %v4686
    %v6527 = vunpack.c.l.b16 %v4687
    %v6528 = vunpack.c.h.b16 %v4687
    %v6529 = vunpack.c.l.b16 %v4688
    %v6530 = vunpack.c.h.b16 %v4688
    %v6531 = vunpack.c.l.b16 %v4689
    %v6532 = vunpack.c.h.b16 %v4689
    %v6533 = vunpack.c.l.b16 %v4690
    %v6534 = vunpack.c.h.b16 %v4690
    %v6535 = vunpack.c.l.b16 %v4691
    %v6536 = vunpack.c.h.b16 %v4691
    %v6537 = vunpack.c.l.b16 %v4692
    %v6538 = vunpack.c.h.b16 %v4692
    %v6539 = vunpack.c.l.b16 %v4693
    %v6540 = vunpack.c.h.b16 %v4693
    %v6541 = vunpack.c.l.b16 %v4694
    %v6542 = vunpack.c.h.b16 %v4694
    %v6543 = vunpack.c.l.b16 %v4695
    %v6544 = vunpack.c.h.b16 %v4695
    %v6545 = vunpack.c.l.b16 %v4696
    %v6546 = vunpack.c.h.b16 %v4696
    %v6547 = vunpack.c.l.b16 %v4697
    %v6548 = vunpack.c.h.b16 %v4697
    %v6549 = vunpack.c.l.b16 %v4698
    %v6550 = vunpack.c.h.b16 %v4698
    %v6551 = vunpack.c.l.b16 %v4699
    %v6552 = vunpack.c.h.b16 %v4699
    %v6553 = vunpack.c.l.b16 %v4700
    %v6554 = vunpack.c.h.b16 %v4700
    %v6555 = vunpack.c.l.b16 %v4701
    %v6556 = vunpack.c.h.b16 %v4701
    %v6557 = vunpack.c.l.b16 %v4702
    %v6558 = vunpack.c.h.b16 %v4702
    %v6559 = vunpack.c.l.b16 %v4703
    %v6560 = vunpack.c.h.b16 %v4703
    %v6561 = vunpack.c.l.b16 %v4704
    %v6562 = vunpack.c.h.b16 %v4704
    %v6563 = vunpack.c.l.b16 %v4705
    %v6564 = vunpack.c.h.b16 %v4705
    %v6565 = vunpack.c.l.b16 %v4706
    %v6566 = vunpack.c.h.b16 %v4706
    %v6567 = vunpack.c.l.b16 %v4707
    %v6568 = vunpack.c.h.b16 %v4707
    %v6569 = vunpack.c.l.b16 %v4708
    %v6570 = vunpack.c.h.b16 %v4708
    %v6571 = vunpack.c.l.b16 %v4709
    %v6572 = vunpack.c.h.b16 %v4709
    %v6573 = vunpack.c.l.b16 %v4710
    %v6574 = vunpack.c.h.b16 %v4710
    %v6575 = vunpack.c.l.b16 %v4711
    %v6576 = vunpack.c.h.b16 %v4711
    %v6577 = vunpack.c.l.b16 %v4712
    %v6578 = vunpack.c.h.b16 %v4712
    %v6579 = vunpack.c.l.b16 %v4713
    %v6580 = vunpack.c.h.b16 %v4713
    %v6581 = vunpack.c.l.b16 %v4714
    %v6582 = vunpack.c.h.b16 %v4714
    %v6583 = vunpack.c.l.b16 %v4715
    %v6584 = vunpack.c.h.b16 %v4715
    %v6585 = vunpack.c.l.b16 %v4716
    %v6586 = vunpack.c.h.b16 %v4716
    %v6587 = vunpack.c.l.b16 %v4717
    %v6588 = vunpack.c.h.b16 %v4717
    %v6589 = vunpack.c.l.b16 %v4718
    %v6590 = vunpack.c.h.b16 %v4718
    %v6591 = vunpack.c.l.b16 %v4719
    %v6592 = vunpack.c.h.b16 %v4719
    %v6593 = vunpack.c.l.b16 %v4720
    %v6594 = vunpack.c.h.b16 %v4720
    %v6595 = vunpack.c.l.b16 %v4721
    %v6596 = vunpack.c.h.b16 %v4721
    %v6597 = vunpack.c.l.b16 %v4722
    %v6598 = vunpack.c.h.b16 %v4722
    %v6599 = vunpack.c.l.b16 %v4723
    %v6600 = vunpack.c.h.b16 %v4723
    %v6601 = vunpack.c.l.b16 %v4724
    %v6602 = vunpack.c.h.b16 %v4724
    %v6603 = vunpack.c.l.b16 %v4725
    %v6604 = vunpack.c.h.b16 %v4725
    %v6605 = vunpack.c.l.b16 %v4726
    %v6606 = vunpack.c.h.b16 %v4726
    %v6607 = vunpack.c.l.b16 %v4727
    %v6608 = vunpack.c.h.b16 %v4727
    %v6609 = vunpack.c.l.b16 %v4728
    %v6610 = vunpack.c.h.b16 %v4728
    %v6611 = vunpack.c.l.b16 %v4729
    %v6612 = vunpack.c.h.b16 %v4729
    %v6613 = vunpack.c.l.b16 %v4730
    %v6614 = vunpack.c.h.b16 %v4730
    %v6615 = vunpack.c.l.b16 %v4731
    %v6616 = vunpack.c.h.b16 %v4731
    %v6617 = vunpack.c.l.b16 %v4732
    %v6618 = vunpack.c.h.b16 %v4732
    %v6619 = vunpack.c.l.b16 %v4733
    %v6620 = vunpack.c.h.b16 %v4733
    %v6621 = vunpack.c.l.b16 %v4734
    %v6622 = vunpack.c.h.b16 %v4734
    %v6623 = vunpack.c.l.b16 %v4735
    %v6624 = vunpack.c.h.b16 %v4735
    %v6625 = vunpack.c.l.b16 %v4736
    %v6626 = vunpack.c.h.b16 %v4736
    %v6627 = vunpack.c.l.b16 %v4737
    %v6628 = vunpack.c.h.b16 %v4737
    %v6629 = vunpack.c.l.b16 %v4738
    %v6630 = vunpack.c.h.b16 %v4738
    %v6631 = vunpack.c.l.b16 %v4739
    %v6632 = vunpack.c.h.b16 %v4739
    %v6633 = vunpack.c.l.b16 %v4740
    %v6634 = vunpack.c.h.b16 %v4740
    %v6635 = vunpack.c.l.b16 %v4741
    %v6636 = vunpack.c.h.b16 %v4741
    %v6637 = vunpack.c.l.b16 %v4742
    %v6638 = vunpack.c.h.b16 %v4742
    %v6639 = vunpack.c.l.b16 %v4743
    %v6640 = vunpack.c.h.b16 %v4743
    %v6641 = vunpack.c.l.b16 %v4744
    %v6642 = vunpack.c.h.b16 %v4744
    %v6643 = vunpack.c.l.b16 %v4745
    %v6644 = vunpack.c.h.b16 %v4745
    %v6645 = vunpack.c.l.b16 %v4746
    %v6646 = vunpack.c.h.b16 %v4746
    %v6647 = vunpack.c.l.b16 %v4747
    %v6648 = vunpack.c.h.b16 %v4747
    %v6649 = vunpack.c.l.b16 %v4748
    %v6650 = vunpack.c.h.b16 %v4748
    %v6651 = vunpack.c.l.b16 %v4749
    %v6652 = vunpack.c.h.b16 %v4749
    %v6653 = vunpack.c.l.b16 %v4750
    %v6654 = vunpack.c.h.b16 %v4750
    %v6655 = vunpack.c.l.b16 %v4751
    %v6656 = vunpack.c.h.b16 %v4751
    %v6657 = vunpack.c.l.b16 %v4752
    %v6658 = vunpack.c.h.b16 %v4752
    %v6659 = vunpack.c.l.b16 %v4753
    %v6660 = vunpack.c.h.b16 %v4753
    %v6661 = vunpack.c.l.b16 %v4754
    %v6662 = vunpack.c.h.b16 %v4754
    %v6663 = vunpack.c.l.b16 %v4755
    %v6664 = vunpack.c.h.b16 %v4755
    %v6665 = vunpack.c.l.b16 %v4756
    %v6666 = vunpack.c.h.b16 %v4756
    %v6667 = vunpack.c.l.b16 %v4757
    %v6668 = vunpack.c.h.b16 %v4757
    %v6669 = vunpack.c.l.b16 %v4758
    %v6670 = vunpack.c.h.b16 %v4758
    %v6671 = vunpack.c.l.b16 %v4759
    %v6672 = vunpack.c.h.b16 %v4759
    %v6673 = vunpack.c.l.b16 %v4760
    %v6674 = vunpack.c.h.b16 %v4760
    %v6675 = vunpack.c.l.b16 %v4761
    %v6676 = vunpack.c.h.b16 %v4761
    %v6677 = vunpack.c.l.b16 %v4762
    %v6678 = vunpack.c.h.b16 %v4762
    %v6679 = vunpack.c.l.b16 %v4763
    %v6680 = vunpack.c.h.b16 %v4763
    %v6681 = vunpack.c.l.b16 %v4764
    %v6682 = vunpack.c.h.b16 %v4764
    %v6683 = vunpack.c.l.b16 %v4765
    %v6684 = vunpack.c.h.b16 %v4765
    %v6685 = vunpack.c.l.b16 %v4766
    %v6686 = vunpack.c.h.b16 %v4766
    %v6687 = vunpack.c.l.b16 %v4767
    %v6688 = vunpack.c.h.b16 %v4767
    %v6689 = vunpack.c.l.b16 %v4768
    %v6690 = vunpack.c.h.b16 %v4768
    %v6691 = vunpack.c.l.b16 %v4769
    %v6692 = vunpack.c.h.b16 %v4769
    %v6693 = vunpack.c.l.b16 %v4770
    %v6694 = vunpack.c.h.b16 %v4770
    %v6695 = vunpack.c.l.b16 %v4771
    %v6696 = vunpack.c.h.b16 %v4771
    %v6697 = vunpack.c.l.b16 %v4772
    %v6698 = vunpack.c.h.b16 %v4772
    %v6699 = vunpack.c.l.b16 %v4773
    %v6700 = vunpack.c.h.b16 %v4773
    %v6701 = vunpack.c.l.b16 %v4774
    %v6702 = vunpack.c.h.b16 %v4774
    %v6703 = vunpack.c.l.b16 %v4775
    %v6704 = vunpack.c.h.b16 %v4775
    %v6705 = vunpack.c.l.b16 %v4776
    %v6706 = vunpack.c.h.b16 %v4776
    %v6707 = vunpack.c.l.b16 %v4777
    %v6708 = vunpack.c.h.b16 %v4777
    %v6709 = vunpack.c.l.b16 %v4778
    %v6710 = vunpack.c.h.b16 %v4778
    %v6711 = vunpack.c.l.b16 %v4779
    %v6712 = vunpack.c.h.b16 %v4779
    %v6713 = vunpack.c.l.b16 %v4780
    %v6714 = vunpack.c.h.b16 %v4780
    %v6715 = vunpack.c.l.b16 %v4781
    %v6716 = vunpack.c.h.b16 %v4781
    %v6717 = vunpack.c.l.b16 %v4782
    %v6718 = vunpack.c.h.b16 %v4782
    %v6719 = vunpack.c.l.b16 %v4783
    %v6720 = vunpack.c.h.b16 %v4783
    %v6721 = vunpack.c.l.b16 %v4784
    %v6722 = vunpack.c.h.b16 %v4784
    %v6723 = vunpack.c.l.b16 %v4785
    %v6724 = vunpack.c.h.b16 %v4785
    %v6725 = vunpack.c.l.b16 %v4786
    %v6726 = vunpack.c.h.b16 %v4786
    %v6727 = vunpack.c.l.b16 %v4787
    %v6728 = vunpack.c.h.b16 %v4787
    %v6729 = vunpack.c.l.b16 %v4788
    %v6730 = vunpack.c.h.b16 %v4788
    %v6731 = vunpack.c.l.b16 %v4789
    %v6732 = vunpack.c.h.b16 %v4789
    %v6733 = vunpack.c.l.b16 %v4790
    %v6734 = vunpack.c.h.b16 %v4790
    %v6735 = vunpack.c.l.b16 %v4791
    %v6736 = vunpack.c.h.b16 %v4791
    %v6737 = vunpack.c.l.b16 %v4792
    %v6738 = vunpack.c.h.b16 %v4792
    %v6739 = vunpack.c.l.b16 %v4793
    %v6740 = vunpack.c.h.b16 %v4793
    %v6741 = vunpack.c.l.b16 %v4794
    %v6742 = vunpack.c.h.b16 %v4794
    %v6743 = vunpack.c.l.b16 %v4795
    %v6744 = vunpack.c.h.b16 %v4795
    %v6745 = vunpack.c.l.b16 %v4796
    %v6746 = vunpack.c.h.b16 %v4796
    %v6747 = vunpack.c.l.b16 %v4797
    %v6748 = vunpack.c.h.b16 %v4797
    %v6749 = vunpack.c.l.b16 %v4798
    %v6750 = vunpack.c.h.b16 %v4798
    %v6751 = vunpack.c.l.b16 %v4799
    %v6752 = vunpack.c.h.b16 %v4799
    %v6753 = vunpack.c.l.b16 %v4800
    %v6754 = vunpack.c.h.b16 %v4800
    %v6755 = vunpack.c.l.b16 %v4801
    %v6756 = vunpack.c.h.b16 %v4801
    %v6757 = vunpack.c.l.b16 %v4802
    %v6758 = vunpack.c.h.b16 %v4802
    %v6759 = vunpack.c.l.b16 %v4803
    %v6760 = vunpack.c.h.b16 %v4803
    %v6761 = vunpack.c.l.b16 %v4804
    %v6762 = vunpack.c.h.b16 %v4804
    %v6763 = vunpack.c.l.b16 %v4805
    %v6764 = vunpack.c.h.b16 %v4805
    %v6765 = vunpack.c.l.b16 %v4806
    %v6766 = vunpack.c.h.b16 %v4806
    %v6767 = vunpack.c.l.b16 %v4807
    %v6768 = vunpack.c.h.b16 %v4807
    %v6769 = vunpack.c.l.b16 %v4808
    %v6770 = vunpack.c.h.b16 %v4808
    %v6771 = vunpack.c.l.b16 %v4809
    %v6772 = vunpack.c.h.b16 %v4809
    %v6773 = vunpack.c.l.b16 %v4810
    %v6774 = vunpack.c.h.b16 %v4810
    %v6775 = vunpack.c.l.b16 %v4811
    %v6776 = vunpack.c.h.b16 %v4811
    %v6777 = vunpack.c.l.b16 %v4812
    %v6778 = vunpack.c.h.b16 %v4812
    %v6779 = vunpack.c.l.b16 %v4813
    %v6780 = vunpack.c.h.b16 %v4813
    %v6781 = vunpack.c.l.b16 %v4814
    %v6782 = vunpack.c.h.b16 %v4814
    %v6783 = vunpack.c.l.b16 %v4815
    %v6784 = vunpack.c.h.b16 %v4815
    %v6785 = vunpack.c.l.b16 %v4816
    %v6786 = vunpack.c.h.b16 %v4816
    %v6787 = vunpack.c.l.b16 %v4817
    %v6788 = vunpack.c.h.b16 %v4817
    %v6789 = vunpack.c.l.b16 %v4818
    %v6790 = vunpack.c.h.b16 %v4818
    %v6791 = vunpack.c.l.b16 %v4819
    %v6792 = vunpack.c.h.b16 %v4819
    %v6793 = vunpack.c.l.b16 %v4820
    %v6794 = vunpack.c.h.b16 %v4820
    %v6795 = vunpack.c.l.b16 %v4821
    %v6796 = vunpack.c.h.b16 %v4821
    %v6797 = vunpack.c.l.b16 %v4822
    %v6798 = vunpack.c.h.b16 %v4822
    %v6799 = vunpack.c.l.b16 %v4823
    %v6800 = vunpack.c.h.b16 %v4823
    %v6801 = vunpack.c.l.b16 %v4824
    %v6802 = vunpack.c.h.b16 %v4824
    %v6803 = vunpack.c.l.b16 %v4825
    %v6804 = vunpack.c.h.b16 %v4825
    %v6805 = vunpack.c.l.b16 %v4826
    %v6806 = vunpack.c.h.b16 %v4826
    %v6807 = vunpack.c.l.b16 %v4827
    %v6808 = vunpack.c.h.b16 %v4827
    %v6809 = vunpack.c.l.b16 %v4828
    %v6810 = vunpack.c.h.b16 %v4828
    %v6811 = vunpack.c.l.b16 %v4829
    %v6812 = vunpack.c.h.b16 %v4829
    %v6813 = vunpack.c.l.b16 %v4830
    %v6814 = vunpack.c.h.b16 %v4830
    %v6815 = vunpack.c.l.b16 %v4831
    %v6816 = vunpack.c.h.b16 %v4831
    %v6817 = vunpack.c.l.b16 %v4832
    %v6818 = vunpack.c.h.b16 %v4832
    %v6819 = vunpack.c.l.b16 %v4833
    %v6820 = vunpack.c.h.b16 %v4833
    %v6821 = vunpack.c.l.b16 %v4834
    %v6822 = vunpack.c.h.b16 %v4834
    %v6823 = vunpack.c.l.b16 %v4835
    %v6824 = vunpack.c.h.b16 %v4835
    %v6825 = vunpack.c.l.b16 %v4836
    %v6826 = vunpack.c.h.b16 %v4836
    %v6827 = vunpack.c.l.b16 %v4837
    %v6828 = vunpack.c.h.b16 %v4837
    %v6829 = vunpack.c.l.b16 %v4838
    %v6830 = vunpack.c.h.b16 %v4838
    %v6831 = vunpack.c.l.b16 %v4839
    %v6832 = vunpack.c.h.b16 %v4839
    %v6833 = vunpack.c.l.b16 %v4840
    %v6834 = vunpack.c.h.b16 %v4840
    %v6835 = vunpack.c.l.b16 %v4841
    %v6836 = vunpack.c.h.b16 %v4841
    %v6837 = vunpack.c.l.b16 %v4842
    %v6838 = vunpack.c.h.b16 %v4842
    %v6839 = vunpack.c.l.b16 %v4843
    %v6840 = vunpack.c.h.b16 %v4843
    %v6841 = vunpack.c.l.b16 %v4844
    %v6842 = vunpack.c.h.b16 %v4844
    %v6843 = vunpack.c.l.b16 %v4845
    %v6844 = vunpack.c.h.b16 %v4845
    %v6845 = vunpack.c.l.b16 %v4846
    %v6846 = vunpack.c.h.b16 %v4846
    %v6847 = vunpack.c.l.b16 %v4847
    %v6848 = vunpack.c.h.b16 %v4847
    %v6849 = vunpack.c.l.b16 %v4848
    %v6850 = vunpack.c.h.b16 %v4848
    %v6851 = vunpack.c.l.b16 %v4849
    %v6852 = vunpack.c.h.b16 %v4849
    %v6853 = vunpack.c.l.b16 %v4850
    %v6854 = vunpack.c.h.b16 %v4850
    %v6855 = vunpack.c.l.b16 %v4851
    %v6856 = vunpack.c.h.b16 %v4851
    %v6857 = vunpack.c.l.b16 %v4852
    %v6858 = vunpack.c.h.b16 %v4852
    %v6859 = vunpack.c.l.b16 %v4853
    %v6860 = vunpack.c.h.b16 %v4853
    %v6861 = vunpack.c.l.b16 %v4854
    %v6862 = vunpack.c.h.b16 %v4854
    %v6863 = vunpack.c.l.b16 %v4855
    %v6864 = vunpack.c.h.b16 %v4855
    %v6865 = vunpack.c.l.b16 %v4856
    %v6866 = vunpack.c.h.b16 %v4856
    %v6867 = vunpack.c.l.b16 %v4857
    %v6868 = vunpack.c.h.b16 %v4857
    %v6869 = vunpack.c.l.b16 %v4858
    %v6870 = vunpack.c.h.b16 %v4858
    %v6871 = vunpack.c.l.b16 %v4859
    %v6872 = vunpack.c.h.b16 %v4859
    %v6873 = vunpack.c.l.b16 %v4860
    %v6874 = vunpack.c.h.b16 %v4860
    %v6875 = vunpack.c.l.b16 %v4861
    %v6876 = vunpack.c.h.b16 %v4861
    %v6877 = vunpack.c.l.b16 %v4862
    %v6878 = vunpack.c.h.b16 %v4862
    %v6879 = vunpack.c.l.b16 %v4863
    %v6880 = vunpack.c.h.b16 %v4863
    %v6881 = vunpack.c.l.b16 %v4864
    %v6882 = vunpack.c.h.b16 %v4864
    %v6883 = vunpack.c.l.b16 %v4865
    %v6884 = vunpack.c.h.b16 %v4865
    %v6885 = vunpack.c.l.b16 %v4866
    %v6886 = vunpack.c.h.b16 %v4866
    %v6887 = vunpack.c.l.b16 %v4867
    %v6888 = vunpack.c.h.b16 %v4867
    %v6889 = vunpack.c.l.b16 %v4868
    %v6890 = vunpack.c.h.b16 %v4868
    %v6891 = vunpack.c.l.b16 %v4869
    %v6892 = vunpack.c.h.b16 %v4869
    %v6893 = vunpack.c.l.b16 %v4870
    %v6894 = vunpack.c.h.b16 %v4870
    %v6895 = vunpack.c.l.b16 %v4871
    %v6896 = vunpack.c.h.b16 %v4871
    %v6897 = vunpack.c.l.b16 %v4872
    %v6898 = vunpack.c.h.b16 %v4872
    %v6899 = vunpack.c.l.b16 %v4873
    %v6900 = vunpack.c.h.b16 %v4873
    %v6901 = vunpack.c.l.b16 %v4874
    %v6902 = vunpack.c.h.b16 %v4874
    %v6903 = vunpack.c.l.b16 %v4875
    %v6904 = vunpack.c.h.b16 %v4875
    %v6905 = vunpack.c.l.b16 %v4876
    %v6906 = vunpack.c.h.b16 %v4876
    %v6907 = vunpack.c.l.b16 %v4877
    %v6908 = vunpack.c.h.b16 %v4877
    %v6909 = vunpack.c.l.b16 %v4878
    %v6910 = vunpack.c.h.b16 %v4878
    %v6911 = vunpack.c.l.b16 %v4879
    %v6912 = vunpack.c.h.b16 %v4879
    %v6913 = vunpack.c.l.b16 %v4880
    %v6914 = vunpack.c.h.b16 %v4880
    %v6915 = vunpack.c.l.b16 %v4881
    %v6916 = vunpack.c.h.b16 %v4881
    %v6917 = vunpack.c.l.b16 %v4882
    %v6918 = vunpack.c.h.b16 %v4882
    %v6919 = vunpack.c.l.b16 %v4883
    %v6920 = vunpack.c.h.b16 %v4883
    %v6921 = vunpack.c.l.b16 %v4884
    %v6922 = vunpack.c.h.b16 %v4884
    %v6923 = vunpack.c.l.b16 %v4885
    %v6924 = vunpack.c.h.b16 %v4885
    %v6925 = vunpack.c.l.b16 %v4886
    %v6926 = vunpack.c.h.b16 %v4886
    %v6927 = vunpack.c.l.b16 %v4887
    %v6928 = vunpack.c.h.b16 %v4887
    %v6929 = vunpack.c.l.b16 %v4888
    %v6930 = vunpack.c.h.b16 %v4888
    %v6931 = vunpack.c.l.b16 %v4889
    %v6932 = vunpack.c.h.b16 %v4889
    %v6933 = vunpack.c.l.b16 %v4890
    %v6934 = vunpack.c.h.b16 %v4890
    %v6935 = vunpack.c.l.b16 %v4891
    %v6936 = vunpack.c.h.b16 %v4891
    %v6937 = vunpack.c.l.b16 %v4892
    %v6938 = vunpack.c.h.b16 %v4892
    %v6939 = vunpack.c.l.b16 %v4893
    %v6940 = vunpack.c.h.b16 %v4893
    %v6941 = vunpack.c.l.b16 %v4894
    %v6942 = vunpack.c.h.b16 %v4894
    %v6943 = vunpack.c.l.b16 %v4895
    %v6944 = vunpack.c.h.b16 %v4895
    %v6945 = vunpack.c.l.b16 %v4896
    %v6946 = vunpack.c.h.b16 %v4896
    %v6947 = vunpack.c.l.b16 %v4897
    %v6948 = vunpack.c.h.b16 %v4897
    %v6949 = vunpack.c.l.b16 %v4898
    %v6950 = vunpack.c.h.b16 %v4898
    %v6951 = vunpack.c.l.b16 %v4899
    %v6952 = vunpack.c.h.b16 %v4899
    %v6953 = vunpack.c.l.b16 %v4900
    %v6954 = vunpack.c.h.b16 %v4900
    %v6955 = vunpack.c.l.b16 %v4901
    %v6956 = vunpack.c.h.b16 %v4901
    %v6957 = vunpack.c.l.b16 %v4902
    %v6958 = vunpack.c.h.b16 %v4902
    %v6959 = vunpack.c.l.b16 %v4903
    %v6960 = vunpack.c.h.b16 %v4903
    %v6961 = vunpack.c.l.b16 %v4904
    %v6962 = vunpack.c.h.b16 %v4904
    %v6963 = vunpack.c.l.b16 %v4905
    %v6964 = vunpack.c.h.b16 %v4905
    %v6965 = vunpack.c.l.b16 %v4906
    %v6966 = vunpack.c.h.b16 %v4906
    %v6967 = vunpack.c.l.b16 %v4907
    %v6968 = vunpack.c.h.b16 %v4907
    %v6969 = vunpack.c.l.b16 %v4908
    %v6970 = vunpack.c.h.b16 %v4908
    %v6971 = vunpack.c.l.b16 %v4909
    %v6972 = vunpack.c.h.b16 %v4909
    %v6973 = vunpack.c.l.b16 %v4910
    %v6974 = vunpack.c.h.b16 %v4910
    %v6975 = vunpack.c.l.b16 %v4911
    %v6976 = vunpack.c.h.b16 %v4911
    %v6977 = vunpack.c.l.b16 %v4912
    %v6978 = vunpack.c.h.b16 %v4912
    %v6979 = vunpack.c.l.b16 %v4913
    %v6980 = vunpack.c.h.b16 %v4913
    %v6981 = vunpack.c.l.b16 %v4914
    %v6982 = vunpack.c.h.b16 %v4914
    %v6983 = vunpack.c.l.b16 %v4915
    %v6984 = vunpack.c.h.b16 %v4915
    %v6985 = vunpack.c.l.b16 %v4916
    %v6986 = vunpack.c.h.b16 %v4916
    %v6987 = vunpack.c.l.b16 %v4917
    %v6988 = vunpack.c.h.b16 %v4917
    %v6989 = vunpack.c.l.b16 %v4918
    %v6990 = vunpack.c.h.b16 %v4918
    %v6991 = vunpack.c.l.b16 %v4919
    %v6992 = vunpack.c.h.b16 %v4919
    %v6993 = vunpack.c.l.b16 %v4920
    %v6994 = vunpack.c.h.b16 %v4920
    %v6995 = vunpack.c.l.b16 %v4921
    %v6996 = vunpack.c.h.b16 %v4921
    %v6997 = vunpack.c.l.b16 %v4922
    %v6998 = vunpack.c.h.b16 %v4922
    %v6999 = vunpack.c.l.b16 %v4923
    %v7000 = vunpack.c.h.b16 %v4923
    %v7001 = vunpack.c.l.b16 %v4924
    %v7002 = vunpack.c.h.b16 %v4924
    %v7003 = vunpack.c.l.b16 %v4925
    %v7004 = vunpack.c.h.b16 %v4925
    %v7005 = vunpack.c.l.b16 %v4926
    %v7006 = vunpack.c.h.b16 %v4926
    %v7007 = vunpack.c.l.b16 %v4927
    %v7008 = vunpack.c.h.b16 %v4927
    %v7009 = vunpack.c.l.b16 %v4928
    %v7010 = vunpack.c.h.b16 %v4928
    %v7011 = vunpack.c.l.b16 %v4929
    %v7012 = vunpack.c.h.b16 %v4929
    %v7013 = vunpack.c.l.b16 %v4930
    %v7014 = vunpack.c.h.b16 %v4930
    %v7015 = vunpack.c.l.b16 %v4931
    %v7016 = vunpack.c.h.b16 %v4931
    %v7017 = vunpack.c.l.b16 %v4932
    %v7018 = vunpack.c.h.b16 %v4932
    %v7019 = vunpack.c.l.b16 %v4933
    %v7020 = vunpack.c.h.b16 %v4933
    %v7021 = vunpack.c.l.b16 %v4934
    %v7022 = vunpack.c.h.b16 %v4934
    %v7023 = vunpack.c.l.b16 %v4935
    %v7024 = vunpack.c.h.b16 %v4935
    %v7025 = vunpack.c.l.b16 %v4936
    %v7026 = vunpack.c.h.b16 %v4936
    %v7027 = vunpack.c.l.b16 %v4937
    %v7028 = vunpack.c.h.b16 %v4937
    %v7029 = vunpack.c.l.b16 %v4938
    %v7030 = vunpack.c.h.b16 %v4938
    %v7031 = vunpack.c.l.b16 %v4939
    %v7032 = vunpack.c.h.b16 %v4939
    %v7033 = vunpack.c.l.b16 %v4940
    %v7034 = vunpack.c.h.b16 %v4940
    %v7035 = vunpack.c.l.b16 %v4941
    %v7036 = vunpack.c.h.b16 %v4941
    %v7037 = vunpack.c.l.b16 %v4942
    %v7038 = vunpack.c.h.b16 %v4942
    %v7039 = vunpack.c.l.b16 %v4943
    %v7040 = vunpack.c.h.b16 %v4943
    %v7041 = vunpack.c.l.b16 %v4944
    %v7042 = vunpack.c.h.b16 %v4944
    %v7043 = vunpack.c.l.b16 %v4945
    %v7044 = vunpack.c.h.b16 %v4945
    %v7045 = vunpack.c.l.b16 %v4946
    %v7046 = vunpack.c.h.b16 %v4946
    %v7047 = vunpack.c.l.b16 %v4947
    %v7048 = vunpack.c.h.b16 %v4947
    %v7049 = vunpack.c.l.b16 %v4948
    %v7050 = vunpack.c.h.b16 %v4948
    %v7051 = vunpack.c.l.b16 %v4949
    %v7052 = vunpack.c.h.b16 %v4949
    %v7053 = vunpack.c.l.b16 %v4950
    %v7054 = vunpack.c.h.b16 %v4950
    %v7055 = vunpack.c.l.b16 %v4951
    %v7056 = vunpack.c.h.b16 %v4951
    %v7057 = vunpack.c.l.b16 %v4952
    %v7058 = vunpack.c.h.b16 %v4952
    %v7059 = vunpack.c.l.b16 %v4953
    %v7060 = vunpack.c.h.b16 %v4953
    %v7061 = vunpack.c.l.b16 %v4954
    %v7062 = vunpack.c.h.b16 %v4954
    %v7063 = vunpack.c.l.b16 %v4955
    %v7064 = vunpack.c.h.b16 %v4955
    %v7065 = vunpack.c.l.b16 %v4956
    %v7066 = vunpack.c.h.b16 %v4956
    %v7067 = vunpack.c.l.b16 %v4957
    %v7068 = vunpack.c.h.b16 %v4957
    %v7069 = vunpack.c.l.b16 %v4958
    %v7070 = vunpack.c.h.b16 %v4958
    %v7071 = vunpack.c.l.b16 %v4959
    %v7072 = vunpack.c.h.b16 %v4959
    %v7073 = vunpack.c.l.b16 %v4960
    %v7074 = vunpack.c.h.b16 %v4960
    %v7075 = vunpack.c.l.b16 %v4961
    %v7076 = vunpack.c.h.b16 %v4961
    %v7077 = vunpack.c.l.b16 %v4962
    %v7078 = vunpack.c.h.b16 %v4962
    %v7079 = vunpack.c.l.b16 %v4963
    %v7080 = vunpack.c.h.b16 %v4963
    %v7081 = vunpack.c.l.b16 %v4964
    %v7082 = vunpack.c.h.b16 %v4964
    %v7083 = vunpack.c.l.b16 %v4965
    %v7084 = vunpack.c.h.b16 %v4965
    %v7085 = vunpack.c.l.b16 %v4966
    %v7086 = vunpack.c.h.b16 %v4966
    %v7087 = vunpack.c.l.b16 %v4967
    %v7088 = vunpack.c.h.b16 %v4967
    %v7089 = vunpack.c.l.b16 %v4968
    %v7090 = vunpack.c.h.b16 %v4968
    %v7091 = vunpack.c.l.b16 %v4969
    %v7092 = vunpack.c.h.b16 %v4969
    %v7093 = vunpack.c.l.b16 %v4970
    %v7094 = vunpack.c.h.b16 %v4970
    %v7095 = vunpack.c.l.b16 %v4971
    %v7096 = vunpack.c.h.b16 %v4971
    %v7097 = vunpack.c.l.b16 %v4972
    %v7098 = vunpack.c.h.b16 %v4972
    %v7099 = vunpack.c.l.b16 %v4973
    %v7100 = vunpack.c.h.b16 %v4973
    %v7101 = vunpack.c.l.b16 %v4974
    %v7102 = vunpack.c.h.b16 %v4974
    %v7103 = vunpack.c.l.b16 %v4975
    %v7104 = vunpack.c.h.b16 %v4975
    %v7105 = vunpack.c.l.b16 %v4976
    %v7106 = vunpack.c.h.b16 %v4976
    %v7107 = vunpack.c.l.b16 %v4977
    %v7108 = vunpack.c.h.b16 %v4977
    %v7109 = vunpack.c.l.b16 %v4978
    %v7110 = vunpack.c.h.b16 %v4978
    %v7111 = vunpack.c.l.b16 %v4979
    %v7112 = vunpack.c.h.b16 %v4979
    %v7113 = vunpack.c.l.b16 %v4980
    %v7114 = vunpack.c.h.b16 %v4980
    %v7115 = vunpack.c.l.b16 %v4981
    %v7116 = vunpack.c.h.b16 %v4981
    %v7117 = vunpack.c.l.b16 %v4982
    %v7118 = vunpack.c.h.b16 %v4982
    %v7119 = vunpack.c.l.b16 %v4983
    %v7120 = vunpack.c.h.b16 %v4983
    %v7121 = vunpack.c.l.b16 %v4984
    %v7122 = vunpack.c.h.b16 %v4984
    %v7123 = vunpack.c.l.b16 %v4985
    %v7124 = vunpack.c.h.b16 %v4985
    %v7125 = vunpack.c.l.b16 %v4986
    %v7126 = vunpack.c.h.b16 %v4986
    %v7127 = vunpack.c.l.b16 %v4987
    %v7128 = vunpack.c.h.b16 %v4987
    %v7129 = vunpack.c.l.b16 %v4988
    %v7130 = vunpack.c.h.b16 %v4988
    %v7131 = vunpack.c.l.b16 %v4989
    %v7132 = vunpack.c.h.b16 %v4989
    %v7133 = vunpack.c.l.b16 %v4990
    %v7134 = vunpack.c.h.b16 %v4990
    %v7135 = vunpack.c.l.b16 %v4991
    %v7136 = vunpack.c.h.b16 %v4991
    %v7137 = vunpack.c.l.b16 %v4992
    %v7138 = vunpack.c.h.b16 %v4992
    %v7139 = vunpack.c.l.b16 %v4993
    %v7140 = vunpack.c.h.b16 %v4993
    %v7141 = vunpack.c.l.b16 %v4994
    %v7142 = vunpack.c.h.b16 %v4994
    %v7143 = vunpack.c.l.b16 %v4995
    %v7144 = vunpack.c.h.b16 %v4995
    %v7145 = vunpack.c.l.b16 %v4996
    %v7146 = vunpack.c.h.b16 %v4996
    %v7147 = vunpack.c.l.b16 %v4997
    %v7148 = vunpack.c.h.b16 %v4997
    %v7149 = vunpack.c.l.b16 %v4998
    %v7150 = vunpack.c.h.b16 %v4998
    %v7151 = vunpack.c.l.b16 %v4999
    %v7152 = vunpack.c.h.b16 %v4999
    %v7153 = vunpack.c.l.b16 %v5000
    %v7154 = vunpack.c.h.b16 %v5000
    %v7155 = vunpack.c.l.b16 %v5001
    %v7156 = vunpack.c.h.b16 %v5001
    %v7157 = vunpack.c.l.b16 %v5002
    %v7158 = vunpack.c.h.b16 %v5002
    %v7159 = vunpack.c.l.b16 %v5003
    %v7160 = vunpack.c.h.b16 %v5003
    %v7161 = vunpack.c.l.b16 %v5004
    %v7162 = vunpack.c.h.b16 %v5004
    %v7163 = vunpack.c.l.b16 %v5005
    %v7164 = vunpack.c.h.b16 %v5005
    %v7165 = vunpack.c.l.b16 %v5006
    %v7166 = vunpack.c.h.b16 %v5006
    %v7167 = vunpack.c.l.b16 %v5007
    %v7168 = vunpack.c.h.b16 %v5007
    %v7169 = vunpack.c.l.b16 %v5008
    %v7170 = vunpack.c.h.b16 %v5008
    %v7171 = vunpack.c.l.b16 %v5009
    %v7172 = vunpack.c.h.b16 %v5009
    %v7173 = vunpack.c.l.b16 %v5010
    %v7174 = vunpack.c.h.b16 %v5010
    %v7175 = vunpack.c.l.b16 %v5011
    %v7176 = vunpack.c.h.b16 %v5011
    %v7177 = vunpack.c.l.b16 %v5012
    %v7178 = vunpack.c.h.b16 %v5012
    %v7179 = vunpack.c.l.b16 %v5013
    %v7180 = vunpack.c.h.b16 %v5013
    %v7181 = vunpack.c.l.b16 %v5014
    %v7182 = vunpack.c.h.b16 %v5014
    %v7183 = vunpack.c.l.b16 %v5015
    %v7184 = vunpack.c.h.b16 %v5015
    %v7185 = vunpack.c.l.b16 %v5016
    %v7186 = vunpack.c.h.b16 %v5016
    %v7187 = vunpack.c.l.b16 %v5017
    %v7188 = vunpack.c.h.b16 %v5017
    %v7189 = vunpack.c.l.b16 %v5018
    %v7190 = vunpack.c.h.b16 %v5018
    %v7191 = vunpack.c.l.b16 %v5019
    %v7192 = vunpack.c.h.b16 %v5019
    %v7193 = vunpack.c.l.b16 %v5020
    %v7194 = vunpack.c.h.b16 %v5020
    %v7195 = vunpack.c.l.b16 %v5021
    %v7196 = vunpack.c.h.b16 %v5021
    %v7197 = vunpack.c.l.b16 %v5022
    %v7198 = vunpack.c.h.b16 %v5022
    %v7199 = vunpack.c.l.b16 %v5023
    %v7200 = vunpack.c.h.b16 %v5023
    %v7201 = vunpack.c.l.b16 %v5024
    %v7202 = vunpack.c.h.b16 %v5024
    %v7203 = vunpack.c.l.b16 %v5025
    %v7204 = vunpack.c.h.b16 %v5025
    %v7205 = vunpack.c.l.b16 %v5026
    %v7206 = vunpack.c.h.b16 %v5026
    %v7207 = vunpack.c.l.b16 %v5027
    %v7208 = vunpack.c.h.b16 %v5027
    %v7209 = vunpack.c.l.b16 %v5028
    %v7210 = vunpack.c.h.b16 %v5028
    %v7211 = vunpack.c.l.b16 %v5029
    %v7212 = vunpack.c.h.b16 %v5029
    %v7213 = vunpack.c.l.b16 %v5030
    %v7214 = vunpack.c.h.b16 %v5030
    %v7215 = vunpack.c.l.b16 %v5031
    %v7216 = vunpack.c.h.b16 %v5031
    %v7217 = vunpack.c.l.b16 %v5032
    %v7218 = vunpack.c.h.b16 %v5032
    %v7219 = vunpack.c.l.b16 %v5033
    %v7220 = vunpack.c.h.b16 %v5033
    %v7221 = vunpack.c.l.b16 %v5034
    %v7222 = vunpack.c.h.b16 %v5034
    %v7223 = vunpack.c.l.b16 %v5035
    %v7224 = vunpack.c.h.b16 %v5035
    %v7225 = vunpack.c.l.b16 %v5036
    %v7226 = vunpack.c.h.b16 %v5036
    %v7227 = vunpack.c.l.b16 %v5037
    %v7228 = vunpack.c.h.b16 %v5037
    %v7229 = vunpack.c.l.b16 %v5038
    %v7230 = vunpack.c.h.b16 %v5038
    %v7231 = vunpack.c.l.b16 %v5039
    %v7232 = vunpack.c.h.b16 %v5039
    %v7233 = vunpack.c.l.b16 %v5040
    %v7234 = vunpack.c.h.b16 %v5040
    %v7235 = vunpack.c.l.b16 %v5041
    %v7236 = vunpack.c.h.b16 %v5041
    %v7237 = vunpack.c.l.b16 %v5042
    %v7238 = vunpack.c.h.b16 %v5042
    %v7239 = vunpack.c.l.b16 %v5043
    %v7240 = vunpack.c.h.b16 %v5043
    %v7241 = vunpack.c.l.b16 %v5044
    %v7242 = vunpack.c.h.b16 %v5044
    %v7243 = vunpack.c.l.b16 %v5045
    %v7244 = vunpack.c.h.b16 %v5045
    %v7245 = vunpack.c.l.b16 %v5046
    %v7246 = vunpack.c.h.b16 %v5046
    %v7247 = vunpack.c.l.b16 %v5047
    %v7248 = vunpack.c.h.b16 %v5047
    %v7249 = vunpack.c.l.b16 %v5048
    %v7250 = vunpack.c.h.b16 %v5048
    %v7251 = vunpack.c.l.b16 %v5049
    %v7252 = vunpack.c.h.b16 %v5049
    %v7253 = vunpack.c.l.b16 %v5050
    %v7254 = vunpack.c.h.b16 %v5050
    %v7255 = vunpack.c.l.b16 %v5051
    %v7256 = vunpack.c.h.b16 %v5051
    %v7257 = vunpack.c.l.b16 %v5052
    %v7258 = vunpack.c.h.b16 %v5052
    %v7259 = vunpack.c.l.b16 %v5053
    %v7260 = vunpack.c.h.b16 %v5053
    %v7261 = vunpack.c.l.b16 %v5054
    %v7262 = vunpack.c.h.b16 %v5054
    %v7263 = vunpack.c.l.b16 %v5055
    %v7264 = vunpack.c.h.b16 %v5055
    %v7265 = vunpack.c.l.b16 %v5056
    %v7266 = vunpack.c.h.b16 %v5056
    %v7267 = vunpack.c.l.b16 %v5057
    %v7268 = vunpack.c.h.b16 %v5057
    %v7269 = vunpack.c.l.b16 %v5058
    %v7270 = vunpack.c.h.b16 %v5058
    %v7271 = vunpack.c.l.b16 %v5059
    %v7272 = vunpack.c.h.b16 %v5059
    %v7273 = vunpack.c.l.b16 %v5060
    %v7274 = vunpack.c.h.b16 %v5060
    %v7275 = vunpack.c.l.b16 %v5061
    %v7276 = vunpack.c.h.b16 %v5061
    %v7277 = vunpack.c.l.b16 %v5062
    %v7278 = vunpack.c.h.b16 %v5062
    %v7279 = vunpack.c.l.b16 %v5063
    %v7280 = vunpack.c.h.b16 %v5063
    %v7281 = vunpack.c.l.b16 %v5064
    %v7282 = vunpack.c.h.b16 %v5064
    %v7283 = vunpack.c.l.b16 %v5065
    %v7284 = vunpack.c.h.b16 %v5065
    %v7285 = vunpack.c.l.b16 %v5066
    %v7286 = vunpack.c.h.b16 %v5066
    %v7287 = vunpack.c.l.b16 %v5067
    %v7288 = vunpack.c.h.b16 %v5067
    %v7289 = vunpack.c.l.b16 %v5068
    %v7290 = vunpack.c.h.b16 %v5068
    %v7291 = vunpack.c.l.b16 %v5069
    %v7292 = vunpack.c.h.b16 %v5069
    %v7293 = vunpack.c.l.b16 %v5070
    %v7294 = vunpack.c.h.b16 %v5070
    %v7295 = vunpack.c.l.b16 %v5071
    %v7296 = vunpack.c.h.b16 %v5071
    %v7297 = vunpack.c.l.b16 %v5072
    %v7298 = vunpack.c.h.b16 %v5072
    %v7299 = vunpack.c.l.b16 %v5073
    %v7300 = vunpack.c.h.b16 %v5073
    %v7301 = vunpack.c.l.b16 %v5074
    %v7302 = vunpack.c.h.b16 %v5074
    %v7303 = vunpack.c.l.b16 %v5075
    %v7304 = vunpack.c.h.b16 %v5075
    %v7305 = vunpack.c.l.b16 %v5076
    %v7306 = vunpack.c.h.b16 %v5076
    %v7307 = vunpack.c.l.b16 %v5077
    %v7308 = vunpack.c.h.b16 %v5077
    %v7309 = vunpack.c.l.b16 %v5078
    %v7310 = vunpack.c.h.b16 %v5078
    %v7311 = vunpack.c.l.b16 %v5079
    %v7312 = vunpack.c.h.b16 %v5079
    %v7313 = vunpack.c.l.b16 %v5080
    %v7314 = vunpack.c.h.b16 %v5080
    %v7315 = vunpack.c.l.b16 %v5081
    %v7316 = vunpack.c.h.b16 %v5081
    %v7317 = vunpack.c.l.b16 %v5082
    %v7318 = vunpack.c.h.b16 %v5082
    %v7319 = vunpack.c.l.b16 %v5083
    %v7320 = vunpack.c.h.b16 %v5083
    %v7321 = vunpack.c.l.b16 %v5084
    %v7322 = vunpack.c.h.b16 %v5084
    %v7323 = vunpack.c.l.b16 %v5085
    %v7324 = vunpack.c.h.b16 %v5085
    %v7325 = vunpack.c.l.b16 %v5086
    %v7326 = vunpack.c.h.b16 %v5086
    %v7327 = vunpack.c.l.b16 %v5087
    %v7328 = vunpack.c.h.b16 %v5087
    %v7329 = vunpack.c.l.b16 %v5088
    %v7330 = vunpack.c.h.b16 %v5088
    %v7331 = vunpack.c.l.b16 %v5089
    %v7332 = vunpack.c.h.b16 %v5089
    %v7333 = vunpack.c.l.b16 %v5090
    %v7334 = vunpack.c.h.b16 %v5090
    %v7335 = vunpack.c.l.b16 %v5091
    %v7336 = vunpack.c.h.b16 %v5091
    %v7337 = vunpack.c.l.b16 %v5092
    %v7338 = vunpack.c.h.b16 %v5092
    %v7339 = vunpack.c.l.b16 %v5093
    %v7340 = vunpack.c.h.b16 %v5093
    %v7341 = vunpack.c.l.b16 %v5094
    %v7342 = vunpack.c.h.b16 %v5094
    %v7343 = vunpack.c.l.b16 %v5095
    %v7344 = vunpack.c.h.b16 %v5095
    %v7345 = vunpack.c.l.b16 %v5096
    %v7346 = vunpack.c.h.b16 %v5096
    %v7347 = vunpack.c.l.b16 %v5097
    %v7348 = vunpack.c.h.b16 %v5097
    %v7349 = vunpack.c.l.b16 %v5098
    %v7350 = vunpack.c.h.b16 %v5098
    %v7351 = vunpack.c.l.b16 %v5099
    %v7352 = vunpack.c.h.b16 %v5099
    %v7353 = vunpack.c.l.b16 %v5100
    %v7354 = vunpack.c.h.b16 %v5100
    %v7355 = vunpack.c.l.b16 %v5101
    %v7356 = vunpack.c.h.b16 %v5101
    %v7357 = vunpack.c.l.b16 %v5102
    %v7358 = vunpack.c.h.b16 %v5102
    %v7359 = vunpack.c.l.b16 %v5103
    %v7360 = vunpack.c.h.b16 %v5103
    %v7361 = vunpack.c.l.b16 %v5104
    %v7362 = vunpack.c.h.b16 %v5104
    %v7363 = vunpack.c.l.b16 %v5105
    %v7364 = vunpack.c.h.b16 %v5105
    %v7365 = vunpack.c.l.b16 %v5106
    %v7366 = vunpack.c.h.b16 %v5106
    %v7367 = vunpack.c.l.b16 %v5107
    %v7368 = vunpack.c.h.b16 %v5107
    %v7369 = vunpack.c.l.b16 %v5108
    %v7370 = vunpack.c.h.b16 %v5108
    %v7371 = vunpack.c.l.b16 %v5109
    %v7372 = vunpack.c.h.b16 %v5109
    %v7373 = vunpack.c.l.b16 %v5110
    %v7374 = vunpack.c.h.b16 %v5110
    %v7375 = vunpack.c.l.b16 %v5111
    %v7376 = vunpack.c.h.b16 %v5111
    %v7377 = vunpack.c.l.b16 %v5112
    %v7378 = vunpack.c.h.b16 %v5112
    %v7379 = vunpack.c.l.b16 %v5113
    %v7380 = vunpack.c.h.b16 %v5113
    %v7381 = vunpack.c.l.b16 %v5114
    %v7382 = vunpack.c.h.b16 %v5114
    %v7383 = vunpack.c.l.b16 %v5115
    %v7384 = vunpack.c.h.b16 %v5115
    %v7385 = vunpack.c.l.b16 %v5116
    %v7386 = vunpack.c.h.b16 %v5116
    %v7387 = vunpack.c.l.b16 %v5117
    %v7388 = vunpack.c.h.b16 %v5117
    %v7389 = vunpack.c.l.b16 %v5118
    %v7390 = vunpack.c.h.b16 %v5118
    %v7391 = vunpack.c.l.b16 %v5119
    %v7392 = vunpack.c.h.b16 %v5119
    %v7393 = vunpack.c.l.b16 %v5120
    %v7394 = vunpack.c.h.b16 %v5120
    %v7395 = vunpack.c.l.b16 %v5121
    %v7396 = vunpack.c.h.b16 %v5121
    %v7397 = vunpack.c.l.b16 %v5122
    %v7398 = vunpack.c.h.b16 %v5122
    %v7399 = vunpack.c.l.b16 %v5123
    %v7400 = vunpack.c.h.b16 %v5123
    %v7401 = vunpack.c.l.b16 %v5124
    %v7402 = vunpack.c.h.b16 %v5124
    %v7403 = vunpack.c.l.b16 %v5125
    %v7404 = vunpack.c.h.b16 %v5125
    %v7405 = vunpack.c.l.b16 %v5126
    %v7406 = vunpack.c.h.b16 %v5126
    %v7407 = vunpack.c.l.b16 %v5127
    %v7408 = vunpack.c.h.b16 %v5127
    %v7409 = vunpack.c.l.b16 %v5128
    %v7410 = vunpack.c.h.b16 %v5128
    %v7411 = vunpack.c.l.b16 %v5129
    %v7412 = vunpack.c.h.b16 %v5129
    %v7413 = vunpack.c.l.b16 %v5130
    %v7414 = vunpack.c.h.b16 %v5130
    %v7415 = vunpack.c.l.b16 %v5131
    %v7416 = vunpack.c.h.b16 %v5131
    %v7417 = vunpack.c.l.b16 %v5132
    %v7418 = vunpack.c.h.b16 %v5132
    %v7419 = vunpack.c.l.b16 %v5133
    %v7420 = vunpack.c.h.b16 %v5133
    %v7421 = vunpack.c.l.b16 %v5134
    %v7422 = vunpack.c.h.b16 %v5134
    %v7423 = vunpack.c.l.b16 %v5135
    %v7424 = vunpack.c.h.b16 %v5135
    %v7425 = vunpack.c.l.b16 %v5136
    %v7426 = vunpack.c.h.b16 %v5136
    %v7427 = vunpack.c.l.b16 %v5137
    %v7428 = vunpack.c.h.b16 %v5137
    %v7429 = vunpack.c.l.b16 %v5138
    %v7430 = vunpack.c.h.b16 %v5138
    %v7431 = vunpack.c.l.b16 %v5139
    %v7432 = vunpack.c.h.b16 %v5139
    %v7433 = vunpack.c.l.b16 %v5140
    %v7434 = vunpack.c.h.b16 %v5140
    %v7435 = vunpack.c.l.b16 %v5141
    %v7436 = vunpack.c.h.b16 %v5141
    %v7437 = vunpack.c.l.b16 %v5142
    %v7438 = vunpack.c.h.b16 %v5142
    %v7439 = vunpack.c.l.b16 %v5143
    %v7440 = vunpack.c.h.b16 %v5143
    %v7441 = vunpack.c.l.b16 %v5144
    %v7442 = vunpack.c.h.b16 %v5144
    %v7443 = vunpack.c.l.b16 %v5145
    %v7444 = vunpack.c.h.b16 %v5145
    %v7445 = vunpack.c.l.b16 %v5146
    %v7446 = vunpack.c.h.b16 %v5146
    %v7447 = vunpack.c.l.b16 %v5147
    %v7448 = vunpack.c.h.b16 %v5147
    %v7449 = vunpack.c.l.b16 %v5148
    %v7450 = vunpack.c.h.b16 %v5148
    %v7451 = vunpack.c.l.b16 %v5149
    %v7452 = vunpack.c.h.b16 %v5149
    %v7453 = vunpack.c.l.b16 %v5150
    %v7454 = vunpack.c.h.b16 %v5150
    %v7455 = vunpack.c.l.b16 %v5151
    %v7456 = vunpack.c.h.b16 %v5151
    %v7457 = vunpack.c.l.b16 %v5152
    %v7458 = vunpack.c.h.b16 %v5152
    %v7459 = vunpack.c.l.b16 %v5153
    %v7460 = vunpack.c.h.b16 %v5153
    %v7461 = vunpack.c.l.b16 %v5154
    %v7462 = vunpack.c.h.b16 %v5154
    %v7463 = vunpack.c.l.b16 %v5155
    %v7464 = vunpack.c.h.b16 %v5155
    %v7465 = vunpack.c.l.b16 %v5156
    %v7466 = vunpack.c.h.b16 %v5156
    %v7467 = vunpack.c.l.b16 %v5157
    %v7468 = vunpack.c.h.b16 %v5157
    %v7469 = vunpack.c.l.b16 %v5158
    %v7470 = vunpack.c.h.b16 %v5158
    %v7471 = vunpack.c.l.b16 %v5159
    %v7472 = vunpack.c.h.b16 %v5159
    %v7473 = vunpack.c.l.b16 %v5160
    %v7474 = vunpack.c.h.b16 %v5160
    %v7475 = vunpack.c.l.b16 %v5161
    %v7476 = vunpack.c.h.b16 %v5161
    %v7477 = vunpack.c.l.b16 %v5162
    %v7478 = vunpack.c.h.b16 %v5162
    %v7479 = vunpack.c.l.b16 %v5163
    %v7480 = vunpack.c.h.b16 %v5163
    %v7481 = vunpack.c.l.b16 %v5164
    %v7482 = vunpack.c.h.b16 %v5164
    %v7483 = vunpack.c.l.b16 %v5165
    %v7484 = vunpack.c.h.b16 %v5165
    %v7485 = vunpack.c.l.b16 %v5166
    %v7486 = vunpack.c.h.b16 %v5166
    %v7487 = vunpack.c.l.b16 %v5167
    %v7488 = vunpack.c.h.b16 %v5167
    %v7489 = vunpack.c.l.b16 %v5168
    %v7490 = vunpack.c.h.b16 %v5168
    %v7491 = vunpack.c.l.b16 %v5169
    %v7492 = vunpack.c.h.b16 %v5169
    %v7493 = vunpack.c.l.b16 %v5170
    %v7494 = vunpack.c.h.b16 %v5170
    %v7495 = vunpack.c.l.b16 %v5171
    %v7496 = vunpack.c.h.b16 %v5171
    %v7497 = vunpack.c.l.b16 %v5172
    %v7498 = vunpack.c.h.b16 %v5172
    %v7499 = vunpack.c.l.b16 %v5173
    %v7500 = vunpack.c.h.b16 %v5173
    %v7501 = vunpack.c.l.b16 %v5174
    %v7502 = vunpack.c.h.b16 %v5174
    %v7503 = vunpack.c.l.b16 %v5175
    %v7504 = vunpack.c.h.b16 %v5175
    %v7505 = vunpack.c.l.b16 %v5176
    %v7506 = vunpack.c.h.b16 %v5176
    %v7507 = vunpack.c.l.b16 %v5177
    %v7508 = vunpack.c.h.b16 %v5177
    %v7509 = vunpack.c.l.b16 %v5178
    %v7510 = vunpack.c.h.b16 %v5178
    %v7511 = vunpack.c.l.b16 %v5179
    %v7512 = vunpack.c.h.b16 %v5179
    %v7513 = vunpack.c.l.b16 %v5180
    %v7514 = vunpack.c.h.b16 %v5180
    %v7515 = vunpack.c.l.b16 %v5181
    %v7516 = vunpack.c.h.b16 %v5181
    %v7517 = vunpack.c.l.b16 %v5182
    %v7518 = vunpack.c.h.b16 %v5182
    %v7519 = vunpack.c.l.b16 %v5183
    %v7520 = vunpack.c.h.b16 %v5183
    %v7521 = vunpack.c.l.b16 %v5184
    %v7522 = vunpack.c.h.b16 %v5184
    %v7523 = vunpack.c.l.b16 %v5185
    %v7524 = vunpack.c.h.b16 %v5185
    %v7525 = vunpack.c.l.b16 %v5186
    %v7526 = vunpack.c.h.b16 %v5186
    %v7527 = vunpack.c.l.b16 %v5187
    %v7528 = vunpack.c.h.b16 %v5187
    %v7529 = vunpack.c.l.b16 %v5188
    %v7530 = vunpack.c.h.b16 %v5188
    %v7531 = vunpack.c.l.b16 %v5189
    %v7532 = vunpack.c.h.b16 %v5189
    %v7533 = vunpack.c.l.b16 %v5190
    %v7534 = vunpack.c.h.b16 %v5190
    %v7535 = vunpack.c.l.b16 %v5191
    %v7536 = vunpack.c.h.b16 %v5191
    %v7537 = vunpack.c.l.b16 %v5192
    %v7538 = vunpack.c.h.b16 %v5192
    %v7539 = vunpack.c.l.b16 %v5193
    %v7540 = vunpack.c.h.b16 %v5193
    %v7541 = vunpack.c.l.b16 %v5194
    %v7542 = vunpack.c.h.b16 %v5194
    %v7543 = vunpack.c.l.b16 %v5195
    %v7544 = vunpack.c.h.b16 %v5195
    %v7545 = vunpack.c.l.b16 %v5196
    %v7546 = vunpack.c.h.b16 %v5196
    %v7547 = vunpack.c.l.b16 %v5197
    %v7548 = vunpack.c.h.b16 %v5197
    %v7549 = vunpack.c.l.b16 %v5198
    %v7550 = vunpack.c.h.b16 %v5198
    %v7551 = vunpack.c.l.b16 %v5199
    %v7552 = vunpack.c.h.b16 %v5199
    %v7553 = vunpack.c.l.b16 %v5200
    %v7554 = vunpack.c.h.b16 %v5200
    %v7555 = vunpack.c.l.b16 %v5201
    %v7556 = vunpack.c.h.b16 %v5201
    %v7557 = vunpack.c.l.b16 %v5202
    %v7558 = vunpack.c.h.b16 %v5202
    %v7559 = vunpack.c.l.b16 %v5203
    %v7560 = vunpack.c.h.b16 %v5203
    %v7561 = vunpack.c.l.b16 %v5204
    %v7562 = vunpack.c.h.b16 %v5204
    %v7563 = vunpack.c.l.b16 %v5205
    %v7564 = vunpack.c.h.b16 %v5205
    %v7565 = vunpack.c.l.b16 %v5206
    %v7566 = vunpack.c.h.b16 %v5206
    %v7567 = vunpack.c.l.b16 %v5207
    %v7568 = vunpack.c.h.b16 %v5207
    %v7569 = vunpack.c.l.b16 %v5208
    %v7570 = vunpack.c.h.b16 %v5208
    %v7571 = vunpack.c.l.b16 %v5209
    %v7572 = vunpack.c.h.b16 %v5209
    %v7573 = vunpack.c.l.b16 %v5210
    %v7574 = vunpack.c.h.b16 %v5210
    %v7575 = vunpack.c.l.b16 %v5211
    %v7576 = vunpack.c.h.b16 %v5211
    %v7577 = vunpack.c.l.b16 %v5212
    %v7578 = vunpack.c.h.b16 %v5212
    %v7579 = vunpack.c.l.b16 %v5213
    %v7580 = vunpack.c.h.b16 %v5213
    %v7581 = vunpack.c.l.b16 %v5214
    %v7582 = vunpack.c.h.b16 %v5214
    %v7583 = vunpack.c.l.b16 %v5215
    %v7584 = vunpack.c.h.b16 %v5215
    %v7585 = vunpack.c.l.b16 %v5216
    %v7586 = vunpack.c.h.b16 %v5216
    %v7587 = vunpack.c.l.b16 %v5217
    %v7588 = vunpack.c.h.b16 %v5217
    %v7589 = vunpack.c.l.b16 %v5218
    %v7590 = vunpack.c.h.b16 %v5218
    %v7591 = vunpack.c.l.b16 %v5219
    %v7592 = vunpack.c.h.b16 %v5219
    %v7593 = vunpack.c.l.b16 %v5220
    %v7594 = vunpack.c.h.b16 %v5220
    %v7595 = vunpack.c.l.b16 %v5221
    %v7596 = vunpack.c.h.b16 %v5221
    %v7597 = vunpack.c.l.b16 %v5222
    %v7598 = vunpack.c.h.b16 %v5222
    %v7599 = vunpack.c.l.b16 %v5223
    %v7600 = vunpack.c.h.b16 %v5223
    %v7601 = vunpack.c.l.b16 %v5224
    %v7602 = vunpack.c.h.b16 %v5224
    %v7603 = vunpack.c.l.b16 %v5225
    %v7604 = vunpack.c.h.b16 %v5225
    %v7605 = vunpack.c.l.b16 %v5226
    %v7606 = vunpack.c.h.b16 %v5226
    %v7607 = vunpack.c.l.b16 %v5227
    %v7608 = vunpack.c.h.b16 %v5227
    %v7609 = vunpack.c.l.b16 %v5228
    %v7610 = vunpack.c.h.b16 %v5228
    %v7611 = vunpack.c.l.b16 %v5229
    %v7612 = vunpack.c.h.b16 %v5229
    %v7613 = vunpack.c.l.b16 %v5230
    %v7614 = vunpack.c.h.b16 %v5230
    %v7615 = vunpack.c.l.b16 %v5231
    %v7616 = vunpack.c.h.b16 %v5231
    %v7617 = vunpack.c.l.b16 %v5232
    %v7618 = vunpack.c.h.b16 %v5232
    %v7619 = vunpack.c.l.b16 %v5233
    %v7620 = vunpack.c.h.b16 %v5233
    %v7621 = vunpack.c.l.b16 %v5234
    %v7622 = vunpack.c.h.b16 %v5234
    %v7623 = vunpack.c.l.b16 %v5235
    %v7624 = vunpack.c.h.b16 %v5235
    %v7625 = vunpack.c.l.b16 %v5236
    %v7626 = vunpack.c.h.b16 %v5236
    %v7627 = vunpack.c.l.b16 %v5237
    %v7628 = vunpack.c.h.b16 %v5237
    %v7629 = vunpack.c.l.b16 %v5238
    %v7630 = vunpack.c.h.b16 %v5238
    %v7631 = vunpack.c.l.b16 %v5239
    %v7632 = vunpack.c.h.b16 %v5239
    %v7633 = vunpack.c.l.b16 %v5240
    %v7634 = vunpack.c.h.b16 %v5240
    %v7635 = vunpack.c.l.b16 %v5241
    %v7636 = vunpack.c.h.b16 %v5241
    %v7637 = vunpack.c.l.b16 %v5242
    %v7638 = vunpack.c.h.b16 %v5242
    %v7639 = vunpack.c.l.b16 %v5243
    %v7640 = vunpack.c.h.b16 %v5243
    %v7641 = vunpack.c.l.b16 %v5244
    %v7642 = vunpack.c.h.b16 %v5244
    %v7643 = vunpack.c.l.b16 %v5245
    %v7644 = vunpack.c.h.b16 %v5245
    %v7645 = vunpack.c.l.b16 %v5246
    %v7646 = vunpack.c.h.b16 %v5246
    %v7647 = vunpack.c.l.b16 %v5247
    %v7648 = vunpack.c.h.b16 %v5247
    %v7649 = vunpack.c.l.b16 %v5248
    %v7650 = vunpack.c.h.b16 %v5248
    %v7651 = vunpack.c.l.b16 %v5249
    %v7652 = vunpack.c.h.b16 %v5249
    %v7653 = vunpack.c.l.b16 %v5250
    %v7654 = vunpack.c.h.b16 %v5250
    %v7655 = vunpack.c.l.b16 %v5251
    %v7656 = vunpack.c.h.b16 %v5251
    %v7657 = vunpack.c.l.b16 %v5252
    %v7658 = vunpack.c.h.b16 %v5252
    %v7659 = vunpack.c.l.b16 %v5253
    %v7660 = vunpack.c.h.b16 %v5253
    %v7661 = vunpack.c.l.b16 %v5254
    %v7662 = vunpack.c.h.b16 %v5254
    %v7663 = vunpack.c.l.b16 %v5255
    %v7664 = vunpack.c.h.b16 %v5255
    %v7665 = vunpack.c.l.b16 %v5256
    %v7666 = vunpack.c.h.b16 %v5256
    %v7667 = vunpack.c.l.b16 %v5257
    %v7668 = vunpack.c.h.b16 %v5257
    %v7669 = vunpack.c.l.b16 %v5258
    %v7670 = vunpack.c.h.b16 %v5258
    %v7671 = vunpack.c.l.b16 %v5259
    %v7672 = vunpack.c.h.b16 %v5259
    %v7673 = vunpack.c.l.b16 %v5260
    %v7674 = vunpack.c.h.b16 %v5260
    %v7675 = vunpack.c.l.b16 %v5261
    %v7676 = vunpack.c.h.b16 %v5261
    %v7677 = vunpack.c.l.b16 %v5262
    %v7678 = vunpack.c.h.b16 %v5262
    %v7679 = vunpack.c.l.b16 %v5263
    %v7680 = vunpack.c.h.b16 %v5263
    %v7681 = vunpack.c.l.b16 %v5264
    %v7682 = vunpack.c.h.b16 %v5264
    %v7683 = vunpack.c.l.b16 %v5265
    %v7684 = vunpack.c.h.b16 %v5265
    %v7685 = vunpack.c.l.b16 %v5266
    %v7686 = vunpack.c.h.b16 %v5266
    %v7687 = vunpack.c.l.b16 %v5267
    %v7688 = vunpack.c.h.b16 %v5267
    %v7689 = vunpack.c.l.b16 %v5268
    %v7690 = vunpack.c.h.b16 %v5268
    %v7691 = vunpack.c.l.b16 %v5269
    %v7692 = vunpack.c.h.b16 %v5269
    %v7693 = vunpack.c.l.b16 %v5270
    %v7694 = vunpack.c.h.b16 %v5270
    %v7695 = vpack.c.b16 %v6105, %v6095
    %v7696 = vpack.c.b16 %v6106, %v6096
    %v7697 = vpack.c.b16 %v6107, %v6097
    %v7698 = vpack.c.b16 %v6108, %v6098
    %v7699 = vpack.c.b16 %v6109, %v6099
    %v7700 = vpack.c.b16 %v6110, %v6100
    %v7701 = vpack.c.b16 %v6111, %v6101
    %v7702 = vpack.c.b16 %v6112, %v6102
    %v7703 = vpack.c.b16 %v6113, %v6103
    %v7704 = vpack.c.b16 %v6114, %v6104
    %v7705 = vpack.c.b16 %v6125, %v6115
    %v7706 = vpack.c.b16 %v6126, %v6116
    %v7707 = vpack.c.b16 %v6127, %v6117
    %v7708 = vpack.c.b16 %v6128, %v6118
    %v7709 = vpack.c.b16 %v6129, %v6119
    %v7710 = vpack.c.b16 %v6130, %v6120
    %v7711 = vpack.c.b16 %v6131, %v6121
    %v7712 = vpack.c.b16 %v6132, %v6122
    %v7713 = vpack.c.b16 %v6133, %v6123
    %v7714 = vpack.c.b16 %v6134, %v6124
    %v7715 = vpack.c.b16 %v6145, %v6135
    %v7716 = vpack.c.b16 %v6146, %v6136
    %v7717 = vpack.c.b16 %v6147, %v6137
    %v7718 = vpack.c.b16 %v6148, %v6138
    %v7719 = vpack.c.b16 %v6149, %v6139
    %v7720 = vpack.c.b16 %v6150, %v6140
    %v7721 = vpack.c.b16 %v6151, %v6141
    %v7722 = vpack.c.b16 %v6152, %v6142
    %v7723 = vpack.c.b16 %v6153, %v6143
    %v7724 = vpack.c.b16 %v6154, %v6144
    %v7725 = vpack.c.b16 %v6165, %v6155
    %v7726 = vpack.c.b16 %v6166, %v6156
    %v7727 = vpack.c.b16 %v6167, %v6157
    %v7728 = vpack.c.b16 %v6168, %v6158
    %v7729 = vpack.c.b16 %v6169, %v6159
    %v7730 = vpack.c.b16 %v6170, %v6160
    %v7731 = vpack.c.b16 %v6171, %v6161
    %v7732 = vpack.c.b16 %v6172, %v6162
    %v7733 = vpack.c.b16 %v6173, %v6163
    %v7734 = vpack.c.b16 %v6174, %v6164
    %v7735 = vpack.c.b16 %v6185, %v6175
    %v7736 = vpack.c.b16 %v6186, %v6176
    %v7737 = vpack.c.b16 %v6187, %v6177
    %v7738 = vpack.c.b16 %v6188, %v6178
    %v7739 = vpack.c.b16 %v6189, %v6179
    %v7740 = vpack.c.b16 %v6190, %v6180
    %v7741 = vpack.c.b16 %v6191, %v6181
    %v7742 = vpack.c.b16 %v6192, %v6182
    %v7743 = vpack.c.b16 %v6193, %v6183
    %v7744 = vpack.c.b16 %v6194, %v6184
    %v7745 = vpack.c.b16 %v6205, %v6195
    %v7746 = vpack.c.b16 %v6206, %v6196
    %v7747 = vpack.c.b16 %v6207, %v6197
    %v7748 = vpack.c.b16 %v6208, %v6198
    %v7749 = vpack.c.b16 %v6209, %v6199
    %v7750 = vpack.c.b16 %v6210, %v6200
    %v7751 = vpack.c.b16 %v6211, %v6201
    %v7752 = vpack.c.b16 %v6212, %v6202
    %v7753 = vpack.c.b16 %v6213, %v6203
    %v7754 = vpack.c.b16 %v6214, %v6204
    %v7755 = vpack.c.b16 %v6225, %v6215
    %v7756 = vpack.c.b16 %v6226, %v6216
    %v7757 = vpack.c.b16 %v6227, %v6217
    %v7758 = vpack.c.b16 %v6228, %v6218
    %v7759 = vpack.c.b16 %v6229, %v6219
    %v7760 = vpack.c.b16 %v6230, %v6220
    %v7761 = vpack.c.b16 %v6231, %v6221
    %v7762 = vpack.c.b16 %v6232, %v6222
    %v7763 = vpack.c.b16 %v6233, %v6223
    %v7764 = vpack.c.b16 %v6234, %v6224
    %v7765 = vpack.c.b16 %v6245, %v6235
    %v7766 = vpack.c.b16 %v6246, %v6236
    %v7767 = vpack.c.b16 %v6247, %v6237
    %v7768 = vpack.c.b16 %v6248, %v6238
    %v7769 = vpack.c.b16 %v6249, %v6239
    %v7770 = vpack.c.b16 %v6250, %v6240
    %v7771 = vpack.c.b16 %v6251, %v6241
    %v7772 = vpack.c.b16 %v6252, %v6242
    %v7773 = vpack.c.b16 %v6253, %v6243
    %v7774 = vpack.c.b16 %v6254, %v6244
    %v7775 = vpack.c.b16 %v6265, %v6255
    %v7776 = vpack.c.b16 %v6266, %v6256
    %v7777 = vpack.c.b16 %v6267, %v6257
    %v7778 = vpack.c.b16 %v6268, %v6258
    %v7779 = vpack.c.b16 %v6269, %v6259
    %v7780 = vpack.c.b16 %v6270, %v6260
    %v7781 = vpack.c.b16 %v6271, %v6261
    %v7782 = vpack.c.b16 %v6272, %v6262
    %v7783 = vpack.c.b16 %v6273, %v6263
    %v7784 = vpack.c.b16 %v6274, %v6264
    %v7785 = vpack.c.b16 %v6285, %v6275
    %v7786 = vpack.c.b16 %v6286, %v6276
    %v7787 = vpack.c.b16 %v6287, %v6277
    %v7788 = vpack.c.b16 %v6288, %v6278
    %v7789 = vpack.c.b16 %v6289, %v6279
    %v7790 = vpack.c.b16 %v6290, %v6280
    %v7791 = vpack.c.b16 %v6291, %v6281
    %v7792 = vpack.c.b16 %v6292, %v6282
    %v7793 = vpack.c.b16 %v6293, %v6283
    %v7794 = vpack.c.b16 %v6294, %v6284
    %v7795 = vpack.c.b16 %v6305, %v6295
    %v7796 = vpack.c.b16 %v6306, %v6296
    %v7797 = vpack.c.b16 %v6307, %v6297
    %v7798 = vpack.c.b16 %v6308, %v6298
    %v7799 = vpack.c.b16 %v6309, %v6299
    %v7800 = vpack.c.b16 %v6310, %v6300
    %v7801 = vpack.c.b16 %v6311, %v6301
    %v7802 = vpack.c.b16 %v6312, %v6302
    %v7803 = vpack.c.b16 %v6313, %v6303
    %v7804 = vpack.c.b16 %v6314, %v6304
    %v7805 = vpack.c.b16 %v6325, %v6315
    %v7806 = vpack.c.b16 %v6326, %v6316
    %v7807 = vpack.c.b16 %v6327, %v6317
    %v7808 = vpack.c.b16 %v6328, %v6318
    %v7809 = vpack.c.b16 %v6329, %v6319
    %v7810 = vpack.c.b16 %v6330, %v6320
    %v7811 = vpack.c.b16 %v6331, %v6321
    %v7812 = vpack.c.b16 %v6332, %v6322
    %v7813 = vpack.c.b16 %v6333, %v6323
    %v7814 = vpack.c.b16 %v6334, %v6324
    %v7815 = vpack.c.b16 %v6345, %v6335
    %v7816 = vpack.c.b16 %v6346, %v6336
    %v7817 = vpack.c.b16 %v6347, %v6337
    %v7818 = vpack.c.b16 %v6348, %v6338
    %v7819 = vpack.c.b16 %v6349, %v6339
    %v7820 = vpack.c.b16 %v6350, %v6340
    %v7821 = vpack.c.b16 %v6351, %v6341
    %v7822 = vpack.c.b16 %v6352, %v6342
    %v7823 = vpack.c.b16 %v6353, %v6343
    %v7824 = vpack.c.b16 %v6354, %v6344
    %v7825 = vpack.c.b16 %v6365, %v6355
    %v7826 = vpack.c.b16 %v6366, %v6356
    %v7827 = vpack.c.b16 %v6367, %v6357
    %v7828 = vpack.c.b16 %v6368, %v6358
    %v7829 = vpack.c.b16 %v6369, %v6359
    %v7830 = vpack.c.b16 %v6370, %v6360
    %v7831 = vpack.c.b16 %v6371, %v6361
    %v7832 = vpack.c.b16 %v6372, %v6362
    %v7833 = vpack.c.b16 %v6373, %v6363
    %v7834 = vpack.c.b16 %v6374, %v6364
    %v7835 = vpack.c.b16 %v6385, %v6375
    %v7836 = vpack.c.b16 %v6386, %v6376
    %v7837 = vpack.c.b16 %v6387, %v6377
    %v7838 = vpack.c.b16 %v6388, %v6378
    %v7839 = vpack.c.b16 %v6389, %v6379
    %v7840 = vpack.c.b16 %v6390, %v6380
    %v7841 = vpack.c.b16 %v6391, %v6381
    %v7842 = vpack.c.b16 %v6392, %v6382
    %v7843 = vpack.c.b16 %v6393, %v6383
    %v7844 = vpack.c.b16 %v6394, %v6384
    %v7845 = vpack.c.b16 %v6405, %v6395
    %v7846 = vpack.c.b16 %v6406, %v6396
    %v7847 = vpack.c.b16 %v6407, %v6397
    %v7848 = vpack.c.b16 %v6408, %v6398
    %v7849 = vpack.c.b16 %v6409, %v6399
    %v7850 = vpack.c.b16 %v6410, %v6400
    %v7851 = vpack.c.b16 %v6411, %v6401
    %v7852 = vpack.c.b16 %v6412, %v6402
    %v7853 = vpack.c.b16 %v6413, %v6403
    %v7854 = vpack.c.b16 %v6414, %v6404
    %v7855 = vpack.c.b16 %v6425, %v6415
    %v7856 = vpack.c.b16 %v6426, %v6416
    %v7857 = vpack.c.b16 %v6427, %v6417
    %v7858 = vpack.c.b16 %v6428, %v6418
    %v7859 = vpack.c.b16 %v6429, %v6419
    %v7860 = vpack.c.b16 %v6430, %v6420
    %v7861 = vpack.c.b16 %v6431, %v6421
    %v7862 = vpack.c.b16 %v6432, %v6422
    %v7863 = vpack.c.b16 %v6433, %v6423
    %v7864 = vpack.c.b16 %v6434, %v6424
    %v7865 = vpack.c.b16 %v6445, %v6435
    %v7866 = vpack.c.b16 %v6446, %v6436
    %v7867 = vpack.c.b16 %v6447, %v6437
    %v7868 = vpack.c.b16 %v6448, %v6438
    %v7869 = vpack.c.b16 %v6449, %v6439
    %v7870 = vpack.c.b16 %v6450, %v6440
    %v7871 = vpack.c.b16 %v6451, %v6441
    %v7872 = vpack.c.b16 %v6452, %v6442
    %v7873 = vpack.c.b16 %v6453, %v6443
    %v7874 = vpack.c.b16 %v6454, %v6444
    %v7875 = vpack.c.b16 %v6465, %v6455
    %v7876 = vpack.c.b16 %v6466, %v6456
    %v7877 = vpack.c.b16 %v6467, %v6457
    %v7878 = vpack.c.b16 %v6468, %v6458
    %v7879 = vpack.c.b16 %v6469, %v6459
    %v7880 = vpack.c.b16 %v6470, %v6460
    %v7881 = vpack.c.b16 %v6471, %v6461
    %v7882 = vpack.c.b16 %v6472, %v6462
    %v7883 = vpack.c.b16 %v6473, %v6463
    %v7884 = vpack.c.b16 %v6474, %v6464
    %v7885 = vpack.c.b16 %v6485, %v6475
    %v7886 = vpack.c.b16 %v6486, %v6476
    %v7887 = vpack.c.b16 %v6487, %v6477
    %v7888 = vpack.c.b16 %v6488, %v6478
    %v7889 = vpack.c.b16 %v6489, %v6479
    %v7890 = vpack.c.b16 %v6490, %v6480
    %v7891 = vpack.c.b16 %v6491, %v6481
    %v7892 = vpack.c.b16 %v6492, %v6482
    %v7893 = vpack.c.b16 %v6493, %v6483
    %v7894 = vpack.c.b16 %v6494, %v6484
    %v7895 = vpack.c.b16 %v6505, %v6495
    %v7896 = vpack.c.b16 %v6506, %v6496
    %v7897 = vpack.c.b16 %v6507, %v6497
    %v7898 = vpack.c.b16 %v6508, %v6498
    %v7899 = vpack.c.b16 %v6509, %v6499
    %v7900 = vpack.c.b16 %v6510, %v6500
    %v7901 = vpack.c.b16 %v6511, %v6501
    %v7902 = vpack.c.b16 %v6512, %v6502
    %v7903 = vpack.c.b16 %v6513, %v6503
    %v7904 = vpack.c.b16 %v6514, %v6504
    %v7905 = vpack.c.b16 %v6525, %v6515
    %v7906 = vpack.c.b16 %v6526, %v6516
    %v7907 = vpack.c.b16 %v6527, %v6517
    %v7908 = vpack.c.b16 %v6528, %v6518
    %v7909 = vpack.c.b16 %v6529, %v6519
    %v7910 = vpack.c.b16 %v6530, %v6520
    %v7911 = vpack.c.b16 %v6531, %v6521
    %v7912 = vpack.c.b16 %v6532, %v6522
    %v7913 = vpack.c.b16 %v6533, %v6523
    %v7914 = vpack.c.b16 %v6534, %v6524
    %v7915 = vpack.c.b16 %v6545, %v6535
    %v7916 = vpack.c.b16 %v6546, %v6536
    %v7917 = vpack.c.b16 %v6547, %v6537
    %v7918 = vpack.c.b16 %v6548, %v6538
    %v7919 = vpack.c.b16 %v6549, %v6539
    %v7920 = vpack.c.b16 %v6550, %v6540
    %v7921 = vpack.c.b16 %v6551, %v6541
    %v7922 = vpack.c.b16 %v6552, %v6542
    %v7923 = vpack.c.b16 %v6553, %v6543
    %v7924 = vpack.c.b16 %v6554, %v6544
    %v7925 = vpack.c.b16 %v6565, %v6555
    %v7926 = vpack.c.b16 %v6566, %v6556
    %v7927 = vpack.c.b16 %v6567, %v6557
    %v7928 = vpack.c.b16 %v6568, %v6558
    %v7929 = vpack.c.b16 %v6569, %v6559
    %v7930 = vpack.c.b16 %v6570, %v6560
    %v7931 = vpack.c.b16 %v6571, %v6561
    %v7932 = vpack.c.b16 %v6572, %v6562
    %v7933 = vpack.c.b16 %v6573, %v6563
    %v7934 = vpack.c.b16 %v6574, %v6564
    %v7935 = vpack.c.b16 %v6585, %v6575
    %v7936 = vpack.c.b16 %v6586, %v6576
    %v7937 = vpack.c.b16 %v6587, %v6577
    %v7938 = vpack.c.b16 %v6588, %v6578
    %v7939 = vpack.c.b16 %v6589, %v6579
    %v7940 = vpack.c.b16 %v6590, %v6580
    %v7941 = vpack.c.b16 %v6591, %v6581
    %v7942 = vpack.c.b16 %v6592, %v6582
    %v7943 = vpack.c.b16 %v6593, %v6583
    %v7944 = vpack.c.b16 %v6594, %v6584
    %v7945 = vpack.c.b16 %v6605, %v6595
    %v7946 = vpack.c.b16 %v6606, %v6596
    %v7947 = vpack.c.b16 %v6607, %v6597
    %v7948 = vpack.c.b16 %v6608, %v6598
    %v7949 = vpack.c.b16 %v6609, %v6599
    %v7950 = vpack.c.b16 %v6610, %v6600
    %v7951 = vpack.c.b16 %v6611, %v6601
    %v7952 = vpack.c.b16 %v6612, %v6602
    %v7953 = vpack.c.b16 %v6613, %v6603
    %v7954 = vpack.c.b16 %v6614, %v6604
    %v7955 = vpack.c.b16 %v6625, %v6615
    %v7956 = vpack.c.b16 %v6626, %v6616
    %v7957 = vpack.c.b16 %v6627, %v6617
    %v7958 = vpack.c.b16 %v6628, %v6618
    %v7959 = vpack.c.b16 %v6629, %v6619
    %v7960 = vpack.c.b16 %v6630, %v6620
    %v7961 = vpack.c.b16 %v6631, %v6621
    %v7962 = vpack.c.b16 %v6632, %v6622
    %v7963 = vpack.c.b16 %v6633, %v6623
    %v7964 = vpack.c.b16 %v6634, %v6624
    %v7965 = vpack.c.b16 %v6645, %v6635
    %v7966 = vpack.c.b16 %v6646, %v6636
    %v7967 = vpack.c.b16 %v6647, %v6637
    %v7968 = vpack.c.b16 %v6648, %v6638
    %v7969 = vpack.c.b16 %v6649, %v6639
    %v7970 = vpack.c.b16 %v6650, %v6640
    %v7971 = vpack.c.b16 %v6651, %v6641
    %v7972 = vpack.c.b16 %v6652, %v6642
    %v7973 = vpack.c.b16 %v6653, %v6643
    %v7974 = vpack.c.b16 %v6654, %v6644
    %v7975 = vpack.c.b16 %v6665, %v6655
    %v7976 = vpack.c.b16 %v6666, %v6656
    %v7977 = vpack.c.b16 %v6667, %v6657
    %v7978 = vpack.c.b16 %v6668, %v6658
    %v7979 = vpack.c.b16 %v6669, %v6659
    %v7980 = vpack.c.b16 %v6670, %v6660
    %v7981 = vpack.c.b16 %v6671, %v6661
    %v7982 = vpack.c.b16 %v6672, %v6662
    %v7983 = vpack.c.b16 %v6673, %v6663
    %v7984 = vpack.c.b16 %v6674, %v6664
    %v7985 = vpack.c.b16 %v6685, %v6675
    %v7986 = vpack.c.b16 %v6686, %v6676
    %v7987 = vpack.c.b16 %v6687, %v6677
    %v7988 = vpack.c.b16 %v6688, %v6678
    %v7989 = vpack.c.b16 %v6689, %v6679
    %v7990 = vpack.c.b16 %v6690, %v6680
    %v7991 = vpack.c.b16 %v6691, %v6681
    %v7992 = vpack.c.b16 %v6692, %v6682
    %v7993 = vpack.c.b16 %v6693, %v6683
    %v7994 = vpack.c.b16 %v6694, %v6684
    %v7995 = vpack.c.b16 %v6705, %v6695
    %v7996 = vpack.c.b16 %v6706, %v6696
    %v7997 = vpack.c.b16 %v6707, %v6697
    %v7998 = vpack.c.b16 %v6708, %v6698
    %v7999 = vpack.c.b16 %v6709, %v6699
    %v8000 = vpack.c.b16 %v6710, %v6700
    %v8001 = vpack.c.b16 %v6711, %v6701
    %v8002 = vpack.c.b16 %v6712, %v6702
    %v8003 = vpack.c.b16 %v6713, %v6703
    %v8004 = vpack.c.b16 %v6714, %v6704
    %v8005 = vpack.c.b16 %v6725, %v6715
    %v8006 = vpack.c.b16 %v6726, %v6716
    %v8007 = vpack.c.b16 %v6727, %v6717
    %v8008 = vpack.c.b16 %v6728, %v6718
    %v8009 = vpack.c.b16 %v6729, %v6719
    %v8010 = vpack.c.b16 %v6730, %v6720
    %v8011 = vpack.c.b16 %v6731, %v6721
    %v8012 = vpack.c.b16 %v6732, %v6722
    %v8013 = vpack.c.b16 %v6733, %v6723
    %v8014 = vpack.c.b16 %v6734, %v6724
    %v8015 = vpack.c.b16 %v6745, %v6735
    %v8016 = vpack.c.b16 %v6746, %v6736
    %v8017 = vpack.c.b16 %v6747, %v6737
    %v8018 = vpack.c.b16 %v6748, %v6738
    %v8019 = vpack.c.b16 %v6749, %v6739
    %v8020 = vpack.c.b16 %v6750, %v6740
    %v8021 = vpack.c.b16 %v6751, %v6741
    %v8022 = vpack.c.b16 %v6752, %v6742
    %v8023 = vpack.c.b16 %v6753, %v6743
    %v8024 = vpack.c.b16 %v6754, %v6744
    %v8025 = vpack.c.b16 %v6765, %v6755
    %v8026 = vpack.c.b16 %v6766, %v6756
    %v8027 = vpack.c.b16 %v6767, %v6757
    %v8028 = vpack.c.b16 %v6768, %v6758
    %v8029 = vpack.c.b16 %v6769, %v6759
    %v8030 = vpack.c.b16 %v6770, %v6760
    %v8031 = vpack.c.b16 %v6771, %v6761
    %v8032 = vpack.c.b16 %v6772, %v6762
    %v8033 = vpack.c.b16 %v6773, %v6763
    %v8034 = vpack.c.b16 %v6774, %v6764
    %v8035 = vpack.c.b16 %v6785, %v6775
    %v8036 = vpack.c.b16 %v6786, %v6776
    %v8037 = vpack.c.b16 %v6787, %v6777
    %v8038 = vpack.c.b16 %v6788, %v6778
    %v8039 = vpack.c.b16 %v6789, %v6779
    %v8040 = vpack.c.b16 %v6790, %v6780
    %v8041 = vpack.c.b16 %v6791, %v6781
    %v8042 = vpack.c.b16 %v6792, %v6782
    %v8043 = vpack.c.b16 %v6793, %v6783
    %v8044 = vpack.c.b16 %v6794, %v6784
    %v8045 = vpack.c.b16 %v6805, %v6795
    %v8046 = vpack.c.b16 %v6806, %v6796
    %v8047 = vpack.c.b16 %v6807, %v6797
    %v8048 = vpack.c.b16 %v6808, %v6798
    %v8049 = vpack.c.b16 %v6809, %v6799
    %v8050 = vpack.c.b16 %v6810, %v6800
    %v8051 = vpack.c.b16 %v6811, %v6801
    %v8052 = vpack.c.b16 %v6812, %v6802
    %v8053 = vpack.c.b16 %v6813, %v6803
    %v8054 = vpack.c.b16 %v6814, %v6804
    %v8055 = vpack.c.b16 %v6825, %v6815
    %v8056 = vpack.c.b16 %v6826, %v6816
    %v8057 = vpack.c.b16 %v6827, %v6817
    %v8058 = vpack.c.b16 %v6828, %v6818
    %v8059 = vpack.c.b16 %v6829, %v6819
    %v8060 = vpack.c.b16 %v6830, %v6820
    %v8061 = vpack.c.b16 %v6831, %v6821
    %v8062 = vpack.c.b16 %v6832, %v6822
    %v8063 = vpack.c.b16 %v6833, %v6823
    %v8064 = vpack.c.b16 %v6834, %v6824
    %v8065 = vpack.c.b16 %v6845, %v6835
    %v8066 = vpack.c.b16 %v6846, %v6836
    %v8067 = vpack.c.b16 %v6847, %v6837
    %v8068 = vpack.c.b16 %v6848, %v6838
    %v8069 = vpack.c.b16 %v6849, %v6839
    %v8070 = vpack.c.b16 %v6850, %v6840
    %v8071 = vpack.c.b16 %v6851, %v6841
    %v8072 = vpack.c.b16 %v6852, %v6842
    %v8073 = vpack.c.b16 %v6853, %v6843
    %v8074 = vpack.c.b16 %v6854, %v6844
    %v8075 = vpack.c.b16 %v6865, %v6855
    %v8076 = vpack.c.b16 %v6866, %v6856
    %v8077 = vpack.c.b16 %v6867, %v6857
    %v8078 = vpack.c.b16 %v6868, %v6858
    %v8079 = vpack.c.b16 %v6869, %v6859
    %v8080 = vpack.c.b16 %v6870, %v6860
    %v8081 = vpack.c.b16 %v6871, %v6861
    %v8082 = vpack.c.b16 %v6872, %v6862
    %v8083 = vpack.c.b16 %v6873, %v6863
    %v8084 = vpack.c.b16 %v6874, %v6864
    %v8085 = vpack.c.b16 %v6885, %v6875
    %v8086 = vpack.c.b16 %v6886, %v6876
    %v8087 = vpack.c.b16 %v6887, %v6877
    %v8088 = vpack.c.b16 %v6888, %v6878
    %v8089 = vpack.c.b16 %v6889, %v6879
    %v8090 = vpack.c.b16 %v6890, %v6880
    %v8091 = vpack.c.b16 %v6891, %v6881
    %v8092 = vpack.c.b16 %v6892, %v6882
    %v8093 = vpack.c.b16 %v6893, %v6883
    %v8094 = vpack.c.b16 %v6894, %v6884
    %v8095 = vpack.c.b16 %v6905, %v6895
    %v8096 = vpack.c.b16 %v6906, %v6896
    %v8097 = vpack.c.b16 %v6907, %v6897
    %v8098 = vpack.c.b16 %v6908, %v6898
    %v8099 = vpack.c.b16 %v6909, %v6899
    %v8100 = vpack.c.b16 %v6910, %v6900
    %v8101 = vpack.c.b16 %v6911, %v6901
    %v8102 = vpack.c.b16 %v6912, %v6902
    %v8103 = vpack.c.b16 %v6913, %v6903
    %v8104 = vpack.c.b16 %v6914, %v6904
    %v8105 = vpack.c.b16 %v6925, %v6915
    %v8106 = vpack.c.b16 %v6926, %v6916
    %v8107 = vpack.c.b16 %v6927, %v6917
    %v8108 = vpack.c.b16 %v6928, %v6918
    %v8109 = vpack.c.b16 %v6929, %v6919
    %v8110 = vpack.c.b16 %v6930, %v6920
    %v8111 = vpack.c.b16 %v6931, %v6921
    %v8112 = vpack.c.b16 %v6932, %v6922
    %v8113 = vpack.c.b16 %v6933, %v6923
    %v8114 = vpack.c.b16 %v6934, %v6924
    %v8115 = vpack.c.b16 %v6945, %v6935
    %v8116 = vpack.c.b16 %v6946, %v6936
    %v8117 = vpack.c.b16 %v6947, %v6937
    %v8118 = vpack.c.b16 %v6948, %v6938
    %v8119 = vpack.c.b16 %v6949, %v6939
    %v8120 = vpack.c.b16 %v6950, %v6940
    %v8121 = vpack.c.b16 %v6951, %v6941
    %v8122 = vpack.c.b16 %v6952, %v6942
    %v8123 = vpack.c.b16 %v6953, %v6943
    %v8124 = vpack.c.b16 %v6954, %v6944
    %v8125 = vpack.c.b16 %v6965, %v6955
    %v8126 = vpack.c.b16 %v6966, %v6956
    %v8127 = vpack.c.b16 %v6967, %v6957
    %v8128 = vpack.c.b16 %v6968, %v6958
    %v8129 = vpack.c.b16 %v6969, %v6959
    %v8130 = vpack.c.b16 %v6970, %v6960
    %v8131 = vpack.c.b16 %v6971, %v6961
    %v8132 = vpack.c.b16 %v6972, %v6962
    %v8133 = vpack.c.b16 %v6973, %v6963
    %v8134 = vpack.c.b16 %v6974, %v6964
    %v8135 = vpack.c.b16 %v6985, %v6975
    %v8136 = vpack.c.b16 %v6986, %v6976
    %v8137 = vpack.c.b16 %v6987, %v6977
    %v8138 = vpack.c.b16 %v6988, %v6978
    %v8139 = vpack.c.b16 %v6989, %v6979
    %v8140 = vpack.c.b16 %v6990, %v6980
    %v8141 = vpack.c.b16 %v6991, %v6981
    %v8142 = vpack.c.b16 %v6992, %v6982
    %v8143 = vpack.c.b16 %v6993, %v6983
    %v8144 = vpack.c.b16 %v6994, %v6984
    %v8145 = vpack.c.b16 %v7005, %v6995
    %v8146 = vpack.c.b16 %v7006, %v6996
    %v8147 = vpack.c.b16 %v7007, %v6997
    %v8148 = vpack.c.b16 %v7008, %v6998
    %v8149 = vpack.c.b16 %v7009, %v6999
    %v8150 = vpack.c.b16 %v7010, %v7000
    %v8151 = vpack.c.b16 %v7011, %v7001
    %v8152 = vpack.c.b16 %v7012, %v7002
    %v8153 = vpack.c.b16 %v7013, %v7003
    %v8154 = vpack.c.b16 %v7014, %v7004
    %v8155 = vpack.c.b16 %v7025, %v7015
    %v8156 = vpack.c.b16 %v7026, %v7016
    %v8157 = vpack.c.b16 %v7027, %v7017
    %v8158 = vpack.c.b16 %v7028, %v7018
    %v8159 = vpack.c.b16 %v7029, %v7019
    %v8160 = vpack.c.b16 %v7030, %v7020
    %v8161 = vpack.c.b16 %v7031, %v7021
    %v8162 = vpack.c.b16 %v7032, %v7022
    %v8163 = vpack.c.b16 %v7033, %v7023
    %v8164 = vpack.c.b16 %v7034, %v7024
    %v8165 = vpack.c.b16 %v7045, %v7035
    %v8166 = vpack.c.b16 %v7046, %v7036
    %v8167 = vpack.c.b16 %v7047, %v7037
    %v8168 = vpack.c.b16 %v7048, %v7038
    %v8169 = vpack.c.b16 %v7049, %v7039
    %v8170 = vpack.c.b16 %v7050, %v7040
    %v8171 = vpack.c.b16 %v7051, %v7041
    %v8172 = vpack.c.b16 %v7052, %v7042
    %v8173 = vpack.c.b16 %v7053, %v7043
    %v8174 = vpack.c.b16 %v7054, %v7044
    %v8175 = vpack.c.b16 %v7065, %v7055
    %v8176 = vpack.c.b16 %v7066, %v7056
    %v8177 = vpack.c.b16 %v7067, %v7057
    %v8178 = vpack.c.b16 %v7068, %v7058
    %v8179 = vpack.c.b16 %v7069, %v7059
    %v8180 = vpack.c.b16 %v7070, %v7060
    %v8181 = vpack.c.b16 %v7071, %v7061
    %v8182 = vpack.c.b16 %v7072, %v7062
    %v8183 = vpack.c.b16 %v7073, %v7063
    %v8184 = vpack.c.b16 %v7074, %v7064
    %v8185 = vpack.c.b16 %v7085, %v7075
    %v8186 = vpack.c.b16 %v7086, %v7076
    %v8187 = vpack.c.b16 %v7087, %v7077
    %v8188 = vpack.c.b16 %v7088, %v7078
    %v8189 = vpack.c.b16 %v7089, %v7079
    %v8190 = vpack.c.b16 %v7090, %v7080
    %v8191 = vpack.c.b16 %v7091, %v7081
    %v8192 = vpack.c.b16 %v7092, %v7082
    %v8193 = vpack.c.b16 %v7093, %v7083
    %v8194 = vpack.c.b16 %v7094, %v7084
    %v8195 = vpack.c.b16 %v7105, %v7095
    %v8196 = vpack.c.b16 %v7106, %v7096
    %v8197 = vpack.c.b16 %v7107, %v7097
    %v8198 = vpack.c.b16 %v7108, %v7098
    %v8199 = vpack.c.b16 %v7109, %v7099
    %v8200 = vpack.c.b16 %v7110, %v7100
    %v8201 = vpack.c.b16 %v7111, %v7101
    %v8202 = vpack.c.b16 %v7112, %v7102
    %v8203 = vpack.c.b16 %v7113, %v7103
    %v8204 = vpack.c.b16 %v7114, %v7104
    %v8205 = vpack.c.b16 %v7125, %v7115
    %v8206 = vpack.c.b16 %v7126, %v7116
    %v8207 = vpack.c.b16 %v7127, %v7117
    %v8208 = vpack.c.b16 %v7128, %v7118
    %v8209 = vpack.c.b16 %v7129, %v7119
    %v8210 = vpack.c.b16 %v7130, %v7120
    %v8211 = vpack.c.b16 %v7131, %v7121
    %v8212 = vpack.c.b16 %v7132, %v7122
    %v8213 = vpack.c.b16 %v7133, %v7123
    %v8214 = vpack.c.b16 %v7134, %v7124
    %v8215 = vpack.c.b16 %v7145, %v7135
    %v8216 = vpack.c.b16 %v7146, %v7136
    %v8217 = vpack.c.b16 %v7147, %v7137
    %v8218 = vpack.c.b16 %v7148, %v7138
    %v8219 = vpack.c.b16 %v7149, %v7139
    %v8220 = vpack.c.b16 %v7150, %v7140
    %v8221 = vpack.c.b16 %v7151, %v7141
    %v8222 = vpack.c.b16 %v7152, %v7142
    %v8223 = vpack.c.b16 %v7153, %v7143
    %v8224 = vpack.c.b16 %v7154, %v7144
    %v8225 = vpack.c.b16 %v7165, %v7155
    %v8226 = vpack.c.b16 %v7166, %v7156
    %v8227 = vpack.c.b16 %v7167, %v7157
    %v8228 = vpack.c.b16 %v7168, %v7158
    %v8229 = vpack.c.b16 %v7169, %v7159
    %v8230 = vpack.c.b16 %v7170, %v7160
    %v8231 = vpack.c.b16 %v7171, %v7161
    %v8232 = vpack.c.b16 %v7172, %v7162
    %v8233 = vpack.c.b16 %v7173, %v7163
    %v8234 = vpack.c.b16 %v7174, %v7164
    %v8235 = vpack.c.b16 %v7185, %v7175
    %v8236 = vpack.c.b16 %v7186, %v7176
    %v8237 = vpack.c.b16 %v7187, %v7177
    %v8238 = vpack.c.b16 %v7188, %v7178
    %v8239 = vpack.c.b16 %v7189, %v7179
    %v8240 = vpack.c.b16 %v7190, %v7180
    %v8241 = vpack.c.b16 %v7191, %v7181
    %v8242 = vpack.c.b16 %v7192, %v7182
    %v8243 = vpack.c.b16 %v7193, %v7183
    %v8244 = vpack.c.b16 %v7194, %v7184
    %v8245 = vpack.c.b16 %v7205, %v7195
    %v8246 = vpack.c.b16 %v7206, %v7196
    %v8247 = vpack.c.b16 %v7207, %v7197
    %v8248 = vpack.c.b16 %v7208, %v7198
    %v8249 = vpack.c.b16 %v7209, %v7199
    %v8250 = vpack.c.b16 %v7210, %v7200
    %v8251 = vpack.c.b16 %v7211, %v7201
    %v8252 = vpack.c.b16 %v7212, %v7202
    %v8253 = vpack.c.b16 %v7213, %v7203
    %v8254 = vpack.c.b16 %v7214, %v7204
    %v8255 = vpack.c.b16 %v7225, %v7215
    %v8256 = vpack.c.b16 %v7226, %v7216
    %v8257 = vpack.c.b16 %v7227, %v7217
    %v8258 = vpack.c.b16 %v7228, %v7218
    %v8259 = vpack.c.b16 %v7229, %v7219
    %v8260 = vpack.c.b16 %v7230, %v7220
    %v8261 = vpack.c.b16 %v7231, %v7221
    %v8262 = vpack.c.b16 %v7232, %v7222
    %v8263 = vpack.c.b16 %v7233, %v7223
    %v8264 = vpack.c.b16 %v7234, %v7224
    %v8265 = vpack.c.b16 %v7245, %v7235
    %v8266 = vpack.c.b16 %v7246, %v7236
    %v8267 = vpack.c.b16 %v7247, %v7237
    %v8268 = vpack.c.b16 %v7248, %v7238
    %v8269 = vpack.c.b16 %v7249, %v7239
    %v8270 = vpack.c.b16 %v7250, %v7240
    %v8271 = vpack.c.b16 %v7251, %v7241
    %v8272 = vpack.c.b16 %v7252, %v7242
    %v8273 = vpack.c.b16 %v7253, %v7243
    %v8274 = vpack.c.b16 %v7254, %v7244
    %v8275 = vpack.c.b16 %v7265, %v7255
    %v8276 = vpack.c.b16 %v7266, %v7256
    %v8277 = vpack.c.b16 %v7267, %v7257
    %v8278 = vpack.c.b16 %v7268, %v7258
    %v8279 = vpack.c.b16 %v7269, %v7259
    %v8280 = vpack.c.b16 %v7270, %v7260
    %v8281 = vpack.c.b16 %v7271, %v7261
    %v8282 = vpack.c.b16 %v7272, %v7262
    %v8283 = vpack.c.b16 %v7273, %v7263
    %v8284 = vpack.c.b16 %v7274, %v7264
    %v8285 = vpack.c.b16 %v7285, %v7275
    %v8286 = vpack.c.b16 %v7286, %v7276
    %v8287 = vpack.c.b16 %v7287, %v7277
    %v8288 = vpack.c.b16 %v7288, %v7278
    %v8289 = vpack.c.b16 %v7289, %v7279
    %v8290 = vpack.c.b16 %v7290, %v7280
    %v8291 = vpack.c.b16 %v7291, %v7281
    %v8292 = vpack.c.b16 %v7292, %v7282
    %v8293 = vpack.c.b16 %v7293, %v7283
    %v8294 = vpack.c.b16 %v7294, %v7284
    %v8295 = vpack.c.b16 %v7305, %v7295
    %v8296 = vpack.c.b16 %v7306, %v7296
    %v8297 = vpack.c.b16 %v7307, %v7297
    %v8298 = vpack.c.b16 %v7308, %v7298
    %v8299 = vpack.c.b16 %v7309, %v7299
    %v8300 = vpack.c.b16 %v7310, %v7300
    %v8301 = vpack.c.b16 %v7311, %v7301
    %v8302 = vpack.c.b16 %v7312, %v7302
    %v8303 = vpack.c.b16 %v7313, %v7303
    %v8304 = vpack.c.b16 %v7314, %v7304
    %v8305 = vpack.c.b16 %v7325, %v7315
    %v8306 = vpack.c.b16 %v7326, %v7316
    %v8307 = vpack.c.b16 %v7327, %v7317
    %v8308 = vpack.c.b16 %v7328, %v7318
    %v8309 = vpack.c.b16 %v7329, %v7319
    %v8310 = vpack.c.b16 %v7330, %v7320
    %v8311 = vpack.c.b16 %v7331, %v7321
    %v8312 = vpack.c.b16 %v7332, %v7322
    %v8313 = vpack.c.b16 %v7333, %v7323
    %v8314 = vpack.c.b16 %v7334, %v7324
    %v8315 = vpack.c.b16 %v7345, %v7335
    %v8316 = vpack.c.b16 %v7346, %v7336
    %v8317 = vpack.c.b16 %v7347, %v7337
    %v8318 = vpack.c.b16 %v7348, %v7338
    %v8319 = vpack.c.b16 %v7349, %v7339
    %v8320 = vpack.c.b16 %v7350, %v7340
    %v8321 = vpack.c.b16 %v7351, %v7341
    %v8322 = vpack.c.b16 %v7352, %v7342
    %v8323 = vpack.c.b16 %v7353, %v7343
    %v8324 = vpack.c.b16 %v7354, %v7344
    %v8325 = vpack.c.b16 %v7365, %v7355
    %v8326 = vpack.c.b16 %v7366, %v7356
    %v8327 = vpack.c.b16 %v7367, %v7357
    %v8328 = vpack.c.b16 %v7368, %v7358
    %v8329 = vpack.c.b16 %v7369, %v7359
    %v8330 = vpack.c.b16 %v7370, %v7360
    %v8331 = vpack.c.b16 %v7371, %v7361
    %v8332 = vpack.c.b16 %v7372, %v7362
    %v8333 = vpack.c.b16 %v7373, %v7363
    %v8334 = vpack.c.b16 %v7374, %v7364
    %v8335 = vpack.c.b16 %v7385, %v7375
    %v8336 = vpack.c.b16 %v7386, %v7376
    %v8337 = vpack.c.b16 %v7387, %v7377
    %v8338 = vpack.c.b16 %v7388, %v7378
    %v8339 = vpack.c.b16 %v7389, %v7379
    %v8340 = vpack.c.b16 %v7390, %v7380
    %v8341 = vpack.c.b16 %v7391, %v7381
    %v8342 = vpack.c.b16 %v7392, %v7382
    %v8343 = vpack.c.b16 %v7393, %v7383
    %v8344 = vpack.c.b16 %v7394, %v7384
    %v8345 = vpack.c.b16 %v7405, %v7395
    %v8346 = vpack.c.b16 %v7406, %v7396
    %v8347 = vpack.c.b16 %v7407, %v7397
    %v8348 = vpack.c.b16 %v7408, %v7398
    %v8349 = vpack.c.b16 %v7409, %v7399
    %v8350 = vpack.c.b16 %v7410, %v7400
    %v8351 = vpack.c.b16 %v7411, %v7401
    %v8352 = vpack.c.b16 %v7412, %v7402
    %v8353 = vpack.c.b16 %v7413, %v7403
    %v8354 = vpack.c.b16 %v7414, %v7404
    %v8355 = vpack.c.b16 %v7425, %v7415
    %v8356 = vpack.c.b16 %v7426, %v7416
    %v8357 = vpack.c.b16 %v7427, %v7417
    %v8358 = vpack.c.b16 %v7428, %v7418
    %v8359 = vpack.c.b16 %v7429, %v7419
    %v8360 = vpack.c.b16 %v7430, %v7420
    %v8361 = vpack.c.b16 %v7431, %v7421
    %v8362 = vpack.c.b16 %v7432, %v7422
    %v8363 = vpack.c.b16 %v7433, %v7423
    %v8364 = vpack.c.b16 %v7434, %v7424
    %v8365 = vpack.c.b16 %v7445, %v7435
    %v8366 = vpack.c.b16 %v7446, %v7436
    %v8367 = vpack.c.b16 %v7447, %v7437
    %v8368 = vpack.c.b16 %v7448, %v7438
    %v8369 = vpack.c.b16 %v7449, %v7439
    %v8370 = vpack.c.b16 %v7450, %v7440
    %v8371 = vpack.c.b16 %v7451, %v7441
    %v8372 = vpack.c.b16 %v7452, %v7442
    %v8373 = vpack.c.b16 %v7453, %v7443
    %v8374 = vpack.c.b16 %v7454, %v7444
    %v8375 = vpack.c.b16 %v7465, %v7455
    %v8376 = vpack.c.b16 %v7466, %v7456
    %v8377 = vpack.c.b16 %v7467, %v7457
    %v8378 = vpack.c.b16 %v7468, %v7458
    %v8379 = vpack.c.b16 %v7469, %v7459
    %v8380 = vpack.c.b16 %v7470, %v7460
    %v8381 = vpack.c.b16 %v7471, %v7461
    %v8382 = vpack.c.b16 %v7472, %v7462
    %v8383 = vpack.c.b16 %v7473, %v7463
    %v8384 = vpack.c.b16 %v7474, %v7464
    %v8385 = vpack.c.b16 %v7485, %v7475
    %v8386 = vpack.c.b16 %v7486, %v7476
    %v8387 = vpack.c.b16 %v7487, %v7477
    %v8388 = vpack.c.b16 %v7488, %v7478
    %v8389 = vpack.c.b16 %v7489, %v7479
    %v8390 = vpack.c.b16 %v7490, %v7480
    %v8391 = vpack.c.b16 %v7491, %v7481
    %v8392 = vpack.c.b16 %v7492, %v7482
    %v8393 = vpack.c.b16 %v7493, %v7483
    %v8394 = vpack.c.b16 %v7494, %v7484
    %v8395 = vpack.c.b16 %v7505, %v7495
    %v8396 = vpack.c.b16 %v7506, %v7496
    %v8397 = vpack.c.b16 %v7507, %v7497
    %v8398 = vpack.c.b16 %v7508, %v7498
    %v8399 = vpack.c.b16 %v7509, %v7499
    %v8400 = vpack.c.b16 %v7510, %v7500
    %v8401 = vpack.c.b16 %v7511, %v7501
    %v8402 = vpack.c.b16 %v7512, %v7502
    %v8403 = vpack.c.b16 %v7513, %v7503
    %v8404 = vpack.c.b16 %v7514, %v7504
    %v8405 = vpack.c.b16 %v7525, %v7515
    %v8406 = vpack.c.b16 %v7526, %v7516
    %v8407 = vpack.c.b16 %v7527, %v7517
    %v8408 = vpack.c.b16 %v7528, %v7518
    %v8409 = vpack.c.b16 %v7529, %v7519
    %v8410 = vpack.c.b16 %v7530, %v7520
    %v8411 = vpack.c.b16 %v7531, %v7521
    %v8412 = vpack.c.b16 %v7532, %v7522
    %v8413 = vpack.c.b16 %v7533, %v7523
    %v8414 = vpack.c.b16 %v7534, %v7524
    %v8415 = vpack.c.b16 %v7545, %v7535
    %v8416 = vpack.c.b16 %v7546, %v7536
    %v8417 = vpack.c.b16 %v7547, %v7537
    %v8418 = vpack.c.b16 %v7548, %v7538
    %v8419 = vpack.c.b16 %v7549, %v7539
    %v8420 = vpack.c.b16 %v7550, %v7540
    %v8421 = vpack.c.b16 %v7551, %v7541
    %v8422 = vpack.c.b16 %v7552, %v7542
    %v8423 = vpack.c.b16 %v7553, %v7543
    %v8424 = vpack.c.b16 %v7554, %v7544
    %v8425 = vpack.c.b16 %v7565, %v7555
    %v8426 = vpack.c.b16 %v7566, %v7556
    %v8427 = vpack.c.b16 %v7567, %v7557
    %v8428 = vpack.c.b16 %v7568, %v7558
    %v8429 = vpack.c.b16 %v7569, %v7559
    %v8430 = vpack.c.b16 %v7570, %v7560
    %v8431 = vpack.c.b16 %v7571, %v7561
    %v8432 = vpack.c.b16 %v7572, %v7562
    %v8433 = vpack.c.b16 %v7573, %v7563
    %v8434 = vpack.c.b16 %v7574, %v7564
    %v8435 = vpack.c.b16 %v7585, %v7575
    %v8436 = vpack.c.b16 %v7586, %v7576
    %v8437 = vpack.c.b16 %v7587, %v7577
    %v8438 = vpack.c.b16 %v7588, %v7578
    %v8439 = vpack.c.b16 %v7589, %v7579
    %v8440 = vpack.c.b16 %v7590, %v7580
    %v8441 = vpack.c.b16 %v7591, %v7581
    %v8442 = vpack.c.b16 %v7592, %v7582
    %v8443 = vpack.c.b16 %v7593, %v7583
    %v8444 = vpack.c.b16 %v7594, %v7584
    %v8445 = vpack.c.b16 %v7605, %v7595
    %v8446 = vpack.c.b16 %v7606, %v7596
    %v8447 = vpack.c.b16 %v7607, %v7597
    %v8448 = vpack.c.b16 %v7608, %v7598
    %v8449 = vpack.c.b16 %v7609, %v7599
    %v8450 = vpack.c.b16 %v7610, %v7600
    %v8451 = vpack.c.b16 %v7611, %v7601
    %v8452 = vpack.c.b16 %v7612, %v7602
    %v8453 = vpack.c.b16 %v7613, %v7603
    %v8454 = vpack.c.b16 %v7614, %v7604
    %v8455 = vpack.c.b16 %v7625, %v7615
    %v8456 = vpack.c.b16 %v7626, %v7616
    %v8457 = vpack.c.b16 %v7627, %v7617
    %v8458 = vpack.c.b16 %v7628, %v7618
    %v8459 = vpack.c.b16 %v7629, %v7619
    %v8460 = vpack.c.b16 %v7630, %v7620
    %v8461 = vpack.c.b16 %v7631, %v7621
    %v8462 = vpack.c.b16 %v7632, %v7622
    %v8463 = vpack.c.b16 %v7633, %v7623
    %v8464 = vpack.c.b16 %v7634, %v7624
    %v8465 = vpack.c.b16 %v7645, %v7635
    %v8466 = vpack.c.b16 %v7646, %v7636
    %v8467 = vpack.c.b16 %v7647, %v7637
    %v8468 = vpack.c.b16 %v7648, %v7638
    %v8469 = vpack.c.b16 %v7649, %v7639
    %v8470 = vpack.c.b16 %v7650, %v7640
    %v8471 = vpack.c.b16 %v7651, %v7641
    %v8472 = vpack.c.b16 %v7652, %v7642
    %v8473 = vpack.c.b16 %v7653, %v7643
    %v8474 = vpack.c.b16 %v7654, %v7644
    %v8475 = vpack.c.b16 %v7665, %v7655
    %v8476 = vpack.c.b16 %v7666, %v7656
    %v8477 = vpack.c.b16 %v7667, %v7657
    %v8478 = vpack.c.b16 %v7668, %v7658
    %v8479 = vpack.c.b16 %v7669, %v7659
    %v8480 = vpack.c.b16 %v7670, %v7660
    %v8481 = vpack.c.b16 %v7671, %v7661
    %v8482 = vpack.c.b16 %v7672, %v7662
    %v8483 = vpack.c.b16 %v7673, %v7663
    %v8484 = vpack.c.b16 %v7674, %v7664
    %v8485 = vpack.c.b16 %v7685, %v7675
    %v8486 = vpack.c.b16 %v7686, %v7676
    %v8487 = vpack.c.b16 %v7687, %v7677
    %v8488 = vpack.c.b16 %v7688, %v7678
    %v8489 = vpack.c.b16 %v7689, %v7679
    %v8490 = vpack.c.b16 %v7690, %v7680
    %v8491 = vpack.c.b16 %v7691, %v7681
    %v8492 = vpack.c.b16 %v7692, %v7682
    %v8493 = vpack.c.b16 %v7693, %v7683
    %v8494 = vpack.c.b16 %v7694, %v7684
    %9295 = vmatpush.bf16.msra.mxu0 %v7765
    %9296 = vmatpush.bf16.msra.mxu0 %v7755
    %9297 = vmatpush.bf16.msra.mxu0 %v7745
    %9298 = vmatpush.bf16.msra.mxu0 %v7735
    %9299 = vmatpush.bf16.msra.mxu0 %v7725
    %9300 = vmatpush.bf16.msra.mxu0 %v7715
    %9301 = vmatpush.bf16.msra.mxu0 %v7705
    %9302 = vmatpush.bf16.msra.mxu0 %v7695
    %9303 = vmatmul.bf16.gmra.mxu0 %v4461
    %v9304 = vpop.f32.mrf.mxu0
    %v9305 = vadd.f32 %v5275, %v9304
    %v9306 = vpop.f32.mrf.mxu0
    %9307 = vdwg.mxu0
    %9308 = vmatpush.bf16.msra.mxu0 %v7845
    %9309 = vmatpush.bf16.msra.mxu0 %v7835
    %9310 = vmatpush.bf16.msra.mxu0 %v7825
    %9311 = vmatpush.bf16.msra.mxu0 %v7815
    %9312 = vmatpush.bf16.msra.mxu0 %v7805
    %9313 = vmatpush.bf16.msra.mxu0 %v7795
    %9314 = vmatpush.bf16.msra.mxu0 %v7785
    %9315 = vmatpush.bf16.msra.mxu0 %v7775
    %9316 = vmatmul.bf16.gmra.mxu0 %v4462
    %v9317 = vpop.f32.mrf.mxu0
    %v9318 = vadd.f32 %v9305, %v9317
    %v9319 = vpop.f32.mrf.mxu0
    %9320 = vdwg.mxu0
    %9321 = vmatpush.bf16.msra.mxu0 %v7925
    %9322 = vmatpush.bf16.msra.mxu0 %v7915
    %9323 = vmatpush.bf16.msra.mxu0 %v7905
    %9324 = vmatpush.bf16.msra.mxu0 %v7895
    %9325 = vmatpush.bf16.msra.mxu0 %v7885
    %9326 = vmatpush.bf16.msra.mxu0 %v7875
    %9327 = vmatpush.bf16.msra.mxu0 %v7865
    %9328 = vmatpush.bf16.msra.mxu0 %v7855
    %9329 = vmatmul.bf16.gmra.mxu0 %v4463
    %v9330 = vpop.f32.mrf.mxu0
    %v9331 = vadd.f32 %v9318, %v9330
    %v9332 = vpop.f32.mrf.mxu0
    %9333 = vdwg.mxu0
    %9334 = vmatpush.bf16.msra.mxu0 %v8005
    %9335 = vmatpush.bf16.msra.mxu0 %v7995
    %9336 = vmatpush.bf16.msra.mxu0 %v7985
    %9337 = vmatpush.bf16.msra.mxu0 %v7975
    %9338 = vmatpush.bf16.msra.mxu0 %v7965
    %9339 = vmatpush.bf16.msra.mxu0 %v7955
    %9340 = vmatpush.bf16.msra.mxu0 %v7945
    %9341 = vmatpush.bf16.msra.mxu0 %v7935
    %9342 = vmatmul.bf16.gmra.mxu0 %v4464
    %v9343 = vpop.f32.mrf.mxu0
    %v9344 = vadd.f32 %v9331, %v9343
    %v9345 = vpop.f32.mrf.mxu0
    %9346 = vdwg.mxu0
    %9347 = vmatpush.bf16.msra.mxu0 %v8085
    %9348 = vmatpush.bf16.msra.mxu0 %v8075
    %9349 = vmatpush.bf16.msra.mxu0 %v8065
    %9350 = vmatpush.bf16.msra.mxu0 %v8055
    %9351 = vmatpush.bf16.msra.mxu0 %v8045
    %9352 = vmatpush.bf16.msra.mxu0 %v8035
    %9353 = vmatpush.bf16.msra.mxu0 %v8025
    %9354 = vmatpush.bf16.msra.mxu0 %v8015
    %9355 = vmatmul.bf16.gmra.mxu0 %v4465
    %v9356 = vpop.f32.mrf.mxu0
    %v9357 = vadd.f32 %v9344, %v9356
    %v9358 = vpop.f32.mrf.mxu0
    %9359 = vdwg.mxu0
    %9360 = vmatpush.bf16.msra.mxu0 %v8165
    %9361 = vmatpush.bf16.msra.mxu0 %v8155
    %9362 = vmatpush.bf16.msra.mxu0 %v8145
    %9363 = vmatpush.bf16.msra.mxu0 %v8135
    %9364 = vmatpush.bf16.msra.mxu0 %v8125
    %9365 = vmatpush.bf16.msra.mxu0 %v8115
    %9366 = vmatpush.bf16.msra.mxu0 %v8105
    %9367 = vmatpush.bf16.msra.mxu0 %v8095
    %9368 = vmatmul.bf16.gmra.mxu0 %v4466
    %v9369 = vpop.f32.mrf.mxu0
    %v9370 = vadd.f32 %v9357, %v9369
    %v9371 = vpop.f32.mrf.mxu0
    %9372 = vdwg.mxu0
    %9373 = vmatpush.bf16.msra.mxu0 %v8245
    %9374 = vmatpush.bf16.msra.mxu0 %v8235
    %9375 = vmatpush.bf16.msra.mxu0 %v8225
    %9376 = vmatpush.bf16.msra.mxu0 %v8215
    %9377 = vmatpush.bf16.msra.mxu0 %v8205
    %9378 = vmatpush.bf16.msra.mxu0 %v8195
    %9379 = vmatpush.bf16.msra.mxu0 %v8185
    %9380 = vmatpush.bf16.msra.mxu0 %v8175
    %9381 = vmatmul.bf16.gmra.mxu0 %v4467
    %v9382 = vpop.f32.mrf.mxu0
    %v9383 = vadd.f32 %v9370, %v9382
    %v9384 = vpop.f32.mrf.mxu0
    %9385 = vdwg.mxu0
    %9386 = vmatpush.bf16.msra.mxu0 %v8325
    %9387 = vmatpush.bf16.msra.mxu0 %v8315
    %9388 = vmatpush.bf16.msra.mxu0 %v8305
    %9389 = vmatpush.bf16.msra.mxu0 %v8295
    %9390 = vmatpush.bf16.msra.mxu0 %v8285
    %9391 = vmatpush.bf16.msra.mxu0 %v8275
    %9392 = vmatpush.bf16.msra.mxu0 %v8265
    %9393 = vmatpush.bf16.msra.mxu0 %v8255
    %9394 = vmatmul.bf16.gmra.mxu0 %v4468
    %v9395 = vpop.f32.mrf.mxu0
    %v9396 = vadd.f32 %v9383, %v9395
    %v9397 = vpop.f32.mrf.mxu0
    %9398 = vdwg.mxu0
    %9399 = vmatpush.bf16.msra.mxu0 %v8405
    %9400 = vmatpush.bf16.msra.mxu0 %v8395
    %9401 = vmatpush.bf16.msra.mxu0 %v8385
    %9402 = vmatpush.bf16.msra.mxu0 %v8375
    %9403 = vmatpush.bf16.msra.mxu0 %v8365
    %9404 = vmatpush.bf16.msra.mxu0 %v8355
    %9405 = vmatpush.bf16.msra.mxu0 %v8345
    %9406 = vmatpush.bf16.msra.mxu0 %v8335
    %9407 = vmatmul.bf16.gmra.mxu0 %v4469
    %v9408 = vpop.f32.mrf.mxu0
    %v9409 = vadd.f32 %v9396, %v9408
    %v9410 = vpop.f32.mrf.mxu0
    %9411 = vdwg.mxu0
    %9412 = vmatpush.bf16.msra.mxu0 %v8485
    %9413 = vmatpush.bf16.msra.mxu0 %v8475
    %9414 = vmatpush.bf16.msra.mxu0 %v8465
    %9415 = vmatpush.bf16.msra.mxu0 %v8455
    %9416 = vmatpush.bf16.msra.mxu0 %v8445
    %9417 = vmatpush.bf16.msra.mxu0 %v8435
    %9418 = vmatpush.bf16.msra.mxu0 %v8425
    %9419 = vmatpush.bf16.msra.mxu0 %v8415
    %9420 = vmatmul.bf16.gmra.mxu0 %v4470
    %v9421 = vpop.f32.mrf.mxu0
    %v9422 = vadd.f32 %v9409, %v9421
    %v9423 = vpop.f32.mrf.mxu0
    %9424 = vdwg.mxu0
    %9425 = vmatpush.bf16.msra.mxu0 %v7766
    %9426 = vmatpush.bf16.msra.mxu0 %v7756
    %9427 = vmatpush.bf16.msra.mxu0 %v7746
    %9428 = vmatpush.bf16.msra.mxu0 %v7736
    %9429 = vmatpush.bf16.msra.mxu0 %v7726
    %9430 = vmatpush.bf16.msra.mxu0 %v7716
    %9431 = vmatpush.bf16.msra.mxu0 %v7706
    %9432 = vmatpush.bf16.msra.mxu0 %v7696
    %9433 = vmatmul.bf16.gmra.mxu0 %v4461
    %v9434 = vpop.f32.mrf.mxu0
    %v9435 = vadd.f32 %v5276, %v9434
    %v9436 = vpop.f32.mrf.mxu0
    %9437 = vdwg.mxu0
    %9438 = vmatpush.bf16.msra.mxu0 %v7846
    %9439 = vmatpush.bf16.msra.mxu0 %v7836
    %9440 = vmatpush.bf16.msra.mxu0 %v7826
    %9441 = vmatpush.bf16.msra.mxu0 %v7816
    %9442 = vmatpush.bf16.msra.mxu0 %v7806
    %9443 = vmatpush.bf16.msra.mxu0 %v7796
    %9444 = vmatpush.bf16.msra.mxu0 %v7786
    %9445 = vmatpush.bf16.msra.mxu0 %v7776
    %9446 = vmatmul.bf16.gmra.mxu0 %v4462
    %v9447 = vpop.f32.mrf.mxu0
    %v9448 = vadd.f32 %v9435, %v9447
    %v9449 = vpop.f32.mrf.mxu0
    %9450 = vdwg.mxu0
    %9451 = vmatpush.bf16.msra.mxu0 %v7926
    %9452 = vmatpush.bf16.msra.mxu0 %v7916
    %9453 = vmatpush.bf16.msra.mxu0 %v7906
    %9454 = vmatpush.bf16.msra.mxu0 %v7896
    %9455 = vmatpush.bf16.msra.mxu0 %v7886
    %9456 = vmatpush.bf16.msra.mxu0 %v7876
    %9457 = vmatpush.bf16.msra.mxu0 %v7866
    %9458 = vmatpush.bf16.msra.mxu0 %v7856
    %9459 = vmatmul.bf16.gmra.mxu0 %v4463
    %v9460 = vpop.f32.mrf.mxu0
    %v9461 = vadd.f32 %v9448, %v9460
    %v9462 = vpop.f32.mrf.mxu0
    %9463 = vdwg.mxu0
    %9464 = vmatpush.bf16.msra.mxu0 %v8006
    %9465 = vmatpush.bf16.msra.mxu0 %v7996
    %9466 = vmatpush.bf16.msra.mxu0 %v7986
    %9467 = vmatpush.bf16.msra.mxu0 %v7976
    %9468 = vmatpush.bf16.msra.mxu0 %v7966
    %9469 = vmatpush.bf16.msra.mxu0 %v7956
    %9470 = vmatpush.bf16.msra.mxu0 %v7946
    %9471 = vmatpush.bf16.msra.mxu0 %v7936
    %9472 = vmatmul.bf16.gmra.mxu0 %v4464
    %v9473 = vpop.f32.mrf.mxu0
    %v9474 = vadd.f32 %v9461, %v9473
    %v9475 = vpop.f32.mrf.mxu0
    %9476 = vdwg.mxu0
    %9477 = vmatpush.bf16.msra.mxu0 %v8086
    %9478 = vmatpush.bf16.msra.mxu0 %v8076
    %9479 = vmatpush.bf16.msra.mxu0 %v8066
    %9480 = vmatpush.bf16.msra.mxu0 %v8056
    %9481 = vmatpush.bf16.msra.mxu0 %v8046
    %9482 = vmatpush.bf16.msra.mxu0 %v8036
    %9483 = vmatpush.bf16.msra.mxu0 %v8026
    %9484 = vmatpush.bf16.msra.mxu0 %v8016
    %9485 = vmatmul.bf16.gmra.mxu0 %v4465
    %v9486 = vpop.f32.mrf.mxu0
    %v9487 = vadd.f32 %v9474, %v9486
    %v9488 = vpop.f32.mrf.mxu0
    %9489 = vdwg.mxu0
    %9490 = vmatpush.bf16.msra.mxu0 %v8166
    %9491 = vmatpush.bf16.msra.mxu0 %v8156
    %9492 = vmatpush.bf16.msra.mxu0 %v8146
    %9493 = vmatpush.bf16.msra.mxu0 %v8136
    %9494 = vmatpush.bf16.msra.mxu0 %v8126
    %9495 = vmatpush.bf16.msra.mxu0 %v8116
    %9496 = vmatpush.bf16.msra.mxu0 %v8106
    %9497 = vmatpush.bf16.msra.mxu0 %v8096
    %9498 = vmatmul.bf16.gmra.mxu0 %v4466
    %v9499 = vpop.f32.mrf.mxu0
    %v9500 = vadd.f32 %v9487, %v9499
    %v9501 = vpop.f32.mrf.mxu0
    %9502 = vdwg.mxu0
    %9503 = vmatpush.bf16.msra.mxu0 %v8246
    %9504 = vmatpush.bf16.msra.mxu0 %v8236
    %9505 = vmatpush.bf16.msra.mxu0 %v8226
    %9506 = vmatpush.bf16.msra.mxu0 %v8216
    %9507 = vmatpush.bf16.msra.mxu0 %v8206
    %9508 = vmatpush.bf16.msra.mxu0 %v8196
    %9509 = vmatpush.bf16.msra.mxu0 %v8186
    %9510 = vmatpush.bf16.msra.mxu0 %v8176
    %9511 = vmatmul.bf16.gmra.mxu0 %v4467
    %v9512 = vpop.f32.mrf.mxu0
    %v9513 = vadd.f32 %v9500, %v9512
    %v9514 = vpop.f32.mrf.mxu0
    %9515 = vdwg.mxu0
    %9516 = vmatpush.bf16.msra.mxu0 %v8326
    %9517 = vmatpush.bf16.msra.mxu0 %v8316
    %9518 = vmatpush.bf16.msra.mxu0 %v8306
    %9519 = vmatpush.bf16.msra.mxu0 %v8296
    %9520 = vmatpush.bf16.msra.mxu0 %v8286
    %9521 = vmatpush.bf16.msra.mxu0 %v8276
    %9522 = vmatpush.bf16.msra.mxu0 %v8266
    %9523 = vmatpush.bf16.msra.mxu0 %v8256
    %9524 = vmatmul.bf16.gmra.mxu0 %v4468
    %v9525 = vpop.f32.mrf.mxu0
    %v9526 = vadd.f32 %v9513, %v9525
    %v9527 = vpop.f32.mrf.mxu0
    %9528 = vdwg.mxu0
    %9529 = vmatpush.bf16.msra.mxu0 %v8406
    %9530 = vmatpush.bf16.msra.mxu0 %v8396
    %9531 = vmatpush.bf16.msra.mxu0 %v8386
    %9532 = vmatpush.bf16.msra.mxu0 %v8376
    %9533 = vmatpush.bf16.msra.mxu0 %v8366
    %9534 = vmatpush.bf16.msra.mxu0 %v8356
    %9535 = vmatpush.bf16.msra.mxu0 %v8346
    %9536 = vmatpush.bf16.msra.mxu0 %v8336
    %9537 = vmatmul.bf16.gmra.mxu0 %v4469
    %v9538 = vpop.f32.mrf.mxu0
    %v9539 = vadd.f32 %v9526, %v9538
    %v9540 = vpop.f32.mrf.mxu0
    %9541 = vdwg.mxu0
    %9542 = vmatpush.bf16.msra.mxu0 %v8486
    %9543 = vmatpush.bf16.msra.mxu0 %v8476
    %9544 = vmatpush.bf16.msra.mxu0 %v8466
    %9545 = vmatpush.bf16.msra.mxu0 %v8456
    %9546 = vmatpush.bf16.msra.mxu0 %v8446
    %9547 = vmatpush.bf16.msra.mxu0 %v8436
    %9548 = vmatpush.bf16.msra.mxu0 %v8426
    %9549 = vmatpush.bf16.msra.mxu0 %v8416
    %9550 = vmatmul.bf16.gmra.mxu0 %v4470
    %v9551 = vpop.f32.mrf.mxu0
    %v9552 = vadd.f32 %v9539, %v9551
    %v9553 = vpop.f32.mrf.mxu0
    %9554 = vdwg.mxu0
    %9555 = vmatpush.bf16.msra.mxu0 %v7767
    %9556 = vmatpush.bf16.msra.mxu0 %v7757
    %9557 = vmatpush.bf16.msra.mxu0 %v7747
    %9558 = vmatpush.bf16.msra.mxu0 %v7737
    %9559 = vmatpush.bf16.msra.mxu0 %v7727
    %9560 = vmatpush.bf16.msra.mxu0 %v7717
    %9561 = vmatpush.bf16.msra.mxu0 %v7707
    %9562 = vmatpush.bf16.msra.mxu0 %v7697
    %9563 = vmatmul.bf16.gmra.mxu0 %v4461
    %v9564 = vpop.f32.mrf.mxu0
    %v9565 = vadd.f32 %v5277, %v9564
    %v9566 = vpop.f32.mrf.mxu0
    %9567 = vdwg.mxu0
    %9568 = vmatpush.bf16.msra.mxu0 %v7847
    %9569 = vmatpush.bf16.msra.mxu0 %v7837
    %9570 = vmatpush.bf16.msra.mxu0 %v7827
    %9571 = vmatpush.bf16.msra.mxu0 %v7817
    %9572 = vmatpush.bf16.msra.mxu0 %v7807
    %9573 = vmatpush.bf16.msra.mxu0 %v7797
    %9574 = vmatpush.bf16.msra.mxu0 %v7787
    %9575 = vmatpush.bf16.msra.mxu0 %v7777
    %9576 = vmatmul.bf16.gmra.mxu0 %v4462
    %v9577 = vpop.f32.mrf.mxu0
    %v9578 = vadd.f32 %v9565, %v9577
    %v9579 = vpop.f32.mrf.mxu0
    %9580 = vdwg.mxu0
    %9581 = vmatpush.bf16.msra.mxu0 %v7927
    %9582 = vmatpush.bf16.msra.mxu0 %v7917
    %9583 = vmatpush.bf16.msra.mxu0 %v7907
    %9584 = vmatpush.bf16.msra.mxu0 %v7897
    %9585 = vmatpush.bf16.msra.mxu0 %v7887
    %9586 = vmatpush.bf16.msra.mxu0 %v7877
    %9587 = vmatpush.bf16.msra.mxu0 %v7867
    %9588 = vmatpush.bf16.msra.mxu0 %v7857
    %9589 = vmatmul.bf16.gmra.mxu0 %v4463
    %v9590 = vpop.f32.mrf.mxu0
    %v9591 = vadd.f32 %v9578, %v9590
    %v9592 = vpop.f32.mrf.mxu0
    %9593 = vdwg.mxu0
    %9594 = vmatpush.bf16.msra.mxu0 %v8007
    %9595 = vmatpush.bf16.msra.mxu0 %v7997
    %9596 = vmatpush.bf16.msra.mxu0 %v7987
    %9597 = vmatpush.bf16.msra.mxu0 %v7977
    %9598 = vmatpush.bf16.msra.mxu0 %v7967
    %9599 = vmatpush.bf16.msra.mxu0 %v7957
    %9600 = vmatpush.bf16.msra.mxu0 %v7947
    %9601 = vmatpush.bf16.msra.mxu0 %v7937
    %9602 = vmatmul.bf16.gmra.mxu0 %v4464
    %v9603 = vpop.f32.mrf.mxu0
    %v9604 = vadd.f32 %v9591, %v9603
    %v9605 = vpop.f32.mrf.mxu0
    %9606 = vdwg.mxu0
    %9607 = vmatpush.bf16.msra.mxu0 %v8087
    %9608 = vmatpush.bf16.msra.mxu0 %v8077
    %9609 = vmatpush.bf16.msra.mxu0 %v8067
    %9610 = vmatpush.bf16.msra.mxu0 %v8057
    %9611 = vmatpush.bf16.msra.mxu0 %v8047
    %9612 = vmatpush.bf16.msra.mxu0 %v8037
    %9613 = vmatpush.bf16.msra.mxu0 %v8027
    %9614 = vmatpush.bf16.msra.mxu0 %v8017
    %9615 = vmatmul.bf16.gmra.mxu0 %v4465
    %v9616 = vpop.f32.mrf.mxu0
    %v9617 = vadd.f32 %v9604, %v9616
    %v9618 = vpop.f32.mrf.mxu0
    %9619 = vdwg.mxu0
    %9620 = vmatpush.bf16.msra.mxu0 %v8167
    %9621 = vmatpush.bf16.msra.mxu0 %v8157
    %9622 = vmatpush.bf16.msra.mxu0 %v8147
    %9623 = vmatpush.bf16.msra.mxu0 %v8137
    %9624 = vmatpush.bf16.msra.mxu0 %v8127
    %9625 = vmatpush.bf16.msra.mxu0 %v8117
    %9626 = vmatpush.bf16.msra.mxu0 %v8107
    %9627 = vmatpush.bf16.msra.mxu0 %v8097
    %9628 = vmatmul.bf16.gmra.mxu0 %v4466
    %v9629 = vpop.f32.mrf.mxu0
    %v9630 = vadd.f32 %v9617, %v9629
    %v9631 = vpop.f32.mrf.mxu0
    %9632 = vdwg.mxu0
    %9633 = vmatpush.bf16.msra.mxu0 %v8247
    %9634 = vmatpush.bf16.msra.mxu0 %v8237
    %9635 = vmatpush.bf16.msra.mxu0 %v8227
    %9636 = vmatpush.bf16.msra.mxu0 %v8217
    %9637 = vmatpush.bf16.msra.mxu0 %v8207
    %9638 = vmatpush.bf16.msra.mxu0 %v8197
    %9639 = vmatpush.bf16.msra.mxu0 %v8187
    %9640 = vmatpush.bf16.msra.mxu0 %v8177
    %9641 = vmatmul.bf16.gmra.mxu0 %v4467
    %v9642 = vpop.f32.mrf.mxu0
    %v9643 = vadd.f32 %v9630, %v9642
    %v9644 = vpop.f32.mrf.mxu0
    %9645 = vdwg.mxu0
    %9646 = vmatpush.bf16.msra.mxu0 %v8327
    %9647 = vmatpush.bf16.msra.mxu0 %v8317
    %9648 = vmatpush.bf16.msra.mxu0 %v8307
    %9649 = vmatpush.bf16.msra.mxu0 %v8297
    %9650 = vmatpush.bf16.msra.mxu0 %v8287
    %9651 = vmatpush.bf16.msra.mxu0 %v8277
    %9652 = vmatpush.bf16.msra.mxu0 %v8267
    %9653 = vmatpush.bf16.msra.mxu0 %v8257
    %9654 = vmatmul.bf16.gmra.mxu0 %v4468
    %v9655 = vpop.f32.mrf.mxu0
    %v9656 = vadd.f32 %v9643, %v9655
    %v9657 = vpop.f32.mrf.mxu0
    %9658 = vdwg.mxu0
    %9659 = vmatpush.bf16.msra.mxu0 %v8407
    %9660 = vmatpush.bf16.msra.mxu0 %v8397
    %9661 = vmatpush.bf16.msra.mxu0 %v8387
    %9662 = vmatpush.bf16.msra.mxu0 %v8377
    %9663 = vmatpush.bf16.msra.mxu0 %v8367
    %9664 = vmatpush.bf16.msra.mxu0 %v8357
    %9665 = vmatpush.bf16.msra.mxu0 %v8347
    %9666 = vmatpush.bf16.msra.mxu0 %v8337
    %9667 = vmatmul.bf16.gmra.mxu0 %v4469
    %v9668 = vpop.f32.mrf.mxu0
    %v9669 = vadd.f32 %v9656, %v9668
    %v9670 = vpop.f32.mrf.mxu0
    %9671 = vdwg.mxu0
    %9672 = vmatpush.bf16.msra.mxu0 %v8487
    %9673 = vmatpush.bf16.msra.mxu0 %v8477
    %9674 = vmatpush.bf16.msra.mxu0 %v8467
    %9675 = vmatpush.bf16.msra.mxu0 %v8457
    %9676 = vmatpush.bf16.msra.mxu0 %v8447
    %9677 = vmatpush.bf16.msra.mxu0 %v8437
    %9678 = vmatpush.bf16.msra.mxu0 %v8427
    %9679 = vmatpush.bf16.msra.mxu0 %v8417
    %9680 = vmatmul.bf16.gmra.mxu0 %v4470
    %v9681 = vpop.f32.mrf.mxu0
    %v9682 = vadd.f32 %v9669, %v9681
    %v9683 = vpop.f32.mrf.mxu0
    %9684 = vdwg.mxu0
    %9685 = vmatpush.bf16.msra.mxu0 %v7768
    %9686 = vmatpush.bf16.msra.mxu0 %v7758
    %9687 = vmatpush.bf16.msra.mxu0 %v7748
    %9688 = vmatpush.bf16.msra.mxu0 %v7738
    %9689 = vmatpush.bf16.msra.mxu0 %v7728
    %9690 = vmatpush.bf16.msra.mxu0 %v7718
    %9691 = vmatpush.bf16.msra.mxu0 %v7708
    %9692 = vmatpush.bf16.msra.mxu0 %v7698
    %9693 = vmatmul.bf16.gmra.mxu0 %v4461
    %v9694 = vpop.f32.mrf.mxu0
    %v9695 = vadd.f32 %v5278, %v9694
    %v9696 = vpop.f32.mrf.mxu0
    %9697 = vdwg.mxu0
    %9698 = vmatpush.bf16.msra.mxu0 %v7848
    %9699 = vmatpush.bf16.msra.mxu0 %v7838
    %9700 = vmatpush.bf16.msra.mxu0 %v7828
    %9701 = vmatpush.bf16.msra.mxu0 %v7818
    %9702 = vmatpush.bf16.msra.mxu0 %v7808
    %9703 = vmatpush.bf16.msra.mxu0 %v7798
    %9704 = vmatpush.bf16.msra.mxu0 %v7788
    %9705 = vmatpush.bf16.msra.mxu0 %v7778
    %9706 = vmatmul.bf16.gmra.mxu0 %v4462
    %v9707 = vpop.f32.mrf.mxu0
    %v9708 = vadd.f32 %v9695, %v9707
    %v9709 = vpop.f32.mrf.mxu0
    %9710 = vdwg.mxu0
    %9711 = vmatpush.bf16.msra.mxu0 %v7928
    %9712 = vmatpush.bf16.msra.mxu0 %v7918
    %9713 = vmatpush.bf16.msra.mxu0 %v7908
    %9714 = vmatpush.bf16.msra.mxu0 %v7898
    %9715 = vmatpush.bf16.msra.mxu0 %v7888
    %9716 = vmatpush.bf16.msra.mxu0 %v7878
    %9717 = vmatpush.bf16.msra.mxu0 %v7868
    %9718 = vmatpush.bf16.msra.mxu0 %v7858
    %9719 = vmatmul.bf16.gmra.mxu0 %v4463
    %v9720 = vpop.f32.mrf.mxu0
    %v9721 = vadd.f32 %v9708, %v9720
    %v9722 = vpop.f32.mrf.mxu0
    %9723 = vdwg.mxu0
    %9724 = vmatpush.bf16.msra.mxu0 %v8008
    %9725 = vmatpush.bf16.msra.mxu0 %v7998
    %9726 = vmatpush.bf16.msra.mxu0 %v7988
    %9727 = vmatpush.bf16.msra.mxu0 %v7978
    %9728 = vmatpush.bf16.msra.mxu0 %v7968
    %9729 = vmatpush.bf16.msra.mxu0 %v7958
    %9730 = vmatpush.bf16.msra.mxu0 %v7948
    %9731 = vmatpush.bf16.msra.mxu0 %v7938
    %9732 = vmatmul.bf16.gmra.mxu0 %v4464
    %v9733 = vpop.f32.mrf.mxu0
    %v9734 = vadd.f32 %v9721, %v9733
    %v9735 = vpop.f32.mrf.mxu0
    %9736 = vdwg.mxu0
    %9737 = vmatpush.bf16.msra.mxu0 %v8088
    %9738 = vmatpush.bf16.msra.mxu0 %v8078
    %9739 = vmatpush.bf16.msra.mxu0 %v8068
    %9740 = vmatpush.bf16.msra.mxu0 %v8058
    %9741 = vmatpush.bf16.msra.mxu0 %v8048
    %9742 = vmatpush.bf16.msra.mxu0 %v8038
    %9743 = vmatpush.bf16.msra.mxu0 %v8028
    %9744 = vmatpush.bf16.msra.mxu0 %v8018
    %9745 = vmatmul.bf16.gmra.mxu0 %v4465
    %v9746 = vpop.f32.mrf.mxu0
    %v9747 = vadd.f32 %v9734, %v9746
    %v9748 = vpop.f32.mrf.mxu0
    %9749 = vdwg.mxu0
    %9750 = vmatpush.bf16.msra.mxu0 %v8168
    %9751 = vmatpush.bf16.msra.mxu0 %v8158
    %9752 = vmatpush.bf16.msra.mxu0 %v8148
    %9753 = vmatpush.bf16.msra.mxu0 %v8138
    %9754 = vmatpush.bf16.msra.mxu0 %v8128
    %9755 = vmatpush.bf16.msra.mxu0 %v8118
    %9756 = vmatpush.bf16.msra.mxu0 %v8108
    %9757 = vmatpush.bf16.msra.mxu0 %v8098
    %9758 = vmatmul.bf16.gmra.mxu0 %v4466
    %v9759 = vpop.f32.mrf.mxu0
    %v9760 = vadd.f32 %v9747, %v9759
    %v9761 = vpop.f32.mrf.mxu0
    %9762 = vdwg.mxu0
    %9763 = vmatpush.bf16.msra.mxu0 %v8248
    %9764 = vmatpush.bf16.msra.mxu0 %v8238
    %9765 = vmatpush.bf16.msra.mxu0 %v8228
    %9766 = vmatpush.bf16.msra.mxu0 %v8218
    %9767 = vmatpush.bf16.msra.mxu0 %v8208
    %9768 = vmatpush.bf16.msra.mxu0 %v8198
    %9769 = vmatpush.bf16.msra.mxu0 %v8188
    %9770 = vmatpush.bf16.msra.mxu0 %v8178
    %9771 = vmatmul.bf16.gmra.mxu0 %v4467
    %v9772 = vpop.f32.mrf.mxu0
    %v9773 = vadd.f32 %v9760, %v9772
    %v9774 = vpop.f32.mrf.mxu0
    %9775 = vdwg.mxu0
    %9776 = vmatpush.bf16.msra.mxu0 %v8328
    %9777 = vmatpush.bf16.msra.mxu0 %v8318
    %9778 = vmatpush.bf16.msra.mxu0 %v8308
    %9779 = vmatpush.bf16.msra.mxu0 %v8298
    %9780 = vmatpush.bf16.msra.mxu0 %v8288
    %9781 = vmatpush.bf16.msra.mxu0 %v8278
    %9782 = vmatpush.bf16.msra.mxu0 %v8268
    %9783 = vmatpush.bf16.msra.mxu0 %v8258
    %9784 = vmatmul.bf16.gmra.mxu0 %v4468
    %v9785 = vpop.f32.mrf.mxu0
    %v9786 = vadd.f32 %v9773, %v9785
    %v9787 = vpop.f32.mrf.mxu0
    %9788 = vdwg.mxu0
    %9789 = vmatpush.bf16.msra.mxu0 %v8408
    %9790 = vmatpush.bf16.msra.mxu0 %v8398
    %9791 = vmatpush.bf16.msra.mxu0 %v8388
    %9792 = vmatpush.bf16.msra.mxu0 %v8378
    %9793 = vmatpush.bf16.msra.mxu0 %v8368
    %9794 = vmatpush.bf16.msra.mxu0 %v8358
    %9795 = vmatpush.bf16.msra.mxu0 %v8348
    %9796 = vmatpush.bf16.msra.mxu0 %v8338
    %9797 = vmatmul.bf16.gmra.mxu0 %v4469
    %v9798 = vpop.f32.mrf.mxu0
    %v9799 = vadd.f32 %v9786, %v9798
    %v9800 = vpop.f32.mrf.mxu0
    %9801 = vdwg.mxu0
    %9802 = vmatpush.bf16.msra.mxu0 %v8488
    %9803 = vmatpush.bf16.msra.mxu0 %v8478
    %9804 = vmatpush.bf16.msra.mxu0 %v8468
    %9805 = vmatpush.bf16.msra.mxu0 %v8458
    %9806 = vmatpush.bf16.msra.mxu0 %v8448
    %9807 = vmatpush.bf16.msra.mxu0 %v8438
    %9808 = vmatpush.bf16.msra.mxu0 %v8428
    %9809 = vmatpush.bf16.msra.mxu0 %v8418
    %9810 = vmatmul.bf16.gmra.mxu0 %v4470
    %v9811 = vpop.f32.mrf.mxu0
    %v9812 = vadd.f32 %v9799, %v9811
    %v9813 = vpop.f32.mrf.mxu0
    %9814 = vdwg.mxu0
    %9815 = vmatpush.bf16.msra.mxu0 %v7769
    %9816 = vmatpush.bf16.msra.mxu0 %v7759
    %9817 = vmatpush.bf16.msra.mxu0 %v7749
    %9818 = vmatpush.bf16.msra.mxu0 %v7739
    %9819 = vmatpush.bf16.msra.mxu0 %v7729
    %9820 = vmatpush.bf16.msra.mxu0 %v7719
    %9821 = vmatpush.bf16.msra.mxu0 %v7709
    %9822 = vmatpush.bf16.msra.mxu0 %v7699
    %9823 = vmatmul.bf16.gmra.mxu0 %v4461
    %v9824 = vpop.f32.mrf.mxu0
    %v9825 = vadd.f32 %v5279, %v9824
    %v9826 = vpop.f32.mrf.mxu0
    %9827 = vdwg.mxu0
    %9828 = vmatpush.bf16.msra.mxu0 %v7849
    %9829 = vmatpush.bf16.msra.mxu0 %v7839
    %9830 = vmatpush.bf16.msra.mxu0 %v7829
    %9831 = vmatpush.bf16.msra.mxu0 %v7819
    %9832 = vmatpush.bf16.msra.mxu0 %v7809
    %9833 = vmatpush.bf16.msra.mxu0 %v7799
    %9834 = vmatpush.bf16.msra.mxu0 %v7789
    %9835 = vmatpush.bf16.msra.mxu0 %v7779
    %9836 = vmatmul.bf16.gmra.mxu0 %v4462
    %v9837 = vpop.f32.mrf.mxu0
    %v9838 = vadd.f32 %v9825, %v9837
    %v9839 = vpop.f32.mrf.mxu0
    %9840 = vdwg.mxu0
    %9841 = vmatpush.bf16.msra.mxu0 %v7929
    %9842 = vmatpush.bf16.msra.mxu0 %v7919
    %9843 = vmatpush.bf16.msra.mxu0 %v7909
    %9844 = vmatpush.bf16.msra.mxu0 %v7899
    %9845 = vmatpush.bf16.msra.mxu0 %v7889
    %9846 = vmatpush.bf16.msra.mxu0 %v7879
    %9847 = vmatpush.bf16.msra.mxu0 %v7869
    %9848 = vmatpush.bf16.msra.mxu0 %v7859
    %9849 = vmatmul.bf16.gmra.mxu0 %v4463
    %v9850 = vpop.f32.mrf.mxu0
    %v9851 = vadd.f32 %v9838, %v9850
    %v9852 = vpop.f32.mrf.mxu0
    %9853 = vdwg.mxu0
    %9854 = vmatpush.bf16.msra.mxu0 %v8009
    %9855 = vmatpush.bf16.msra.mxu0 %v7999
    %9856 = vmatpush.bf16.msra.mxu0 %v7989
    %9857 = vmatpush.bf16.msra.mxu0 %v7979
    %9858 = vmatpush.bf16.msra.mxu0 %v7969
    %9859 = vmatpush.bf16.msra.mxu0 %v7959
    %9860 = vmatpush.bf16.msra.mxu0 %v7949
    %9861 = vmatpush.bf16.msra.mxu0 %v7939
    %9862 = vmatmul.bf16.gmra.mxu0 %v4464
    %v9863 = vpop.f32.mrf.mxu0
    %v9864 = vadd.f32 %v9851, %v9863
    %v9865 = vpop.f32.mrf.mxu0
    %9866 = vdwg.mxu0
    %9867 = vmatpush.bf16.msra.mxu0 %v8089
    %9868 = vmatpush.bf16.msra.mxu0 %v8079
    %9869 = vmatpush.bf16.msra.mxu0 %v8069
    %9870 = vmatpush.bf16.msra.mxu0 %v8059
    %9871 = vmatpush.bf16.msra.mxu0 %v8049
    %9872 = vmatpush.bf16.msra.mxu0 %v8039
    %9873 = vmatpush.bf16.msra.mxu0 %v8029
    %9874 = vmatpush.bf16.msra.mxu0 %v8019
    %9875 = vmatmul.bf16.gmra.mxu0 %v4465
    %v9876 = vpop.f32.mrf.mxu0
    %v9877 = vadd.f32 %v9864, %v9876
    %v9878 = vpop.f32.mrf.mxu0
    %9879 = vdwg.mxu0
    %9880 = vmatpush.bf16.msra.mxu0 %v8169
    %9881 = vmatpush.bf16.msra.mxu0 %v8159
    %9882 = vmatpush.bf16.msra.mxu0 %v8149
    %9883 = vmatpush.bf16.msra.mxu0 %v8139
    %9884 = vmatpush.bf16.msra.mxu0 %v8129
    %9885 = vmatpush.bf16.msra.mxu0 %v8119
    %9886 = vmatpush.bf16.msra.mxu0 %v8109
    %9887 = vmatpush.bf16.msra.mxu0 %v8099
    %9888 = vmatmul.bf16.gmra.mxu0 %v4466
    %v9889 = vpop.f32.mrf.mxu0
    %v9890 = vadd.f32 %v9877, %v9889
    %v9891 = vpop.f32.mrf.mxu0
    %9892 = vdwg.mxu0
    %9893 = vmatpush.bf16.msra.mxu0 %v8249
    %9894 = vmatpush.bf16.msra.mxu0 %v8239
    %9895 = vmatpush.bf16.msra.mxu0 %v8229
    %9896 = vmatpush.bf16.msra.mxu0 %v8219
    %9897 = vmatpush.bf16.msra.mxu0 %v8209
    %9898 = vmatpush.bf16.msra.mxu0 %v8199
    %9899 = vmatpush.bf16.msra.mxu0 %v8189
    %9900 = vmatpush.bf16.msra.mxu0 %v8179
    %9901 = vmatmul.bf16.gmra.mxu0 %v4467
    %v9902 = vpop.f32.mrf.mxu0
    %v9903 = vadd.f32 %v9890, %v9902
    %v9904 = vpop.f32.mrf.mxu0
    %9905 = vdwg.mxu0
    %9906 = vmatpush.bf16.msra.mxu0 %v8329
    %9907 = vmatpush.bf16.msra.mxu0 %v8319
    %9908 = vmatpush.bf16.msra.mxu0 %v8309
    %9909 = vmatpush.bf16.msra.mxu0 %v8299
    %9910 = vmatpush.bf16.msra.mxu0 %v8289
    %9911 = vmatpush.bf16.msra.mxu0 %v8279
    %9912 = vmatpush.bf16.msra.mxu0 %v8269
    %9913 = vmatpush.bf16.msra.mxu0 %v8259
    %9914 = vmatmul.bf16.gmra.mxu0 %v4468
    %v9915 = vpop.f32.mrf.mxu0
    %v9916 = vadd.f32 %v9903, %v9915
    %v9917 = vpop.f32.mrf.mxu0
    %9918 = vdwg.mxu0
    %9919 = vmatpush.bf16.msra.mxu0 %v8409
    %9920 = vmatpush.bf16.msra.mxu0 %v8399
    %9921 = vmatpush.bf16.msra.mxu0 %v8389
    %9922 = vmatpush.bf16.msra.mxu0 %v8379
    %9923 = vmatpush.bf16.msra.mxu0 %v8369
    %9924 = vmatpush.bf16.msra.mxu0 %v8359
    %9925 = vmatpush.bf16.msra.mxu0 %v8349
    %9926 = vmatpush.bf16.msra.mxu0 %v8339
    %9927 = vmatmul.bf16.gmra.mxu0 %v4469
    %v9928 = vpop.f32.mrf.mxu0
    %v9929 = vadd.f32 %v9916, %v9928
    %v9930 = vpop.f32.mrf.mxu0
    %9931 = vdwg.mxu0
    %9932 = vmatpush.bf16.msra.mxu0 %v8489
    %9933 = vmatpush.bf16.msra.mxu0 %v8479
    %9934 = vmatpush.bf16.msra.mxu0 %v8469
    %9935 = vmatpush.bf16.msra.mxu0 %v8459
    %9936 = vmatpush.bf16.msra.mxu0 %v8449
    %9937 = vmatpush.bf16.msra.mxu0 %v8439
    %9938 = vmatpush.bf16.msra.mxu0 %v8429
    %9939 = vmatpush.bf16.msra.mxu0 %v8419
    %9940 = vmatmul.bf16.gmra.mxu0 %v4470
    %v9941 = vpop.f32.mrf.mxu0
    %v9942 = vadd.f32 %v9929, %v9941
    %v9943 = vpop.f32.mrf.mxu0
    %9944 = vdwg.mxu0
    %9945 = vmatpush.bf16.msra.mxu0 %v7770
    %9946 = vmatpush.bf16.msra.mxu0 %v7760
    %9947 = vmatpush.bf16.msra.mxu0 %v7750
    %9948 = vmatpush.bf16.msra.mxu0 %v7740
    %9949 = vmatpush.bf16.msra.mxu0 %v7730
    %9950 = vmatpush.bf16.msra.mxu0 %v7720
    %9951 = vmatpush.bf16.msra.mxu0 %v7710
    %9952 = vmatpush.bf16.msra.mxu0 %v7700
    %9953 = vmatmul.bf16.gmra.mxu0 %v4461
    %v9954 = vpop.f32.mrf.mxu0
    %v9955 = vadd.f32 %v5280, %v9954
    %v9956 = vpop.f32.mrf.mxu0
    %9957 = vdwg.mxu0
    %9958 = vmatpush.bf16.msra.mxu0 %v7850
    %9959 = vmatpush.bf16.msra.mxu0 %v7840
    %9960 = vmatpush.bf16.msra.mxu0 %v7830
    %9961 = vmatpush.bf16.msra.mxu0 %v7820
    %9962 = vmatpush.bf16.msra.mxu0 %v7810
    %9963 = vmatpush.bf16.msra.mxu0 %v7800
    %9964 = vmatpush.bf16.msra.mxu0 %v7790
    %9965 = vmatpush.bf16.msra.mxu0 %v7780
    %9966 = vmatmul.bf16.gmra.mxu0 %v4462
    %v9967 = vpop.f32.mrf.mxu0
    %v9968 = vadd.f32 %v9955, %v9967
    %v9969 = vpop.f32.mrf.mxu0
    %9970 = vdwg.mxu0
    %9971 = vmatpush.bf16.msra.mxu0 %v7930
    %9972 = vmatpush.bf16.msra.mxu0 %v7920
    %9973 = vmatpush.bf16.msra.mxu0 %v7910
    %9974 = vmatpush.bf16.msra.mxu0 %v7900
    %9975 = vmatpush.bf16.msra.mxu0 %v7890
    %9976 = vmatpush.bf16.msra.mxu0 %v7880
    %9977 = vmatpush.bf16.msra.mxu0 %v7870
    %9978 = vmatpush.bf16.msra.mxu0 %v7860
    %9979 = vmatmul.bf16.gmra.mxu0 %v4463
    %v9980 = vpop.f32.mrf.mxu0
    %v9981 = vadd.f32 %v9968, %v9980
    %v9982 = vpop.f32.mrf.mxu0
    %9983 = vdwg.mxu0
    %9984 = vmatpush.bf16.msra.mxu0 %v8010
    %9985 = vmatpush.bf16.msra.mxu0 %v8000
    %9986 = vmatpush.bf16.msra.mxu0 %v7990
    %9987 = vmatpush.bf16.msra.mxu0 %v7980
    %9988 = vmatpush.bf16.msra.mxu0 %v7970
    %9989 = vmatpush.bf16.msra.mxu0 %v7960
    %9990 = vmatpush.bf16.msra.mxu0 %v7950
    %9991 = vmatpush.bf16.msra.mxu0 %v7940
    %9992 = vmatmul.bf16.gmra.mxu0 %v4464
    %v9993 = vpop.f32.mrf.mxu0
    %v9994 = vadd.f32 %v9981, %v9993
    %v9995 = vpop.f32.mrf.mxu0
    %9996 = vdwg.mxu0
    %9997 = vmatpush.bf16.msra.mxu0 %v8090
    %9998 = vmatpush.bf16.msra.mxu0 %v8080
    %9999 = vmatpush.bf16.msra.mxu0 %v8070
    %10000 = vmatpush.bf16.msra.mxu0 %v8060
    %10001 = vmatpush.bf16.msra.mxu0 %v8050
    %10002 = vmatpush.bf16.msra.mxu0 %v8040
    %10003 = vmatpush.bf16.msra.mxu0 %v8030
    %10004 = vmatpush.bf16.msra.mxu0 %v8020
    %10005 = vmatmul.bf16.gmra.mxu0 %v4465
    %v10006 = vpop.f32.mrf.mxu0
    %v10007 = vadd.f32 %v9994, %v10006
    %v10008 = vpop.f32.mrf.mxu0
    %10009 = vdwg.mxu0
    %10010 = vmatpush.bf16.msra.mxu0 %v8170
    %10011 = vmatpush.bf16.msra.mxu0 %v8160
    %10012 = vmatpush.bf16.msra.mxu0 %v8150
    %10013 = vmatpush.bf16.msra.mxu0 %v8140
    %10014 = vmatpush.bf16.msra.mxu0 %v8130
    %10015 = vmatpush.bf16.msra.mxu0 %v8120
    %10016 = vmatpush.bf16.msra.mxu0 %v8110
    %10017 = vmatpush.bf16.msra.mxu0 %v8100
    %10018 = vmatmul.bf16.gmra.mxu0 %v4466
    %v10019 = vpop.f32.mrf.mxu0
    %v10020 = vadd.f32 %v10007, %v10019
    %v10021 = vpop.f32.mrf.mxu0
    %10022 = vdwg.mxu0
    %10023 = vmatpush.bf16.msra.mxu0 %v8250
    %10024 = vmatpush.bf16.msra.mxu0 %v8240
    %10025 = vmatpush.bf16.msra.mxu0 %v8230
    %10026 = vmatpush.bf16.msra.mxu0 %v8220
    %10027 = vmatpush.bf16.msra.mxu0 %v8210
    %10028 = vmatpush.bf16.msra.mxu0 %v8200
    %10029 = vmatpush.bf16.msra.mxu0 %v8190
    %10030 = vmatpush.bf16.msra.mxu0 %v8180
    %10031 = vmatmul.bf16.gmra.mxu0 %v4467
    %v10032 = vpop.f32.mrf.mxu0
    %v10033 = vadd.f32 %v10020, %v10032
    %v10034 = vpop.f32.mrf.mxu0
    %10035 = vdwg.mxu0
    %10036 = vmatpush.bf16.msra.mxu0 %v8330
    %10037 = vmatpush.bf16.msra.mxu0 %v8320
    %10038 = vmatpush.bf16.msra.mxu0 %v8310
    %10039 = vmatpush.bf16.msra.mxu0 %v8300
    %10040 = vmatpush.bf16.msra.mxu0 %v8290
    %10041 = vmatpush.bf16.msra.mxu0 %v8280
    %10042 = vmatpush.bf16.msra.mxu0 %v8270
    %10043 = vmatpush.bf16.msra.mxu0 %v8260
    %10044 = vmatmul.bf16.gmra.mxu0 %v4468
    %v10045 = vpop.f32.mrf.mxu0
    %v10046 = vadd.f32 %v10033, %v10045
    %v10047 = vpop.f32.mrf.mxu0
    %10048 = vdwg.mxu0
    %10049 = vmatpush.bf16.msra.mxu0 %v8410
    %10050 = vmatpush.bf16.msra.mxu0 %v8400
    %10051 = vmatpush.bf16.msra.mxu0 %v8390
    %10052 = vmatpush.bf16.msra.mxu0 %v8380
    %10053 = vmatpush.bf16.msra.mxu0 %v8370
    %10054 = vmatpush.bf16.msra.mxu0 %v8360
    %10055 = vmatpush.bf16.msra.mxu0 %v8350
    %10056 = vmatpush.bf16.msra.mxu0 %v8340
    %10057 = vmatmul.bf16.gmra.mxu0 %v4469
    %v10058 = vpop.f32.mrf.mxu0
    %v10059 = vadd.f32 %v10046, %v10058
    %v10060 = vpop.f32.mrf.mxu0
    %10061 = vdwg.mxu0
    %10062 = vmatpush.bf16.msra.mxu0 %v8490
    %10063 = vmatpush.bf16.msra.mxu0 %v8480
    %10064 = vmatpush.bf16.msra.mxu0 %v8470
    %10065 = vmatpush.bf16.msra.mxu0 %v8460
    %10066 = vmatpush.bf16.msra.mxu0 %v8450
    %10067 = vmatpush.bf16.msra.mxu0 %v8440
    %10068 = vmatpush.bf16.msra.mxu0 %v8430
    %10069 = vmatpush.bf16.msra.mxu0 %v8420
    %10070 = vmatmul.bf16.gmra.mxu0 %v4470
    %v10071 = vpop.f32.mrf.mxu0
    %v10072 = vadd.f32 %v10059, %v10071
    %v10073 = vpop.f32.mrf.mxu0
    %10074 = vdwg.mxu0
    %10075 = vmatpush.bf16.msra.mxu0 %v7771
    %10076 = vmatpush.bf16.msra.mxu0 %v7761
    %10077 = vmatpush.bf16.msra.mxu0 %v7751
    %10078 = vmatpush.bf16.msra.mxu0 %v7741
    %10079 = vmatpush.bf16.msra.mxu0 %v7731
    %10080 = vmatpush.bf16.msra.mxu0 %v7721
    %10081 = vmatpush.bf16.msra.mxu0 %v7711
    %10082 = vmatpush.bf16.msra.mxu0 %v7701
    %10083 = vmatmul.bf16.gmra.mxu0 %v4461
    %v10084 = vpop.f32.mrf.mxu0
    %v10085 = vadd.f32 %v5281, %v10084
    %v10086 = vpop.f32.mrf.mxu0
    %10087 = vdwg.mxu0
    %10088 = vmatpush.bf16.msra.mxu0 %v7851
    %10089 = vmatpush.bf16.msra.mxu0 %v7841
    %10090 = vmatpush.bf16.msra.mxu0 %v7831
    %10091 = vmatpush.bf16.msra.mxu0 %v7821
    %10092 = vmatpush.bf16.msra.mxu0 %v7811
    %10093 = vmatpush.bf16.msra.mxu0 %v7801
    %10094 = vmatpush.bf16.msra.mxu0 %v7791
    %10095 = vmatpush.bf16.msra.mxu0 %v7781
    %10096 = vmatmul.bf16.gmra.mxu0 %v4462
    %v10097 = vpop.f32.mrf.mxu0
    %v10098 = vadd.f32 %v10085, %v10097
    %v10099 = vpop.f32.mrf.mxu0
    %10100 = vdwg.mxu0
    %10101 = vmatpush.bf16.msra.mxu0 %v7931
    %10102 = vmatpush.bf16.msra.mxu0 %v7921
    %10103 = vmatpush.bf16.msra.mxu0 %v7911
    %10104 = vmatpush.bf16.msra.mxu0 %v7901
    %10105 = vmatpush.bf16.msra.mxu0 %v7891
    %10106 = vmatpush.bf16.msra.mxu0 %v7881
    %10107 = vmatpush.bf16.msra.mxu0 %v7871
    %10108 = vmatpush.bf16.msra.mxu0 %v7861
    %10109 = vmatmul.bf16.gmra.mxu0 %v4463
    %v10110 = vpop.f32.mrf.mxu0
    %v10111 = vadd.f32 %v10098, %v10110
    %v10112 = vpop.f32.mrf.mxu0
    %10113 = vdwg.mxu0
    %10114 = vmatpush.bf16.msra.mxu0 %v8011
    %10115 = vmatpush.bf16.msra.mxu0 %v8001
    %10116 = vmatpush.bf16.msra.mxu0 %v7991
    %10117 = vmatpush.bf16.msra.mxu0 %v7981
    %10118 = vmatpush.bf16.msra.mxu0 %v7971
    %10119 = vmatpush.bf16.msra.mxu0 %v7961
    %10120 = vmatpush.bf16.msra.mxu0 %v7951
    %10121 = vmatpush.bf16.msra.mxu0 %v7941
    %10122 = vmatmul.bf16.gmra.mxu0 %v4464
    %v10123 = vpop.f32.mrf.mxu0
    %v10124 = vadd.f32 %v10111, %v10123
    %v10125 = vpop.f32.mrf.mxu0
    %10126 = vdwg.mxu0
    %10127 = vmatpush.bf16.msra.mxu0 %v8091
    %10128 = vmatpush.bf16.msra.mxu0 %v8081
    %10129 = vmatpush.bf16.msra.mxu0 %v8071
    %10130 = vmatpush.bf16.msra.mxu0 %v8061
    %10131 = vmatpush.bf16.msra.mxu0 %v8051
    %10132 = vmatpush.bf16.msra.mxu0 %v8041
    %10133 = vmatpush.bf16.msra.mxu0 %v8031
    %10134 = vmatpush.bf16.msra.mxu0 %v8021
    %10135 = vmatmul.bf16.gmra.mxu0 %v4465
    %v10136 = vpop.f32.mrf.mxu0
    %v10137 = vadd.f32 %v10124, %v10136
    %v10138 = vpop.f32.mrf.mxu0
    %10139 = vdwg.mxu0
    %10140 = vmatpush.bf16.msra.mxu0 %v8171
    %10141 = vmatpush.bf16.msra.mxu0 %v8161
    %10142 = vmatpush.bf16.msra.mxu0 %v8151
    %10143 = vmatpush.bf16.msra.mxu0 %v8141
    %10144 = vmatpush.bf16.msra.mxu0 %v8131
    %10145 = vmatpush.bf16.msra.mxu0 %v8121
    %10146 = vmatpush.bf16.msra.mxu0 %v8111
    %10147 = vmatpush.bf16.msra.mxu0 %v8101
    %10148 = vmatmul.bf16.gmra.mxu0 %v4466
    %v10149 = vpop.f32.mrf.mxu0
    %v10150 = vadd.f32 %v10137, %v10149
    %v10151 = vpop.f32.mrf.mxu0
    %10152 = vdwg.mxu0
    %10153 = vmatpush.bf16.msra.mxu0 %v8251
    %10154 = vmatpush.bf16.msra.mxu0 %v8241
    %10155 = vmatpush.bf16.msra.mxu0 %v8231
    %10156 = vmatpush.bf16.msra.mxu0 %v8221
    %10157 = vmatpush.bf16.msra.mxu0 %v8211
    %10158 = vmatpush.bf16.msra.mxu0 %v8201
    %10159 = vmatpush.bf16.msra.mxu0 %v8191
    %10160 = vmatpush.bf16.msra.mxu0 %v8181
    %10161 = vmatmul.bf16.gmra.mxu0 %v4467
    %v10162 = vpop.f32.mrf.mxu0
    %v10163 = vadd.f32 %v10150, %v10162
    %v10164 = vpop.f32.mrf.mxu0
    %10165 = vdwg.mxu0
    %10166 = vmatpush.bf16.msra.mxu0 %v8331
    %10167 = vmatpush.bf16.msra.mxu0 %v8321
    %10168 = vmatpush.bf16.msra.mxu0 %v8311
    %10169 = vmatpush.bf16.msra.mxu0 %v8301
    %10170 = vmatpush.bf16.msra.mxu0 %v8291
    %10171 = vmatpush.bf16.msra.mxu0 %v8281
    %10172 = vmatpush.bf16.msra.mxu0 %v8271
    %10173 = vmatpush.bf16.msra.mxu0 %v8261
    %10174 = vmatmul.bf16.gmra.mxu0 %v4468
    %v10175 = vpop.f32.mrf.mxu0
    %v10176 = vadd.f32 %v10163, %v10175
    %v10177 = vpop.f32.mrf.mxu0
    %10178 = vdwg.mxu0
    %10179 = vmatpush.bf16.msra.mxu0 %v8411
    %10180 = vmatpush.bf16.msra.mxu0 %v8401
    %10181 = vmatpush.bf16.msra.mxu0 %v8391
    %10182 = vmatpush.bf16.msra.mxu0 %v8381
    %10183 = vmatpush.bf16.msra.mxu0 %v8371
    %10184 = vmatpush.bf16.msra.mxu0 %v8361
    %10185 = vmatpush.bf16.msra.mxu0 %v8351
    %10186 = vmatpush.bf16.msra.mxu0 %v8341
    %10187 = vmatmul.bf16.gmra.mxu0 %v4469
    %v10188 = vpop.f32.mrf.mxu0
    %v10189 = vadd.f32 %v10176, %v10188
    %v10190 = vpop.f32.mrf.mxu0
    %10191 = vdwg.mxu0
    %10192 = vmatpush.bf16.msra.mxu0 %v8491
    %10193 = vmatpush.bf16.msra.mxu0 %v8481
    %10194 = vmatpush.bf16.msra.mxu0 %v8471
    %10195 = vmatpush.bf16.msra.mxu0 %v8461
    %10196 = vmatpush.bf16.msra.mxu0 %v8451
    %10197 = vmatpush.bf16.msra.mxu0 %v8441
    %10198 = vmatpush.bf16.msra.mxu0 %v8431
    %10199 = vmatpush.bf16.msra.mxu0 %v8421
    %10200 = vmatmul.bf16.gmra.mxu0 %v4470
    %v10201 = vpop.f32.mrf.mxu0
    %v10202 = vadd.f32 %v10189, %v10201
    %v10203 = vpop.f32.mrf.mxu0
    %10204 = vdwg.mxu0
    %10205 = vmatpush.bf16.msra.mxu0 %v7772
    %10206 = vmatpush.bf16.msra.mxu0 %v7762
    %10207 = vmatpush.bf16.msra.mxu0 %v7752
    %10208 = vmatpush.bf16.msra.mxu0 %v7742
    %10209 = vmatpush.bf16.msra.mxu0 %v7732
    %10210 = vmatpush.bf16.msra.mxu0 %v7722
    %10211 = vmatpush.bf16.msra.mxu0 %v7712
    %10212 = vmatpush.bf16.msra.mxu0 %v7702
    %10213 = vmatmul.bf16.gmra.mxu0 %v4461
    %v10214 = vpop.f32.mrf.mxu0
    %v10215 = vadd.f32 %v5282, %v10214
    %v10216 = vpop.f32.mrf.mxu0
    %10217 = vdwg.mxu0
    %10218 = vmatpush.bf16.msra.mxu0 %v7852
    %10219 = vmatpush.bf16.msra.mxu0 %v7842
    %10220 = vmatpush.bf16.msra.mxu0 %v7832
    %10221 = vmatpush.bf16.msra.mxu0 %v7822
    %10222 = vmatpush.bf16.msra.mxu0 %v7812
    %10223 = vmatpush.bf16.msra.mxu0 %v7802
    %10224 = vmatpush.bf16.msra.mxu0 %v7792
    %10225 = vmatpush.bf16.msra.mxu0 %v7782
    %10226 = vmatmul.bf16.gmra.mxu0 %v4462
    %v10227 = vpop.f32.mrf.mxu0
    %v10228 = vadd.f32 %v10215, %v10227
    %v10229 = vpop.f32.mrf.mxu0
    %10230 = vdwg.mxu0
    %10231 = vmatpush.bf16.msra.mxu0 %v7932
    %10232 = vmatpush.bf16.msra.mxu0 %v7922
    %10233 = vmatpush.bf16.msra.mxu0 %v7912
    %10234 = vmatpush.bf16.msra.mxu0 %v7902
    %10235 = vmatpush.bf16.msra.mxu0 %v7892
    %10236 = vmatpush.bf16.msra.mxu0 %v7882
    %10237 = vmatpush.bf16.msra.mxu0 %v7872
    %10238 = vmatpush.bf16.msra.mxu0 %v7862
    %10239 = vmatmul.bf16.gmra.mxu0 %v4463
    %v10240 = vpop.f32.mrf.mxu0
    %v10241 = vadd.f32 %v10228, %v10240
    %v10242 = vpop.f32.mrf.mxu0
    %10243 = vdwg.mxu0
    %10244 = vmatpush.bf16.msra.mxu0 %v8012
    %10245 = vmatpush.bf16.msra.mxu0 %v8002
    %10246 = vmatpush.bf16.msra.mxu0 %v7992
    %10247 = vmatpush.bf16.msra.mxu0 %v7982
    %10248 = vmatpush.bf16.msra.mxu0 %v7972
    %10249 = vmatpush.bf16.msra.mxu0 %v7962
    %10250 = vmatpush.bf16.msra.mxu0 %v7952
    %10251 = vmatpush.bf16.msra.mxu0 %v7942
    %10252 = vmatmul.bf16.gmra.mxu0 %v4464
    %v10253 = vpop.f32.mrf.mxu0
    %v10254 = vadd.f32 %v10241, %v10253
    %v10255 = vpop.f32.mrf.mxu0
    %10256 = vdwg.mxu0
    %10257 = vmatpush.bf16.msra.mxu0 %v8092
    %10258 = vmatpush.bf16.msra.mxu0 %v8082
    %10259 = vmatpush.bf16.msra.mxu0 %v8072
    %10260 = vmatpush.bf16.msra.mxu0 %v8062
    %10261 = vmatpush.bf16.msra.mxu0 %v8052
    %10262 = vmatpush.bf16.msra.mxu0 %v8042
    %10263 = vmatpush.bf16.msra.mxu0 %v8032
    %10264 = vmatpush.bf16.msra.mxu0 %v8022
    %10265 = vmatmul.bf16.gmra.mxu0 %v4465
    %v10266 = vpop.f32.mrf.mxu0
    %v10267 = vadd.f32 %v10254, %v10266
    %v10268 = vpop.f32.mrf.mxu0
    %10269 = vdwg.mxu0
    %10270 = vmatpush.bf16.msra.mxu0 %v8172
    %10271 = vmatpush.bf16.msra.mxu0 %v8162
    %10272 = vmatpush.bf16.msra.mxu0 %v8152
    %10273 = vmatpush.bf16.msra.mxu0 %v8142
    %10274 = vmatpush.bf16.msra.mxu0 %v8132
    %10275 = vmatpush.bf16.msra.mxu0 %v8122
    %10276 = vmatpush.bf16.msra.mxu0 %v8112
    %10277 = vmatpush.bf16.msra.mxu0 %v8102
    %10278 = vmatmul.bf16.gmra.mxu0 %v4466
    %v10279 = vpop.f32.mrf.mxu0
    %v10280 = vadd.f32 %v10267, %v10279
    %v10281 = vpop.f32.mrf.mxu0
    %10282 = vdwg.mxu0
    %10283 = vmatpush.bf16.msra.mxu0 %v8252
    %10284 = vmatpush.bf16.msra.mxu0 %v8242
    %10285 = vmatpush.bf16.msra.mxu0 %v8232
    %10286 = vmatpush.bf16.msra.mxu0 %v8222
    %10287 = vmatpush.bf16.msra.mxu0 %v8212
    %10288 = vmatpush.bf16.msra.mxu0 %v8202
    %10289 = vmatpush.bf16.msra.mxu0 %v8192
    %10290 = vmatpush.bf16.msra.mxu0 %v8182
    %10291 = vmatmul.bf16.gmra.mxu0 %v4467
    %v10292 = vpop.f32.mrf.mxu0
    %v10293 = vadd.f32 %v10280, %v10292
    %v10294 = vpop.f32.mrf.mxu0
    %10295 = vdwg.mxu0
    %10296 = vmatpush.bf16.msra.mxu0 %v8332
    %10297 = vmatpush.bf16.msra.mxu0 %v8322
    %10298 = vmatpush.bf16.msra.mxu0 %v8312
    %10299 = vmatpush.bf16.msra.mxu0 %v8302
    %10300 = vmatpush.bf16.msra.mxu0 %v8292
    %10301 = vmatpush.bf16.msra.mxu0 %v8282
    %10302 = vmatpush.bf16.msra.mxu0 %v8272
    %10303 = vmatpush.bf16.msra.mxu0 %v8262
    %10304 = vmatmul.bf16.gmra.mxu0 %v4468
    %v10305 = vpop.f32.mrf.mxu0
    %v10306 = vadd.f32 %v10293, %v10305
    %v10307 = vpop.f32.mrf.mxu0
    %10308 = vdwg.mxu0
    %10309 = vmatpush.bf16.msra.mxu0 %v8412
    %10310 = vmatpush.bf16.msra.mxu0 %v8402
    %10311 = vmatpush.bf16.msra.mxu0 %v8392
    %10312 = vmatpush.bf16.msra.mxu0 %v8382
    %10313 = vmatpush.bf16.msra.mxu0 %v8372
    %10314 = vmatpush.bf16.msra.mxu0 %v8362
    %10315 = vmatpush.bf16.msra.mxu0 %v8352
    %10316 = vmatpush.bf16.msra.mxu0 %v8342
    %10317 = vmatmul.bf16.gmra.mxu0 %v4469
    %v10318 = vpop.f32.mrf.mxu0
    %v10319 = vadd.f32 %v10306, %v10318
    %v10320 = vpop.f32.mrf.mxu0
    %10321 = vdwg.mxu0
    %10322 = vmatpush.bf16.msra.mxu0 %v8492
    %10323 = vmatpush.bf16.msra.mxu0 %v8482
    %10324 = vmatpush.bf16.msra.mxu0 %v8472
    %10325 = vmatpush.bf16.msra.mxu0 %v8462
    %10326 = vmatpush.bf16.msra.mxu0 %v8452
    %10327 = vmatpush.bf16.msra.mxu0 %v8442
    %10328 = vmatpush.bf16.msra.mxu0 %v8432
    %10329 = vmatpush.bf16.msra.mxu0 %v8422
    %10330 = vmatmul.bf16.gmra.mxu0 %v4470
    %v10331 = vpop.f32.mrf.mxu0
    %v10332 = vadd.f32 %v10319, %v10331
    %v10333 = vpop.f32.mrf.mxu0
    %10334 = vdwg.mxu0
    %10335 = vmatpush.bf16.msra.mxu0 %v7773
    %10336 = vmatpush.bf16.msra.mxu0 %v7763
    %10337 = vmatpush.bf16.msra.mxu0 %v7753
    %10338 = vmatpush.bf16.msra.mxu0 %v7743
    %10339 = vmatpush.bf16.msra.mxu0 %v7733
    %10340 = vmatpush.bf16.msra.mxu0 %v7723
    %10341 = vmatpush.bf16.msra.mxu0 %v7713
    %10342 = vmatpush.bf16.msra.mxu0 %v7703
    %10343 = vmatmul.bf16.gmra.mxu0 %v4461
    %v10344 = vpop.f32.mrf.mxu0
    %v10345 = vadd.f32 %v5283, %v10344
    %v10346 = vpop.f32.mrf.mxu0
    %10347 = vdwg.mxu0
    %10348 = vmatpush.bf16.msra.mxu0 %v7853
    %10349 = vmatpush.bf16.msra.mxu0 %v7843
    %10350 = vmatpush.bf16.msra.mxu0 %v7833
    %10351 = vmatpush.bf16.msra.mxu0 %v7823
    %10352 = vmatpush.bf16.msra.mxu0 %v7813
    %10353 = vmatpush.bf16.msra.mxu0 %v7803
    %10354 = vmatpush.bf16.msra.mxu0 %v7793
    %10355 = vmatpush.bf16.msra.mxu0 %v7783
    %10356 = vmatmul.bf16.gmra.mxu0 %v4462
    %v10357 = vpop.f32.mrf.mxu0
    %v10358 = vadd.f32 %v10345, %v10357
    %v10359 = vpop.f32.mrf.mxu0
    %10360 = vdwg.mxu0
    %10361 = vmatpush.bf16.msra.mxu0 %v7933
    %10362 = vmatpush.bf16.msra.mxu0 %v7923
    %10363 = vmatpush.bf16.msra.mxu0 %v7913
    %10364 = vmatpush.bf16.msra.mxu0 %v7903
    %10365 = vmatpush.bf16.msra.mxu0 %v7893
    %10366 = vmatpush.bf16.msra.mxu0 %v7883
    %10367 = vmatpush.bf16.msra.mxu0 %v7873
    %10368 = vmatpush.bf16.msra.mxu0 %v7863
    %10369 = vmatmul.bf16.gmra.mxu0 %v4463
    %v10370 = vpop.f32.mrf.mxu0
    %v10371 = vadd.f32 %v10358, %v10370
    %v10372 = vpop.f32.mrf.mxu0
    %10373 = vdwg.mxu0
    %10374 = vmatpush.bf16.msra.mxu0 %v8013
    %10375 = vmatpush.bf16.msra.mxu0 %v8003
    %10376 = vmatpush.bf16.msra.mxu0 %v7993
    %10377 = vmatpush.bf16.msra.mxu0 %v7983
    %10378 = vmatpush.bf16.msra.mxu0 %v7973
    %10379 = vmatpush.bf16.msra.mxu0 %v7963
    %10380 = vmatpush.bf16.msra.mxu0 %v7953
    %10381 = vmatpush.bf16.msra.mxu0 %v7943
    %10382 = vmatmul.bf16.gmra.mxu0 %v4464
    %v10383 = vpop.f32.mrf.mxu0
    %v10384 = vadd.f32 %v10371, %v10383
    %v10385 = vpop.f32.mrf.mxu0
    %10386 = vdwg.mxu0
    %10387 = vmatpush.bf16.msra.mxu0 %v8093
    %10388 = vmatpush.bf16.msra.mxu0 %v8083
    %10389 = vmatpush.bf16.msra.mxu0 %v8073
    %10390 = vmatpush.bf16.msra.mxu0 %v8063
    %10391 = vmatpush.bf16.msra.mxu0 %v8053
    %10392 = vmatpush.bf16.msra.mxu0 %v8043
    %10393 = vmatpush.bf16.msra.mxu0 %v8033
    %10394 = vmatpush.bf16.msra.mxu0 %v8023
    %10395 = vmatmul.bf16.gmra.mxu0 %v4465
    %v10396 = vpop.f32.mrf.mxu0
    %v10397 = vadd.f32 %v10384, %v10396
    %v10398 = vpop.f32.mrf.mxu0
    %10399 = vdwg.mxu0
    %10400 = vmatpush.bf16.msra.mxu0 %v8173
    %10401 = vmatpush.bf16.msra.mxu0 %v8163
    %10402 = vmatpush.bf16.msra.mxu0 %v8153
    %10403 = vmatpush.bf16.msra.mxu0 %v8143
    %10404 = vmatpush.bf16.msra.mxu0 %v8133
    %10405 = vmatpush.bf16.msra.mxu0 %v8123
    %10406 = vmatpush.bf16.msra.mxu0 %v8113
    %10407 = vmatpush.bf16.msra.mxu0 %v8103
    %10408 = vmatmul.bf16.gmra.mxu0 %v4466
    %v10409 = vpop.f32.mrf.mxu0
    %v10410 = vadd.f32 %v10397, %v10409
    %v10411 = vpop.f32.mrf.mxu0
    %10412 = vdwg.mxu0
    %10413 = vmatpush.bf16.msra.mxu0 %v8253
    %10414 = vmatpush.bf16.msra.mxu0 %v8243
    %10415 = vmatpush.bf16.msra.mxu0 %v8233
    %10416 = vmatpush.bf16.msra.mxu0 %v8223
    %10417 = vmatpush.bf16.msra.mxu0 %v8213
    %10418 = vmatpush.bf16.msra.mxu0 %v8203
    %10419 = vmatpush.bf16.msra.mxu0 %v8193
    %10420 = vmatpush.bf16.msra.mxu0 %v8183
    %10421 = vmatmul.bf16.gmra.mxu0 %v4467
    %v10422 = vpop.f32.mrf.mxu0
    %v10423 = vadd.f32 %v10410, %v10422
    %v10424 = vpop.f32.mrf.mxu0
    %10425 = vdwg.mxu0
    %10426 = vmatpush.bf16.msra.mxu0 %v8333
    %10427 = vmatpush.bf16.msra.mxu0 %v8323
    %10428 = vmatpush.bf16.msra.mxu0 %v8313
    %10429 = vmatpush.bf16.msra.mxu0 %v8303
    %10430 = vmatpush.bf16.msra.mxu0 %v8293
    %10431 = vmatpush.bf16.msra.mxu0 %v8283
    %10432 = vmatpush.bf16.msra.mxu0 %v8273
    %10433 = vmatpush.bf16.msra.mxu0 %v8263
    %10434 = vmatmul.bf16.gmra.mxu0 %v4468
    %v10435 = vpop.f32.mrf.mxu0
    %v10436 = vadd.f32 %v10423, %v10435
    %v10437 = vpop.f32.mrf.mxu0
    %10438 = vdwg.mxu0
    %10439 = vmatpush.bf16.msra.mxu0 %v8413
    %10440 = vmatpush.bf16.msra.mxu0 %v8403
    %10441 = vmatpush.bf16.msra.mxu0 %v8393
    %10442 = vmatpush.bf16.msra.mxu0 %v8383
    %10443 = vmatpush.bf16.msra.mxu0 %v8373
    %10444 = vmatpush.bf16.msra.mxu0 %v8363
    %10445 = vmatpush.bf16.msra.mxu0 %v8353
    %10446 = vmatpush.bf16.msra.mxu0 %v8343
    %10447 = vmatmul.bf16.gmra.mxu0 %v4469
    %v10448 = vpop.f32.mrf.mxu0
    %v10449 = vadd.f32 %v10436, %v10448
    %v10450 = vpop.f32.mrf.mxu0
    %10451 = vdwg.mxu0
    %10452 = vmatpush.bf16.msra.mxu0 %v8493
    %10453 = vmatpush.bf16.msra.mxu0 %v8483
    %10454 = vmatpush.bf16.msra.mxu0 %v8473
    %10455 = vmatpush.bf16.msra.mxu0 %v8463
    %10456 = vmatpush.bf16.msra.mxu0 %v8453
    %10457 = vmatpush.bf16.msra.mxu0 %v8443
    %10458 = vmatpush.bf16.msra.mxu0 %v8433
    %10459 = vmatpush.bf16.msra.mxu0 %v8423
    %10460 = vmatmul.bf16.gmra.mxu0 %v4470
    %v10461 = vpop.f32.mrf.mxu0
    %v10462 = vadd.f32 %v10449, %v10461
    %v10463 = vpop.f32.mrf.mxu0
    %10464 = vdwg.mxu0
    %10465 = vmatpush.bf16.msra.mxu0 %v7774
    %10466 = vmatpush.bf16.msra.mxu0 %v7764
    %10467 = vmatpush.bf16.msra.mxu0 %v7754
    %10468 = vmatpush.bf16.msra.mxu0 %v7744
    %10469 = vmatpush.bf16.msra.mxu0 %v7734
    %10470 = vmatpush.bf16.msra.mxu0 %v7724
    %10471 = vmatpush.bf16.msra.mxu0 %v7714
    %10472 = vmatpush.bf16.msra.mxu0 %v7704
    %10473 = vmatmul.bf16.gmra.mxu0 %v4461
    %v10474 = vpop.f32.mrf.mxu0
    %v10475 = vadd.f32 %v5284, %v10474
    %v10476 = vpop.f32.mrf.mxu0
    %10477 = vdwg.mxu0
    %10478 = vmatpush.bf16.msra.mxu0 %v7854
    %10479 = vmatpush.bf16.msra.mxu0 %v7844
    %10480 = vmatpush.bf16.msra.mxu0 %v7834
    %10481 = vmatpush.bf16.msra.mxu0 %v7824
    %10482 = vmatpush.bf16.msra.mxu0 %v7814
    %10483 = vmatpush.bf16.msra.mxu0 %v7804
    %10484 = vmatpush.bf16.msra.mxu0 %v7794
    %10485 = vmatpush.bf16.msra.mxu0 %v7784
    %10486 = vmatmul.bf16.gmra.mxu0 %v4462
    %v10487 = vpop.f32.mrf.mxu0
    %v10488 = vadd.f32 %v10475, %v10487
    %v10489 = vpop.f32.mrf.mxu0
    %10490 = vdwg.mxu0
    %10491 = vmatpush.bf16.msra.mxu0 %v7934
    %10492 = vmatpush.bf16.msra.mxu0 %v7924
    %10493 = vmatpush.bf16.msra.mxu0 %v7914
    %10494 = vmatpush.bf16.msra.mxu0 %v7904
    %10495 = vmatpush.bf16.msra.mxu0 %v7894
    %10496 = vmatpush.bf16.msra.mxu0 %v7884
    %10497 = vmatpush.bf16.msra.mxu0 %v7874
    %10498 = vmatpush.bf16.msra.mxu0 %v7864
    %10499 = vmatmul.bf16.gmra.mxu0 %v4463
    %v10500 = vpop.f32.mrf.mxu0
    %v10501 = vadd.f32 %v10488, %v10500
    %v10502 = vpop.f32.mrf.mxu0
    %10503 = vdwg.mxu0
    %10504 = vmatpush.bf16.msra.mxu0 %v8014
    %10505 = vmatpush.bf16.msra.mxu0 %v8004
    %10506 = vmatpush.bf16.msra.mxu0 %v7994
    %10507 = vmatpush.bf16.msra.mxu0 %v7984
    %10508 = vmatpush.bf16.msra.mxu0 %v7974
    %10509 = vmatpush.bf16.msra.mxu0 %v7964
    %10510 = vmatpush.bf16.msra.mxu0 %v7954
    %10511 = vmatpush.bf16.msra.mxu0 %v7944
    %10512 = vmatmul.bf16.gmra.mxu0 %v4464
    %v10513 = vpop.f32.mrf.mxu0
    %v10514 = vadd.f32 %v10501, %v10513
    %v10515 = vpop.f32.mrf.mxu0
    %10516 = vdwg.mxu0
    %10517 = vmatpush.bf16.msra.mxu0 %v8094
    %10518 = vmatpush.bf16.msra.mxu0 %v8084
    %10519 = vmatpush.bf16.msra.mxu0 %v8074
    %10520 = vmatpush.bf16.msra.mxu0 %v8064
    %10521 = vmatpush.bf16.msra.mxu0 %v8054
    %10522 = vmatpush.bf16.msra.mxu0 %v8044
    %10523 = vmatpush.bf16.msra.mxu0 %v8034
    %10524 = vmatpush.bf16.msra.mxu0 %v8024
    %10525 = vmatmul.bf16.gmra.mxu0 %v4465
    %v10526 = vpop.f32.mrf.mxu0
    %v10527 = vadd.f32 %v10514, %v10526
    %v10528 = vpop.f32.mrf.mxu0
    %10529 = vdwg.mxu0
    %10530 = vmatpush.bf16.msra.mxu0 %v8174
    %10531 = vmatpush.bf16.msra.mxu0 %v8164
    %10532 = vmatpush.bf16.msra.mxu0 %v8154
    %10533 = vmatpush.bf16.msra.mxu0 %v8144
    %10534 = vmatpush.bf16.msra.mxu0 %v8134
    %10535 = vmatpush.bf16.msra.mxu0 %v8124
    %10536 = vmatpush.bf16.msra.mxu0 %v8114
    %10537 = vmatpush.bf16.msra.mxu0 %v8104
    %10538 = vmatmul.bf16.gmra.mxu0 %v4466
    %v10539 = vpop.f32.mrf.mxu0
    %v10540 = vadd.f32 %v10527, %v10539
    %v10541 = vpop.f32.mrf.mxu0
    %10542 = vdwg.mxu0
    %10543 = vmatpush.bf16.msra.mxu0 %v8254
    %10544 = vmatpush.bf16.msra.mxu0 %v8244
    %10545 = vmatpush.bf16.msra.mxu0 %v8234
    %10546 = vmatpush.bf16.msra.mxu0 %v8224
    %10547 = vmatpush.bf16.msra.mxu0 %v8214
    %10548 = vmatpush.bf16.msra.mxu0 %v8204
    %10549 = vmatpush.bf16.msra.mxu0 %v8194
    %10550 = vmatpush.bf16.msra.mxu0 %v8184
    %10551 = vmatmul.bf16.gmra.mxu0 %v4467
    %v10552 = vpop.f32.mrf.mxu0
    %v10553 = vadd.f32 %v10540, %v10552
    %v10554 = vpop.f32.mrf.mxu0
    %10555 = vdwg.mxu0
    %10556 = vmatpush.bf16.msra.mxu0 %v8334
    %10557 = vmatpush.bf16.msra.mxu0 %v8324
    %10558 = vmatpush.bf16.msra.mxu0 %v8314
    %10559 = vmatpush.bf16.msra.mxu0 %v8304
    %10560 = vmatpush.bf16.msra.mxu0 %v8294
    %10561 = vmatpush.bf16.msra.mxu0 %v8284
    %10562 = vmatpush.bf16.msra.mxu0 %v8274
    %10563 = vmatpush.bf16.msra.mxu0 %v8264
    %10564 = vmatmul.bf16.gmra.mxu0 %v4468
    %v10565 = vpop.f32.mrf.mxu0
    %v10566 = vadd.f32 %v10553, %v10565
    %v10567 = vpop.f32.mrf.mxu0
    %10568 = vdwg.mxu0
    %10569 = vmatpush.bf16.msra.mxu0 %v8414
    %10570 = vmatpush.bf16.msra.mxu0 %v8404
    %10571 = vmatpush.bf16.msra.mxu0 %v8394
    %10572 = vmatpush.bf16.msra.mxu0 %v8384
    %10573 = vmatpush.bf16.msra.mxu0 %v8374
    %10574 = vmatpush.bf16.msra.mxu0 %v8364
    %10575 = vmatpush.bf16.msra.mxu0 %v8354
    %10576 = vmatpush.bf16.msra.mxu0 %v8344
    %10577 = vmatmul.bf16.gmra.mxu0 %v4469
    %v10578 = vpop.f32.mrf.mxu0
    %v10579 = vadd.f32 %v10566, %v10578
    %v10580 = vpop.f32.mrf.mxu0
    %10581 = vdwg.mxu0
    %10582 = vmatpush.bf16.msra.mxu0 %v8494
    %10583 = vmatpush.bf16.msra.mxu0 %v8484
    %10584 = vmatpush.bf16.msra.mxu0 %v8474
    %10585 = vmatpush.bf16.msra.mxu0 %v8464
    %10586 = vmatpush.bf16.msra.mxu0 %v8454
    %10587 = vmatpush.bf16.msra.mxu0 %v8444
    %10588 = vmatpush.bf16.msra.mxu0 %v8434
    %10589 = vmatpush.bf16.msra.mxu0 %v8424
    %10590 = vmatmul.bf16.gmra.mxu0 %v4470
    %v10591 = vpop.f32.mrf.mxu0
    %v10592 = vadd.f32 %v10579, %v10591
    %v10593 = vpop.f32.mrf.mxu0
    %10594 = vdwg.mxu0
    %v10595 = vmax.f32 %v9422, 0.0
    %v10596 = vmax.f32 %v9552, 0.0
    %v10597 = vmax.f32 %v9682, 0.0
    %v10598 = vmax.f32 %v9812, 0.0
    %v10599 = vmax.f32 %v9942, 0.0
    %v10600 = vmax.f32 %v10072, 0.0
    %v10601 = vmax.f32 %v10202, 0.0
    %v10602 = vmax.f32 %v10332, 0.0
    %v10603 = vmax.f32 %v10462, 0.0
    %v10604 = vmax.f32 %v10592, 0.0
    %v10605 = vpack.c.bf16 %v10595, %v10595
    %v10606 = vpack.c.bf16 %v10596, %v10596
    %v10607 = vpack.c.bf16 %v10597, %v10597
    %v10608 = vpack.c.bf16 %v10598, %v10598
    %v10609 = vpack.c.bf16 %v10599, %v10599
    %v10610 = vpack.c.bf16 %v10600, %v10600
    %v10611 = vpack.c.bf16 %v10601, %v10601
    %v10612 = vpack.c.bf16 %v10602, %v10602
    %v10613 = vpack.c.bf16 %v10603, %v10603
    %v10614 = vpack.c.bf16 %v10604, %v10604
    %v10615 = vld [vmem:[#allocation11] sm:$0xf]
    %v10616 = vld [vmem:[#allocation11 + $0x4] sm:$0xf]
    %v10617 = vld [vmem:[#allocation11 + $0x8] sm:$0xf]
    %v10618 = vld [vmem:[#allocation11 + $0xc] sm:$0xf]
    %v10619 = vld [vmem:[#allocation11 + $0x10] sm:$0xf]
    %v10620 = vld [vmem:[#allocation11 + $0x14] sm:$0xf]
    %v10621 = vld [vmem:[#allocation11 + $0x18] sm:$0xf]
    %v10622 = vld [vmem:[#allocation11 + $0x1c] sm:$0xf]
    %v10623 = vld [vmem:[#allocation11 + $0x20] sm:$0xf]
    %v10624 = vld [vmem:[#allocation11 + $0x24] sm:$0xf]
    %v10625 = vld [vmem:[#allocation11 + $0x28] sm:$0xf]
    %v10626 = vld [vmem:[#allocation11 + $0x2c] sm:$0xf]
    %v10627 = vld [vmem:[#allocation11 + $0x30] sm:$0xf]
    %v10628 = vld [vmem:[#allocation11 + $0x34] sm:$0xf]
    %v10629 = vld [vmem:[#allocation11 + $0x38] sm:$0xf]
    %v10630 = vld [vmem:[#allocation11 + $0x3c] sm:$0xf]
    %v10631 = vld [vmem:[#allocation11 + $0x40] sm:$0xf]
    %v10632 = vld [vmem:[#allocation11 + $0x44] sm:$0xf]
    %v10633 = vld [vmem:[#allocation11 + $0x48] sm:$0xf]
    %v10634 = vld [vmem:[#allocation11 + $0x4c] sm:$0xf]
    %v10635 = vld [vmem:[#allocation11 + $0x50] sm:$0xf]
    %v10636 = vld [vmem:[#allocation11 + $0x54] sm:$0xf]
    %v10637 = vld [vmem:[#allocation11 + $0x58] sm:$0xf]
    %v10638 = vld [vmem:[#allocation11 + $0x5c] sm:$0xf]
    %v10639 = vld [vmem:[#allocation11 + $0x60] sm:$0xf]
    %v10640 = vld [vmem:[#allocation11 + $0x64] sm:$0xf]
    %v10641 = vld [vmem:[#allocation11 + $0x68] sm:$0xf]
    %v10642 = vld [vmem:[#allocation11 + $0x6c] sm:$0xf]
    %v10643 = vld [vmem:[#allocation11 + $0x70] sm:$0xf]
    %v10644 = vld [vmem:[#allocation11 + $0x74] sm:$0xf]
    %v10645 = vld [vmem:[#allocation11 + $0x78] sm:$0xf]
    %v10646 = vld [vmem:[#allocation11 + $0x7c] sm:$0xf]
    %v10647 = vld [vmem:[#allocation11 + $0x80] sm:$0xf]
    %v10648 = vld [vmem:[#allocation11 + $0x84] sm:$0xf]
    %v10649 = vld [vmem:[#allocation11 + $0x88] sm:$0xf]
    %v10650 = vld [vmem:[#allocation11 + $0x8c] sm:$0xf]
    %v10651 = vld [vmem:[#allocation11 + $0x90] sm:$0xf]
    %v10652 = vld [vmem:[#allocation11 + $0x94] sm:$0xf]
    %v10653 = vld [vmem:[#allocation11 + $0x98] sm:$0xf]
    %v10654 = vld [vmem:[#allocation11 + $0x9c] sm:$0xf]
    %v10655 = vld [vmem:[#allocation11 + $0xa0] sm:$0xf]
    %v10656 = vld [vmem:[#allocation11 + $0xa4] sm:$0xf]
    %v10657 = vld [vmem:[#allocation11 + $0xa8] sm:$0xf]
    %v10658 = vld [vmem:[#allocation11 + $0xac] sm:$0xf]
    %v10659 = vld [vmem:[#allocation11 + $0xb0] sm:$0xf]
    %v10660 = vld [vmem:[#allocation11 + $0xb4] sm:$0xf]
    %v10661 = vld [vmem:[#allocation11 + $0xb8] sm:$0xf]
    %v10662 = vld [vmem:[#allocation11 + $0xbc] sm:$0xf]
    %v10663 = vld [vmem:[#allocation11 + $0xc0] sm:$0xf]
    %v10664 = vld [vmem:[#allocation11 + $0xc4] sm:$0xf]
    %v10665 = vld [vmem:[#allocation11 + $0xc8] sm:$0xf]
    %v10666 = vld [vmem:[#allocation11 + $0xcc] sm:$0xf]
    %v10667 = vld [vmem:[#allocation11 + $0xd0] sm:$0xf]
    %v10668 = vld [vmem:[#allocation11 + $0xd4] sm:$0xf]
    %v10669 = vld [vmem:[#allocation11 + $0xd8] sm:$0xf]
    %v10670 = vld [vmem:[#allocation11 + $0xdc] sm:$0xf]
    %v10671 = vld [vmem:[#allocation11 + $0xe0] sm:$0xf]
    %v10672 = vld [vmem:[#allocation11 + $0xe4] sm:$0xf]
    %v10673 = vld [vmem:[#allocation11 + $0xe8] sm:$0xf]
    %v10674 = vld [vmem:[#allocation11 + $0xec] sm:$0xf]
    %v10675 = vld [vmem:[#allocation11 + $0xf0] sm:$0xf]
    %v10676 = vld [vmem:[#allocation11 + $0xf4] sm:$0xf]
    %v10677 = vld [vmem:[#allocation11 + $0xf8] sm:$0xf]
    %v10678 = vld [vmem:[#allocation11 + $0xfc] sm:$0xf]
    %v10679 = vld [vmem:[#allocation11 + $0x100] sm:$0xf]
    %v10680 = vld [vmem:[#allocation11 + $0x104] sm:$0xf]
    %v10681 = vld [vmem:[#allocation11 + $0x108] sm:$0xf]
    %v10682 = vld [vmem:[#allocation11 + $0x10c] sm:$0xf]
    %v10683 = vld [vmem:[#allocation11 + $0x110] sm:$0xf]
    %v10684 = vld [vmem:[#allocation11 + $0x114] sm:$0xf]
    %v10685 = vld [vmem:[#allocation11 + $0x118] sm:$0xf]
    %v10686 = vld [vmem:[#allocation11 + $0x11c] sm:$0xf]
    %v10687 = vld [vmem:[#allocation11 + $0x120] sm:$0xf]
    %v10688 = vld [vmem:[#allocation11 + $0x124] sm:$0xf]
    %v10689 = vld [vmem:[#allocation11 + $0x128] sm:$0xf]
    %v10690 = vld [vmem:[#allocation11 + $0x12c] sm:$0xf]
    %v10691 = vld [vmem:[#allocation11 + $0x130] sm:$0xf]
    %v10692 = vld [vmem:[#allocation11 + $0x134] sm:$0xf]
    %v10693 = vld [vmem:[#allocation11 + $0x138] sm:$0xf]
    %v10694 = vld [vmem:[#allocation11 + $0x13c] sm:$0xf]
    %v10695 = vld [vmem:[#allocation11 + $0x140] sm:$0xf]
    %v10696 = vld [vmem:[#allocation11 + $0x144] sm:$0xf]
    %v10697 = vld [vmem:[#allocation11 + $0x148] sm:$0xf]
    %v10698 = vld [vmem:[#allocation11 + $0x14c] sm:$0xf]
    %v10699 = vld [vmem:[#allocation11 + $0x150] sm:$0xf]
    %v10700 = vld [vmem:[#allocation11 + $0x154] sm:$0xf]
    %v10701 = vld [vmem:[#allocation11 + $0x158] sm:$0xf]
    %v10702 = vld [vmem:[#allocation11 + $0x15c] sm:$0xf]
    %v10703 = vld [vmem:[#allocation11 + $0x160] sm:$0xf]
    %v10704 = vld [vmem:[#allocation11 + $0x164] sm:$0xf]
    %v10705 = vld [vmem:[#allocation11 + $0x168] sm:$0xf]
    %v10706 = vld [vmem:[#allocation11 + $0x16c] sm:$0xf]
    %v10707 = vld [vmem:[#allocation11 + $0x170] sm:$0xf]
    %v10708 = vld [vmem:[#allocation11 + $0x174] sm:$0xf]
    %v10709 = vld [vmem:[#allocation11 + $0x178] sm:$0xf]
    %v10710 = vld [vmem:[#allocation11 + $0x17c] sm:$0xf]
    %v10711 = vld [vmem:[#allocation11 + $0x180] sm:$0xf]
    %v10712 = vld [vmem:[#allocation11 + $0x184] sm:$0xf]
    %v10713 = vld [vmem:[#allocation11 + $0x188] sm:$0xf]
    %v10714 = vld [vmem:[#allocation11 + $0x18c] sm:$0xf]
    %v10715 = vld [vmem:[#allocation11 + $0x190] sm:$0xf]
    %v10716 = vld [vmem:[#allocation11 + $0x194] sm:$0xf]
    %v10717 = vld [vmem:[#allocation11 + $0x198] sm:$0xf]
    %v10718 = vld [vmem:[#allocation11 + $0x19c] sm:$0xf]
    %v10719 = vld [vmem:[#allocation11 + $0x1a0] sm:$0xf]
    %v10720 = vld [vmem:[#allocation11 + $0x1a4] sm:$0xf]
    %v10721 = vld [vmem:[#allocation11 + $0x1a8] sm:$0xf]
    %v10722 = vld [vmem:[#allocation11 + $0x1ac] sm:$0xf]
    %v10723 = vld [vmem:[#allocation11 + $0x1b0] sm:$0xf]
    %v10724 = vld [vmem:[#allocation11 + $0x1b4] sm:$0xf]
    %v10725 = vld [vmem:[#allocation11 + $0x1b8] sm:$0xf]
    %v10726 = vld [vmem:[#allocation11 + $0x1bc] sm:$0xf]
    %v10727 = vld [vmem:[#allocation11 + $0x1c0] sm:$0xf]
    %v10728 = vld [vmem:[#allocation11 + $0x1c4] sm:$0xf]
    %v10729 = vld [vmem:[#allocation11 + $0x1c8] sm:$0xf]
    %v10730 = vld [vmem:[#allocation11 + $0x1cc] sm:$0xf]
    %v10731 = vld [vmem:[#allocation11 + $0x1d0] sm:$0xf]
    %v10732 = vld [vmem:[#allocation11 + $0x1d4] sm:$0xf]
    %v10733 = vld [vmem:[#allocation11 + $0x1d8] sm:$0xf]
    %v10734 = vld [vmem:[#allocation11 + $0x1dc] sm:$0xf]
    %v10735 = vld [vmem:[#allocation11 + $0x1e0] sm:$0xf]
    %v10736 = vld [vmem:[#allocation11 + $0x1e4] sm:$0xf]
    %v10737 = vld [vmem:[#allocation11 + $0x1e8] sm:$0xf]
    %v10738 = vld [vmem:[#allocation11 + $0x1ec] sm:$0xf]
    %v10739 = vld [vmem:[#allocation11 + $0x1f0] sm:$0xf]
    %v10740 = vld [vmem:[#allocation11 + $0x1f4] sm:$0xf]
    %v10741 = vld [vmem:[#allocation11 + $0x1f8] sm:$0xf]
    %v10742 = vld [vmem:[#allocation11 + $0x1fc] sm:$0xf]
    %v10743 = vld [vmem:[#allocation11 + $0x200] sm:$0xf]
    %v10744 = vld [vmem:[#allocation11 + $0x204] sm:$0xf]
    %v10745 = vld [vmem:[#allocation11 + $0x208] sm:$0xf]
    %v10746 = vld [vmem:[#allocation11 + $0x20c] sm:$0xf]
    %v10747 = vld [vmem:[#allocation11 + $0x210] sm:$0xf]
    %v10748 = vld [vmem:[#allocation11 + $0x214] sm:$0xf]
    %v10749 = vld [vmem:[#allocation11 + $0x218] sm:$0xf]
    %v10750 = vld [vmem:[#allocation11 + $0x21c] sm:$0xf]
    %v10751 = vld [vmem:[#allocation11 + $0x220] sm:$0xf]
    %v10752 = vld [vmem:[#allocation11 + $0x224] sm:$0xf]
    %v10753 = vld [vmem:[#allocation11 + $0x228] sm:$0xf]
    %v10754 = vld [vmem:[#allocation11 + $0x22c] sm:$0xf]
    %v10755 = vld [vmem:[#allocation11 + $0x230] sm:$0xf]
    %v10756 = vld [vmem:[#allocation11 + $0x234] sm:$0xf]
    %v10757 = vld [vmem:[#allocation11 + $0x238] sm:$0xf]
    %v10758 = vld [vmem:[#allocation11 + $0x23c] sm:$0xf]
    %v10759 = vld [vmem:[#allocation11 + $0x240] sm:$0xf]
    %v10760 = vld [vmem:[#allocation11 + $0x244] sm:$0xf]
    %v10761 = vld [vmem:[#allocation11 + $0x248] sm:$0xf]
    %v10762 = vld [vmem:[#allocation11 + $0x24c] sm:$0xf]
    %v10763 = vld [vmem:[#allocation11 + $0x250] sm:$0xf]
    %v10764 = vld [vmem:[#allocation11 + $0x254] sm:$0xf]
    %v10765 = vld [vmem:[#allocation11 + $0x258] sm:$0xf]
    %v10766 = vld [vmem:[#allocation11 + $0x25c] sm:$0xf]
    %v10767 = vld [vmem:[#allocation11 + $0x260] sm:$0xf]
    %v10768 = vld [vmem:[#allocation11 + $0x264] sm:$0xf]
    %v10769 = vld [vmem:[#allocation11 + $0x268] sm:$0xf]
    %v10770 = vld [vmem:[#allocation11 + $0x26c] sm:$0xf]
    %v10771 = vld [vmem:[#allocation11 + $0x270] sm:$0xf]
    %v10772 = vld [vmem:[#allocation11 + $0x274] sm:$0xf]
    %v10773 = vld [vmem:[#allocation11 + $0x278] sm:$0xf]
    %v10774 = vld [vmem:[#allocation11 + $0x27c] sm:$0xf]
    %v10775 = vld [vmem:[#allocation13] sm:$0x1]
    %v10777 = vperm.slane %v10775, 0
    %v10939 = vunpack.c.l.b16 %v10615
    %v10940 = vunpack.c.l.b16 %v10616
    %v10941 = vunpack.c.l.b16 %v10617
    %v10942 = vunpack.c.l.b16 %v10618
    %v10943 = vunpack.c.l.b16 %v10619
    %v10944 = vunpack.c.l.b16 %v10620
    %v10945 = vunpack.c.l.b16 %v10621
    %v10946 = vunpack.c.l.b16 %v10622
    %v10947 = vunpack.c.l.b16 %v10623
    %v10948 = vunpack.c.l.b16 %v10624
    %v10949 = vunpack.c.l.b16 %v10625
    %v10950 = vunpack.c.l.b16 %v10626
    %v10951 = vunpack.c.l.b16 %v10627
    %v10952 = vunpack.c.l.b16 %v10628
    %v10953 = vunpack.c.l.b16 %v10629
    %v10954 = vunpack.c.l.b16 %v10630
    %v10955 = vunpack.c.l.b16 %v10631
    %v10956 = vunpack.c.l.b16 %v10632
    %v10957 = vunpack.c.l.b16 %v10633
    %v10958 = vunpack.c.l.b16 %v10634
    %v10959 = vunpack.c.l.b16 %v10635
    %v10960 = vunpack.c.l.b16 %v10636
    %v10961 = vunpack.c.l.b16 %v10637
    %v10962 = vunpack.c.l.b16 %v10638
    %v10963 = vunpack.c.l.b16 %v10639
    %v10964 = vunpack.c.l.b16 %v10640
    %v10965 = vunpack.c.l.b16 %v10641
    %v10966 = vunpack.c.l.b16 %v10642
    %v10967 = vunpack.c.l.b16 %v10643
    %v10968 = vunpack.c.l.b16 %v10644
    %v10969 = vunpack.c.l.b16 %v10645
    %v10970 = vunpack.c.l.b16 %v10646
    %v10971 = vunpack.c.l.b16 %v10647
    %v10972 = vunpack.c.l.b16 %v10648
    %v10973 = vunpack.c.l.b16 %v10649
    %v10974 = vunpack.c.l.b16 %v10650
    %v10975 = vunpack.c.l.b16 %v10651
    %v10976 = vunpack.c.l.b16 %v10652
    %v10977 = vunpack.c.l.b16 %v10653
    %v10978 = vunpack.c.l.b16 %v10654
    %v10979 = vunpack.c.l.b16 %v10655
    %v10980 = vunpack.c.l.b16 %v10656
    %v10981 = vunpack.c.l.b16 %v10657
    %v10982 = vunpack.c.l.b16 %v10658
    %v10983 = vunpack.c.l.b16 %v10659
    %v10984 = vunpack.c.l.b16 %v10660
    %v10985 = vunpack.c.l.b16 %v10661
    %v10986 = vunpack.c.l.b16 %v10662
    %v10987 = vunpack.c.l.b16 %v10663
    %v10988 = vunpack.c.l.b16 %v10664
    %v10989 = vunpack.c.l.b16 %v10665
    %v10990 = vunpack.c.l.b16 %v10666
    %v10991 = vunpack.c.l.b16 %v10667
    %v10992 = vunpack.c.l.b16 %v10668
    %v10993 = vunpack.c.l.b16 %v10669
    %v10994 = vunpack.c.l.b16 %v10670
    %v10995 = vunpack.c.l.b16 %v10671
    %v10996 = vunpack.c.l.b16 %v10672
    %v10997 = vunpack.c.l.b16 %v10673
    %v10998 = vunpack.c.l.b16 %v10674
    %v10999 = vunpack.c.l.b16 %v10675
    %v11000 = vunpack.c.l.b16 %v10676
    %v11001 = vunpack.c.l.b16 %v10677
    %v11002 = vunpack.c.l.b16 %v10678
    %v11003 = vunpack.c.l.b16 %v10679
    %v11004 = vunpack.c.l.b16 %v10680
    %v11005 = vunpack.c.l.b16 %v10681
    %v11006 = vunpack.c.l.b16 %v10682
    %v11007 = vunpack.c.l.b16 %v10683
    %v11008 = vunpack.c.l.b16 %v10684
    %v11009 = vunpack.c.l.b16 %v10685
    %v11010 = vunpack.c.l.b16 %v10686
    %v11011 = vunpack.c.l.b16 %v10687
    %v11012 = vunpack.c.l.b16 %v10688
    %v11013 = vunpack.c.l.b16 %v10689
    %v11014 = vunpack.c.l.b16 %v10690
    %v11015 = vunpack.c.l.b16 %v10691
    %v11016 = vunpack.c.l.b16 %v10692
    %v11017 = vunpack.c.l.b16 %v10693
    %v11018 = vunpack.c.l.b16 %v10694
    %v11019 = vunpack.c.l.b16 %v10695
    %v11020 = vunpack.c.l.b16 %v10696
    %v11021 = vunpack.c.l.b16 %v10697
    %v11022 = vunpack.c.l.b16 %v10698
    %v11023 = vunpack.c.l.b16 %v10699
    %v11024 = vunpack.c.l.b16 %v10700
    %v11025 = vunpack.c.l.b16 %v10701
    %v11026 = vunpack.c.l.b16 %v10702
    %v11027 = vunpack.c.l.b16 %v10703
    %v11028 = vunpack.c.l.b16 %v10704
    %v11029 = vunpack.c.l.b16 %v10705
    %v11030 = vunpack.c.l.b16 %v10706
    %v11031 = vunpack.c.l.b16 %v10707
    %v11032 = vunpack.c.l.b16 %v10708
    %v11033 = vunpack.c.l.b16 %v10709
    %v11034 = vunpack.c.l.b16 %v10710
    %v11035 = vunpack.c.l.b16 %v10711
    %v11036 = vunpack.c.l.b16 %v10712
    %v11037 = vunpack.c.l.b16 %v10713
    %v11038 = vunpack.c.l.b16 %v10714
    %v11039 = vunpack.c.l.b16 %v10715
    %v11040 = vunpack.c.l.b16 %v10716
    %v11041 = vunpack.c.l.b16 %v10717
    %v11042 = vunpack.c.l.b16 %v10718
    %v11043 = vunpack.c.l.b16 %v10719
    %v11044 = vunpack.c.l.b16 %v10720
    %v11045 = vunpack.c.l.b16 %v10721
    %v11046 = vunpack.c.l.b16 %v10722
    %v11047 = vunpack.c.l.b16 %v10723
    %v11048 = vunpack.c.l.b16 %v10724
    %v11049 = vunpack.c.l.b16 %v10725
    %v11050 = vunpack.c.l.b16 %v10726
    %v11051 = vunpack.c.l.b16 %v10727
    %v11052 = vunpack.c.l.b16 %v10728
    %v11053 = vunpack.c.l.b16 %v10729
    %v11054 = vunpack.c.l.b16 %v10730
    %v11055 = vunpack.c.l.b16 %v10731
    %v11056 = vunpack.c.l.b16 %v10732
    %v11057 = vunpack.c.l.b16 %v10733
    %v11058 = vunpack.c.l.b16 %v10734
    %v11059 = vunpack.c.l.b16 %v10735
    %v11060 = vunpack.c.l.b16 %v10736
    %v11061 = vunpack.c.l.b16 %v10737
    %v11062 = vunpack.c.l.b16 %v10738
    %v11063 = vunpack.c.l.b16 %v10739
    %v11064 = vunpack.c.l.b16 %v10740
    %v11065 = vunpack.c.l.b16 %v10741
    %v11066 = vunpack.c.l.b16 %v10742
    %v11067 = vunpack.c.l.b16 %v10743
    %v11068 = vunpack.c.l.b16 %v10744
    %v11069 = vunpack.c.l.b16 %v10745
    %v11070 = vunpack.c.l.b16 %v10746
    %v11071 = vunpack.c.l.b16 %v10747
    %v11072 = vunpack.c.l.b16 %v10748
    %v11073 = vunpack.c.l.b16 %v10749
    %v11074 = vunpack.c.l.b16 %v10750
    %v11075 = vunpack.c.l.b16 %v10751
    %v11076 = vunpack.c.l.b16 %v10752
    %v11077 = vunpack.c.l.b16 %v10753
    %v11078 = vunpack.c.l.b16 %v10754
    %v11079 = vunpack.c.l.b16 %v10755
    %v11080 = vunpack.c.l.b16 %v10756
    %v11081 = vunpack.c.l.b16 %v10757
    %v11082 = vunpack.c.l.b16 %v10758
    %v11083 = vunpack.c.l.b16 %v10759
    %v11084 = vunpack.c.l.b16 %v10760
    %v11085 = vunpack.c.l.b16 %v10761
    %v11086 = vunpack.c.l.b16 %v10762
    %v11087 = vunpack.c.l.b16 %v10763
    %v11088 = vunpack.c.l.b16 %v10764
    %v11089 = vunpack.c.l.b16 %v10765
    %v11090 = vunpack.c.l.b16 %v10766
    %v11091 = vunpack.c.l.b16 %v10767
    %v11092 = vunpack.c.l.b16 %v10768
    %v11093 = vunpack.c.l.b16 %v10769
    %v11094 = vunpack.c.l.b16 %v10770
    %v11095 = vunpack.c.l.b16 %v10771
    %v11096 = vunpack.c.l.b16 %v10772
    %v11097 = vunpack.c.l.b16 %v10773
    %v11098 = vunpack.c.l.b16 %v10774
    %v11099 = vpack.c.b16 %v10940, %v10939
    %v11100 = vpack.c.b16 %v10942, %v10941
    %v11101 = vpack.c.b16 %v10944, %v10943
    %v11102 = vpack.c.b16 %v10946, %v10945
    %v11103 = vpack.c.b16 %v10948, %v10947
    %v11104 = vpack.c.b16 %v10950, %v10949
    %v11105 = vpack.c.b16 %v10952, %v10951
    %v11106 = vpack.c.b16 %v10954, %v10953
    %v11107 = vpack.c.b16 %v10956, %v10955
    %v11108 = vpack.c.b16 %v10958, %v10957
    %v11109 = vpack.c.b16 %v10960, %v10959
    %v11110 = vpack.c.b16 %v10962, %v10961
    %v11111 = vpack.c.b16 %v10964, %v10963
    %v11112 = vpack.c.b16 %v10966, %v10965
    %v11113 = vpack.c.b16 %v10968, %v10967
    %v11114 = vpack.c.b16 %v10970, %v10969
    %v11115 = vpack.c.b16 %v10972, %v10971
    %v11116 = vpack.c.b16 %v10974, %v10973
    %v11117 = vpack.c.b16 %v10976, %v10975
    %v11118 = vpack.c.b16 %v10978, %v10977
    %v11119 = vpack.c.b16 %v10980, %v10979
    %v11120 = vpack.c.b16 %v10982, %v10981
    %v11121 = vpack.c.b16 %v10984, %v10983
    %v11122 = vpack.c.b16 %v10986, %v10985
    %v11123 = vpack.c.b16 %v10988, %v10987
    %v11124 = vpack.c.b16 %v10990, %v10989
    %v11125 = vpack.c.b16 %v10992, %v10991
    %v11126 = vpack.c.b16 %v10994, %v10993
    %v11127 = vpack.c.b16 %v10996, %v10995
    %v11128 = vpack.c.b16 %v10998, %v10997
    %v11129 = vpack.c.b16 %v11000, %v10999
    %v11130 = vpack.c.b16 %v11002, %v11001
    %v11131 = vpack.c.b16 %v11004, %v11003
    %v11132 = vpack.c.b16 %v11006, %v11005
    %v11133 = vpack.c.b16 %v11008, %v11007
    %v11134 = vpack.c.b16 %v11010, %v11009
    %v11135 = vpack.c.b16 %v11012, %v11011
    %v11136 = vpack.c.b16 %v11014, %v11013
    %v11137 = vpack.c.b16 %v11016, %v11015
    %v11138 = vpack.c.b16 %v11018, %v11017
    %v11139 = vpack.c.b16 %v11020, %v11019
    %v11140 = vpack.c.b16 %v11022, %v11021
    %v11141 = vpack.c.b16 %v11024, %v11023
    %v11142 = vpack.c.b16 %v11026, %v11025
    %v11143 = vpack.c.b16 %v11028, %v11027
    %v11144 = vpack.c.b16 %v11030, %v11029
    %v11145 = vpack.c.b16 %v11032, %v11031
    %v11146 = vpack.c.b16 %v11034, %v11033
    %v11147 = vpack.c.b16 %v11036, %v11035
    %v11148 = vpack.c.b16 %v11038, %v11037
    %v11149 = vpack.c.b16 %v11040, %v11039
    %v11150 = vpack.c.b16 %v11042, %v11041
    %v11151 = vpack.c.b16 %v11044, %v11043
    %v11152 = vpack.c.b16 %v11046, %v11045
    %v11153 = vpack.c.b16 %v11048, %v11047
    %v11154 = vpack.c.b16 %v11050, %v11049
    %v11155 = vpack.c.b16 %v11052, %v11051
    %v11156 = vpack.c.b16 %v11054, %v11053
    %v11157 = vpack.c.b16 %v11056, %v11055
    %v11158 = vpack.c.b16 %v11058, %v11057
    %v11159 = vpack.c.b16 %v11060, %v11059
    %v11160 = vpack.c.b16 %v11062, %v11061
    %v11161 = vpack.c.b16 %v11064, %v11063
    %v11162 = vpack.c.b16 %v11066, %v11065
    %v11163 = vpack.c.b16 %v11068, %v11067
    %v11164 = vpack.c.b16 %v11070, %v11069
    %v11165 = vpack.c.b16 %v11072, %v11071
    %v11166 = vpack.c.b16 %v11074, %v11073
    %v11167 = vpack.c.b16 %v11076, %v11075
    %v11168 = vpack.c.b16 %v11078, %v11077
    %v11169 = vpack.c.b16 %v11080, %v11079
    %v11170 = vpack.c.b16 %v11082, %v11081
    %v11171 = vpack.c.b16 %v11084, %v11083
    %v11172 = vpack.c.b16 %v11086, %v11085
    %v11173 = vpack.c.b16 %v11088, %v11087
    %v11174 = vpack.c.b16 %v11090, %v11089
    %v11175 = vpack.c.b16 %v11092, %v11091
    %v11176 = vpack.c.b16 %v11094, %v11093
    %v11177 = vpack.c.b16 %v11096, %v11095
    %v11178 = vpack.c.b16 %v11098, %v11097
    %11259 = vmatpush.bf16.msra.mxu0 %v11106
    %11260 = vmatpush.bf16.msra.mxu0 %v11105
    %11261 = vmatpush.bf16.msra.mxu0 %v11104
    %11262 = vmatpush.bf16.msra.mxu0 %v11103
    %11263 = vmatpush.bf16.msra.mxu0 %v11102
    %11264 = vmatpush.bf16.msra.mxu0 %v11101
    %11265 = vmatpush.bf16.msra.mxu0 %v11100
    %11266 = vmatpush.bf16.msra.mxu0 %v11099
    %11267 = vmatmul.bf16.gmra.mxu0 %v10605
    %v11268 = vpop.f32.mrf.mxu0
    %v11269 = vadd.f32 %v10777, %v11268
    %v11270 = vpop.f32.mrf.mxu0
    %11271 = vdwg.mxu0
    %11272 = vmatpush.bf16.msra.mxu0 %v11114
    %11273 = vmatpush.bf16.msra.mxu0 %v11113
    %11274 = vmatpush.bf16.msra.mxu0 %v11112
    %11275 = vmatpush.bf16.msra.mxu0 %v11111
    %11276 = vmatpush.bf16.msra.mxu0 %v11110
    %11277 = vmatpush.bf16.msra.mxu0 %v11109
    %11278 = vmatpush.bf16.msra.mxu0 %v11108
    %11279 = vmatpush.bf16.msra.mxu0 %v11107
    %11280 = vmatmul.bf16.gmra.mxu0 %v10606
    %v11281 = vpop.f32.mrf.mxu0
    %v11282 = vadd.f32 %v11269, %v11281
    %v11283 = vpop.f32.mrf.mxu0
    %11284 = vdwg.mxu0
    %11285 = vmatpush.bf16.msra.mxu0 %v11122
    %11286 = vmatpush.bf16.msra.mxu0 %v11121
    %11287 = vmatpush.bf16.msra.mxu0 %v11120
    %11288 = vmatpush.bf16.msra.mxu0 %v11119
    %11289 = vmatpush.bf16.msra.mxu0 %v11118
    %11290 = vmatpush.bf16.msra.mxu0 %v11117
    %11291 = vmatpush.bf16.msra.mxu0 %v11116
    %11292 = vmatpush.bf16.msra.mxu0 %v11115
    %11293 = vmatmul.bf16.gmra.mxu0 %v10607
    %v11294 = vpop.f32.mrf.mxu0
    %v11295 = vadd.f32 %v11282, %v11294
    %v11296 = vpop.f32.mrf.mxu0
    %11297 = vdwg.mxu0
    %11298 = vmatpush.bf16.msra.mxu0 %v11130
    %11299 = vmatpush.bf16.msra.mxu0 %v11129
    %11300 = vmatpush.bf16.msra.mxu0 %v11128
    %11301 = vmatpush.bf16.msra.mxu0 %v11127
    %11302 = vmatpush.bf16.msra.mxu0 %v11126
    %11303 = vmatpush.bf16.msra.mxu0 %v11125
    %11304 = vmatpush.bf16.msra.mxu0 %v11124
    %11305 = vmatpush.bf16.msra.mxu0 %v11123
    %11306 = vmatmul.bf16.gmra.mxu0 %v10608
    %v11307 = vpop.f32.mrf.mxu0
    %v11308 = vadd.f32 %v11295, %v11307
    %v11309 = vpop.f32.mrf.mxu0
    %11310 = vdwg.mxu0
    %11311 = vmatpush.bf16.msra.mxu0 %v11138
    %11312 = vmatpush.bf16.msra.mxu0 %v11137
    %11313 = vmatpush.bf16.msra.mxu0 %v11136
    %11314 = vmatpush.bf16.msra.mxu0 %v11135
    %11315 = vmatpush.bf16.msra.mxu0 %v11134
    %11316 = vmatpush.bf16.msra.mxu0 %v11133
    %11317 = vmatpush.bf16.msra.mxu0 %v11132
    %11318 = vmatpush.bf16.msra.mxu0 %v11131
    %11319 = vmatmul.bf16.gmra.mxu0 %v10609
    %v11320 = vpop.f32.mrf.mxu0
    %v11321 = vadd.f32 %v11308, %v11320
    %v11322 = vpop.f32.mrf.mxu0
    %11323 = vdwg.mxu0
    %11324 = vmatpush.bf16.msra.mxu0 %v11146
    %11325 = vmatpush.bf16.msra.mxu0 %v11145
    %11326 = vmatpush.bf16.msra.mxu0 %v11144
    %11327 = vmatpush.bf16.msra.mxu0 %v11143
    %11328 = vmatpush.bf16.msra.mxu0 %v11142
    %11329 = vmatpush.bf16.msra.mxu0 %v11141
    %11330 = vmatpush.bf16.msra.mxu0 %v11140
    %11331 = vmatpush.bf16.msra.mxu0 %v11139
    %11332 = vmatmul.bf16.gmra.mxu0 %v10610
    %v11333 = vpop.f32.mrf.mxu0
    %v11334 = vadd.f32 %v11321, %v11333
    %v11335 = vpop.f32.mrf.mxu0
    %11336 = vdwg.mxu0
    %11337 = vmatpush.bf16.msra.mxu0 %v11154
    %11338 = vmatpush.bf16.msra.mxu0 %v11153
    %11339 = vmatpush.bf16.msra.mxu0 %v11152
    %11340 = vmatpush.bf16.msra.mxu0 %v11151
    %11341 = vmatpush.bf16.msra.mxu0 %v11150
    %11342 = vmatpush.bf16.msra.mxu0 %v11149
    %11343 = vmatpush.bf16.msra.mxu0 %v11148
    %11344 = vmatpush.bf16.msra.mxu0 %v11147
    %11345 = vmatmul.bf16.gmra.mxu0 %v10611
    %v11346 = vpop.f32.mrf.mxu0
    %v11347 = vadd.f32 %v11334, %v11346
    %v11348 = vpop.f32.mrf.mxu0
    %11349 = vdwg.mxu0
    %11350 = vmatpush.bf16.msra.mxu0 %v11162
    %11351 = vmatpush.bf16.msra.mxu0 %v11161
    %11352 = vmatpush.bf16.msra.mxu0 %v11160
    %11353 = vmatpush.bf16.msra.mxu0 %v11159
    %11354 = vmatpush.bf16.msra.mxu0 %v11158
    %11355 = vmatpush.bf16.msra.mxu0 %v11157
    %11356 = vmatpush.bf16.msra.mxu0 %v11156
    %11357 = vmatpush.bf16.msra.mxu0 %v11155
    %11358 = vmatmul.bf16.gmra.mxu0 %v10612
    %v11359 = vpop.f32.mrf.mxu0
    %v11360 = vadd.f32 %v11347, %v11359
    %v11361 = vpop.f32.mrf.mxu0
    %11362 = vdwg.mxu0
    %11363 = vmatpush.bf16.msra.mxu0 %v11170
    %11364 = vmatpush.bf16.msra.mxu0 %v11169
    %11365 = vmatpush.bf16.msra.mxu0 %v11168
    %11366 = vmatpush.bf16.msra.mxu0 %v11167
    %11367 = vmatpush.bf16.msra.mxu0 %v11166
    %11368 = vmatpush.bf16.msra.mxu0 %v11165
    %11369 = vmatpush.bf16.msra.mxu0 %v11164
    %11370 = vmatpush.bf16.msra.mxu0 %v11163
    %11371 = vmatmul.bf16.gmra.mxu0 %v10613
    %v11372 = vpop.f32.mrf.mxu0
    %v11373 = vadd.f32 %v11360, %v11372
    %v11374 = vpop.f32.mrf.mxu0
    %11375 = vdwg.mxu0
    %11376 = vmatpush.bf16.msra.mxu0 %v11178
    %11377 = vmatpush.bf16.msra.mxu0 %v11177
    %11378 = vmatpush.bf16.msra.mxu0 %v11176
    %11379 = vmatpush.bf16.msra.mxu0 %v11175
    %11380 = vmatpush.bf16.msra.mxu0 %v11174
    %11381 = vmatpush.bf16.msra.mxu0 %v11173
    %11382 = vmatpush.bf16.msra.mxu0 %v11172
    %11383 = vmatpush.bf16.msra.mxu0 %v11171
    %11384 = vmatmul.bf16.gmra.mxu0 %v10614
    %v11385 = vpop.f32.mrf.mxu0
    %v11386 = vadd.f32 %v11373, %v11385
    %v11387 = vpop.f32.mrf.mxu0
    %11388 = vdwg.mxu0
    %11389 = vst [vmem:[#allocation14] sm:$0xff] %v11386
    // Predicated region
    $region58: #{tpu_custom_call.1} parent=1 // pred_check
      _
    $region59: #{tpu_custom_call.1} parent=1 // pred_check_branch
      %11391 = sbr.rel (0) target = $region61
    $region60: #{tpu_custom_call.1} parent=1 // pred_region
      %11393 = vsyncadd [#allocation4], 0
      %s11395 = sshll.u32 [#allocation14], 4
      %s11396 = int_to_ptr.vmem [resolvable:$true] %s11395
      %s11397 = sshll.u32 %s7, 4
      %s11398 = int_to_ptr.hbm [resolvable:$true] %s11397
      %11400 = dma.vmem_to_hbm [thread:$0]  %s11396, 128, %s11398, [#allocation4]
    $region61: #{tpu_custom_call.1} parent=1 // pred_fallthru
      _
    // Predicated region
    $region62: #{tpu_custom_call.1} parent=1 // pred_check
      _
    $region63: #{tpu_custom_call.1} parent=1 // pred_check_branch
      %11402 = sbr.rel (0) target = $region65
    $region64: #{tpu_custom_call.1} parent=1 // pred_region
      %11404 = dma.done [#allocation4], 128
    $region65: #{tpu_custom_call.1} parent=1 // pred_fallthru
      _
    %11405 = vsyncpa [#allocation3], 1
    %11406 = vsyncpa [#allocation6], 1
    %11407 = vsyncpa [#allocation9], 1
    %11408 = vsyncpa [#allocation12], 1
    %11409 = vsyncpa [#allocation4], 1

</llo_original>
